<compile_context>
chip_gen: v6e
topology: v6e:2x2x1
jax: 0.10.0
libtpu: 0.0.40
codegen_flags: <defaults>
</compile_context>

<pallas_src>
import functools

import jax
import jax.numpy as jnp
from jax import lax
from jax.experimental import pallas as pl
from jax.experimental.pallas import tpu as pltpu

EPS = 1e-5
LANE = 128
_VMEM_STEP_BUDGET = 8 << 20           # target per-grid-step working set
_SINGLE_BUFFER_WEIGHTS = True         # flipped off in __main__ if unsupported


def _round_up(x, m):
    return (x + m - 1) // m * m


def _pad_last(x, c_p):
    c = x.shape[-1]
    if c == c_p:
        return x
    return jnp.pad(x, [(0, 0)] * (x.ndim - 1) + [(0, c_p - c)])


def _pad_vec(v, c_p):
    return jnp.pad(v.astype(jnp.float32), (0, c_p - v.shape[0]))


def _pick_h_tile(H, W, N, per_row_bytes, budget_bytes=_VMEM_STEP_BUDGET,
                 min_steps=4):
    """Largest divisor of H whose per-step footprint fits the VMEM budget,
    backed off (when possible) so the grid has enough steps for double-buffer
    pipelining / both v7x TensorCores, keeping >= 8 rows per matmul."""
    divs = [d for d in range(1, H + 1) if H % d == 0]
    fit = [d for d in divs if d * per_row_bytes <= budget_bytes] or [1]
    th = fit[-1]
    while th > 1 and N * (H // th) < min_steps:
        smaller = max(d for d in divs if d < th)
        if smaller * W < 8:
            break
        th = smaller
    return th


def _const_spec(shape):
    """BlockSpec for a grid-invariant operand (weights / folded BN vectors).
    Requests single buffering (the default double buffer is wasted VMEM for a
    block whose index never changes); falls back if unsupported."""
    imap = lambda n, h: (0,) * len(shape)
    if _SINGLE_BUFFER_WEIGHTS:
        try:
            return pl.BlockSpec(shape, imap, pipeline_mode=pl.Buffered(1))
        except Exception:
            pass
    return pl.BlockSpec(shape, imap)


def _mosaic_params(vmem_est_bytes):
    limit = int(min(max(2 * vmem_est_bytes, 32 << 20), 48 << 20))
    return pltpu.CompilerParams(
        dimension_semantics=("parallel", "parallel"),
        vmem_limit_bytes=limit)


def _stats_spec(C, nH):
    # Each (n, h) grid step writes a DISTINCT stats block -> safe under
    # "parallel" semantics (do not accumulate these into one block).
    return pl.BlockSpec((1, 2, C), lambda n, h, nH=nH: (n * nH + h, 0, 0))


def _col_stats(y2d):
    # (rows, C) f32 -> (1, 2, C): per-column sum and sum of squares.
    s = jnp.sum(y2d, axis=0, keepdims=True)
    q = jnp.sum(y2d * y2d, axis=0, keepdims=True)
    return jnp.concatenate([s, q], axis=0)[None]


# ----------------------------- Pallas kernels -------------------------------

def _conv1_proj_kernel(x_ref, w1_ref, ws_ref, y1_ref, ysc_ref, st1_ref, stsc_ref):
    # conv1 (1x1) and the projection-shortcut conv share the same x tile.
    _, TH, W, Cin = x_ref.shape
    x = x_ref[...].reshape(TH * W, Cin)                       # bf16
    y1 = jnp.dot(x, w1_ref[...], preferred_element_type=jnp.float32)
    ysc = jnp.dot(x, ws_ref[...], preferred_element_type=jnp.float32)
    y1_ref[...] = y1.astype(y1_ref.dtype).reshape(y1_ref.shape)
    ysc_ref[...] = ysc.astype(ysc_ref.dtype).reshape(ysc_ref.shape)
    st1_ref[...] = _col_stats(y1)
    stsc_ref[...] = _col_stats(ysc)


def _conv1_id_kernel(x_ref, w1_ref, y1_ref, st1_ref):
    _, TH, W, Cin = x_ref.shape
    x = x_ref[...].reshape(TH * W, Cin)
    y1 = jnp.dot(x, w1_ref[...], preferred_element_type=jnp.float32)
    y1_ref[...] = y1.astype(y1_ref.dtype).reshape(y1_ref.shape)
    st1_ref[...] = _col_stats(y1)


def _conv2_kernel(y1_ref, a1_ref, c1_ref, w2_ref, y2_ref, st2_ref):
    # Fused BN1(scale+shift)+ReLU prologue, then the 3x3 conv as an in-VMEM
    # im2col (TH*W, 9*C) patch matrix feeding ONE long-K MXU matmul.
    _, H, W, C = y1_ref.shape
    TH = y2_ref.shape[1]
    h = pl.program_id(1)
    row0 = pl.multiple_of(h * TH, TH)

    a1 = a1_ref[...].reshape(1, 1, C)
    c1 = c1_ref[...].reshape(1, 1, C)

    def bn1_relu(rows):                                       # (r, W, C) -> bf16
        return jnp.maximum(rows.astype(jnp.float32) * a1 + c1,
                           0.0).astype(jnp.bfloat16)

    mid = bn1_relu(y1_ref[0, pl.ds(row0, TH), :, :])          # (TH, W, C)
    top = bn1_relu(y1_ref[0, pl.ds(jnp.maximum(row0 - 1, 0), 1), :, :])
    bot = bn1_relu(y1_ref[0, pl.ds(jnp.minimum(row0 + TH, H - 1), 1), :, :])
    # Halo rows outside the image are zero padding.
    top = top * (h > 0).astype(jnp.bfloat16)
    bot = bot * (h < pl.num_programs(1) - 1).astype(jnp.bfloat16)

    zcol = jnp.zeros((TH + 2, 1, C), jnp.bfloat16)
    act = jnp.concatenate([top, mid, bot], axis=0)            # (TH+2, W,   C)
    act = jnp.concatenate([zcol, act, zcol], axis=1)          # (TH+2, W+2, C)

    patch = jnp.concatenate(
        [act[di:di + TH, dj:dj + W, :].reshape(TH * W, C)
         for di in range(3) for dj in range(3)], axis=-1)     # (TH*W, 9*C)
    y2 = jnp.dot(patch, w2_ref[...], preferred_element_type=jnp.float32)
    y2_ref[...] = y2.astype(y2_ref.dtype).reshape(y2_ref.shape)
    st2_ref[...] = _col_stats(y2)


def _conv3_kernel(y2_ref, a2_ref, c2_ref, w3_ref, y3_ref, st3_ref):
    # Fused BN2 + ReLU prologue, then conv3 (1x1) matmul.
    _, TH, W, C = y2_ref.shape
    a2 = a2_ref[...].reshape(1, 1, 1, C)
    c2 = c2_ref[...].reshape(1, 1, 1, C)
    act = jnp.maximum(y2_ref[...].astype(jnp.float32) * a2 + c2, 0.0)
    y3 = jnp.dot(act.astype(jnp.bfloat16).reshape(TH * W, C), w3_ref[...],
                 preferred_element_type=jnp.float32)
    y3_ref[...] = y3.astype(y3_ref.dtype).reshape(y3_ref.shape)
    st3_ref[...] = _col_stats(y3)


def _final_proj_kernel(y3_ref, a3_ref, c3_ref, ysc_ref, asc_ref, csc_ref, o_ref):
    # bn3(conv3) + bn_s(conv_s(x)) -> relu  (projection shortcut), f32 epilogue.
    C = y3_ref.shape[-1]
    y = (y3_ref[...].astype(jnp.float32) * a3_ref[...].reshape(1, 1, 1, C)
         + c3_ref[...].reshape(1, 1, 1, C))
    s = (ysc_ref[...].astype(jnp.float32) * asc_ref[...].reshape(1, 1, 1, C)
         + csc_ref[...].reshape(1, 1, 1, C))
    o_ref[...] = jnp.maximum(y + s, 0.0).astype(o_ref.dtype)


def _final_id_kernel(y3_ref, a3_ref, c3_ref, x_ref, o_ref):
    # bn3(conv3) + x (original f32 activation) -> relu  (identity shortcut).
    C = y3_ref.shape[-1]
    y = (y3_ref[...].astype(jnp.float32) * a3_ref[...].reshape(1, 1, 1, C)
         + c3_ref[...].reshape(1, 1, 1, C))
    o_ref[...] = jnp.maximum(y + x_ref[...].astype(jnp.float32),
                             0.0).astype(o_ref.dtype)


# ------------------------------ pallas_call glue -----------------------------

def _stage1_call(xs_bf, w1p, wsp):
    N, H, W, Cin_p = xs_bf.shape
    Cm_p = w1p.shape[1]
    proj = wsp is not None
    C4_p = wsp.shape[1] if proj else 0
    per_row = W * (Cin_p * 4 + (Cm_p + C4_p) * 8)
    TH = _pick_h_tile(H, W, N, per_row)
    nH = H // TH
    M = N * H * W
    wbytes = (w1p.size + (wsp.size if proj else 0)) * 2
    vmem_est = TH * per_row + wbytes + (1 << 20)
    cost = pl.CostEstimate(
        flops=int(2 * M * Cin_p * (Cm_p + C4_p)), transcendentals=0,
        bytes_accessed=int(M * Cin_p * 2 + wbytes + M * (Cm_p + C4_p) * 2))
    tile = lambda c: pl.BlockSpec((1, TH, W, c), lambda n, h: (n, h, 0, 0))

    if proj:
        return pl.pallas_call(
            _conv1_proj_kernel,
            out_shape=(jax.ShapeDtypeStruct((N, H, W, Cm_p), jnp.bfloat16),
                       jax.ShapeDtypeStruct((N, H, W, C4_p), jnp.bfloat16),
                       jax.ShapeDtypeStruct((N * nH, 2, Cm_p), jnp.float32),
                       jax.ShapeDtypeStruct((N * nH, 2, C4_p), jnp.float32)),
            grid=(N, nH),
            in_specs=[tile(Cin_p), _const_spec((Cin_p, Cm_p)),
                      _const_spec((Cin_p, C4_p))],
            out_specs=(tile(Cm_p), tile(C4_p),
                       _stats_spec(Cm_p, nH), _stats_spec(C4_p, nH)),
            compiler_params=_mosaic_params(vmem_est),
            cost_estimate=cost,
        )(xs_bf, w1p, wsp)
    return pl.pallas_call(
        _conv1_id_kernel,
        out_shape=(jax.ShapeDtypeStruct((N, H, W, Cm_p), jnp.bfloat16),
                   jax.ShapeDtypeStruct((N * nH, 2, Cm_p), jnp.float32)),
        grid=(N, nH),
        in_specs=[tile(Cin_p), _const_spec((Cin_p, Cm_p))],
        out_specs=(tile(Cm_p), _stats_spec(Cm_p, nH)),
        compiler_params=_mosaic_params(vmem_est),
        cost_estimate=cost,
    )(xs_bf, w1p)


def _conv2_call(y1, a1, c1, w2mat):
    N, H, W, C = y1.shape
    per_row = W * C * 42                     # im2col + act temps + f32 result + out
    TH = _pick_h_tile(H, W, N, per_row)
    nH = H // TH
    M = N * H * W
    vmem_est = 2 * H * W * C * 2 + w2mat.size * 2 + TH * per_row + (1 << 20)
    cost = pl.CostEstimate(flops=int(2 * M * 9 * C * C), transcendentals=0,
                           bytes_accessed=int(M * C * 4 + w2mat.size * 2))
    return pl.pallas_call(
        _conv2_kernel,
        out_shape=(jax.ShapeDtypeStruct((N, H, W, C), jnp.bfloat16),
                   jax.ShapeDtypeStruct((N * nH, 2, C), jnp.float32)),
        grid=(N, nH),
        # y1's block index is constant along h -> single DMA per image.
        in_specs=[pl.BlockSpec((1, H, W, C), lambda n, h: (n, 0, 0, 0)),
                  _const_spec((1, C)), _const_spec((1, C)),
                  _const_spec((9 * C, C))],
        out_specs=(pl.BlockSpec((1, TH, W, C), lambda n, h: (n, h, 0, 0)),
                   _stats_spec(C, nH)),
        compiler_params=_mosaic_params(vmem_est),
        cost_estimate=cost,
    )(y1, a1, c1, w2mat)


def _conv3_call(y2, a2, c2, w3p):
    N, H, W, Cm_p = y2.shape
    C4_p = w3p.shape[1]
    per_row = W * (Cm_p * 10 + C4_p * 8)
    TH = _pick_h_tile(H, W, N, per_row)
    nH = H // TH
    M = N * H * W
    vmem_est = TH * per_row + w3p.size * 2 + (1 << 20)
    cost = pl.CostEstimate(
        flops=int(2 * M * Cm_p * C4_p), transcendentals=0,
        bytes_accessed=int(M * (Cm_p + C4_p) * 2 + w3p.size * 2))
    return pl.pallas_call(
        _conv3_kernel,
        out_shape=(jax.ShapeDtypeStruct((N, H, W, C4_p), jnp.bfloat16),
                   jax.ShapeDtypeStruct((N * nH, 2, C4_p), jnp.float32)),
        grid=(N, nH),
        in_specs=[pl.BlockSpec((1, TH, W, Cm_p), lambda n, h: (n, h, 0, 0)),
                  _const_spec((1, Cm_p)), _const_spec((1, Cm_p)),
                  _const_spec((Cm_p, C4_p))],
        out_specs=(pl.BlockSpec((1, TH, W, C4_p), lambda n, h: (n, h, 0, 0)),
                   _stats_spec(C4_p, nH)),
        compiler_params=_mosaic_params(vmem_est),
        cost_estimate=cost,
    )(y2, a2, c2, w3p)


def _final_proj_call(y3, a3, c3, ysc, asc, csc):
    N, H, W, C4_p = y3.shape
    per_row = W * C4_p * 24
    TH = _pick_h_tile(H, W, N, per_row)
    nH = H // TH
    M = N * H * W
    cost = pl.CostEstimate(flops=int(6 * M * C4_p), transcendentals=0,
                           bytes_accessed=int(M * C4_p * 8))
    tile = lambda c: pl.BlockSpec((1, TH, W, c), lambda n, h: (n, h, 0, 0))
    return pl.pallas_call(
        _final_proj_kernel,
        out_shape=jax.ShapeDtypeStruct((N, H, W, C4_p), jnp.float32),
        grid=(N, nH),
        in_specs=[tile(C4_p), _const_spec((1, C4_p)), _const_spec((1, C4_p)),
                  tile(C4_p), _const_spec((1, C4_p)), _const_spec((1, C4_p))],
        out_specs=tile(C4_p),
        compiler_params=_mosaic_params(TH * per_row + (1 << 20)),
        cost_estimate=cost,
    )(y3, a3, c3, ysc, asc, csc)


def _final_id_call(y3, a3, c3, x_sc):
    N, H, W, C4_p = y3.shape
    per_row = W * C4_p * 28
    TH = _pick_h_tile(H, W, N, per_row)
    nH = H // TH
    M = N * H * W
    cost = pl.CostEstimate(flops=int(4 * M * C4_p), transcendentals=0,
                           bytes_accessed=int(M * C4_p * 10))
    tile = lambda c, dt=None: pl.BlockSpec((1, TH, W, c), lambda n, h: (n, h, 0, 0))
    return pl.pallas_call(
        _final_id_kernel,
        out_shape=jax.ShapeDtypeStruct((N, H, W, C4_p), jnp.float32),
        grid=(N, nH),
        in_specs=[tile(C4_p), _const_spec((1, C4_p)), _const_spec((1, C4_p)),
                  tile(C4_p)],
        out_specs=tile(C4_p),
        compiler_params=_mosaic_params(TH * per_row + (1 << 20)),
        cost_estimate=cost,
    )(y3, a3, c3, x_sc)


# ------------------------- BN fold (tiny XLA reduce) -------------------------

def _bn_affine(stats, count, gamma_p, beta_p):
    # Reduce per-tile partial sums; fold training-mode BN into one per-column
    # scale+shift:  bn(y) = y*a + c,  a = gamma*rsqrt(var+eps), c = beta - mean*a.
    s = jnp.sum(stats[:, 0, :], axis=0)
    q = jnp.sum(stats[:, 1, :], axis=0)
    mean = s / count
    var = jnp.maximum(q / count - mean * mean, 0.0)   # guard E[x^2]-E[x]^2 cancel
    a = gamma_p * lax.rsqrt(var + EPS)
    c = beta_p - mean * a
    return (a.reshape(1, -1).astype(jnp.float32),
            c.reshape(1, -1).astype(jnp.float32))


# --------------------------------- forward ----------------------------------

def res_bottleneck_forward(x_nchw, params, stride):
    """Equivalent of ResBottleNeck.forward (training-mode BN). NCHW in/out."""
    Cin = x_nchw.shape[1]
    Cmid = params["w1"].shape[1]
    C4 = params["w3"].shape[1]
    has_proj = (stride != 1) or (Cin != C4)

    Cin_p = _round_up(Cin, LANE)
    Cm_p = _round_up(Cmid, LANE)
    C4_p = _round_up(C4, LANE)

    # TODO(synk): the NCHW<->NHWC transposes at the boundaries stay in XLA;
    # transpose + stride subsample + channel pad + bf16 cast fuse into one pass.
    x_nhwc = jnp.transpose(x_nchw, (0, 2, 3, 1))
    xs = x_nhwc[:, ::stride, ::stride, :]
    xs_bf = _pad_last(xs, Cin_p).astype(jnp.bfloat16)
    N, H, W, _ = xs.shape
    M = N * H * W

    # Lane-padded bf16 weights.  Conv biases are omitted: every conv feeds a
    # training-mode BatchNorm whose mean subtraction cancels them exactly.
    w1p = jnp.pad(params["w1"], ((0, Cin_p - Cin), (0, Cm_p - Cmid))
                  ).astype(jnp.bfloat16)
    w2p = jnp.pad(params["w2"], ((0, 0), (0, Cm_p - Cmid), (0, Cm_p - Cmid))
                  ).reshape(9 * Cm_p, Cm_p).astype(jnp.bfloat16)
    w3p = jnp.pad(params["w3"], ((0, Cm_p - Cmid), (0, C4_p - C4))
                  ).astype(jnp.bfloat16)

    # Stage 1: conv1 (+ projection shortcut conv sharing the x tile) + BN partials.
    if has_proj:
        wsp = jnp.pad(params["ws"], ((0, Cin_p - Cin), (0, C4_p - C4))
                      ).astype(jnp.bfloat16)
        y1, ysc, st1, stsc = _stage1_call(xs_bf, w1p, wsp)
        asc, csc = _bn_affine(stsc, M, _pad_vec(params["gs"], C4_p),
                              _pad_vec(params["bes"], C4_p))
    else:
        y1, st1 = _stage1_call(xs_bf, w1p, None)
    a1, c1 = _bn_affine(st1, M, _pad_vec(params["g1"], Cm_p),
                        _pad_vec(params["be1"], Cm_p))

    # Stage 2: bn1+relu fused prologue, 3x3 conv via in-VMEM im2col, K=9*Cmid.
    y2, st2 = _conv2_call(y1, a1, c1, w2p)
    a2, c2 = _bn_affine(st2, M, _pad_vec(params["g2"], Cm_p),
                        _pad_vec(params["be2"], Cm_p))

    # Stage 3: bn2+relu fused prologue, conv3 (1x1).
    y3, st3 = _conv3_call(y2, a2, c2, w3p)
    a3, c3 = _bn_affine(st3, M, _pad_vec(params["g3"], C4_p),
                        _pad_vec(params["be3"], C4_p))

    # Stage 4: bn3 + shortcut (+bn) + residual add + relu.
    if has_proj:
        out4 = _final_proj_call(y3, a3, c3, ysc, asc, csc)
    else:
        out4 = _final_id_call(y3, a3, c3, _pad_last(xs, C4_p))  # f32 shortcut

    return jnp.transpose(out4[:, :, :, :C4], (0, 3, 1, 2))      # back to NCHW


# --------------------------- deterministic params ----------------------------

def init_params(key, in_channels, out_channels, stride):
    out4 = out_channels * 4
    ks = jax.random.split(key, 12)

    def nrm(k, shape, scale=0.1):
        return scale * jax.random.normal(k, shape, dtype=jnp.float32)

    p = {
        "w1": nrm(ks[0], (in_channels, out_channels)),              # (Cin, Cmid)
        "g1": 1.0 + nrm(ks[1], (out_channels,), 0.05),
        "be1": nrm(ks[2], (out_channels,), 0.05),
        "w2": nrm(ks[3], (9, out_channels, out_channels)),          # (kh*kw, Cin, Cout)
        "g2": 1.0 + nrm(ks[4], (out_channels,), 0.05),
        "be2": nrm(ks[5], (out_channels,), 0.05),
        "w3": nrm(ks[6], (out_channels, out4)),                     # (Cmid, 4*Cout)
        "g3": 1.0 + nrm(ks[7], (out4,), 0.05),
        "be3": nrm(ks[8], (out4,), 0.05),
    }
    if stride != 1 or in_channels != out4:
        p["ws"] = nrm(ks[9], (in_channels, out4))                   # (Cin, 4*Cout)
        p["gs"] = 1.0 + nrm(ks[10], (out4,), 0.05)
        p["bes"] = nrm(ks[11], (out4,), 0.05)
    return p


# ------------------------------ pure-JAX reference ---------------------------

def reference_forward(x_nchw, params, stride):
    x = jnp.transpose(x_nchw, (0, 2, 3, 1)).astype(jnp.float32)
    Cmid = params["w1"].shape[1]

    def bn(y, g, b):
        m = jnp.mean(y, axis=(0, 1, 2), keepdims=True)
        v = jnp.mean(jnp.square(y - m), axis=(0, 1, 2), keepdims=True)
        return (y - m) * lax.rsqrt(v + EPS) * g + b

    xs = x[:, ::stride, ::stride, :]
    y1 = jnp.einsum("nhwc,cd->nhwd", xs, params["w1"], precision="highest")
    a1 = jax.nn.relu(bn(y1, params["g1"], params["be1"]))
    w2 = params["w2"].reshape(3, 3, Cmid, Cmid)
    y2 = lax.conv_general_dilated(a1, w2, (1, 1), "SAME",
                                  dimension_numbers=("NHWC", "HWIO", "NHWC"),
                                  precision="highest")
    a2 = jax.nn.relu(bn(y2, params["g2"], params["be2"]))
    y3 = bn(jnp.einsum("nhwc,cd->nhwd", a2, params["w3"], precision="highest"),
            params["g3"], params["be3"])
    if "ws" in params:
        sc = bn(jnp.einsum("nhwc,cd->nhwd", xs, params["ws"], precision="highest"),
                params["gs"], params["bes"])
    else:
        sc = xs
    return jnp.transpose(jax.nn.relu(y3 + sc), (0, 3, 1, 2))


# ----------------------------------- main ------------------------------------

if __name__ == "__main__":
    key = jax.random.PRNGKey(0)
    k_x, k_p = jax.random.split(key)

    in_channels, out_channels, stride = 4, 4, 2
    x = jax.random.normal(k_x, (2, in_channels, 16, 16), dtype=jnp.float32)  # NCHW
    params = init_params(k_p, in_channels, out_channels, stride)

    def _run():
        fwd = jax.jit(functools.partial(res_bottleneck_forward, stride=stride))
        return jax.block_until_ready(fwd(x, params))

    try:
        out = _run()
    except Exception:
        # Fall back if this JAX/Mosaic version rejects single-buffered weight
        # specs (pipeline_mode=pl.Buffered(1)) at lowering time.
        _SINGLE_BUFFER_WEIGHTS = False
        out = _run()

    assert out.shape == (2, out_channels * 4, 8, 8), out.shape
    assert bool(jnp.all(jnp.isfinite(out)))
    assert bool(jnp.all(out >= 0.0))  # trailing ReLU

    ref = reference_forward(x, params, stride)
    max_err = float(jnp.max(jnp.abs(out - ref)))
    assert max_err < 1e-1, f"max abs err vs f32 reference: {max_err}"

    print("KERNEL_OK")
</pallas_src>

<mosaic_0001>
module attributes {stable_mosaic.version = 11 : i64} {
  func.func @_conv1_proj_kernel(%arg0: i32, %arg1: i32, %arg2: memref<1x4x8x128xbf16, #tpu.memory_space<vmem>>, %arg3: memref<128x128xbf16, #tpu.memory_space<vmem>>, %arg4: memref<128x128xbf16, #tpu.memory_space<vmem>>, %arg5: memref<1x4x8x128xbf16, #tpu.memory_space<vmem>>, %arg6: memref<1x4x8x128xbf16, #tpu.memory_space<vmem>>, %arg7: memref<1x2x128xf32, #tpu.memory_space<vmem>>, %arg8: memref<1x2x128xf32, #tpu.memory_space<vmem>>) attributes {dimension_semantics = [#tpu.dimension_semantics<parallel>, #tpu.dimension_semantics<parallel>], iteration_bounds = array<i64: 2, 2>, scalar_prefetch = 0 : i64, scratch_operands = 0 : i64, tpu.core_type = #tpu.core_type<tc>, window_params = [{transform_indices = @transform_0, window_bounds = array<i64: 1, 4, 8, 128>}, {pipeline_mode = #tpu.pipeline_mode<synchronous>, transform_indices = @transform_1, window_bounds = array<i64: 128, 128>}, {pipeline_mode = #tpu.pipeline_mode<synchronous>, transform_indices = @transform_2, window_bounds = array<i64: 128, 128>}, {transform_indices = @transform_3, window_bounds = array<i64: 1, 4, 8, 128>}, {transform_indices = @transform_4, window_bounds = array<i64: 1, 4, 8, 128>}, {transform_indices = @transform_5, window_bounds = array<i64: 1, 2, 128>}, {transform_indices = @transform_6, window_bounds = array<i64: 1, 2, 128>}]} {
    %c0 = arith.constant 0 : index
    %c0_0 = arith.constant 0 : index
    %c0_1 = arith.constant 0 : index
    %c0_2 = arith.constant 0 : index
    %0 = vector.load %arg2[%c0, %c0_0, %c0_1, %c0_2] : memref<1x4x8x128xbf16, #tpu.memory_space<vmem>>, vector<1x4x8x128xbf16>
    %1 = vector.shape_cast %0 : vector<1x4x8x128xbf16> to vector<32x128xbf16>
    %c0_3 = arith.constant 0 : index
    %c0_4 = arith.constant 0 : index
    %2 = vector.load %arg3[%c0_3, %c0_4] : memref<128x128xbf16, #tpu.memory_space<vmem>>, vector<128x128xbf16>
    %cst = arith.constant dense<0.000000e+00> : vector<32x128xf32>
    %3 = tpu.matmul %1, %2, %cst {dimension_numbers = #tpu.dot_dimension_numbers<[1], [0], [0], [1], [0, 0, 1, 1], [], []>} : vector<32x128xbf16>, vector<128x128xbf16>, vector<32x128xf32> -> vector<32x128xf32>
    %c0_5 = arith.constant 0 : index
    %c0_6 = arith.constant 0 : index
    %4 = vector.load %arg4[%c0_5, %c0_6] : memref<128x128xbf16, #tpu.memory_space<vmem>>, vector<128x128xbf16>
    %cst_7 = arith.constant dense<0.000000e+00> : vector<32x128xf32>
    %5 = tpu.matmul %1, %4, %cst_7 {dimension_numbers = #tpu.dot_dimension_numbers<[1], [0], [0], [1], [0, 0, 1, 1], [], []>} : vector<32x128xbf16>, vector<128x128xbf16>, vector<32x128xf32> -> vector<32x128xf32>
    %6 = arith.truncf %3 : vector<32x128xf32> to vector<32x128xbf16>
    %7 = vector.shape_cast %6 : vector<32x128xbf16> to vector<1x4x8x128xbf16>
    %c0_8 = arith.constant 0 : index
    %c0_9 = arith.constant 0 : index
    %c0_10 = arith.constant 0 : index
    %c0_11 = arith.constant 0 : index
    %8 = vector.load %arg5[%c0_8, %c0_9, %c0_10, %c0_11] : memref<1x4x8x128xbf16, #tpu.memory_space<vmem>>, vector<1x4x8x128xbf16>
    tpu.vector_store %arg5[%c0_8, %c0_9, %c0_10, %c0_11], %7 {strides = array<i32>} : memref<1x4x8x128xbf16, #tpu.memory_space<vmem>>, vector<1x4x8x128xbf16>,
    %9 = arith.truncf %5 : vector<32x128xf32> to vector<32x128xbf16>
    %10 = vector.shape_cast %9 : vector<32x128xbf16> to vector<1x4x8x128xbf16>
    %c0_12 = arith.constant 0 : index
    %c0_13 = arith.constant 0 : index
    %c0_14 = arith.constant 0 : index
    %c0_15 = arith.constant 0 : index
    %11 = vector.load %arg6[%c0_12, %c0_13, %c0_14, %c0_15] : memref<1x4x8x128xbf16, #tpu.memory_space<vmem>>, vector<1x4x8x128xbf16>
    tpu.vector_store %arg6[%c0_12, %c0_13, %c0_14, %c0_15], %10 {strides = array<i32>} : memref<1x4x8x128xbf16, #tpu.memory_space<vmem>>, vector<1x4x8x128xbf16>,
    %cst_16 = arith.constant dense<0.000000e+00> : vector<128xf32>
    %12 = vector.multi_reduction <add>, %3, %cst_16 [0] : vector<32x128xf32> to vector<128xf32>
    %13 = vector.shape_cast %12 : vector<128xf32> to vector<1x128xf32>
    %14 = arith.mulf %3, %3 : vector<32x128xf32>
    %cst_17 = arith.constant dense<0.000000e+00> : vector<128xf32>
    %15 = vector.multi_reduction <add>, %14, %cst_17 [0] : vector<32x128xf32> to vector<128xf32>
    %16 = vector.shape_cast %15 : vector<128xf32> to vector<1x128xf32>
    %17 = tpu.concatenate %13, %16 in 0 : vector<1x128xf32>, vector<1x128xf32> -> vector<2x128xf32>
    %18 = vector.shape_cast %17 : vector<2x128xf32> to vector<1x2x128xf32>
    %c0_18 = arith.constant 0 : index
    %c0_19 = arith.constant 0 : index
    %c0_20 = arith.constant 0 : index
    %19 = vector.load %arg7[%c0_18, %c0_19, %c0_20] : memref<1x2x128xf32, #tpu.memory_space<vmem>>, vector<1x2x128xf32>
    tpu.vector_store %arg7[%c0_18, %c0_19, %c0_20], %18 {strides = array<i32>} : memref<1x2x128xf32, #tpu.memory_space<vmem>>, vector<1x2x128xf32>,
    %cst_21 = arith.constant dense<0.000000e+00> : vector<128xf32>
    %20 = vector.multi_reduction <add>, %5, %cst_21 [0] : vector<32x128xf32> to vector<128xf32>
    %21 = vector.shape_cast %20 : vector<128xf32> to vector<1x128xf32>
    %22 = arith.mulf %5, %5 : vector<32x128xf32>
    %cst_22 = arith.constant dense<0.000000e+00> : vector<128xf32>
    %23 = vector.multi_reduction <add>, %22, %cst_22 [0] : vector<32x128xf32> to vector<128xf32>
    %24 = vector.shape_cast %23 : vector<128xf32> to vector<1x128xf32>
    %25 = tpu.concatenate %21, %24 in 0 : vector<1x128xf32>, vector<1x128xf32> -> vector<2x128xf32>
    %26 = vector.shape_cast %25 : vector<2x128xf32> to vector<1x2x128xf32>
    %c0_23 = arith.constant 0 : index
    %c0_24 = arith.constant 0 : index
    %c0_25 = arith.constant 0 : index
    %27 = vector.load %arg8[%c0_23, %c0_24, %c0_25] : memref<1x2x128xf32, #tpu.memory_space<vmem>>, vector<1x2x128xf32>
    tpu.vector_store %arg8[%c0_23, %c0_24, %c0_25], %26 {strides = array<i32>} : memref<1x2x128xf32, #tpu.memory_space<vmem>>, vector<1x2x128xf32>,
    return
  }
  func.func @transform_0(%arg0: i32, %arg1: i32) -> (i32, i32, i32, i32) {
    %c0_i32 = arith.constant 0 : i32
    %c0_i32_0 = arith.constant 0 : i32
    %c0_i32_1 = arith.constant 0 : i32
    return %arg0, %arg1, %c0_i32, %c0_i32_0 : i32, i32, i32, i32
  }
  func.func @transform_1(%arg0: i32, %arg1: i32) -> (i32, i32) {
    %c0_i32 = arith.constant 0 : i32
    %c0_i32_0 = arith.constant 0 : i32
    %c0_i32_1 = arith.constant 0 : i32
    return %c0_i32, %c0_i32_0 : i32, i32
  }
  func.func @transform_2(%arg0: i32, %arg1: i32) -> (i32, i32) {
    %c0_i32 = arith.constant 0 : i32
    %c0_i32_0 = arith.constant 0 : i32
    %c0_i32_1 = arith.constant 0 : i32
    return %c0_i32, %c0_i32_0 : i32, i32
  }
  func.func @transform_3(%arg0: i32, %arg1: i32) -> (i32, i32, i32, i32) {
    %c0_i32 = arith.constant 0 : i32
    %c0_i32_0 = arith.constant 0 : i32
    %c0_i32_1 = arith.constant 0 : i32
    return %arg0, %arg1, %c0_i32, %c0_i32_0 : i32, i32, i32, i32
  }
  func.func @transform_4(%arg0: i32, %arg1: i32) -> (i32, i32, i32, i32) {
    %c0_i32 = arith.constant 0 : i32
    %c0_i32_0 = arith.constant 0 : i32
    %c0_i32_1 = arith.constant 0 : i32
    return %arg0, %arg1, %c0_i32, %c0_i32_0 : i32, i32, i32, i32
  }
  func.func @transform_5(%arg0: i32, %arg1: i32) -> (i32, i32, i32) {
    %c2_i32 = arith.constant 2 : i32
    %0 = arith.muli %arg0, %c2_i32 : i32
    %1 = arith.addi %0, %arg1 : i32
    %c0_i32 = arith.constant 0 : i32
    %c0_i32_0 = arith.constant 0 : i32
    %c0_i32_1 = arith.constant 0 : i32
    return %1, %c0_i32, %c0_i32_0 : i32, i32, i32
  }
  func.func @transform_6(%arg0: i32, %arg1: i32) -> (i32, i32, i32) {
    %c2_i32 = arith.constant 2 : i32
    %0 = arith.muli %arg0, %c2_i32 : i32
    %1 = arith.addi %0, %arg1 : i32
    %c0_i32 = arith.constant 0 : i32
    %c0_i32_0 = arith.constant 0 : i32
    %c0_i32_1 = arith.constant 0 : i32
    return %1, %c0_i32, %c0_i32_0 : i32, i32, i32
  }
}

module attributes {stable_mosaic.version = 11 : i64} {
  func.func @_conv2_kernel(%arg0: i32, %arg1: i32, %arg2: memref<1x8x8x128xbf16, #tpu.memory_space<vmem>>, %arg3: memref<1x128xf32, #tpu.memory_space<vmem>>, %arg4: memref<1x128xf32, #tpu.memory_space<vmem>>, %arg5: memref<1152x128xbf16, #tpu.memory_space<vmem>>, %arg6: memref<1x4x8x128xbf16, #tpu.memory_space<vmem>>, %arg7: memref<1x2x128xf32, #tpu.memory_space<vmem>>) attributes {dimension_semantics = [#tpu.dimension_semantics<parallel>, #tpu.dimension_semantics<parallel>], iteration_bounds = array<i64: 2, 2>, scalar_prefetch = 0 : i64, scratch_operands = 0 : i64, tpu.core_type = #tpu.core_type<tc>, window_params = [{transform_indices = @transform_0, window_bounds = array<i64: 1, 8, 8, 128>}, {pipeline_mode = #tpu.pipeline_mode<synchronous>, transform_indices = @transform_1, window_bounds = array<i64: 1, 128>}, {pipeline_mode = #tpu.pipeline_mode<synchronous>, transform_indices = @transform_2, window_bounds = array<i64: 1, 128>}, {pipeline_mode = #tpu.pipeline_mode<synchronous>, transform_indices = @transform_3, window_bounds = array<i64: 1152, 128>}, {transform_indices = @transform_4, window_bounds = array<i64: 1, 4, 8, 128>}, {transform_indices = @transform_5, window_bounds = array<i64: 1, 2, 128>}]} {
    %c4_i32 = arith.constant 4 : i32
    %0 = arith.muli %arg1, %c4_i32 : i32
    %1 = tpu.assume_multiple %0, 4 : i32
    %c0 = arith.constant 0 : index
    %c0_0 = arith.constant 0 : index
    %2 = vector.load %arg3[%c0, %c0_0] : memref<1x128xf32, #tpu.memory_space<vmem>>, vector<1x128xf32>
    %3 = vector.shape_cast %2 : vector<1x128xf32> to vector<1x1x128xf32>
    %c0_1 = arith.constant 0 : index
    %c0_2 = arith.constant 0 : index
    %4 = vector.load %arg4[%c0_1, %c0_2] : memref<1x128xf32, #tpu.memory_space<vmem>>, vector<1x128xf32>
    %5 = vector.shape_cast %4 : vector<1x128xf32> to vector<1x1x128xf32>
    %c0_3 = arith.constant 0 : index
    %6 = arith.index_cast %1 : i32 to index
    %c0_4 = arith.constant 0 : index
    %c0_5 = arith.constant 0 : index
    %7 = vector.load %arg2[%c0_3, %6, %c0_4, %c0_5] : memref<1x8x8x128xbf16, #tpu.memory_space<vmem>>, vector<1x4x8x128xbf16>
    %8 = vector.shape_cast %7 : vector<1x4x8x128xbf16> to vector<4x8x128xbf16>
    %9 = arith.extf %8 : vector<4x8x128xbf16> to vector<4x8x128xf32>
    %10 = vector.broadcast %3 : vector<1x1x128xf32> to vector<4x8x128xf32>
    %11 = arith.mulf %9, %10 : vector<4x8x128xf32>
    %12 = vector.broadcast %5 : vector<1x1x128xf32> to vector<4x8x128xf32>
    %13 = arith.addf %11, %12 : vector<4x8x128xf32>
    %cst = arith.constant 0.000000e+00 : f32
    %14 = vector.broadcast %cst : f32 to vector<4x8x128xf32>
    %15 = arith.maximumf %13, %14 : vector<4x8x128xf32>
    %16 = arith.truncf %15 : vector<4x8x128xf32> to vector<4x8x128xbf16>
    %c1_i32 = arith.constant 1 : i32
    %17 = arith.subi %1, %c1_i32 : i32
    %c0_i32 = arith.constant 0 : i32
    %18 = arith.maxsi %17, %c0_i32 : i32
    %c0_6 = arith.constant 0 : index
    %19 = arith.index_cast %18 : i32 to index
    %c0_7 = arith.constant 0 : index
    %c0_8 = arith.constant 0 : index
    %20 = vector.load %arg2[%c0_6, %19, %c0_7, %c0_8] : memref<1x8x8x128xbf16, #tpu.memory_space<vmem>>, vector<1x1x8x128xbf16>
    %21 = vector.shape_cast %20 : vector<1x1x8x128xbf16> to vector<1x8x128xbf16>
    %22 = arith.extf %21 : vector<1x8x128xbf16> to vector<1x8x128xf32>
    %23 = vector.broadcast %3 : vector<1x1x128xf32> to vector<1x8x128xf32>
    %24 = arith.mulf %22, %23 : vector<1x8x128xf32>
    %25 = vector.broadcast %5 : vector<1x1x128xf32> to vector<1x8x128xf32>
    %26 = arith.addf %24, %25 : vector<1x8x128xf32>
    %cst_9 = arith.constant 0.000000e+00 : f32
    %27 = vector.broadcast %cst_9 : f32 to vector<1x8x128xf32>
    %28 = arith.maximumf %26, %27 : vector<1x8x128xf32>
    %29 = arith.truncf %28 : vector<1x8x128xf32> to vector<1x8x128xbf16>
    %c4_i32_10 = arith.constant 4 : i32
    %30 = arith.addi %1, %c4_i32_10 : i32
    %c7_i32 = arith.constant 7 : i32
    %31 = arith.minsi %30, %c7_i32 : i32
    %c0_11 = arith.constant 0 : index
    %32 = arith.index_cast %31 : i32 to index
    %c0_12 = arith.constant 0 : index
    %c0_13 = arith.constant 0 : index
    %33 = vector.load %arg2[%c0_11, %32, %c0_12, %c0_13] : memref<1x8x8x128xbf16, #tpu.memory_space<vmem>>, vector<1x1x8x128xbf16>
    %34 = vector.shape_cast %33 : vector<1x1x8x128xbf16> to vector<1x8x128xbf16>
    %35 = arith.extf %34 : vector<1x8x128xbf16> to vector<1x8x128xf32>
    %36 = vector.broadcast %3 : vector<1x1x128xf32> to vector<1x8x128xf32>
    %37 = arith.mulf %35, %36 : vector<1x8x128xf32>
    %38 = vector.broadcast %5 : vector<1x1x128xf32> to vector<1x8x128xf32>
    %39 = arith.addf %37, %38 : vector<1x8x128xf32>
    %cst_14 = arith.constant 0.000000e+00 : f32
    %40 = vector.broadcast %cst_14 : f32 to vector<1x8x128xf32>
    %41 = arith.maximumf %39, %40 : vector<1x8x128xf32>
    %42 = arith.truncf %41 : vector<1x8x128xf32> to vector<1x8x128xbf16>
    %c0_i32_15 = arith.constant 0 : i32
    %43 = arith.cmpi sgt, %arg1, %c0_i32_15 : i32
    %44 = arith.extui %43 : i1 to i32
    %45 = arith.sitofp %44 : i32 to f32
    %46 = arith.truncf %45 : f32 to bf16
    %47 = vector.broadcast %46 : bf16 to vector<1x8x128xbf16>
    %48 = arith.mulf %29, %47 : vector<1x8x128xbf16>
    %c1_i32_16 = arith.constant 1 : i32
    %49 = arith.cmpi slt, %arg1, %c1_i32_16 : i32
    %50 = arith.extui %49 : i1 to i32
    %51 = arith.sitofp %50 : i32 to f32
    %52 = arith.truncf %51 : f32 to bf16
    %53 = vector.broadcast %52 : bf16 to vector<1x8x128xbf16>
    %54 = arith.mulf %42, %53 : vector<1x8x128xbf16>
    %cst_17 = arith.constant 0.000000e+00 : bf16
    %55 = vector.broadcast %cst_17 : bf16 to vector<6x1x128xbf16>
    %56 = tpu.concatenate %48, %16, %54 in 0 : vector<1x8x128xbf16>, vector<4x8x128xbf16>, vector<1x8x128xbf16> -> vector<6x8x128xbf16>
    %57 = tpu.concatenate %55, %56, %55 in 1 : vector<6x1x128xbf16>, vector<6x8x128xbf16>, vector<6x1x128xbf16> -> vector<6x10x128xbf16>
    %58 = vector.extract_strided_slice %57 {offsets = [0, 0, 0], sizes = [4, 8, 128], strides = [1, 1, 1]} : vector<6x10x128xbf16> to vector<4x8x128xbf16>
    %59 = vector.shape_cast %58 : vector<4x8x128xbf16> to vector<32x128xbf16>
    %60 = vector.extract_strided_slice %57 {offsets = [0, 1, 0], sizes = [4, 8, 128], strides = [1, 1, 1]} : vector<6x10x128xbf16> to vector<4x8x128xbf16>
    %61 = vector.shape_cast %60 : vector<4x8x128xbf16> to vector<32x128xbf16>
    %62 = vector.extract_strided_slice %57 {offsets = [0, 2, 0], sizes = [4, 8, 128], strides = [1, 1, 1]} : vector<6x10x128xbf16> to vector<4x8x128xbf16>
    %63 = vector.shape_cast %62 : vector<4x8x128xbf16> to vector<32x128xbf16>
    %64 = vector.extract_strided_slice %57 {offsets = [1, 0, 0], sizes = [4, 8, 128], strides = [1, 1, 1]} : vector<6x10x128xbf16> to vector<4x8x128xbf16>
    %65 = vector.shape_cast %64 : vector<4x8x128xbf16> to vector<32x128xbf16>
    %66 = vector.extract_strided_slice %57 {offsets = [1, 1, 0], sizes = [4, 8, 128], strides = [1, 1, 1]} : vector<6x10x128xbf16> to vector<4x8x128xbf16>
    %67 = vector.shape_cast %66 : vector<4x8x128xbf16> to vector<32x128xbf16>
    %68 = vector.extract_strided_slice %57 {offsets = [1, 2, 0], sizes = [4, 8, 128], strides = [1, 1, 1]} : vector<6x10x128xbf16> to vector<4x8x128xbf16>
    %69 = vector.shape_cast %68 : vector<4x8x128xbf16> to vector<32x128xbf16>
    %70 = vector.extract_strided_slice %57 {offsets = [2, 0, 0], sizes = [4, 8, 128], strides = [1, 1, 1]} : vector<6x10x128xbf16> to vector<4x8x128xbf16>
    %71 = vector.shape_cast %70 : vector<4x8x128xbf16> to vector<32x128xbf16>
    %72 = vector.extract_strided_slice %57 {offsets = [2, 1, 0], sizes = [4, 8, 128], strides = [1, 1, 1]} : vector<6x10x128xbf16> to vector<4x8x128xbf16>
    %73 = vector.shape_cast %72 : vector<4x8x128xbf16> to vector<32x128xbf16>
    %74 = vector.extract_strided_slice %57 {offsets = [2, 2, 0], sizes = [4, 8, 128], strides = [1, 1, 1]} : vector<6x10x128xbf16> to vector<4x8x128xbf16>
    %75 = vector.shape_cast %74 : vector<4x8x128xbf16> to vector<32x128xbf16>
    %76 = tpu.concatenate %59, %61, %63, %65, %67, %69, %71, %73, %75 in 1 : vector<32x128xbf16>, vector<32x128xbf16>, vector<32x128xbf16>, vector<32x128xbf16>, vector<32x128xbf16>, vector<32x128xbf16>, vector<32x128xbf16>, vector<32x128xbf16>, vector<32x128xbf16> -> vector<32x1152xbf16>
    %c0_18 = arith.constant 0 : index
    %c0_19 = arith.constant 0 : index
    %77 = vector.load %arg5[%c0_18, %c0_19] : memref<1152x128xbf16, #tpu.memory_space<vmem>>, vector<1152x128xbf16>
    %cst_20 = arith.constant dense<0.000000e+00> : vector<32x128xf32>
    %78 = tpu.matmul %76, %77, %cst_20 {dimension_numbers = #tpu.dot_dimension_numbers<[1], [0], [0], [1], [0, 0, 1, 1], [], []>} : vector<32x1152xbf16>, vector<1152x128xbf16>, vector<32x128xf32> -> vector<32x128xf32>
    %79 = arith.truncf %78 : vector<32x128xf32> to vector<32x128xbf16>
    %80 = vector.shape_cast %79 : vector<32x128xbf16> to vector<1x4x8x128xbf16>
    %c0_21 = arith.constant 0 : index
    %c0_22 = arith.constant 0 : index
    %c0_23 = arith.constant 0 : index
    %c0_24 = arith.constant 0 : index
    %81 = vector.load %arg6[%c0_21, %c0_22, %c0_23, %c0_24] : memref<1x4x8x128xbf16, #tpu.memory_space<vmem>>, vector<1x4x8x128xbf16>
    tpu.vector_store %arg6[%c0_21, %c0_22, %c0_23, %c0_24], %80 {strides = array<i32>} : memref<1x4x8x128xbf16, #tpu.memory_space<vmem>>, vector<1x4x8x128xbf16>,
    %cst_25 = arith.constant dense<0.000000e+00> : vector<128xf32>
    %82 = vector.multi_reduction <add>, %78, %cst_25 [0] : vector<32x128xf32> to vector<128xf32>
    %83 = vector.shape_cast %82 : vector<128xf32> to vector<1x128xf32>
    %84 = arith.mulf %78, %78 : vector<32x128xf32>
    %cst_26 = arith.constant dense<0.000000e+00> : vector<128xf32>
    %85 = vector.multi_reduction <add>, %84, %cst_26 [0] : vector<32x128xf32> to vector<128xf32>
    %86 = vector.shape_cast %85 : vector<128xf32> to vector<1x128xf32>
    %87 = tpu.concatenate %83, %86 in 0 : vector<1x128xf32>, vector<1x128xf32> -> vector<2x128xf32>
    %88 = vector.shape_cast %87 : vector<2x128xf32> to vector<1x2x128xf32>
    %c0_27 = arith.constant 0 : index
    %c0_28 = arith.constant 0 : index
    %c0_29 = arith.constant 0 : index
    %89 = vector.load %arg7[%c0_27, %c0_28, %c0_29] : memref<1x2x128xf32, #tpu.memory_space<vmem>>, vector<1x2x128xf32>
    tpu.vector_store %arg7[%c0_27, %c0_28, %c0_29], %88 {strides = array<i32>} : memref<1x2x128xf32, #tpu.memory_space<vmem>>, vector<1x2x128xf32>,
    return
  }
  func.func @transform_0(%arg0: i32, %arg1: i32) -> (i32, i32, i32, i32) {
    %c0_i32 = arith.constant 0 : i32
    %c0_i32_0 = arith.constant 0 : i32
    %c0_i32_1 = arith.constant 0 : i32
    %c0_i32_2 = arith.constant 0 : i32
    return %arg0, %c0_i32, %c0_i32_0, %c0_i32_1 : i32, i32, i32, i32
  }
  func.func @transform_1(%arg0: i32, %arg1: i32) -> (i32, i32) {
    %c0_i32 = arith.constant 0 : i32
    %c0_i32_0 = arith.constant 0 : i32
    %c0_i32_1 = arith.constant 0 : i32
    return %c0_i32, %c0_i32_0 : i32, i32
  }
  func.func @transform_2(%arg0: i32, %arg1: i32) -> (i32, i32) {
    %c0_i32 = arith.constant 0 : i32
    %c0_i32_0 = arith.constant 0 : i32
    %c0_i32_1 = arith.constant 0 : i32
    return %c0_i32, %c0_i32_0 : i32, i32
  }
  func.func @transform_3(%arg0: i32, %arg1: i32) -> (i32, i32) {
    %c0_i32 = arith.constant 0 : i32
    %c0_i32_0 = arith.constant 0 : i32
    %c0_i32_1 = arith.constant 0 : i32
    return %c0_i32, %c0_i32_0 : i32, i32
  }
  func.func @transform_4(%arg0: i32, %arg1: i32) -> (i32, i32, i32, i32) {
    %c0_i32 = arith.constant 0 : i32
    %c0_i32_0 = arith.constant 0 : i32
    %c0_i32_1 = arith.constant 0 : i32
    return %arg0, %arg1, %c0_i32, %c0_i32_0 : i32, i32, i32, i32
  }
  func.func @transform_5(%arg0: i32, %arg1: i32) -> (i32, i32, i32) {
    %c2_i32 = arith.constant 2 : i32
    %0 = arith.muli %arg0, %c2_i32 : i32
    %1 = arith.addi %0, %arg1 : i32
    %c0_i32 = arith.constant 0 : i32
    %c0_i32_0 = arith.constant 0 : i32
    %c0_i32_1 = arith.constant 0 : i32
    return %1, %c0_i32, %c0_i32_0 : i32, i32, i32
  }
}

module attributes {stable_mosaic.version = 11 : i64} {
  func.func @_conv3_kernel(%arg0: i32, %arg1: i32, %arg2: memref<1x4x8x128xbf16, #tpu.memory_space<vmem>>, %arg3: memref<1x128xf32, #tpu.memory_space<vmem>>, %arg4: memref<1x128xf32, #tpu.memory_space<vmem>>, %arg5: memref<128x128xbf16, #tpu.memory_space<vmem>>, %arg6: memref<1x4x8x128xbf16, #tpu.memory_space<vmem>>, %arg7: memref<1x2x128xf32, #tpu.memory_space<vmem>>) attributes {dimension_semantics = [#tpu.dimension_semantics<parallel>, #tpu.dimension_semantics<parallel>], iteration_bounds = array<i64: 2, 2>, scalar_prefetch = 0 : i64, scratch_operands = 0 : i64, tpu.core_type = #tpu.core_type<tc>, window_params = [{transform_indices = @transform_0, window_bounds = array<i64: 1, 4, 8, 128>}, {pipeline_mode = #tpu.pipeline_mode<synchronous>, transform_indices = @transform_1, window_bounds = array<i64: 1, 128>}, {pipeline_mode = #tpu.pipeline_mode<synchronous>, transform_indices = @transform_2, window_bounds = array<i64: 1, 128>}, {pipeline_mode = #tpu.pipeline_mode<synchronous>, transform_indices = @transform_3, window_bounds = array<i64: 128, 128>}, {transform_indices = @transform_4, window_bounds = array<i64: 1, 4, 8, 128>}, {transform_indices = @transform_5, window_bounds = array<i64: 1, 2, 128>}]} {
    %c0 = arith.constant 0 : index
    %c0_0 = arith.constant 0 : index
    %0 = vector.load %arg3[%c0, %c0_0] : memref<1x128xf32, #tpu.memory_space<vmem>>, vector<1x128xf32>
    %1 = vector.shape_cast %0 : vector<1x128xf32> to vector<1x1x1x128xf32>
    %c0_1 = arith.constant 0 : index
    %c0_2 = arith.constant 0 : index
    %2 = vector.load %arg4[%c0_1, %c0_2] : memref<1x128xf32, #tpu.memory_space<vmem>>, vector<1x128xf32>
    %3 = vector.shape_cast %2 : vector<1x128xf32> to vector<1x1x1x128xf32>
    %c0_3 = arith.constant 0 : index
    %c0_4 = arith.constant 0 : index
    %c0_5 = arith.constant 0 : index
    %c0_6 = arith.constant 0 : index
    %4 = vector.load %arg2[%c0_3, %c0_4, %c0_5, %c0_6] : memref<1x4x8x128xbf16, #tpu.memory_space<vmem>>, vector<1x4x8x128xbf16>
    %5 = arith.extf %4 : vector<1x4x8x128xbf16> to vector<1x4x8x128xf32>
    %6 = vector.broadcast %1 : vector<1x1x1x128xf32> to vector<1x4x8x128xf32>
    %7 = arith.mulf %5, %6 : vector<1x4x8x128xf32>
    %8 = vector.broadcast %3 : vector<1x1x1x128xf32> to vector<1x4x8x128xf32>
    %9 = arith.addf %7, %8 : vector<1x4x8x128xf32>
    %cst = arith.constant 0.000000e+00 : f32
    %10 = vector.broadcast %cst : f32 to vector<1x4x8x128xf32>
    %11 = arith.maximumf %9, %10 : vector<1x4x8x128xf32>
    %12 = arith.truncf %11 : vector<1x4x8x128xf32> to vector<1x4x8x128xbf16>
    %13 = vector.shape_cast %12 : vector<1x4x8x128xbf16> to vector<32x128xbf16>
    %c0_7 = arith.constant 0 : index
    %c0_8 = arith.constant 0 : index
    %14 = vector.load %arg5[%c0_7, %c0_8] : memref<128x128xbf16, #tpu.memory_space<vmem>>, vector<128x128xbf16>
    %cst_9 = arith.constant dense<0.000000e+00> : vector<32x128xf32>
    %15 = tpu.matmul %13, %14, %cst_9 {dimension_numbers = #tpu.dot_dimension_numbers<[1], [0], [0], [1], [0, 0, 1, 1], [], []>} : vector<32x128xbf16>, vector<128x128xbf16>, vector<32x128xf32> -> vector<32x128xf32>
    %16 = arith.truncf %15 : vector<32x128xf32> to vector<32x128xbf16>
    %17 = vector.shape_cast %16 : vector<32x128xbf16> to vector<1x4x8x128xbf16>
    %c0_10 = arith.constant 0 : index
    %c0_11 = arith.constant 0 : index
    %c0_12 = arith.constant 0 : index
    %c0_13 = arith.constant 0 : index
    %18 = vector.load %arg6[%c0_10, %c0_11, %c0_12, %c0_13] : memref<1x4x8x128xbf16, #tpu.memory_space<vmem>>, vector<1x4x8x128xbf16>
    tpu.vector_store %arg6[%c0_10, %c0_11, %c0_12, %c0_13], %17 {strides = array<i32>} : memref<1x4x8x128xbf16, #tpu.memory_space<vmem>>, vector<1x4x8x128xbf16>,
    %cst_14 = arith.constant dense<0.000000e+00> : vector<128xf32>
    %19 = vector.multi_reduction <add>, %15, %cst_14 [0] : vector<32x128xf32> to vector<128xf32>
    %20 = vector.shape_cast %19 : vector<128xf32> to vector<1x128xf32>
    %21 = arith.mulf %15, %15 : vector<32x128xf32>
    %cst_15 = arith.constant dense<0.000000e+00> : vector<128xf32>
    %22 = vector.multi_reduction <add>, %21, %cst_15 [0] : vector<32x128xf32> to vector<128xf32>
    %23 = vector.shape_cast %22 : vector<128xf32> to vector<1x128xf32>
    %24 = tpu.concatenate %20, %23 in 0 : vector<1x128xf32>, vector<1x128xf32> -> vector<2x128xf32>
    %25 = vector.shape_cast %24 : vector<2x128xf32> to vector<1x2x128xf32>
    %c0_16 = arith.constant 0 : index
    %c0_17 = arith.constant 0 : index
    %c0_18 = arith.constant 0 : index
    %26 = vector.load %arg7[%c0_16, %c0_17, %c0_18] : memref<1x2x128xf32, #tpu.memory_space<vmem>>, vector<1x2x128xf32>
    tpu.vector_store %arg7[%c0_16, %c0_17, %c0_18], %25 {strides = array<i32>} : memref<1x2x128xf32, #tpu.memory_space<vmem>>, vector<1x2x128xf32>,
    return
  }
  func.func @transform_0(%arg0: i32, %arg1: i32) -> (i32, i32, i32, i32) {
    %c0_i32 = arith.constant 0 : i32
    %c0_i32_0 = arith.constant 0 : i32
    %c0_i32_1 = arith.constant 0 : i32
    return %arg0, %arg1, %c0_i32, %c0_i32_0 : i32, i32, i32, i32
  }
  func.func @transform_1(%arg0: i32, %arg1: i32) -> (i32, i32) {
    %c0_i32 = arith.constant 0 : i32
    %c0_i32_0 = arith.constant 0 : i32
    %c0_i32_1 = arith.constant 0 : i32
    return %c0_i32, %c0_i32_0 : i32, i32
  }
  func.func @transform_2(%arg0: i32, %arg1: i32) -> (i32, i32) {
    %c0_i32 = arith.constant 0 : i32
    %c0_i32_0 = arith.constant 0 : i32
    %c0_i32_1 = arith.constant 0 : i32
    return %c0_i32, %c0_i32_0 : i32, i32
  }
  func.func @transform_3(%arg0: i32, %arg1: i32) -> (i32, i32) {
    %c0_i32 = arith.constant 0 : i32
    %c0_i32_0 = arith.constant 0 : i32
    %c0_i32_1 = arith.constant 0 : i32
    return %c0_i32, %c0_i32_0 : i32, i32
  }
  func.func @transform_4(%arg0: i32, %arg1: i32) -> (i32, i32, i32, i32) {
    %c0_i32 = arith.constant 0 : i32
    %c0_i32_0 = arith.constant 0 : i32
    %c0_i32_1 = arith.constant 0 : i32
    return %arg0, %arg1, %c0_i32, %c0_i32_0 : i32, i32, i32, i32
  }
  func.func @transform_5(%arg0: i32, %arg1: i32) -> (i32, i32, i32) {
    %c2_i32 = arith.constant 2 : i32
    %0 = arith.muli %arg0, %c2_i32 : i32
    %1 = arith.addi %0, %arg1 : i32
    %c0_i32 = arith.constant 0 : i32
    %c0_i32_0 = arith.constant 0 : i32
    %c0_i32_1 = arith.constant 0 : i32
    return %1, %c0_i32, %c0_i32_0 : i32, i32, i32
  }
}

module attributes {stable_mosaic.version = 11 : i64} {
  func.func @_final_proj_kernel(%arg0: i32, %arg1: i32, %arg2: memref<1x4x8x128xbf16, #tpu.memory_space<vmem>>, %arg3: memref<1x128xf32, #tpu.memory_space<vmem>>, %arg4: memref<1x128xf32, #tpu.memory_space<vmem>>, %arg5: memref<1x4x8x128xbf16, #tpu.memory_space<vmem>>, %arg6: memref<1x128xf32, #tpu.memory_space<vmem>>, %arg7: memref<1x128xf32, #tpu.memory_space<vmem>>, %arg8: memref<1x4x8x128xf32, #tpu.memory_space<vmem>>) attributes {dimension_semantics = [#tpu.dimension_semantics<parallel>, #tpu.dimension_semantics<parallel>], iteration_bounds = array<i64: 2, 2>, scalar_prefetch = 0 : i64, scratch_operands = 0 : i64, tpu.core_type = #tpu.core_type<tc>, window_params = [{transform_indices = @transform_0, window_bounds = array<i64: 1, 4, 8, 128>}, {pipeline_mode = #tpu.pipeline_mode<synchronous>, transform_indices = @transform_1, window_bounds = array<i64: 1, 128>}, {pipeline_mode = #tpu.pipeline_mode<synchronous>, transform_indices = @transform_2, window_bounds = array<i64: 1, 128>}, {transform_indices = @transform_3, window_bounds = array<i64: 1, 4, 8, 128>}, {pipeline_mode = #tpu.pipeline_mode<synchronous>, transform_indices = @transform_4, window_bounds = array<i64: 1, 128>}, {pipeline_mode = #tpu.pipeline_mode<synchronous>, transform_indices = @transform_5, window_bounds = array<i64: 1, 128>}, {transform_indices = @transform_6, window_bounds = array<i64: 1, 4, 8, 128>}]} {
    %c0 = arith.constant 0 : index
    %c0_0 = arith.constant 0 : index
    %c0_1 = arith.constant 0 : index
    %c0_2 = arith.constant 0 : index
    %0 = vector.load %arg2[%c0, %c0_0, %c0_1, %c0_2] : memref<1x4x8x128xbf16, #tpu.memory_space<vmem>>, vector<1x4x8x128xbf16>
    %1 = arith.extf %0 : vector<1x4x8x128xbf16> to vector<1x4x8x128xf32>
    %c0_3 = arith.constant 0 : index
    %c0_4 = arith.constant 0 : index
    %2 = vector.load %arg3[%c0_3, %c0_4] : memref<1x128xf32, #tpu.memory_space<vmem>>, vector<1x128xf32>
    %3 = vector.shape_cast %2 : vector<1x128xf32> to vector<1x1x1x128xf32>
    %4 = vector.broadcast %3 : vector<1x1x1x128xf32> to vector<1x4x8x128xf32>
    %5 = arith.mulf %1, %4 : vector<1x4x8x128xf32>
    %c0_5 = arith.constant 0 : index
    %c0_6 = arith.constant 0 : index
    %6 = vector.load %arg4[%c0_5, %c0_6] : memref<1x128xf32, #tpu.memory_space<vmem>>, vector<1x128xf32>
    %7 = vector.shape_cast %6 : vector<1x128xf32> to vector<1x1x1x128xf32>
    %8 = vector.broadcast %7 : vector<1x1x1x128xf32> to vector<1x4x8x128xf32>
    %9 = arith.addf %5, %8 : vector<1x4x8x128xf32>
    %c0_7 = arith.constant 0 : index
    %c0_8 = arith.constant 0 : index
    %c0_9 = arith.constant 0 : index
    %c0_10 = arith.constant 0 : index
    %10 = vector.load %arg5[%c0_7, %c0_8, %c0_9, %c0_10] : memref<1x4x8x128xbf16, #tpu.memory_space<vmem>>, vector<1x4x8x128xbf16>
    %11 = arith.extf %10 : vector<1x4x8x128xbf16> to vector<1x4x8x128xf32>
    %c0_11 = arith.constant 0 : index
    %c0_12 = arith.constant 0 : index
    %12 = vector.load %arg6[%c0_11, %c0_12] : memref<1x128xf32, #tpu.memory_space<vmem>>, vector<1x128xf32>
    %13 = vector.shape_cast %12 : vector<1x128xf32> to vector<1x1x1x128xf32>
    %14 = vector.broadcast %13 : vector<1x1x1x128xf32> to vector<1x4x8x128xf32>
    %15 = arith.mulf %11, %14 : vector<1x4x8x128xf32>
    %c0_13 = arith.constant 0 : index
    %c0_14 = arith.constant 0 : index
    %16 = vector.load %arg7[%c0_13, %c0_14] : memref<1x128xf32, #tpu.memory_space<vmem>>, vector<1x128xf32>
    %17 = vector.shape_cast %16 : vector<1x128xf32> to vector<1x1x1x128xf32>
    %18 = vector.broadcast %17 : vector<1x1x1x128xf32> to vector<1x4x8x128xf32>
    %19 = arith.addf %15, %18 : vector<1x4x8x128xf32>
    %20 = arith.addf %9, %19 : vector<1x4x8x128xf32>
    %cst = arith.constant 0.000000e+00 : f32
    %21 = vector.broadcast %cst : f32 to vector<1x4x8x128xf32>
    %22 = arith.maximumf %20, %21 : vector<1x4x8x128xf32>
    %c0_15 = arith.constant 0 : index
    %c0_16 = arith.constant 0 : index
    %c0_17 = arith.constant 0 : index
    %c0_18 = arith.constant 0 : index
    %23 = vector.load %arg8[%c0_15, %c0_16, %c0_17, %c0_18] : memref<1x4x8x128xf32, #tpu.memory_space<vmem>>, vector<1x4x8x128xf32>
    tpu.vector_store %arg8[%c0_15, %c0_16, %c0_17, %c0_18], %22 {strides = array<i32>} : memref<1x4x8x128xf32, #tpu.memory_space<vmem>>, vector<1x4x8x128xf32>,
    return
  }
  func.func @transform_0(%arg0: i32, %arg1: i32) -> (i32, i32, i32, i32) {
    %c0_i32 = arith.constant 0 : i32
    %c0_i32_0 = arith.constant 0 : i32
    %c0_i32_1 = arith.constant 0 : i32
    return %arg0, %arg1, %c0_i32, %c0_i32_0 : i32, i32, i32, i32
  }
  func.func @transform_1(%arg0: i32, %arg1: i32) -> (i32, i32) {
    %c0_i32 = arith.constant 0 : i32
    %c0_i32_0 = arith.constant 0 : i32
    %c0_i32_1 = arith.constant 0 : i32
    return %c0_i32, %c0_i32_0 : i32, i32
  }
  func.func @transform_2(%arg0: i32, %arg1: i32) -> (i32, i32) {
    %c0_i32 = arith.constant 0 : i32
    %c0_i32_0 = arith.constant 0 : i32
    %c0_i32_1 = arith.constant 0 : i32
    return %c0_i32, %c0_i32_0 : i32, i32
  }
  func.func @transform_3(%arg0: i32, %arg1: i32) -> (i32, i32, i32, i32) {
    %c0_i32 = arith.constant 0 : i32
    %c0_i32_0 = arith.constant 0 : i32
    %c0_i32_1 = arith.constant 0 : i32
    return %arg0, %arg1, %c0_i32, %c0_i32_0 : i32, i32, i32, i32
  }
  func.func @transform_4(%arg0: i32, %arg1: i32) -> (i32, i32) {
    %c0_i32 = arith.constant 0 : i32
    %c0_i32_0 = arith.constant 0 : i32
    %c0_i32_1 = arith.constant 0 : i32
    return %c0_i32, %c0_i32_0 : i32, i32
  }
  func.func @transform_5(%arg0: i32, %arg1: i32) -> (i32, i32) {
    %c0_i32 = arith.constant 0 : i32
    %c0_i32_0 = arith.constant 0 : i32
    %c0_i32_1 = arith.constant 0 : i32
    return %c0_i32, %c0_i32_0 : i32, i32
  }
  func.func @transform_6(%arg0: i32, %arg1: i32) -> (i32, i32, i32, i32) {
    %c0_i32 = arith.constant 0 : i32
    %c0_i32_0 = arith.constant 0 : i32
    %c0_i32_1 = arith.constant 0 : i32
    return %arg0, %arg1, %c0_i32, %c0_i32_0 : i32, i32, i32, i32
  }
}

module attributes {stable_mosaic.version = 11 : i64} {
  func.func @_conv1_proj_kernel(%arg0: i32, %arg1: i32, %arg2: memref<1x4x8x128xbf16, #tpu.memory_space<vmem>>, %arg3: memref<128x128xbf16, #tpu.memory_space<vmem>>, %arg4: memref<128x128xbf16, #tpu.memory_space<vmem>>, %arg5: memref<1x4x8x128xbf16, #tpu.memory_space<vmem>>, %arg6: memref<1x4x8x128xbf16, #tpu.memory_space<vmem>>, %arg7: memref<1x2x128xf32, #tpu.memory_space<vmem>>, %arg8: memref<1x2x128xf32, #tpu.memory_space<vmem>>) attributes {dimension_semantics = [#tpu.dimension_semantics<parallel>, #tpu.dimension_semantics<parallel>], iteration_bounds = array<i64: 2, 2>, scalar_prefetch = 0 : i64, scratch_operands = 0 : i64, tpu.core_type = #tpu.core_type<tc>, window_params = [{transform_indices = @transform_0, window_bounds = array<i64: 1, 4, 8, 128>}, {pipeline_mode = #tpu.pipeline_mode<synchronous>, transform_indices = @transform_1, window_bounds = array<i64: 128, 128>}, {pipeline_mode = #tpu.pipeline_mode<synchronous>, transform_indices = @transform_2, window_bounds = array<i64: 128, 128>}, {transform_indices = @transform_3, window_bounds = array<i64: 1, 4, 8, 128>}, {transform_indices = @transform_4, window_bounds = array<i64: 1, 4, 8, 128>}, {transform_indices = @transform_5, window_bounds = array<i64: 1, 2, 128>}, {transform_indices = @transform_6, window_bounds = array<i64: 1, 2, 128>}]} {
    %c0 = arith.constant 0 : index
    %c0_0 = arith.constant 0 : index
    %c0_1 = arith.constant 0 : index
    %c0_2 = arith.constant 0 : index
    %0 = vector.load %arg2[%c0, %c0_0, %c0_1, %c0_2] : memref<1x4x8x128xbf16, #tpu.memory_space<vmem>>, vector<1x4x8x128xbf16>
    %1 = vector.shape_cast %0 : vector<1x4x8x128xbf16> to vector<32x128xbf16>
    %c0_3 = arith.constant 0 : index
    %c0_4 = arith.constant 0 : index
    %2 = vector.load %arg3[%c0_3, %c0_4] : memref<128x128xbf16, #tpu.memory_space<vmem>>, vector<128x128xbf16>
    %cst = arith.constant dense<0.000000e+00> : vector<32x128xf32>
    %3 = tpu.matmul %1, %2, %cst {dimension_numbers = #tpu.dot_dimension_numbers<[1], [0], [0], [1], [0, 0, 1, 1], [], []>} : vector<32x128xbf16>, vector<128x128xbf16>, vector<32x128xf32> -> vector<32x128xf32>
    %c0_5 = arith.constant 0 : index
    %c0_6 = arith.constant 0 : index
    %4 = vector.load %arg4[%c0_5, %c0_6] : memref<128x128xbf16, #tpu.memory_space<vmem>>, vector<128x128xbf16>
    %cst_7 = arith.constant dense<0.000000e+00> : vector<32x128xf32>
    %5 = tpu.matmul %1, %4, %cst_7 {dimension_numbers = #tpu.dot_dimension_numbers<[1], [0], [0], [1], [0, 0, 1, 1], [], []>} : vector<32x128xbf16>, vector<128x128xbf16>, vector<32x128xf32> -> vector<32x128xf32>
    %6 = arith.truncf %3 : vector<32x128xf32> to vector<32x128xbf16>
    %7 = vector.shape_cast %6 : vector<32x128xbf16> to vector<1x4x8x128xbf16>
    %c0_8 = arith.constant 0 : index
    %c0_9 = arith.constant 0 : index
    %c0_10 = arith.constant 0 : index
    %c0_11 = arith.constant 0 : index
    %8 = vector.load %arg5[%c0_8, %c0_9, %c0_10, %c0_11] : memref<1x4x8x128xbf16, #tpu.memory_space<vmem>>, vector<1x4x8x128xbf16>
    tpu.vector_store %arg5[%c0_8, %c0_9, %c0_10, %c0_11], %7 {strides = array<i32>} : memref<1x4x8x128xbf16, #tpu.memory_space<vmem>>, vector<1x4x8x128xbf16>,
    %9 = arith.truncf %5 : vector<32x128xf32> to vector<32x128xbf16>
    %10 = vector.shape_cast %9 : vector<32x128xbf16> to vector<1x4x8x128xbf16>
    %c0_12 = arith.constant 0 : index
    %c0_13 = arith.constant 0 : index
    %c0_14 = arith.constant 0 : index
    %c0_15 = arith.constant 0 : index
    %11 = vector.load %arg6[%c0_12, %c0_13, %c0_14, %c0_15] : memref<1x4x8x128xbf16, #tpu.memory_space<vmem>>, vector<1x4x8x128xbf16>
    tpu.vector_store %arg6[%c0_12, %c0_13, %c0_14, %c0_15], %10 {strides = array<i32>} : memref<1x4x8x128xbf16, #tpu.memory_space<vmem>>, vector<1x4x8x128xbf16>,
    %cst_16 = arith.constant dense<0.000000e+00> : vector<128xf32>
    %12 = vector.multi_reduction <add>, %3, %cst_16 [0] : vector<32x128xf32> to vector<128xf32>
    %13 = vector.shape_cast %12 : vector<128xf32> to vector<1x128xf32>
    %14 = arith.mulf %3, %3 : vector<32x128xf32>
    %cst_17 = arith.constant dense<0.000000e+00> : vector<128xf32>
    %15 = vector.multi_reduction <add>, %14, %cst_17 [0] : vector<32x128xf32> to vector<128xf32>
    %16 = vector.shape_cast %15 : vector<128xf32> to vector<1x128xf32>
    %17 = tpu.concatenate %13, %16 in 0 : vector<1x128xf32>, vector<1x128xf32> -> vector<2x128xf32>
    %18 = vector.shape_cast %17 : vector<2x128xf32> to vector<1x2x128xf32>
    %c0_18 = arith.constant 0 : index
    %c0_19 = arith.constant 0 : index
    %c0_20 = arith.constant 0 : index
    %19 = vector.load %arg7[%c0_18, %c0_19, %c0_20] : memref<1x2x128xf32, #tpu.memory_space<vmem>>, vector<1x2x128xf32>
    tpu.vector_store %arg7[%c0_18, %c0_19, %c0_20], %18 {strides = array<i32>} : memref<1x2x128xf32, #tpu.memory_space<vmem>>, vector<1x2x128xf32>,
    %cst_21 = arith.constant dense<0.000000e+00> : vector<128xf32>
    %20 = vector.multi_reduction <add>, %5, %cst_21 [0] : vector<32x128xf32> to vector<128xf32>
    %21 = vector.shape_cast %20 : vector<128xf32> to vector<1x128xf32>
    %22 = arith.mulf %5, %5 : vector<32x128xf32>
    %cst_22 = arith.constant dense<0.000000e+00> : vector<128xf32>
    %23 = vector.multi_reduction <add>, %22, %cst_22 [0] : vector<32x128xf32> to vector<128xf32>
    %24 = vector.shape_cast %23 : vector<128xf32> to vector<1x128xf32>
    %25 = tpu.concatenate %21, %24 in 0 : vector<1x128xf32>, vector<1x128xf32> -> vector<2x128xf32>
    %26 = vector.shape_cast %25 : vector<2x128xf32> to vector<1x2x128xf32>
    %c0_23 = arith.constant 0 : index
    %c0_24 = arith.constant 0 : index
    %c0_25 = arith.constant 0 : index
    %27 = vector.load %arg8[%c0_23, %c0_24, %c0_25] : memref<1x2x128xf32, #tpu.memory_space<vmem>>, vector<1x2x128xf32>
    tpu.vector_store %arg8[%c0_23, %c0_24, %c0_25], %26 {strides = array<i32>} : memref<1x2x128xf32, #tpu.memory_space<vmem>>, vector<1x2x128xf32>,
    return
  }
  func.func @transform_0(%arg0: i32, %arg1: i32) -> (i32, i32, i32, i32) {
    %c0_i32 = arith.constant 0 : i32
    %c0_i32_0 = arith.constant 0 : i32
    %c0_i32_1 = arith.constant 0 : i32
    return %arg0, %arg1, %c0_i32, %c0_i32_0 : i32, i32, i32, i32
  }
  func.func @transform_1(%arg0: i32, %arg1: i32) -> (i32, i32) {
    %c0_i32 = arith.constant 0 : i32
    %c0_i32_0 = arith.constant 0 : i32
    %c0_i32_1 = arith.constant 0 : i32
    return %c0_i32, %c0_i32_0 : i32, i32
  }
  func.func @transform_2(%arg0: i32, %arg1: i32) -> (i32, i32) {
    %c0_i32 = arith.constant 0 : i32
    %c0_i32_0 = arith.constant 0 : i32
    %c0_i32_1 = arith.constant 0 : i32
    return %c0_i32, %c0_i32_0 : i32, i32
  }
  func.func @transform_3(%arg0: i32, %arg1: i32) -> (i32, i32, i32, i32) {
    %c0_i32 = arith.constant 0 : i32
    %c0_i32_0 = arith.constant 0 : i32
    %c0_i32_1 = arith.constant 0 : i32
    return %arg0, %arg1, %c0_i32, %c0_i32_0 : i32, i32, i32, i32
  }
  func.func @transform_4(%arg0: i32, %arg1: i32) -> (i32, i32, i32, i32) {
    %c0_i32 = arith.constant 0 : i32
    %c0_i32_0 = arith.constant 0 : i32
    %c0_i32_1 = arith.constant 0 : i32
    return %arg0, %arg1, %c0_i32, %c0_i32_0 : i32, i32, i32, i32
  }
  func.func @transform_5(%arg0: i32, %arg1: i32) -> (i32, i32, i32) {
    %c2_i32 = arith.constant 2 : i32
    %0 = arith.muli %arg0, %c2_i32 : i32
    %1 = arith.addi %0, %arg1 : i32
    %c0_i32 = arith.constant 0 : i32
    %c0_i32_0 = arith.constant 0 : i32
    %c0_i32_1 = arith.constant 0 : i32
    return %1, %c0_i32, %c0_i32_0 : i32, i32, i32
  }
  func.func @transform_6(%arg0: i32, %arg1: i32) -> (i32, i32, i32) {
    %c2_i32 = arith.constant 2 : i32
    %0 = arith.muli %arg0, %c2_i32 : i32
    %1 = arith.addi %0, %arg1 : i32
    %c0_i32 = arith.constant 0 : i32
    %c0_i32_0 = arith.constant 0 : i32
    %c0_i32_1 = arith.constant 0 : i32
    return %1, %c0_i32, %c0_i32_0 : i32, i32, i32
  }
}

module attributes {stable_mosaic.version = 11 : i64} {
  func.func @_conv2_kernel(%arg0: i32, %arg1: i32, %arg2: memref<1x8x8x128xbf16, #tpu.memory_space<vmem>>, %arg3: memref<1x128xf32, #tpu.memory_space<vmem>>, %arg4: memref<1x128xf32, #tpu.memory_space<vmem>>, %arg5: memref<1152x128xbf16, #tpu.memory_space<vmem>>, %arg6: memref<1x4x8x128xbf16, #tpu.memory_space<vmem>>, %arg7: memref<1x2x128xf32, #tpu.memory_space<vmem>>) attributes {dimension_semantics = [#tpu.dimension_semantics<parallel>, #tpu.dimension_semantics<parallel>], iteration_bounds = array<i64: 2, 2>, scalar_prefetch = 0 : i64, scratch_operands = 0 : i64, tpu.core_type = #tpu.core_type<tc>, window_params = [{transform_indices = @transform_0, window_bounds = array<i64: 1, 8, 8, 128>}, {pipeline_mode = #tpu.pipeline_mode<synchronous>, transform_indices = @transform_1, window_bounds = array<i64: 1, 128>}, {pipeline_mode = #tpu.pipeline_mode<synchronous>, transform_indices = @transform_2, window_bounds = array<i64: 1, 128>}, {pipeline_mode = #tpu.pipeline_mode<synchronous>, transform_indices = @transform_3, window_bounds = array<i64: 1152, 128>}, {transform_indices = @transform_4, window_bounds = array<i64: 1, 4, 8, 128>}, {transform_indices = @transform_5, window_bounds = array<i64: 1, 2, 128>}]} {
    %c4_i32 = arith.constant 4 : i32
    %0 = arith.muli %arg1, %c4_i32 : i32
    %1 = tpu.assume_multiple %0, 4 : i32
    %c0 = arith.constant 0 : index
    %c0_0 = arith.constant 0 : index
    %2 = vector.load %arg3[%c0, %c0_0] : memref<1x128xf32, #tpu.memory_space<vmem>>, vector<1x128xf32>
    %3 = vector.shape_cast %2 : vector<1x128xf32> to vector<1x1x128xf32>
    %c0_1 = arith.constant 0 : index
    %c0_2 = arith.constant 0 : index
    %4 = vector.load %arg4[%c0_1, %c0_2] : memref<1x128xf32, #tpu.memory_space<vmem>>, vector<1x128xf32>
    %5 = vector.shape_cast %4 : vector<1x128xf32> to vector<1x1x128xf32>
    %c0_3 = arith.constant 0 : index
    %6 = arith.index_cast %1 : i32 to index
    %c0_4 = arith.constant 0 : index
    %c0_5 = arith.constant 0 : index
    %7 = vector.load %arg2[%c0_3, %6, %c0_4, %c0_5] : memref<1x8x8x128xbf16, #tpu.memory_space<vmem>>, vector<1x4x8x128xbf16>
    %8 = vector.shape_cast %7 : vector<1x4x8x128xbf16> to vector<4x8x128xbf16>
    %9 = arith.extf %8 : vector<4x8x128xbf16> to vector<4x8x128xf32>
    %10 = vector.broadcast %3 : vector<1x1x128xf32> to vector<4x8x128xf32>
    %11 = arith.mulf %9, %10 : vector<4x8x128xf32>
    %12 = vector.broadcast %5 : vector<1x1x128xf32> to vector<4x8x128xf32>
    %13 = arith.addf %11, %12 : vector<4x8x128xf32>
    %cst = arith.constant 0.000000e+00 : f32
    %14 = vector.broadcast %cst : f32 to vector<4x8x128xf32>
    %15 = arith.maximumf %13, %14 : vector<4x8x128xf32>
    %16 = arith.truncf %15 : vector<4x8x128xf32> to vector<4x8x128xbf16>
    %c1_i32 = arith.constant 1 : i32
    %17 = arith.subi %1, %c1_i32 : i32
    %c0_i32 = arith.constant 0 : i32
    %18 = arith.maxsi %17, %c0_i32 : i32
    %c0_6 = arith.constant 0 : index
    %19 = arith.index_cast %18 : i32 to index
    %c0_7 = arith.constant 0 : index
    %c0_8 = arith.constant 0 : index
    %20 = vector.load %arg2[%c0_6, %19, %c0_7, %c0_8] : memref<1x8x8x128xbf16, #tpu.memory_space<vmem>>, vector<1x1x8x128xbf16>
    %21 = vector.shape_cast %20 : vector<1x1x8x128xbf16> to vector<1x8x128xbf16>
    %22 = arith.extf %21 : vector<1x8x128xbf16> to vector<1x8x128xf32>
    %23 = vector.broadcast %3 : vector<1x1x128xf32> to vector<1x8x128xf32>
    %24 = arith.mulf %22, %23 : vector<1x8x128xf32>
    %25 = vector.broadcast %5 : vector<1x1x128xf32> to vector<1x8x128xf32>
    %26 = arith.addf %24, %25 : vector<1x8x128xf32>
    %cst_9 = arith.constant 0.000000e+00 : f32
    %27 = vector.broadcast %cst_9 : f32 to vector<1x8x128xf32>
    %28 = arith.maximumf %26, %27 : vector<1x8x128xf32>
    %29 = arith.truncf %28 : vector<1x8x128xf32> to vector<1x8x128xbf16>
    %c4_i32_10 = arith.constant 4 : i32
    %30 = arith.addi %1, %c4_i32_10 : i32
    %c7_i32 = arith.constant 7 : i32
    %31 = arith.minsi %30, %c7_i32 : i32
    %c0_11 = arith.constant 0 : index
    %32 = arith.index_cast %31 : i32 to index
    %c0_12 = arith.constant 0 : index
    %c0_13 = arith.constant 0 : index
    %33 = vector.load %arg2[%c0_11, %32, %c0_12, %c0_13] : memref<1x8x8x128xbf16, #tpu.memory_space<vmem>>, vector<1x1x8x128xbf16>
    %34 = vector.shape_cast %33 : vector<1x1x8x128xbf16> to vector<1x8x128xbf16>
    %35 = arith.extf %34 : vector<1x8x128xbf16> to vector<1x8x128xf32>
    %36 = vector.broadcast %3 : vector<1x1x128xf32> to vector<1x8x128xf32>
    %37 = arith.mulf %35, %36 : vector<1x8x128xf32>
    %38 = vector.broadcast %5 : vector<1x1x128xf32> to vector<1x8x128xf32>
    %39 = arith.addf %37, %38 : vector<1x8x128xf32>
    %cst_14 = arith.constant 0.000000e+00 : f32
    %40 = vector.broadcast %cst_14 : f32 to vector<1x8x128xf32>
    %41 = arith.maximumf %39, %40 : vector<1x8x128xf32>
    %42 = arith.truncf %41 : vector<1x8x128xf32> to vector<1x8x128xbf16>
    %c0_i32_15 = arith.constant 0 : i32
    %43 = arith.cmpi sgt, %arg1, %c0_i32_15 : i32
    %44 = arith.extui %43 : i1 to i32
    %45 = arith.sitofp %44 : i32 to f32
    %46 = arith.truncf %45 : f32 to bf16
    %47 = vector.broadcast %46 : bf16 to vector<1x8x128xbf16>
    %48 = arith.mulf %29, %47 : vector<1x8x128xbf16>
    %c1_i32_16 = arith.constant 1 : i32
    %49 = arith.cmpi slt, %arg1, %c1_i32_16 : i32
    %50 = arith.extui %49 : i1 to i32
    %51 = arith.sitofp %50 : i32 to f32
    %52 = arith.truncf %51 : f32 to bf16
    %53 = vector.broadcast %52 : bf16 to vector<1x8x128xbf16>
    %54 = arith.mulf %42, %53 : vector<1x8x128xbf16>
    %cst_17 = arith.constant 0.000000e+00 : bf16
    %55 = vector.broadcast %cst_17 : bf16 to vector<6x1x128xbf16>
    %56 = tpu.concatenate %48, %16, %54 in 0 : vector<1x8x128xbf16>, vector<4x8x128xbf16>, vector<1x8x128xbf16> -> vector<6x8x128xbf16>
    %57 = tpu.concatenate %55, %56, %55 in 1 : vector<6x1x128xbf16>, vector<6x8x128xbf16>, vector<6x1x128xbf16> -> vector<6x10x128xbf16>
    %58 = vector.extract_strided_slice %57 {offsets = [0, 0, 0], sizes = [4, 8, 128], strides = [1, 1, 1]} : vector<6x10x128xbf16> to vector<4x8x128xbf16>
    %59 = vector.shape_cast %58 : vector<4x8x128xbf16> to vector<32x128xbf16>
    %60 = vector.extract_strided_slice %57 {offsets = [0, 1, 0], sizes = [4, 8, 128], strides = [1, 1, 1]} : vector<6x10x128xbf16> to vector<4x8x128xbf16>
    %61 = vector.shape_cast %60 : vector<4x8x128xbf16> to vector<32x128xbf16>
    %62 = vector.extract_strided_slice %57 {offsets = [0, 2, 0], sizes = [4, 8, 128], strides = [1, 1, 1]} : vector<6x10x128xbf16> to vector<4x8x128xbf16>
    %63 = vector.shape_cast %62 : vector<4x8x128xbf16> to vector<32x128xbf16>
    %64 = vector.extract_strided_slice %57 {offsets = [1, 0, 0], sizes = [4, 8, 128], strides = [1, 1, 1]} : vector<6x10x128xbf16> to vector<4x8x128xbf16>
    %65 = vector.shape_cast %64 : vector<4x8x128xbf16> to vector<32x128xbf16>
    %66 = vector.extract_strided_slice %57 {offsets = [1, 1, 0], sizes = [4, 8, 128], strides = [1, 1, 1]} : vector<6x10x128xbf16> to vector<4x8x128xbf16>
    %67 = vector.shape_cast %66 : vector<4x8x128xbf16> to vector<32x128xbf16>
    %68 = vector.extract_strided_slice %57 {offsets = [1, 2, 0], sizes = [4, 8, 128], strides = [1, 1, 1]} : vector<6x10x128xbf16> to vector<4x8x128xbf16>
    %69 = vector.shape_cast %68 : vector<4x8x128xbf16> to vector<32x128xbf16>
    %70 = vector.extract_strided_slice %57 {offsets = [2, 0, 0], sizes = [4, 8, 128], strides = [1, 1, 1]} : vector<6x10x128xbf16> to vector<4x8x128xbf16>
    %71 = vector.shape_cast %70 : vector<4x8x128xbf16> to vector<32x128xbf16>
    %72 = vector.extract_strided_slice %57 {offsets = [2, 1, 0], sizes = [4, 8, 128], strides = [1, 1, 1]} : vector<6x10x128xbf16> to vector<4x8x128xbf16>
    %73 = vector.shape_cast %72 : vector<4x8x128xbf16> to vector<32x128xbf16>
    %74 = vector.extract_strided_slice %57 {offsets = [2, 2, 0], sizes = [4, 8, 128], strides = [1, 1, 1]} : vector<6x10x128xbf16> to vector<4x8x128xbf16>
    %75 = vector.shape_cast %74 : vector<4x8x128xbf16> to vector<32x128xbf16>
    %76 = tpu.concatenate %59, %61, %63, %65, %67, %69, %71, %73, %75 in 1 : vector<32x128xbf16>, vector<32x128xbf16>, vector<32x128xbf16>, vector<32x128xbf16>, vector<32x128xbf16>, vector<32x128xbf16>, vector<32x128xbf16>, vector<32x128xbf16>, vector<32x128xbf16> -> vector<32x1152xbf16>
    %c0_18 = arith.constant 0 : index
    %c0_19 = arith.constant 0 : index
    %77 = vector.load %arg5[%c0_18, %c0_19] : memref<1152x128xbf16, #tpu.memory_space<vmem>>, vector<1152x128xbf16>
    %cst_20 = arith.constant dense<0.000000e+00> : vector<32x128xf32>
    %78 = tpu.matmul %76, %77, %cst_20 {dimension_numbers = #tpu.dot_dimension_numbers<[1], [0], [0], [1], [0, 0, 1, 1], [], []>} : vector<32x1152xbf16>, vector<1152x128xbf16>, vector<32x128xf32> -> vector<32x128xf32>
    %79 = arith.truncf %78 : vector<32x128xf32> to vector<32x128xbf16>
    %80 = vector.shape_cast %79 : vector<32x128xbf16> to vector<1x4x8x128xbf16>
    %c0_21 = arith.constant 0 : index
    %c0_22 = arith.constant 0 : index
    %c0_23 = arith.constant 0 : index
    %c0_24 = arith.constant 0 : index
    %81 = vector.load %arg6[%c0_21, %c0_22, %c0_23, %c0_24] : memref<1x4x8x128xbf16, #tpu.memory_space<vmem>>, vector<1x4x8x128xbf16>
    tpu.vector_store %arg6[%c0_21, %c0_22, %c0_23, %c0_24], %80 {strides = array<i32>} : memref<1x4x8x128xbf16, #tpu.memory_space<vmem>>, vector<1x4x8x128xbf16>,
    %cst_25 = arith.constant dense<0.000000e+00> : vector<128xf32>
    %82 = vector.multi_reduction <add>, %78, %cst_25 [0] : vector<32x128xf32> to vector<128xf32>
    %83 = vector.shape_cast %82 : vector<128xf32> to vector<1x128xf32>
    %84 = arith.mulf %78, %78 : vector<32x128xf32>
    %cst_26 = arith.constant dense<0.000000e+00> : vector<128xf32>
    %85 = vector.multi_reduction <add>, %84, %cst_26 [0] : vector<32x128xf32> to vector<128xf32>
    %86 = vector.shape_cast %85 : vector<128xf32> to vector<1x128xf32>
    %87 = tpu.concatenate %83, %86 in 0 : vector<1x128xf32>, vector<1x128xf32> -> vector<2x128xf32>
    %88 = vector.shape_cast %87 : vector<2x128xf32> to vector<1x2x128xf32>
    %c0_27 = arith.constant 0 : index
    %c0_28 = arith.constant 0 : index
    %c0_29 = arith.constant 0 : index
    %89 = vector.load %arg7[%c0_27, %c0_28, %c0_29] : memref<1x2x128xf32, #tpu.memory_space<vmem>>, vector<1x2x128xf32>
    tpu.vector_store %arg7[%c0_27, %c0_28, %c0_29], %88 {strides = array<i32>} : memref<1x2x128xf32, #tpu.memory_space<vmem>>, vector<1x2x128xf32>,
    return
  }
  func.func @transform_0(%arg0: i32, %arg1: i32) -> (i32, i32, i32, i32) {
    %c0_i32 = arith.constant 0 : i32
    %c0_i32_0 = arith.constant 0 : i32
    %c0_i32_1 = arith.constant 0 : i32
    %c0_i32_2 = arith.constant 0 : i32
    return %arg0, %c0_i32, %c0_i32_0, %c0_i32_1 : i32, i32, i32, i32
  }
  func.func @transform_1(%arg0: i32, %arg1: i32) -> (i32, i32) {
    %c0_i32 = arith.constant 0 : i32
    %c0_i32_0 = arith.constant 0 : i32
    %c0_i32_1 = arith.constant 0 : i32
    return %c0_i32, %c0_i32_0 : i32, i32
  }
  func.func @transform_2(%arg0: i32, %arg1: i32) -> (i32, i32) {
    %c0_i32 = arith.constant 0 : i32
    %c0_i32_0 = arith.constant 0 : i32
    %c0_i32_1 = arith.constant 0 : i32
    return %c0_i32, %c0_i32_0 : i32, i32
  }
  func.func @transform_3(%arg0: i32, %arg1: i32) -> (i32, i32) {
    %c0_i32 = arith.constant 0 : i32
    %c0_i32_0 = arith.constant 0 : i32
    %c0_i32_1 = arith.constant 0 : i32
    return %c0_i32, %c0_i32_0 : i32, i32
  }
  func.func @transform_4(%arg0: i32, %arg1: i32) -> (i32, i32, i32, i32) {
    %c0_i32 = arith.constant 0 : i32
    %c0_i32_0 = arith.constant 0 : i32
    %c0_i32_1 = arith.constant 0 : i32
    return %arg0, %arg1, %c0_i32, %c0_i32_0 : i32, i32, i32, i32
  }
  func.func @transform_5(%arg0: i32, %arg1: i32) -> (i32, i32, i32) {
    %c2_i32 = arith.constant 2 : i32
    %0 = arith.muli %arg0, %c2_i32 : i32
    %1 = arith.addi %0, %arg1 : i32
    %c0_i32 = arith.constant 0 : i32
    %c0_i32_0 = arith.constant 0 : i32
    %c0_i32_1 = arith.constant 0 : i32
    return %1, %c0_i32, %c0_i32_0 : i32, i32, i32
  }
}

module attributes {stable_mosaic.version = 11 : i64} {
  func.func @_conv3_kernel(%arg0: i32, %arg1: i32, %arg2: memref<1x4x8x128xbf16, #tpu.memory_space<vmem>>, %arg3: memref<1x128xf32, #tpu.memory_space<vmem>>, %arg4: memref<1x128xf32, #tpu.memory_space<vmem>>, %arg5: memref<128x128xbf16, #tpu.memory_space<vmem>>, %arg6: memref<1x4x8x128xbf16, #tpu.memory_space<vmem>>, %arg7: memref<1x2x128xf32, #tpu.memory_space<vmem>>) attributes {dimension_semantics = [#tpu.dimension_semantics<parallel>, #tpu.dimension_semantics<parallel>], iteration_bounds = array<i64: 2, 2>, scalar_prefetch = 0 : i64, scratch_operands = 0 : i64, tpu.core_type = #tpu.core_type<tc>, window_params = [{transform_indices = @transform_0, window_bounds = array<i64: 1, 4, 8, 128>}, {pipeline_mode = #tpu.pipeline_mode<synchronous>, transform_indices = @transform_1, window_bounds = array<i64: 1, 128>}, {pipeline_mode = #tpu.pipeline_mode<synchronous>, transform_indices = @transform_2, window_bounds = array<i64: 1, 128>}, {pipeline_mode = #tpu.pipeline_mode<synchronous>, transform_indices = @transform_3, window_bounds = array<i64: 128, 128>}, {transform_indices = @transform_4, window_bounds = array<i64: 1, 4, 8, 128>}, {transform_indices = @transform_5, window_bounds = array<i64: 1, 2, 128>}]} {
    %c0 = arith.constant 0 : index
    %c0_0 = arith.constant 0 : index
    %0 = vector.load %arg3[%c0, %c0_0] : memref<1x128xf32, #tpu.memory_space<vmem>>, vector<1x128xf32>
    %1 = vector.shape_cast %0 : vector<1x128xf32> to vector<1x1x1x128xf32>
    %c0_1 = arith.constant 0 : index
    %c0_2 = arith.constant 0 : index
    %2 = vector.load %arg4[%c0_1, %c0_2] : memref<1x128xf32, #tpu.memory_space<vmem>>, vector<1x128xf32>
    %3 = vector.shape_cast %2 : vector<1x128xf32> to vector<1x1x1x128xf32>
    %c0_3 = arith.constant 0 : index
    %c0_4 = arith.constant 0 : index
    %c0_5 = arith.constant 0 : index
    %c0_6 = arith.constant 0 : index
    %4 = vector.load %arg2[%c0_3, %c0_4, %c0_5, %c0_6] : memref<1x4x8x128xbf16, #tpu.memory_space<vmem>>, vector<1x4x8x128xbf16>
    %5 = arith.extf %4 : vector<1x4x8x128xbf16> to vector<1x4x8x128xf32>
    %6 = vector.broadcast %1 : vector<1x1x1x128xf32> to vector<1x4x8x128xf32>
    %7 = arith.mulf %5, %6 : vector<1x4x8x128xf32>
    %8 = vector.broadcast %3 : vector<1x1x1x128xf32> to vector<1x4x8x128xf32>
    %9 = arith.addf %7, %8 : vector<1x4x8x128xf32>
    %cst = arith.constant 0.000000e+00 : f32
    %10 = vector.broadcast %cst : f32 to vector<1x4x8x128xf32>
    %11 = arith.maximumf %9, %10 : vector<1x4x8x128xf32>
    %12 = arith.truncf %11 : vector<1x4x8x128xf32> to vector<1x4x8x128xbf16>
    %13 = vector.shape_cast %12 : vector<1x4x8x128xbf16> to vector<32x128xbf16>
    %c0_7 = arith.constant 0 : index
    %c0_8 = arith.constant 0 : index
    %14 = vector.load %arg5[%c0_7, %c0_8] : memref<128x128xbf16, #tpu.memory_space<vmem>>, vector<128x128xbf16>
    %cst_9 = arith.constant dense<0.000000e+00> : vector<32x128xf32>
    %15 = tpu.matmul %13, %14, %cst_9 {dimension_numbers = #tpu.dot_dimension_numbers<[1], [0], [0], [1], [0, 0, 1, 1], [], []>} : vector<32x128xbf16>, vector<128x128xbf16>, vector<32x128xf32> -> vector<32x128xf32>
    %16 = arith.truncf %15 : vector<32x128xf32> to vector<32x128xbf16>
    %17 = vector.shape_cast %16 : vector<32x128xbf16> to vector<1x4x8x128xbf16>
    %c0_10 = arith.constant 0 : index
    %c0_11 = arith.constant 0 : index
    %c0_12 = arith.constant 0 : index
    %c0_13 = arith.constant 0 : index
    %18 = vector.load %arg6[%c0_10, %c0_11, %c0_12, %c0_13] : memref<1x4x8x128xbf16, #tpu.memory_space<vmem>>, vector<1x4x8x128xbf16>
    tpu.vector_store %arg6[%c0_10, %c0_11, %c0_12, %c0_13], %17 {strides = array<i32>} : memref<1x4x8x128xbf16, #tpu.memory_space<vmem>>, vector<1x4x8x128xbf16>,
    %cst_14 = arith.constant dense<0.000000e+00> : vector<128xf32>
    %19 = vector.multi_reduction <add>, %15, %cst_14 [0] : vector<32x128xf32> to vector<128xf32>
    %20 = vector.shape_cast %19 : vector<128xf32> to vector<1x128xf32>
    %21 = arith.mulf %15, %15 : vector<32x128xf32>
    %cst_15 = arith.constant dense<0.000000e+00> : vector<128xf32>
    %22 = vector.multi_reduction <add>, %21, %cst_15 [0] : vector<32x128xf32> to vector<128xf32>
    %23 = vector.shape_cast %22 : vector<128xf32> to vector<1x128xf32>
    %24 = tpu.concatenate %20, %23 in 0 : vector<1x128xf32>, vector<1x128xf32> -> vector<2x128xf32>
    %25 = vector.shape_cast %24 : vector<2x128xf32> to vector<1x2x128xf32>
    %c0_16 = arith.constant 0 : index
    %c0_17 = arith.constant 0 : index
    %c0_18 = arith.constant 0 : index
    %26 = vector.load %arg7[%c0_16, %c0_17, %c0_18] : memref<1x2x128xf32, #tpu.memory_space<vmem>>, vector<1x2x128xf32>
    tpu.vector_store %arg7[%c0_16, %c0_17, %c0_18], %25 {strides = array<i32>} : memref<1x2x128xf32, #tpu.memory_space<vmem>>, vector<1x2x128xf32>,
    return
  }
  func.func @transform_0(%arg0: i32, %arg1: i32) -> (i32, i32, i32, i32) {
    %c0_i32 = arith.constant 0 : i32
    %c0_i32_0 = arith.constant 0 : i32
    %c0_i32_1 = arith.constant 0 : i32
    return %arg0, %arg1, %c0_i32, %c0_i32_0 : i32, i32, i32, i32
  }
  func.func @transform_1(%arg0: i32, %arg1: i32) -> (i32, i32) {
    %c0_i32 = arith.constant 0 : i32
    %c0_i32_0 = arith.constant 0 : i32
    %c0_i32_1 = arith.constant 0 : i32
    return %c0_i32, %c0_i32_0 : i32, i32
  }
  func.func @transform_2(%arg0: i32, %arg1: i32) -> (i32, i32) {
    %c0_i32 = arith.constant 0 : i32
    %c0_i32_0 = arith.constant 0 : i32
    %c0_i32_1 = arith.constant 0 : i32
    return %c0_i32, %c0_i32_0 : i32, i32
  }
  func.func @transform_3(%arg0: i32, %arg1: i32) -> (i32, i32) {
    %c0_i32 = arith.constant 0 : i32
    %c0_i32_0 = arith.constant 0 : i32
    %c0_i32_1 = arith.constant 0 : i32
    return %c0_i32, %c0_i32_0 : i32, i32
  }
  func.func @transform_4(%arg0: i32, %arg1: i32) -> (i32, i32, i32, i32) {
    %c0_i32 = arith.constant 0 : i32
    %c0_i32_0 = arith.constant 0 : i32
    %c0_i32_1 = arith.constant 0 : i32
    return %arg0, %arg1, %c0_i32, %c0_i32_0 : i32, i32, i32, i32
  }
  func.func @transform_5(%arg0: i32, %arg1: i32) -> (i32, i32, i32) {
    %c2_i32 = arith.constant 2 : i32
    %0 = arith.muli %arg0, %c2_i32 : i32
    %1 = arith.addi %0, %arg1 : i32
    %c0_i32 = arith.constant 0 : i32
    %c0_i32_0 = arith.constant 0 : i32
    %c0_i32_1 = arith.constant 0 : i32
    return %1, %c0_i32, %c0_i32_0 : i32, i32, i32
  }
}

module attributes {stable_mosaic.version = 11 : i64} {
  func.func @_final_proj_kernel(%arg0: i32, %arg1: i32, %arg2: memref<1x4x8x128xbf16, #tpu.memory_space<vmem>>, %arg3: memref<1x128xf32, #tpu.memory_space<vmem>>, %arg4: memref<1x128xf32, #tpu.memory_space<vmem>>, %arg5: memref<1x4x8x128xbf16, #tpu.memory_space<vmem>>, %arg6: memref<1x128xf32, #tpu.memory_space<vmem>>, %arg7: memref<1x128xf32, #tpu.memory_space<vmem>>, %arg8: memref<1x4x8x128xf32, #tpu.memory_space<vmem>>) attributes {dimension_semantics = [#tpu.dimension_semantics<parallel>, #tpu.dimension_semantics<parallel>], iteration_bounds = array<i64: 2, 2>, scalar_prefetch = 0 : i64, scratch_operands = 0 : i64, tpu.core_type = #tpu.core_type<tc>, window_params = [{transform_indices = @transform_0, window_bounds = array<i64: 1, 4, 8, 128>}, {pipeline_mode = #tpu.pipeline_mode<synchronous>, transform_indices = @transform_1, window_bounds = array<i64: 1, 128>}, {pipeline_mode = #tpu.pipeline_mode<synchronous>, transform_indices = @transform_2, window_bounds = array<i64: 1, 128>}, {transform_indices = @transform_3, window_bounds = array<i64: 1, 4, 8, 128>}, {pipeline_mode = #tpu.pipeline_mode<synchronous>, transform_indices = @transform_4, window_bounds = array<i64: 1, 128>}, {pipeline_mode = #tpu.pipeline_mode<synchronous>, transform_indices = @transform_5, window_bounds = array<i64: 1, 128>}, {transform_indices = @transform_6, window_bounds = array<i64: 1, 4, 8, 128>}]} {
    %c0 = arith.constant 0 : index
    %c0_0 = arith.constant 0 : index
    %c0_1 = arith.constant 0 : index
    %c0_2 = arith.constant 0 : index
    %0 = vector.load %arg2[%c0, %c0_0, %c0_1, %c0_2] : memref<1x4x8x128xbf16, #tpu.memory_space<vmem>>, vector<1x4x8x128xbf16>
    %1 = arith.extf %0 : vector<1x4x8x128xbf16> to vector<1x4x8x128xf32>
    %c0_3 = arith.constant 0 : index
    %c0_4 = arith.constant 0 : index
    %2 = vector.load %arg3[%c0_3, %c0_4] : memref<1x128xf32, #tpu.memory_space<vmem>>, vector<1x128xf32>
    %3 = vector.shape_cast %2 : vector<1x128xf32> to vector<1x1x1x128xf32>
    %4 = vector.broadcast %3 : vector<1x1x1x128xf32> to vector<1x4x8x128xf32>
    %5 = arith.mulf %1, %4 : vector<1x4x8x128xf32>
    %c0_5 = arith.constant 0 : index
    %c0_6 = arith.constant 0 : index
    %6 = vector.load %arg4[%c0_5, %c0_6] : memref<1x128xf32, #tpu.memory_space<vmem>>, vector<1x128xf32>
    %7 = vector.shape_cast %6 : vector<1x128xf32> to vector<1x1x1x128xf32>
    %8 = vector.broadcast %7 : vector<1x1x1x128xf32> to vector<1x4x8x128xf32>
    %9 = arith.addf %5, %8 : vector<1x4x8x128xf32>
    %c0_7 = arith.constant 0 : index
    %c0_8 = arith.constant 0 : index
    %c0_9 = arith.constant 0 : index
    %c0_10 = arith.constant 0 : index
    %10 = vector.load %arg5[%c0_7, %c0_8, %c0_9, %c0_10] : memref<1x4x8x128xbf16, #tpu.memory_space<vmem>>, vector<1x4x8x128xbf16>
    %11 = arith.extf %10 : vector<1x4x8x128xbf16> to vector<1x4x8x128xf32>
    %c0_11 = arith.constant 0 : index
    %c0_12 = arith.constant 0 : index
    %12 = vector.load %arg6[%c0_11, %c0_12] : memref<1x128xf32, #tpu.memory_space<vmem>>, vector<1x128xf32>
    %13 = vector.shape_cast %12 : vector<1x128xf32> to vector<1x1x1x128xf32>
    %14 = vector.broadcast %13 : vector<1x1x1x128xf32> to vector<1x4x8x128xf32>
    %15 = arith.mulf %11, %14 : vector<1x4x8x128xf32>
    %c0_13 = arith.constant 0 : index
    %c0_14 = arith.constant 0 : index
    %16 = vector.load %arg7[%c0_13, %c0_14] : memref<1x128xf32, #tpu.memory_space<vmem>>, vector<1x128xf32>
    %17 = vector.shape_cast %16 : vector<1x128xf32> to vector<1x1x1x128xf32>
    %18 = vector.broadcast %17 : vector<1x1x1x128xf32> to vector<1x4x8x128xf32>
    %19 = arith.addf %15, %18 : vector<1x4x8x128xf32>
    %20 = arith.addf %9, %19 : vector<1x4x8x128xf32>
    %cst = arith.constant 0.000000e+00 : f32
    %21 = vector.broadcast %cst : f32 to vector<1x4x8x128xf32>
    %22 = arith.maximumf %20, %21 : vector<1x4x8x128xf32>
    %c0_15 = arith.constant 0 : index
    %c0_16 = arith.constant 0 : index
    %c0_17 = arith.constant 0 : index
    %c0_18 = arith.constant 0 : index
    %23 = vector.load %arg8[%c0_15, %c0_16, %c0_17, %c0_18] : memref<1x4x8x128xf32, #tpu.memory_space<vmem>>, vector<1x4x8x128xf32>
    tpu.vector_store %arg8[%c0_15, %c0_16, %c0_17, %c0_18], %22 {strides = array<i32>} : memref<1x4x8x128xf32, #tpu.memory_space<vmem>>, vector<1x4x8x128xf32>,
    return
  }
  func.func @transform_0(%arg0: i32, %arg1: i32) -> (i32, i32, i32, i32) {
    %c0_i32 = arith.constant 0 : i32
    %c0_i32_0 = arith.constant 0 : i32
    %c0_i32_1 = arith.constant 0 : i32
    return %arg0, %arg1, %c0_i32, %c0_i32_0 : i32, i32, i32, i32
  }
  func.func @transform_1(%arg0: i32, %arg1: i32) -> (i32, i32) {
    %c0_i32 = arith.constant 0 : i32
    %c0_i32_0 = arith.constant 0 : i32
    %c0_i32_1 = arith.constant 0 : i32
    return %c0_i32, %c0_i32_0 : i32, i32
  }
  func.func @transform_2(%arg0: i32, %arg1: i32) -> (i32, i32) {
    %c0_i32 = arith.constant 0 : i32
    %c0_i32_0 = arith.constant 0 : i32
    %c0_i32_1 = arith.constant 0 : i32
    return %c0_i32, %c0_i32_0 : i32, i32
  }
  func.func @transform_3(%arg0: i32, %arg1: i32) -> (i32, i32, i32, i32) {
    %c0_i32 = arith.constant 0 : i32
    %c0_i32_0 = arith.constant 0 : i32
    %c0_i32_1 = arith.constant 0 : i32
    return %arg0, %arg1, %c0_i32, %c0_i32_0 : i32, i32, i32, i32
  }
  func.func @transform_4(%arg0: i32, %arg1: i32) -> (i32, i32) {
    %c0_i32 = arith.constant 0 : i32
    %c0_i32_0 = arith.constant 0 : i32
    %c0_i32_1 = arith.constant 0 : i32
    return %c0_i32, %c0_i32_0 : i32, i32
  }
  func.func @transform_5(%arg0: i32, %arg1: i32) -> (i32, i32) {
    %c0_i32 = arith.constant 0 : i32
    %c0_i32_0 = arith.constant 0 : i32
    %c0_i32_1 = arith.constant 0 : i32
    return %c0_i32, %c0_i32_0 : i32, i32
  }
  func.func @transform_6(%arg0: i32, %arg1: i32) -> (i32, i32, i32, i32) {
    %c0_i32 = arith.constant 0 : i32
    %c0_i32_0 = arith.constant 0 : i32
    %c0_i32_1 = arith.constant 0 : i32
    return %arg0, %arg1, %c0_i32, %c0_i32_0 : i32, i32, i32, i32
  }
}

</mosaic_0001>

<llo_original>
// kernel: res_bottleneck_forward.4
$region0: #{res_bottleneck_forward.4}
  #allocation0 [shape = 'u32[]', space=smem, size = 0x4, offset = 0x4, fixed_abs, tag = 'smem constant byte address 0x4 - core index']
  #allocation1 [shape = 'u32[144,128]{1,0:T(1,128)}', space=vmem, size = 0x12000, scoped, tag = 'internal scratch']
  %s0 = inlined_call_operand.vmem [shape: bf16[2,8,8,128], index: 0, kind: input, shape index: {}]
  %s1 = inlined_call_operand.vmem [shape: bf16[128,128], index: 1, kind: input, shape index: {}]
  %s2 = inlined_call_operand.vmem [shape: bf16[128,128], index: 2, kind: input, shape index: {}]
  %s3 = inlined_call_operand.vmem [shape: bf16[2,8,8,128], index: 3, kind: output, shape index: {0}]
  %s4 = inlined_call_operand.vmem [shape: bf16[2,8,8,128], index: 4, kind: output, shape index: {1}]
  %s5 = inlined_call_operand.vmem [shape: f32[4,2,128], index: 5, kind: output, shape index: {2}]
  %s6 = inlined_call_operand.vmem [shape: f32[4,2,128], index: 6, kind: output, shape index: {3}]
  %7 = xla_tuple %s3, %s4, %s5, %s6
  %s8 = sld [smem:[#allocation0]]
  $region69: #{res_bottleneck_forward.4} parent=0
    _
  %s10 = ssub.s32 1, %s8
  %s11 = scalar_select 0, %s10, %s8
  loop: start=0, step=1, limit=6
  $region2: #{res_bottleneck_forward.4} parent=0 // loop_pre_header
    _
  $region3: #{res_bottleneck_forward.4} parent=0 // loop_header
    %s13 = sphi 0, %s17
    %p14 = scmp.ge.s32.totalorder %s13, 6
    %s20 = sphi 0, %s32
    %s21 = sphi 0, %s28
    %s22 = sphi 0, %s20
    %s23 = sphi 0, %s21
    %s24 = sphi 0, %s22
    %s25 = sphi 0, %s23
    %s37 = sphi 0, %s39
    %s40 = sphi 0, %s37
    %s41 = sphi 0, %s40
    %s57 = sphi 0, %s41
    %s61 = sphi 0, %s61
    %s63 = sphi 0, %s61
    %s64 = sphi 0, %s63
    %s78 = sphi 0, %s64
    %s82 = sphi 0, %s82
    %s84 = sphi 0, %s82
    %s85 = sphi 0, %s84
    %s99 = sphi 0, %s85
    %s107 = sphi 0, %s109
    %s110 = sphi 0, %s107
    %s111 = sphi 0, %s110
    %s127 = sphi 0, %s111
    %s135 = sphi 0, %s137
    %s138 = sphi 0, %s135
    %s139 = sphi 0, %s138
    %s155 = sphi 0, %s139
    %s165 = sphi 0, %s167
    %s168 = sphi 0, %s165
    %s169 = sphi 0, %s168
    %s185 = sphi 0, %s169
    %s195 = sphi 0, %s197
    %s198 = sphi 0, %s195
    %s199 = sphi 0, %s198
    %s215 = sphi 0, %s199
  $region4: #{res_bottleneck_forward.4} parent=0 // loop_header_branch
    %16 = sbr.rel (%p14) target = $region8
  $region5: #{res_bottleneck_forward.4} parent=0 // loop_body
    %s18 = ssub.s32 %s13, 1
    %s19 = ssub.s32 %s13, 2
    %s26 = sadd.s32 1, %s21
    %p27 = scmp.ge.s32.totalorder %s26, 2
    %s28 = scalar_select %p27, 0, %s26
    %s29 = sadd.s32 1, %s20
    %s30 = scalar_select %p27, %s29, %s20
    %p31 = scmp.ge.s32.totalorder %s30, 2
    %s32 = scalar_select %p31, 0, %s30
    %s33 = ssub.s32 %s20, %s32
    %s34 = ssub.s32 %s21, %s28
    %s35 = sor.u32 %s33, %s34
    %p36 = scmp.eq.s32.totalorder %s35, 0
    %s38 = sadd.s32 %s37, 1
    %s39 = scalar_select %p36, %s37, %s38
    %p42 = pneg %p36
    %p43 = scmp.eq.s32.totalorder %s13, 3
    %p44 = por %p42, %p43
    %p45 = scmp.ne.s32.totalorder %s37, %s40
    %p46 = scmp.eq.s32.totalorder %s13, 0
    %p47 = por %p45, %p46
    %p48 = scmp.ne.s32.totalorder %s37, %s40
    %p49 = scmp.eq.s32.totalorder %s18, 3
    %p50 = por %p48, %p49
    %p51 = scmp.ne.s32.totalorder %s40, %s41
    %p52 = scmp.eq.s32.totalorder %s18, 0
    %p53 = por %p51, %p52
    %p54 = scmp.ne.s32.totalorder %s40, %s41
    %p55 = scmp.eq.s32.totalorder %s19, 3
    %p56 = por %p54, %p55
    %p58 = scmp.ne.s32.totalorder %s41, %s57
    %p59 = scmp.eq.s32.totalorder %s19, 0
    %p60 = por %p58, %p59
    %s62 = sadd.s32 %s61, 1
    %p65 = scmp.eq.s32.totalorder %s13, 3
    %p66 = scmp.ne.s32.totalorder %s61, %s63
    %p67 = scmp.eq.s32.totalorder %s13, 0
    %p68 = por %p66, %p67
    %p69 = scmp.ne.s32.totalorder %s61, %s63
    %p70 = scmp.eq.s32.totalorder %s18, 3
    %p71 = por %p69, %p70
    %p72 = scmp.ne.s32.totalorder %s63, %s64
    %p73 = scmp.eq.s32.totalorder %s18, 0
    %p74 = por %p72, %p73
    %p75 = scmp.ne.s32.totalorder %s63, %s64
    %p76 = scmp.eq.s32.totalorder %s19, 3
    %p77 = por %p75, %p76
    %p79 = scmp.ne.s32.totalorder %s64, %s78
    %p80 = scmp.eq.s32.totalorder %s19, 0
    %p81 = por %p79, %p80
    %s83 = sadd.s32 %s82, 1
    %p86 = scmp.eq.s32.totalorder %s13, 3
    %p87 = scmp.ne.s32.totalorder %s82, %s84
    %p88 = scmp.eq.s32.totalorder %s13, 0
    %p89 = por %p87, %p88
    %p90 = scmp.ne.s32.totalorder %s82, %s84
    %p91 = scmp.eq.s32.totalorder %s18, 3
    %p92 = por %p90, %p91
    %p93 = scmp.ne.s32.totalorder %s84, %s85
    %p94 = scmp.eq.s32.totalorder %s18, 0
    %p95 = por %p93, %p94
    %p96 = scmp.ne.s32.totalorder %s84, %s85
    %p97 = scmp.eq.s32.totalorder %s19, 3
    %p98 = por %p96, %p97
    %p100 = scmp.ne.s32.totalorder %s85, %s99
    %p101 = scmp.eq.s32.totalorder %s19, 0
    %p102 = por %p100, %p101
    %s103 = ssub.s32 %s20, %s32
    %s104 = ssub.s32 %s21, %s28
    %s105 = sor.u32 %s103, %s104
    %p106 = scmp.eq.s32.totalorder %s105, 0
    %s108 = sadd.s32 %s107, 1
    %s109 = scalar_select %p106, %s107, %s108
    %p112 = pneg %p106
    %p113 = scmp.eq.s32.totalorder %s13, 3
    %p114 = por %p112, %p113
    %p115 = scmp.ne.s32.totalorder %s107, %s110
    %p116 = scmp.eq.s32.totalorder %s13, 0
    %p117 = por %p115, %p116
    %p118 = scmp.ne.s32.totalorder %s107, %s110
    %p119 = scmp.eq.s32.totalorder %s18, 3
    %p120 = por %p118, %p119
    %p121 = scmp.ne.s32.totalorder %s110, %s111
    %p122 = scmp.eq.s32.totalorder %s18, 0
    %p123 = por %p121, %p122
    %p124 = scmp.ne.s32.totalorder %s110, %s111
    %p125 = scmp.eq.s32.totalorder %s19, 3
    %p126 = por %p124, %p125
    %p128 = scmp.ne.s32.totalorder %s111, %s127
    %p129 = scmp.eq.s32.totalorder %s19, 0
    %p130 = por %p128, %p129
    %s131 = ssub.s32 %s20, %s32
    %s132 = ssub.s32 %s21, %s28
    %s133 = sor.u32 %s131, %s132
    %p134 = scmp.eq.s32.totalorder %s133, 0
    %s136 = sadd.s32 %s135, 1
    %s137 = scalar_select %p134, %s135, %s136
    %p140 = pneg %p134
    %p141 = scmp.eq.s32.totalorder %s13, 3
    %p142 = por %p140, %p141
    %p143 = scmp.ne.s32.totalorder %s135, %s138
    %p144 = scmp.eq.s32.totalorder %s13, 0
    %p145 = por %p143, %p144
    %p146 = scmp.ne.s32.totalorder %s135, %s138
    %p147 = scmp.eq.s32.totalorder %s18, 3
    %p148 = por %p146, %p147
    %p149 = scmp.ne.s32.totalorder %s138, %s139
    %p150 = scmp.eq.s32.totalorder %s18, 0
    %p151 = por %p149, %p150
    %p152 = scmp.ne.s32.totalorder %s138, %s139
    %p153 = scmp.eq.s32.totalorder %s19, 3
    %p154 = por %p152, %p153
    %p156 = scmp.ne.s32.totalorder %s139, %s155
    %p157 = scmp.eq.s32.totalorder %s19, 0
    %p158 = por %p156, %p157
    %s159 = smul.u32 %s20, 2
    %s160 = sadd.s32 %s159, %s21
    %s161 = smul.u32 %s32, 2
    %s162 = sadd.s32 %s161, %s28
    %s163 = ssub.s32 %s160, %s162
    %p164 = scmp.eq.s32.totalorder %s163, 0
    %s166 = sadd.s32 %s165, 1
    %s167 = scalar_select %p164, %s165, %s166
    %p170 = pneg %p164
    %p171 = scmp.eq.s32.totalorder %s13, 3
    %p172 = por %p170, %p171
    %p173 = scmp.ne.s32.totalorder %s165, %s168
    %p174 = scmp.eq.s32.totalorder %s13, 0
    %p175 = por %p173, %p174
    %p176 = scmp.ne.s32.totalorder %s165, %s168
    %p177 = scmp.eq.s32.totalorder %s18, 3
    %p178 = por %p176, %p177
    %p179 = scmp.ne.s32.totalorder %s168, %s169
    %p180 = scmp.eq.s32.totalorder %s18, 0
    %p181 = por %p179, %p180
    %p182 = scmp.ne.s32.totalorder %s168, %s169
    %p183 = scmp.eq.s32.totalorder %s19, 3
    %p184 = por %p182, %p183
    %p186 = scmp.ne.s32.totalorder %s169, %s185
    %p187 = scmp.eq.s32.totalorder %s19, 0
    %p188 = por %p186, %p187
    %s189 = smul.u32 %s20, 2
    %s190 = sadd.s32 %s189, %s21
    %s191 = smul.u32 %s32, 2
    %s192 = sadd.s32 %s191, %s28
    %s193 = ssub.s32 %s190, %s192
    %p194 = scmp.eq.s32.totalorder %s193, 0
    %s196 = sadd.s32 %s195, 1
    %s197 = scalar_select %p194, %s195, %s196
    %p200 = pneg %p194
    %p201 = scmp.eq.s32.totalorder %s13, 3
    %p202 = por %p200, %p201
    %p203 = scmp.ne.s32.totalorder %s195, %s198
    %p204 = scmp.eq.s32.totalorder %s13, 0
    %p205 = por %p203, %p204
    %p206 = scmp.ne.s32.totalorder %s195, %s198
    %p207 = scmp.eq.s32.totalorder %s18, 3
    %p208 = por %p206, %p207
    %p209 = scmp.ne.s32.totalorder %s198, %s199
    %p210 = scmp.eq.s32.totalorder %s18, 0
    %p211 = por %p209, %p210
    %p212 = scmp.ne.s32.totalorder %s198, %s199
    %p213 = scmp.eq.s32.totalorder %s19, 3
    %p214 = por %p212, %p213
    %p216 = scmp.ne.s32.totalorder %s199, %s215
    %p217 = scmp.eq.s32.totalorder %s19, 0
    %p218 = por %p216, %p217
    %p219 = scmp.le.s32.totalorder 1, %s13
    %p220 = scmp.lt.s32.totalorder %s13, 5
    %p221 = pnand %p219, %p220
    %p222 = pneg %p221
    // Predicated region
    $region9: #{res_bottleneck_forward.4} parent=5 // pred_check
      _
    $region10: #{res_bottleneck_forward.4} parent=5 // pred_check_branch
      %224 = sbr.rel (%p221) target = $region12
    $region11: #{res_bottleneck_forward.4} parent=5 // pred_region
      %s225 = ssub.s32 %s13, 1
      // Predicated region
      $region13: #{res_bottleneck_forward.4} parent=11 // pred_check
        %p226 = pneg %p74
      $region14: #{res_bottleneck_forward.4} parent=11 // pred_check_branch
        %228 = sbr.rel (%p226) target = $region16
      $region15: #{res_bottleneck_forward.4} parent=11 // pred_region
        _
      $region16: #{res_bottleneck_forward.4} parent=11 // pred_fallthru
        _
      // Predicated region
      $region17: #{res_bottleneck_forward.4} parent=11 // pred_check
        %p229 = pneg %p95
      $region18: #{res_bottleneck_forward.4} parent=11 // pred_check_branch
        %231 = sbr.rel (%p229) target = $region20
      $region19: #{res_bottleneck_forward.4} parent=11 // pred_region
        _
      $region20: #{res_bottleneck_forward.4} parent=11 // pred_fallthru
        _
    $region12: #{res_bottleneck_forward.4} parent=5 // pred_fallthru
      _
    %p232 = scmp.lt.s32.totalorder %s13, 4
    // Predicated region
    $region21: #{res_bottleneck_forward.4} parent=5 // pred_check
      %p233 = pneg %p232
    $region22: #{res_bottleneck_forward.4} parent=5 // pred_check_branch
      %235 = sbr.rel (%p233) target = $region24
    $region23: #{res_bottleneck_forward.4} parent=5 // pred_region
      // Predicated region
      $region25: #{res_bottleneck_forward.4} parent=23 // pred_check
        %p236 = pneg %p47
      $region26: #{res_bottleneck_forward.4} parent=23 // pred_check_branch
        %238 = sbr.rel (%p236) target = $region28
      $region27: #{res_bottleneck_forward.4} parent=23 // pred_region
        %s239 = smul.u32 4, %s21
        %p240 = scmp.lt.s32.totalorder %s20, 1
        %s241 = scalar_select %p240, %s20, 1
        %p242 = scmp.lt.s32.totalorder %s239, 7
        %s243 = scalar_select %p242, %s239, 7
        %s244 = smul.addr %s241, 8
        %s245 = sadd.s32 %s243, %s244
        %s246 = smul.addr %s245, 4
        %s247 = scalar_lea.vmem %s0, %s246
        %s248 = smul.u32 4, %s21
      $region28: #{res_bottleneck_forward.4} parent=23 // pred_fallthru
        _
    $region24: #{res_bottleneck_forward.4} parent=5 // pred_fallthru
      _
    %p249 = scmp.le.s32.totalorder 1, %s13
    %p250 = scmp.lt.s32.totalorder %s13, 5
    %p251 = pnand %p249, %p250
    %p252 = pneg %p251
    // Predicated region
    $region29: #{res_bottleneck_forward.4} parent=5 // pred_check
      _
    $region30: #{res_bottleneck_forward.4} parent=5 // pred_check_branch
      %254 = sbr.rel (%p251) target = $region32
    $region31: #{res_bottleneck_forward.4} parent=5 // pred_region
      %s255 = ssub.s32 %s13, 1
      %s256 = smul.u32 4, %s23
      %p257 = scmp.lt.s32.totalorder %s22, 1
      %s258 = scalar_select %p257, %s22, 1
      %p259 = scmp.lt.s32.totalorder %s256, 7
      %s260 = scalar_select %p259, %s256, 7
      %s261 = smul.addr %s258, 8
      %s262 = sadd.s32 %s260, %s261
      %s263 = smul.addr %s262, 4
      %s264 = scalar_lea.vmem %s0, %s263
      %p265 = pneg %p53
      %p266 = pneg %p50
      %p267 = pneg %p74
      %p268 = pneg %p71
      %p269 = pneg %p95
      %p270 = pneg %p92
      %p271 = pneg %p123
      %p272 = pneg %p120
      %s273 = smul.u32 4, %s23
      %p274 = scmp.lt.s32.totalorder %s22, 1
      %s275 = scalar_select %p274, %s22, 1
      %p276 = scmp.lt.s32.totalorder %s273, 7
      %s277 = scalar_select %p276, %s273, 7
      %s278 = smul.addr %s275, 8
      %s279 = sadd.s32 %s277, %s278
      %s280 = smul.addr %s279, 4
      %s281 = scalar_lea.vmem %s3, %s280
      %p282 = pneg %p151
      %p283 = pneg %p148
      %s284 = smul.u32 4, %s23
      %p285 = scmp.lt.s32.totalorder %s22, 1
      %s286 = scalar_select %p285, %s22, 1
      %p287 = scmp.lt.s32.totalorder %s284, 7
      %s288 = scalar_select %p287, %s284, 7
      %s289 = smul.addr %s286, 8
      %s290 = sadd.s32 %s288, %s289
      %s291 = smul.addr %s290, 4
      %s292 = scalar_lea.vmem %s4, %s291
      %p293 = pneg %p181
      %p294 = pneg %p178
      %s295 = smul.u32 %s22, 2
      %s296 = sadd.s32 %s295, %s23
      %p297 = scmp.lt.s32.totalorder %s296, 3
      %s298 = scalar_select %p297, %s296, 3
      %s299 = smul.addr %s298, 2
      %s300 = scalar_lea.vmem %s5, %s299
      %p301 = pneg %p211
      %p302 = pneg %p208
      %s303 = smul.u32 %s22, 2
      %s304 = sadd.s32 %s303, %s23
      %p305 = scmp.lt.s32.totalorder %s304, 3
      %s306 = scalar_select %p305, %s304, 3
      %s307 = smul.addr %s306, 2
      %s308 = scalar_lea.vmem %s6, %s307
      %s309 = smul.u32 4, %s23
      %p310 = scmp.lt.s32.totalorder %s22, 1
      %s311 = scalar_select %p310, %s22, 1
      %p312 = scmp.lt.s32.totalorder %s309, 7
      %s313 = scalar_select %p312, %s309, 7
      %s314 = smul.addr %s311, 8
      %s315 = sadd.s32 %s313, %s314
      %s316 = smul.addr %s315, 4
      %s317 = scalar_lea.vmem %s0, %s316
      %s318 = smul.u32 4, %s23
      %s319 = smul.u32 4, %s23
      %p320 = scmp.lt.s32.totalorder %s22, 1
      %s321 = scalar_select %p320, %s22, 1
      %p322 = scmp.lt.s32.totalorder %s319, 7
      %s323 = scalar_select %p322, %s319, 7
      %s324 = smul.addr %s321, 8
      %s325 = sadd.s32 %s323, %s324
      %s326 = smul.addr %s325, 4
      %s327 = scalar_lea.vmem %s3, %s326
      %s328 = smul.u32 4, %s23
      %s329 = smul.u32 4, %s23
      %p330 = scmp.lt.s32.totalorder %s22, 1
      %s331 = scalar_select %p330, %s22, 1
      %p332 = scmp.lt.s32.totalorder %s329, 7
      %s333 = scalar_select %p332, %s329, 7
      %s334 = smul.addr %s331, 8
      %s335 = sadd.s32 %s333, %s334
      %s336 = smul.addr %s335, 4
      %s337 = scalar_lea.vmem %s4, %s336
      %s338 = smul.u32 4, %s23
      %s339 = smul.u32 %s22, 2
      %s340 = sadd.s32 %s339, %s23
      %p341 = scmp.lt.s32.totalorder %s340, 3
      %s342 = scalar_select %p341, %s340, 3
      %s343 = smul.addr %s342, 2
      %s344 = scalar_lea.vmem %s5, %s343
      %s345 = smul.u32 %s22, 2
      %s346 = sadd.s32 %s345, %s23
      %s347 = smul.u32 %s22, 2
      %s348 = sadd.s32 %s347, %s23
      %p349 = scmp.lt.s32.totalorder %s348, 3
      %s350 = scalar_select %p349, %s348, 3
      %s351 = smul.addr %s350, 2
      %s352 = scalar_lea.vmem %s6, %s351
      %s353 = smul.u32 %s22, 2
      %s354 = sadd.s32 %s353, %s23
      %v356 = vld [vmem:[%s317] sm:$0xf]
      %v357 = vld [vmem:[%s317 + $0x4] sm:$0xf]
      %v358 = vld [vmem:[%s317 + $0x8] sm:$0xf]
      %v359 = vld [vmem:[%s317 + $0xc] sm:$0xf]
      %v360 = vld [vmem:[%s1] sm:$0xf]
      %v361 = vld [vmem:[%s1 + $0x4] sm:$0xf]
      %v362 = vld [vmem:[%s1 + $0x8] sm:$0xf]
      %v363 = vld [vmem:[%s1 + $0xc] sm:$0xf]
      %v364 = vld [vmem:[%s1 + $0x10] sm:$0xf]
      %v365 = vld [vmem:[%s1 + $0x14] sm:$0xf]
      %v366 = vld [vmem:[%s1 + $0x18] sm:$0xf]
      %v367 = vld [vmem:[%s1 + $0x1c] sm:$0xf]
      %v368 = vld [vmem:[%s1 + $0x20] sm:$0xf]
      %v369 = vld [vmem:[%s1 + $0x24] sm:$0xf]
      %v370 = vld [vmem:[%s1 + $0x28] sm:$0xf]
      %v371 = vld [vmem:[%s1 + $0x2c] sm:$0xf]
      %v372 = vld [vmem:[%s1 + $0x30] sm:$0xf]
      %v373 = vld [vmem:[%s1 + $0x34] sm:$0xf]
      %v374 = vld [vmem:[%s1 + $0x38] sm:$0xf]
      %v375 = vld [vmem:[%s1 + $0x3c] sm:$0xf]
      %v380 = vunpack.c.l.b16 %v356
      %v381 = vunpack.c.l.b16 %v357
      %v382 = vunpack.c.l.b16 %v358
      %v383 = vunpack.c.l.b16 %v359
      %v384 = vpack.c.b16 %v381, %v380
      %v385 = vpack.c.b16 %v383, %v382
      %v404 = vunpack.c.l.b16 %v360
      %v405 = vunpack.c.l.b16 %v361
      %v406 = vunpack.c.l.b16 %v362
      %v407 = vunpack.c.l.b16 %v363
      %v408 = vunpack.c.l.b16 %v364
      %v409 = vunpack.c.l.b16 %v365
      %v410 = vunpack.c.l.b16 %v366
      %v411 = vunpack.c.l.b16 %v367
      %v412 = vunpack.c.l.b16 %v368
      %v413 = vunpack.c.l.b16 %v369
      %v414 = vunpack.c.l.b16 %v370
      %v415 = vunpack.c.l.b16 %v371
      %v416 = vunpack.c.l.b16 %v372
      %v417 = vunpack.c.l.b16 %v373
      %v418 = vunpack.c.l.b16 %v374
      %v419 = vunpack.c.l.b16 %v375
      %v420 = vpack.c.b16 %v405, %v404
      %v421 = vpack.c.b16 %v407, %v406
      %v422 = vpack.c.b16 %v409, %v408
      %v423 = vpack.c.b16 %v411, %v410
      %v424 = vpack.c.b16 %v413, %v412
      %v425 = vpack.c.b16 %v415, %v414
      %v426 = vpack.c.b16 %v417, %v416
      %v427 = vpack.c.b16 %v419, %v418
      %436 = vmatprep.subr.bf16.mxu0 0
      %437 = vmatpush1.bf16.msra.mxu0 %v427
      %438 = vmatprep.subr.bf16.mxu0 0
      %439 = vmatpush1.bf16.msra.mxu0 %v426
      %440 = vmatprep.subr.bf16.mxu0 0
      %441 = vmatpush1.bf16.msra.mxu0 %v425
      %442 = vmatprep.subr.bf16.mxu0 0
      %443 = vmatpush1.bf16.msra.mxu0 %v424
      %444 = vmatprep.subr.bf16.mxu0 0
      %445 = vmatpush1.bf16.msra.mxu0 %v423
      %446 = vmatprep.subr.bf16.mxu0 0
      %447 = vmatpush1.bf16.msra.mxu0 %v422
      %448 = vmatprep.subr.bf16.mxu0 0
      %449 = vmatpush1.bf16.msra.mxu0 %v421
      %450 = vmatprep.subr.bf16.mxu0 0
      %451 = vmatpush1.bf16.msra.mxu0 %v420
      %452 = vmatprep.subr.bf16.mxu0 0
      %453 = vmatpush2.bf16.msra.mxu0 0
      %454 = vmatprep.subr.bf16.mxu0 0
      %455 = vmatpush2.bf16.msra.mxu0 0
      %456 = vmatprep.subr.bf16.mxu0 0
      %457 = vmatpush2.bf16.msra.mxu0 0
      %458 = vmatprep.subr.bf16.mxu0 0
      %459 = vmatpush2.bf16.msra.mxu0 0
      %460 = vmatprep.subr.bf16.mxu0 0
      %461 = vmatpush2.bf16.msra.mxu0 0
      %462 = vmatprep.subr.bf16.mxu0 0
      %463 = vmatpush2.bf16.msra.mxu0 0
      %464 = vmatprep.subr.bf16.mxu0 0
      %465 = vmatpush2.bf16.msra.mxu0 0
      %466 = vmatprep.subr.bf16.mxu0 0
      %467 = vmatpush2.bf16.msra.mxu0 0
      %468 = vmatprep.mubr.bf16.mxu0 0
      %469 = vmatmul.mubr.bf16.gmra.mxu0 %v384
      %v470 = vpop.f32.mrf.mxu0
      %v471 = vadd.f32 0.0, %v470
      %v472 = vpop.f32.mrf.mxu0
      %v473 = vpop.f32.mrf.mxu0
      %v474 = vadd.f32 0.0, %v473
      %v475 = vpop.f32.mrf.mxu0
      %476 = vmatprep.mubr.bf16.mxu0 0
      %477 = vmatmul.mubr.bf16.gmra.mxu0 %v385
      %v478 = vpop.f32.mrf.mxu0
      %v479 = vadd.f32 0.0, %v478
      %v480 = vpop.f32.mrf.mxu0
      %v481 = vpop.f32.mrf.mxu0
      %v482 = vadd.f32 0.0, %v481
      %v483 = vpop.f32.mrf.mxu0
      %484 = vdwg.mxu0
      %v485 = vld [vmem:[%s2] sm:$0xf]
      %v486 = vld [vmem:[%s2 + $0x4] sm:$0xf]
      %v487 = vld [vmem:[%s2 + $0x8] sm:$0xf]
      %v488 = vld [vmem:[%s2 + $0xc] sm:$0xf]
      %v489 = vld [vmem:[%s2 + $0x10] sm:$0xf]
      %v490 = vld [vmem:[%s2 + $0x14] sm:$0xf]
      %v491 = vld [vmem:[%s2 + $0x18] sm:$0xf]
      %v492 = vld [vmem:[%s2 + $0x1c] sm:$0xf]
      %v493 = vld [vmem:[%s2 + $0x20] sm:$0xf]
      %v494 = vld [vmem:[%s2 + $0x24] sm:$0xf]
      %v495 = vld [vmem:[%s2 + $0x28] sm:$0xf]
      %v496 = vld [vmem:[%s2 + $0x2c] sm:$0xf]
      %v497 = vld [vmem:[%s2 + $0x30] sm:$0xf]
      %v498 = vld [vmem:[%s2 + $0x34] sm:$0xf]
      %v499 = vld [vmem:[%s2 + $0x38] sm:$0xf]
      %v500 = vld [vmem:[%s2 + $0x3c] sm:$0xf]
      %v517 = vunpack.c.l.b16 %v485
      %v518 = vunpack.c.l.b16 %v486
      %v519 = vunpack.c.l.b16 %v487
      %v520 = vunpack.c.l.b16 %v488
      %v521 = vunpack.c.l.b16 %v489
      %v522 = vunpack.c.l.b16 %v490
      %v523 = vunpack.c.l.b16 %v491
      %v524 = vunpack.c.l.b16 %v492
      %v525 = vunpack.c.l.b16 %v493
      %v526 = vunpack.c.l.b16 %v494
      %v527 = vunpack.c.l.b16 %v495
      %v528 = vunpack.c.l.b16 %v496
      %v529 = vunpack.c.l.b16 %v497
      %v530 = vunpack.c.l.b16 %v498
      %v531 = vunpack.c.l.b16 %v499
      %v532 = vunpack.c.l.b16 %v500
      %v533 = vpack.c.b16 %v518, %v517
      %v534 = vpack.c.b16 %v520, %v519
      %v535 = vpack.c.b16 %v522, %v521
      %v536 = vpack.c.b16 %v524, %v523
      %v537 = vpack.c.b16 %v526, %v525
      %v538 = vpack.c.b16 %v528, %v527
      %v539 = vpack.c.b16 %v530, %v529
      %v540 = vpack.c.b16 %v532, %v531
      %549 = vmatprep.subr.bf16.mxu0 0
      %550 = vmatpush1.bf16.msra.mxu0 %v540
      %551 = vmatprep.subr.bf16.mxu0 0
      %552 = vmatpush1.bf16.msra.mxu0 %v539
      %553 = vmatprep.subr.bf16.mxu0 0
      %554 = vmatpush1.bf16.msra.mxu0 %v538
      %555 = vmatprep.subr.bf16.mxu0 0
      %556 = vmatpush1.bf16.msra.mxu0 %v537
      %557 = vmatprep.subr.bf16.mxu0 0
      %558 = vmatpush1.bf16.msra.mxu0 %v536
      %559 = vmatprep.subr.bf16.mxu0 0
      %560 = vmatpush1.bf16.msra.mxu0 %v535
      %561 = vmatprep.subr.bf16.mxu0 0
      %562 = vmatpush1.bf16.msra.mxu0 %v534
      %563 = vmatprep.subr.bf16.mxu0 0
      %564 = vmatpush1.bf16.msra.mxu0 %v533
      %565 = vmatprep.subr.bf16.mxu0 0
      %566 = vmatpush2.bf16.msra.mxu0 0
      %567 = vmatprep.subr.bf16.mxu0 0
      %568 = vmatpush2.bf16.msra.mxu0 0
      %569 = vmatprep.subr.bf16.mxu0 0
      %570 = vmatpush2.bf16.msra.mxu0 0
      %571 = vmatprep.subr.bf16.mxu0 0
      %572 = vmatpush2.bf16.msra.mxu0 0
      %573 = vmatprep.subr.bf16.mxu0 0
      %574 = vmatpush2.bf16.msra.mxu0 0
      %575 = vmatprep.subr.bf16.mxu0 0
      %576 = vmatpush2.bf16.msra.mxu0 0
      %577 = vmatprep.subr.bf16.mxu0 0
      %578 = vmatpush2.bf16.msra.mxu0 0
      %579 = vmatprep.subr.bf16.mxu0 0
      %580 = vmatpush2.bf16.msra.mxu0 0
      %581 = vmatprep.mubr.bf16.mxu0 0
      %582 = vmatmul.mubr.bf16.gmra.mxu0 %v384
      %v583 = vpop.f32.mrf.mxu0
      %v584 = vadd.f32 0.0, %v583
      %v585 = vpop.f32.mrf.mxu0
      %v586 = vpop.f32.mrf.mxu0
      %v587 = vadd.f32 0.0, %v586
      %v588 = vpop.f32.mrf.mxu0
      %589 = vmatprep.mubr.bf16.mxu0 0
      %590 = vmatmul.mubr.bf16.gmra.mxu0 %v385
      %v591 = vpop.f32.mrf.mxu0
      %v592 = vadd.f32 0.0, %v591
      %v593 = vpop.f32.mrf.mxu0
      %v594 = vpop.f32.mrf.mxu0
      %v595 = vadd.f32 0.0, %v594
      %v596 = vpop.f32.mrf.mxu0
      %597 = vdwg.mxu0
      %v598 = vpack.c.bf16 %v474, %v471
      %v599 = vpack.c.bf16 %v482, %v479
      %v602 = vunpack.c.l.b16 %v598
      %v603 = vunpack.c.h.b16 %v598
      %v604 = vunpack.c.l.b16 %v599
      %v605 = vunpack.c.h.b16 %v599
      %v606 = vpack.c.b16 %v602, %v602
      %v607 = vpack.c.b16 %v603, %v603
      %v608 = vpack.c.b16 %v604, %v604
      %v609 = vpack.c.b16 %v605, %v605
      %614 = vst [vmem:[%s327] sm:$0xf] %v606
      %615 = vst [vmem:[%s327 + $0x4] sm:$0xf] %v607
      %616 = vst [vmem:[%s327 + $0x8] sm:$0xf] %v608
      %617 = vst [vmem:[%s327 + $0xc] sm:$0xf] %v609
      %v618 = vpack.c.bf16 %v587, %v584
      %v619 = vpack.c.bf16 %v595, %v592
      %v622 = vunpack.c.l.b16 %v618
      %v623 = vunpack.c.h.b16 %v618
      %v624 = vunpack.c.l.b16 %v619
      %v625 = vunpack.c.h.b16 %v619
      %v626 = vpack.c.b16 %v622, %v622
      %v627 = vpack.c.b16 %v623, %v623
      %v628 = vpack.c.b16 %v624, %v624
      %v629 = vpack.c.b16 %v625, %v625
      %634 = vst [vmem:[%s337] sm:$0xf] %v626
      %635 = vst [vmem:[%s337 + $0x4] sm:$0xf] %v627
      %636 = vst [vmem:[%s337 + $0x8] sm:$0xf] %v628
      %637 = vst [vmem:[%s337 + $0xc] sm:$0xf] %v629
      %v638 = vadd.f32 %v471, %v474
      %v639 = vadd.f32 %v638, %v479
      %v640 = vadd.f32 %v639, %v482
      %v641 = vrot.slane %v640, 4
      %v642 = vadd.f32 %v640, %v641
      %v643 = vrot.slane %v642, 2
      %v644 = vadd.f32 %v642, %v643
      %v645 = vrot.slane %v644, 1
      %v646 = vadd.f32 %v644, %v645
      %v647 = vmul.f32 %v471, %v471
      %v648 = vmul.f32 %v474, %v474
      %v649 = vmul.f32 %v479, %v479
      %v650 = vmul.f32 %v482, %v482
      %v651 = vadd.f32 %v647, %v648
      %v652 = vadd.f32 %v651, %v649
      %v653 = vadd.f32 %v652, %v650
      %v654 = vrot.slane %v653, 4
      %v655 = vadd.f32 %v653, %v654
      %v656 = vrot.slane %v655, 2
      %v657 = vadd.f32 %v655, %v656
      %v658 = vrot.slane %v657, 1
      %v659 = vadd.f32 %v657, %v658
      %vm660 = vcmask 1040384
      %v661 = vsel %vm660, %v646, %v659
      %662 = vst [vmem:[%s344] sm:$0x3] %v661
      %v663 = vadd.f32 %v584, %v587
      %v664 = vadd.f32 %v663, %v592
      %v665 = vadd.f32 %v664, %v595
      %v666 = vrot.slane %v665, 4
      %v667 = vadd.f32 %v665, %v666
      %v668 = vrot.slane %v667, 2
      %v669 = vadd.f32 %v667, %v668
      %v670 = vrot.slane %v669, 1
      %v671 = vadd.f32 %v669, %v670
      %v672 = vmul.f32 %v584, %v584
      %v673 = vmul.f32 %v587, %v587
      %v674 = vmul.f32 %v592, %v592
      %v675 = vmul.f32 %v595, %v595
      %v676 = vadd.f32 %v672, %v673
      %v677 = vadd.f32 %v676, %v674
      %v678 = vadd.f32 %v677, %v675
      %v679 = vrot.slane %v678, 4
      %v680 = vadd.f32 %v678, %v679
      %v681 = vrot.slane %v680, 2
      %v682 = vadd.f32 %v680, %v681
      %v683 = vrot.slane %v682, 1
      %v684 = vadd.f32 %v682, %v683
      %v685 = vsel %vm660, %v671, %v684
      %686 = vst [vmem:[%s352] sm:$0x3] %v685
      %s687 = smul.u32 4, %s23
      %p688 = scmp.lt.s32.totalorder %s22, 1
      %s689 = scalar_select %p688, %s22, 1
      %p690 = scmp.lt.s32.totalorder %s687, 7
      %s691 = scalar_select %p690, %s687, 7
      %s692 = smul.addr %s689, 8
      %s693 = sadd.s32 %s691, %s692
      %s694 = smul.addr %s693, 4
      %s695 = scalar_lea.vmem %s3, %s694
      %s696 = smul.u32 4, %s23
      %p697 = scmp.lt.s32.totalorder %s22, 1
      %s698 = scalar_select %p697, %s22, 1
      %p699 = scmp.lt.s32.totalorder %s696, 7
      %s700 = scalar_select %p699, %s696, 7
      %s701 = smul.addr %s698, 8
      %s702 = sadd.s32 %s700, %s701
      %s703 = smul.addr %s702, 4
      %s704 = scalar_lea.vmem %s4, %s703
      %s705 = smul.u32 %s22, 2
      %s706 = sadd.s32 %s705, %s23
      %p707 = scmp.lt.s32.totalorder %s706, 3
      %s708 = scalar_select %p707, %s706, 3
      %s709 = smul.addr %s708, 2
      %s710 = scalar_lea.vmem %s5, %s709
      %s711 = smul.u32 %s22, 2
      %s712 = sadd.s32 %s711, %s23
      %p713 = scmp.lt.s32.totalorder %s712, 3
      %s714 = scalar_select %p713, %s712, 3
      %s715 = smul.addr %s714, 2
      %s716 = scalar_lea.vmem %s6, %s715
      // Predicated region
      $region33: #{res_bottleneck_forward.4} parent=31 // pred_check
        %p717 = pneg %p120
      $region34: #{res_bottleneck_forward.4} parent=31 // pred_check_branch
        %719 = sbr.rel (%p717) target = $region36
      $region35: #{res_bottleneck_forward.4} parent=31 // pred_region
        %s720 = smul.u32 4, %s23
      $region36: #{res_bottleneck_forward.4} parent=31 // pred_fallthru
        _
      // Predicated region
      $region37: #{res_bottleneck_forward.4} parent=31 // pred_check
        %p721 = pneg %p148
      $region38: #{res_bottleneck_forward.4} parent=31 // pred_check_branch
        %723 = sbr.rel (%p721) target = $region40
      $region39: #{res_bottleneck_forward.4} parent=31 // pred_region
        %s724 = smul.u32 4, %s23
      $region40: #{res_bottleneck_forward.4} parent=31 // pred_fallthru
        _
      // Predicated region
      $region41: #{res_bottleneck_forward.4} parent=31 // pred_check
        %p725 = pneg %p178
      $region42: #{res_bottleneck_forward.4} parent=31 // pred_check_branch
        %727 = sbr.rel (%p725) target = $region44
      $region43: #{res_bottleneck_forward.4} parent=31 // pred_region
        %s728 = smul.u32 %s22, 2
        %s729 = sadd.s32 %s728, %s23
      $region44: #{res_bottleneck_forward.4} parent=31 // pred_fallthru
        _
      // Predicated region
      $region45: #{res_bottleneck_forward.4} parent=31 // pred_check
        %p730 = pneg %p208
      $region46: #{res_bottleneck_forward.4} parent=31 // pred_check_branch
        %732 = sbr.rel (%p730) target = $region48
      $region47: #{res_bottleneck_forward.4} parent=31 // pred_region
        %s733 = smul.u32 %s22, 2
        %s734 = sadd.s32 %s733, %s23
      $region48: #{res_bottleneck_forward.4} parent=31 // pred_fallthru
        _
    $region32: #{res_bottleneck_forward.4} parent=5 // pred_fallthru
      _
    %p735 = scmp.le.s32.totalorder 2, %s13
    // Predicated region
    $region49: #{res_bottleneck_forward.4} parent=5 // pred_check
      %p736 = pneg %p735
    $region50: #{res_bottleneck_forward.4} parent=5 // pred_check_branch
      %738 = sbr.rel (%p736) target = $region52
    $region51: #{res_bottleneck_forward.4} parent=5 // pred_region
      %s739 = ssub.s32 %s13, 2
      // Predicated region
      $region53: #{res_bottleneck_forward.4} parent=51 // pred_check
        %p740 = pneg %p126
      $region54: #{res_bottleneck_forward.4} parent=51 // pred_check_branch
        %742 = sbr.rel (%p740) target = $region56
      $region55: #{res_bottleneck_forward.4} parent=51 // pred_region
        %s743 = smul.u32 4, %s25
        %p744 = scmp.lt.s32.totalorder %s24, 1
        %s745 = scalar_select %p744, %s24, 1
        %p746 = scmp.lt.s32.totalorder %s743, 7
        %s747 = scalar_select %p746, %s743, 7
        %s748 = smul.addr %s745, 8
        %s749 = sadd.s32 %s747, %s748
        %s750 = smul.addr %s749, 4
        %s751 = scalar_lea.vmem %s3, %s750
      $region56: #{res_bottleneck_forward.4} parent=51 // pred_fallthru
        _
      // Predicated region
      $region57: #{res_bottleneck_forward.4} parent=51 // pred_check
        %p752 = pneg %p154
      $region58: #{res_bottleneck_forward.4} parent=51 // pred_check_branch
        %754 = sbr.rel (%p752) target = $region60
      $region59: #{res_bottleneck_forward.4} parent=51 // pred_region
        %s755 = smul.u32 4, %s25
        %p756 = scmp.lt.s32.totalorder %s24, 1
        %s757 = scalar_select %p756, %s24, 1
        %p758 = scmp.lt.s32.totalorder %s755, 7
        %s759 = scalar_select %p758, %s755, 7
        %s760 = smul.addr %s757, 8
        %s761 = sadd.s32 %s759, %s760
        %s762 = smul.addr %s761, 4
        %s763 = scalar_lea.vmem %s4, %s762
      $region60: #{res_bottleneck_forward.4} parent=51 // pred_fallthru
        _
      // Predicated region
      $region61: #{res_bottleneck_forward.4} parent=51 // pred_check
        %p764 = pneg %p184
      $region62: #{res_bottleneck_forward.4} parent=51 // pred_check_branch
        %766 = sbr.rel (%p764) target = $region64
      $region63: #{res_bottleneck_forward.4} parent=51 // pred_region
        %s767 = smul.u32 %s24, 2
        %s768 = sadd.s32 %s767, %s25
        %p769 = scmp.lt.s32.totalorder %s768, 3
        %s770 = scalar_select %p769, %s768, 3
        %s771 = smul.addr %s770, 2
        %s772 = scalar_lea.vmem %s5, %s771
      $region64: #{res_bottleneck_forward.4} parent=51 // pred_fallthru
        _
      // Predicated region
      $region65: #{res_bottleneck_forward.4} parent=51 // pred_check
        %p773 = pneg %p214
      $region66: #{res_bottleneck_forward.4} parent=51 // pred_check_branch
        %775 = sbr.rel (%p773) target = $region68
      $region67: #{res_bottleneck_forward.4} parent=51 // pred_region
        %s776 = smul.u32 %s24, 2
        %s777 = sadd.s32 %s776, %s25
        %p778 = scmp.lt.s32.totalorder %s777, 3
        %s779 = scalar_select %p778, %s777, 3
        %s780 = smul.addr %s779, 2
        %s781 = scalar_lea.vmem %s6, %s780
      $region68: #{res_bottleneck_forward.4} parent=51 // pred_fallthru
        _
    $region52: #{res_bottleneck_forward.4} parent=5 // pred_fallthru
      _
  $region6: #{res_bottleneck_forward.4} parent=0 // loop_footer
    %s17 = sadd.s32 1, %s13
  $region7: #{res_bottleneck_forward.4} parent=0 // loop_footer_branch
    %12 = sbr.rel target = $region3
  $region8: #{res_bottleneck_forward.4} parent=0 // loop_exit
    _

// kernel: res_bottleneck_forward.6
$region0: #{res_bottleneck_forward.6}
  #allocation0 [shape = 'u32[]', space=smem, size = 0x4, offset = 0x4, fixed_abs, tag = 'smem constant byte address 0x4 - core index']
  #allocation1 [shape = 'u32[144,128]{1,0:T(1,128)}', space=vmem, size = 0x12000, scoped, tag = 'internal scratch']
  %s0 = inlined_call_operand.vmem [shape: bf16[2,8,8,128], index: 0, kind: input, shape index: {}]
  %s1 = inlined_call_operand.vmem [shape: f32[1,128], index: 1, kind: input, shape index: {}]
  %s2 = inlined_call_operand.vmem [shape: f32[1,128], index: 2, kind: input, shape index: {}]
  %s3 = inlined_call_operand.vmem [shape: bf16[128,128], index: 3, kind: input, shape index: {}]
  %s4 = inlined_call_operand.vmem [shape: bf16[2,8,8,128], index: 4, kind: output, shape index: {0}]
  %s5 = inlined_call_operand.vmem [shape: f32[4,2,128], index: 5, kind: output, shape index: {1}]
  %6 = xla_tuple %s4, %s5
  %s7 = sld [smem:[#allocation0]]
  $region57: #{res_bottleneck_forward.6} parent=0
    _
  %s9 = ssub.s32 1, %s7
  %s10 = scalar_select 0, %s9, %s7
  loop: start=0, step=1, limit=6
  $region2: #{res_bottleneck_forward.6} parent=0 // loop_pre_header
    _
  $region3: #{res_bottleneck_forward.6} parent=0 // loop_header
    %s12 = sphi 0, %s16
    %p13 = scmp.ge.s32.totalorder %s12, 6
    %s19 = sphi 0, %s31
    %s20 = sphi 0, %s27
    %s21 = sphi 0, %s19
    %s22 = sphi 0, %s20
    %s23 = sphi 0, %s21
    %s24 = sphi 0, %s22
    %s36 = sphi 0, %s38
    %s39 = sphi 0, %s36
    %s40 = sphi 0, %s39
    %s56 = sphi 0, %s40
    %s60 = sphi 0, %s60
    %s62 = sphi 0, %s60
    %s63 = sphi 0, %s62
    %s77 = sphi 0, %s63
    %s81 = sphi 0, %s81
    %s83 = sphi 0, %s81
    %s84 = sphi 0, %s83
    %s98 = sphi 0, %s84
    %s102 = sphi 0, %s102
    %s104 = sphi 0, %s102
    %s105 = sphi 0, %s104
    %s119 = sphi 0, %s105
    %s127 = sphi 0, %s129
    %s130 = sphi 0, %s127
    %s131 = sphi 0, %s130
    %s147 = sphi 0, %s131
    %s157 = sphi 0, %s159
    %s160 = sphi 0, %s157
    %s161 = sphi 0, %s160
    %s177 = sphi 0, %s161
  $region4: #{res_bottleneck_forward.6} parent=0 // loop_header_branch
    %15 = sbr.rel (%p13) target = $region8
  $region5: #{res_bottleneck_forward.6} parent=0 // loop_body
    %s17 = ssub.s32 %s12, 1
    %s18 = ssub.s32 %s12, 2
    %s25 = sadd.s32 1, %s20
    %p26 = scmp.ge.s32.totalorder %s25, 2
    %s27 = scalar_select %p26, 0, %s25
    %s28 = sadd.s32 1, %s19
    %s29 = scalar_select %p26, %s28, %s19
    %p30 = scmp.ge.s32.totalorder %s29, 2
    %s31 = scalar_select %p30, 0, %s29
    %s32 = ssub.s32 %s19, %s31
    %s33 = ssub.s32 %s20, %s27
    %s34 = sor.u32 %s32, %s33
    %p35 = scmp.eq.s32.totalorder %s34, 0
    %s37 = sadd.s32 %s36, 1
    %s38 = scalar_select %p35, %s36, %s37
    %p41 = pneg %p35
    %p42 = scmp.eq.s32.totalorder %s12, 3
    %p43 = por %p41, %p42
    %p44 = scmp.ne.s32.totalorder %s36, %s39
    %p45 = scmp.eq.s32.totalorder %s12, 0
    %p46 = por %p44, %p45
    %p47 = scmp.ne.s32.totalorder %s36, %s39
    %p48 = scmp.eq.s32.totalorder %s17, 3
    %p49 = por %p47, %p48
    %p50 = scmp.ne.s32.totalorder %s39, %s40
    %p51 = scmp.eq.s32.totalorder %s17, 0
    %p52 = por %p50, %p51
    %p53 = scmp.ne.s32.totalorder %s39, %s40
    %p54 = scmp.eq.s32.totalorder %s18, 3
    %p55 = por %p53, %p54
    %p57 = scmp.ne.s32.totalorder %s40, %s56
    %p58 = scmp.eq.s32.totalorder %s18, 0
    %p59 = por %p57, %p58
    %s61 = sadd.s32 %s60, 1
    %p64 = scmp.eq.s32.totalorder %s12, 3
    %p65 = scmp.ne.s32.totalorder %s60, %s62
    %p66 = scmp.eq.s32.totalorder %s12, 0
    %p67 = por %p65, %p66
    %p68 = scmp.ne.s32.totalorder %s60, %s62
    %p69 = scmp.eq.s32.totalorder %s17, 3
    %p70 = por %p68, %p69
    %p71 = scmp.ne.s32.totalorder %s62, %s63
    %p72 = scmp.eq.s32.totalorder %s17, 0
    %p73 = por %p71, %p72
    %p74 = scmp.ne.s32.totalorder %s62, %s63
    %p75 = scmp.eq.s32.totalorder %s18, 3
    %p76 = por %p74, %p75
    %p78 = scmp.ne.s32.totalorder %s63, %s77
    %p79 = scmp.eq.s32.totalorder %s18, 0
    %p80 = por %p78, %p79
    %s82 = sadd.s32 %s81, 1
    %p85 = scmp.eq.s32.totalorder %s12, 3
    %p86 = scmp.ne.s32.totalorder %s81, %s83
    %p87 = scmp.eq.s32.totalorder %s12, 0
    %p88 = por %p86, %p87
    %p89 = scmp.ne.s32.totalorder %s81, %s83
    %p90 = scmp.eq.s32.totalorder %s17, 3
    %p91 = por %p89, %p90
    %p92 = scmp.ne.s32.totalorder %s83, %s84
    %p93 = scmp.eq.s32.totalorder %s17, 0
    %p94 = por %p92, %p93
    %p95 = scmp.ne.s32.totalorder %s83, %s84
    %p96 = scmp.eq.s32.totalorder %s18, 3
    %p97 = por %p95, %p96
    %p99 = scmp.ne.s32.totalorder %s84, %s98
    %p100 = scmp.eq.s32.totalorder %s18, 0
    %p101 = por %p99, %p100
    %s103 = sadd.s32 %s102, 1
    %p106 = scmp.eq.s32.totalorder %s12, 3
    %p107 = scmp.ne.s32.totalorder %s102, %s104
    %p108 = scmp.eq.s32.totalorder %s12, 0
    %p109 = por %p107, %p108
    %p110 = scmp.ne.s32.totalorder %s102, %s104
    %p111 = scmp.eq.s32.totalorder %s17, 3
    %p112 = por %p110, %p111
    %p113 = scmp.ne.s32.totalorder %s104, %s105
    %p114 = scmp.eq.s32.totalorder %s17, 0
    %p115 = por %p113, %p114
    %p116 = scmp.ne.s32.totalorder %s104, %s105
    %p117 = scmp.eq.s32.totalorder %s18, 3
    %p118 = por %p116, %p117
    %p120 = scmp.ne.s32.totalorder %s105, %s119
    %p121 = scmp.eq.s32.totalorder %s18, 0
    %p122 = por %p120, %p121
    %s123 = ssub.s32 %s19, %s31
    %s124 = ssub.s32 %s20, %s27
    %s125 = sor.u32 %s123, %s124
    %p126 = scmp.eq.s32.totalorder %s125, 0
    %s128 = sadd.s32 %s127, 1
    %s129 = scalar_select %p126, %s127, %s128
    %p132 = pneg %p126
    %p133 = scmp.eq.s32.totalorder %s12, 3
    %p134 = por %p132, %p133
    %p135 = scmp.ne.s32.totalorder %s127, %s130
    %p136 = scmp.eq.s32.totalorder %s12, 0
    %p137 = por %p135, %p136
    %p138 = scmp.ne.s32.totalorder %s127, %s130
    %p139 = scmp.eq.s32.totalorder %s17, 3
    %p140 = por %p138, %p139
    %p141 = scmp.ne.s32.totalorder %s130, %s131
    %p142 = scmp.eq.s32.totalorder %s17, 0
    %p143 = por %p141, %p142
    %p144 = scmp.ne.s32.totalorder %s130, %s131
    %p145 = scmp.eq.s32.totalorder %s18, 3
    %p146 = por %p144, %p145
    %p148 = scmp.ne.s32.totalorder %s131, %s147
    %p149 = scmp.eq.s32.totalorder %s18, 0
    %p150 = por %p148, %p149
    %s151 = smul.u32 %s19, 2
    %s152 = sadd.s32 %s151, %s20
    %s153 = smul.u32 %s31, 2
    %s154 = sadd.s32 %s153, %s27
    %s155 = ssub.s32 %s152, %s154
    %p156 = scmp.eq.s32.totalorder %s155, 0
    %s158 = sadd.s32 %s157, 1
    %s159 = scalar_select %p156, %s157, %s158
    %p162 = pneg %p156
    %p163 = scmp.eq.s32.totalorder %s12, 3
    %p164 = por %p162, %p163
    %p165 = scmp.ne.s32.totalorder %s157, %s160
    %p166 = scmp.eq.s32.totalorder %s12, 0
    %p167 = por %p165, %p166
    %p168 = scmp.ne.s32.totalorder %s157, %s160
    %p169 = scmp.eq.s32.totalorder %s17, 3
    %p170 = por %p168, %p169
    %p171 = scmp.ne.s32.totalorder %s160, %s161
    %p172 = scmp.eq.s32.totalorder %s17, 0
    %p173 = por %p171, %p172
    %p174 = scmp.ne.s32.totalorder %s160, %s161
    %p175 = scmp.eq.s32.totalorder %s18, 3
    %p176 = por %p174, %p175
    %p178 = scmp.ne.s32.totalorder %s161, %s177
    %p179 = scmp.eq.s32.totalorder %s18, 0
    %p180 = por %p178, %p179
    %p181 = scmp.le.s32.totalorder 1, %s12
    %p182 = scmp.lt.s32.totalorder %s12, 5
    %p183 = pnand %p181, %p182
    %p184 = pneg %p183
    // Predicated region
    $region9: #{res_bottleneck_forward.6} parent=5 // pred_check
      _
    $region10: #{res_bottleneck_forward.6} parent=5 // pred_check_branch
      %186 = sbr.rel (%p183) target = $region12
    $region11: #{res_bottleneck_forward.6} parent=5 // pred_region
      %s187 = ssub.s32 %s12, 1
      // Predicated region
      $region13: #{res_bottleneck_forward.6} parent=11 // pred_check
        %p188 = pneg %p73
      $region14: #{res_bottleneck_forward.6} parent=11 // pred_check_branch
        %190 = sbr.rel (%p188) target = $region16
      $region15: #{res_bottleneck_forward.6} parent=11 // pred_region
        _
      $region16: #{res_bottleneck_forward.6} parent=11 // pred_fallthru
        _
      // Predicated region
      $region17: #{res_bottleneck_forward.6} parent=11 // pred_check
        %p191 = pneg %p94
      $region18: #{res_bottleneck_forward.6} parent=11 // pred_check_branch
        %193 = sbr.rel (%p191) target = $region20
      $region19: #{res_bottleneck_forward.6} parent=11 // pred_region
        _
      $region20: #{res_bottleneck_forward.6} parent=11 // pred_fallthru
        _
      // Predicated region
      $region21: #{res_bottleneck_forward.6} parent=11 // pred_check
        %p194 = pneg %p115
      $region22: #{res_bottleneck_forward.6} parent=11 // pred_check_branch
        %196 = sbr.rel (%p194) target = $region24
      $region23: #{res_bottleneck_forward.6} parent=11 // pred_region
        _
      $region24: #{res_bottleneck_forward.6} parent=11 // pred_fallthru
        _
    $region12: #{res_bottleneck_forward.6} parent=5 // pred_fallthru
      _
    %p197 = scmp.lt.s32.totalorder %s12, 4
    // Predicated region
    $region25: #{res_bottleneck_forward.6} parent=5 // pred_check
      %p198 = pneg %p197
    $region26: #{res_bottleneck_forward.6} parent=5 // pred_check_branch
      %200 = sbr.rel (%p198) target = $region28
    $region27: #{res_bottleneck_forward.6} parent=5 // pred_region
      // Predicated region
      $region29: #{res_bottleneck_forward.6} parent=27 // pred_check
        %p201 = pneg %p46
      $region30: #{res_bottleneck_forward.6} parent=27 // pred_check_branch
        %203 = sbr.rel (%p201) target = $region32
      $region31: #{res_bottleneck_forward.6} parent=27 // pred_region
        %s204 = smul.u32 4, %s20
        %p205 = scmp.lt.s32.totalorder %s19, 1
        %s206 = scalar_select %p205, %s19, 1
        %p207 = scmp.lt.s32.totalorder %s204, 7
        %s208 = scalar_select %p207, %s204, 7
        %s209 = smul.addr %s206, 8
        %s210 = sadd.s32 %s208, %s209
        %s211 = smul.addr %s210, 4
        %s212 = scalar_lea.vmem %s0, %s211
        %s213 = smul.u32 4, %s20
      $region32: #{res_bottleneck_forward.6} parent=27 // pred_fallthru
        _
    $region28: #{res_bottleneck_forward.6} parent=5 // pred_fallthru
      _
    %p214 = scmp.le.s32.totalorder 1, %s12
    %p215 = scmp.lt.s32.totalorder %s12, 5
    %p216 = pnand %p214, %p215
    %p217 = pneg %p216
    // Predicated region
    $region33: #{res_bottleneck_forward.6} parent=5 // pred_check
      _
    $region34: #{res_bottleneck_forward.6} parent=5 // pred_check_branch
      %219 = sbr.rel (%p216) target = $region36
    $region35: #{res_bottleneck_forward.6} parent=5 // pred_region
      %s220 = ssub.s32 %s12, 1
      %s221 = smul.u32 4, %s22
      %p222 = scmp.lt.s32.totalorder %s21, 1
      %s223 = scalar_select %p222, %s21, 1
      %p224 = scmp.lt.s32.totalorder %s221, 7
      %s225 = scalar_select %p224, %s221, 7
      %s226 = smul.addr %s223, 8
      %s227 = sadd.s32 %s225, %s226
      %s228 = smul.addr %s227, 4
      %s229 = scalar_lea.vmem %s0, %s228
      %p230 = pneg %p52
      %p231 = pneg %p49
      %p232 = pneg %p73
      %p233 = pneg %p70
      %p234 = pneg %p94
      %p235 = pneg %p91
      %p236 = pneg %p115
      %p237 = pneg %p112
      %p238 = pneg %p143
      %p239 = pneg %p140
      %s240 = smul.u32 4, %s22
      %p241 = scmp.lt.s32.totalorder %s21, 1
      %s242 = scalar_select %p241, %s21, 1
      %p243 = scmp.lt.s32.totalorder %s240, 7
      %s244 = scalar_select %p243, %s240, 7
      %s245 = smul.addr %s242, 8
      %s246 = sadd.s32 %s244, %s245
      %s247 = smul.addr %s246, 4
      %s248 = scalar_lea.vmem %s4, %s247
      %p249 = pneg %p173
      %p250 = pneg %p170
      %s251 = smul.u32 %s21, 2
      %s252 = sadd.s32 %s251, %s22
      %p253 = scmp.lt.s32.totalorder %s252, 3
      %s254 = scalar_select %p253, %s252, 3
      %s255 = smul.addr %s254, 2
      %s256 = scalar_lea.vmem %s5, %s255
      %s257 = smul.u32 4, %s22
      %p258 = scmp.lt.s32.totalorder %s21, 1
      %s259 = scalar_select %p258, %s21, 1
      %p260 = scmp.lt.s32.totalorder %s257, 7
      %s261 = scalar_select %p260, %s257, 7
      %s262 = smul.addr %s259, 8
      %s263 = sadd.s32 %s261, %s262
      %s264 = smul.addr %s263, 4
      %s265 = scalar_lea.vmem %s0, %s264
      %s266 = smul.u32 4, %s22
      %s267 = smul.u32 4, %s22
      %p268 = scmp.lt.s32.totalorder %s21, 1
      %s269 = scalar_select %p268, %s21, 1
      %p270 = scmp.lt.s32.totalorder %s267, 7
      %s271 = scalar_select %p270, %s267, 7
      %s272 = smul.addr %s269, 8
      %s273 = sadd.s32 %s271, %s272
      %s274 = smul.addr %s273, 4
      %s275 = scalar_lea.vmem %s4, %s274
      %s276 = smul.u32 4, %s22
      %s277 = smul.u32 %s21, 2
      %s278 = sadd.s32 %s277, %s22
      %p279 = scmp.lt.s32.totalorder %s278, 3
      %s280 = scalar_select %p279, %s278, 3
      %s281 = smul.addr %s280, 2
      %s282 = scalar_lea.vmem %s5, %s281
      %s283 = smul.u32 %s21, 2
      %s284 = sadd.s32 %s283, %s22
      %v286 = vld [vmem:[%s1] sm:$0x1]
      %v287 = vld [vmem:[%s2] sm:$0x1]
      %v288 = vld [vmem:[%s265] sm:$0xf]
      %v289 = vld [vmem:[%s265 + $0x4] sm:$0xf]
      %v290 = vld [vmem:[%s265 + $0x8] sm:$0xf]
      %v291 = vld [vmem:[%s265 + $0xc] sm:$0xf]
      %v292 = vunpack.c.l.bf16 %v288
      %v293 = vunpack.c.l.bf16 %v289
      %v294 = vunpack.c.l.bf16 %v290
      %v295 = vunpack.c.l.bf16 %v291
      %v297 = vlaneseq
      %v298 = vshrl.u32 %v297, 7
      %v299 = vsub.s32 0, %v298
      %v300 = vrot.slane %v286, %v299
      %v302 = vmul.f32 %v292, %v300
      %v303 = vmul.f32 %v293, %v300
      %v304 = vmul.f32 %v294, %v300
      %v305 = vmul.f32 %v295, %v300
      %v307 = vlaneseq
      %v308 = vshrl.u32 %v307, 7
      %v309 = vsub.s32 0, %v308
      %v310 = vrot.slane %v287, %v309
      %v312 = vadd.f32 %v302, %v310
      %v313 = vadd.f32 %v303, %v310
      %v314 = vadd.f32 %v304, %v310
      %v315 = vadd.f32 %v305, %v310
      %v316 = vmax.f32 %v312, 0.0
      %v317 = vmax.f32 %v313, 0.0
      %v318 = vmax.f32 %v314, 0.0
      %v319 = vmax.f32 %v315, 0.0
      %v320 = vpack.c.bf16 %v316, %v316
      %v321 = vpack.c.bf16 %v317, %v317
      %v322 = vpack.c.bf16 %v318, %v318
      %v323 = vpack.c.bf16 %v319, %v319
      %v324 = vld [vmem:[%s3] sm:$0xf]
      %v325 = vld [vmem:[%s3 + $0x4] sm:$0xf]
      %v326 = vld [vmem:[%s3 + $0x8] sm:$0xf]
      %v327 = vld [vmem:[%s3 + $0xc] sm:$0xf]
      %v328 = vld [vmem:[%s3 + $0x10] sm:$0xf]
      %v329 = vld [vmem:[%s3 + $0x14] sm:$0xf]
      %v330 = vld [vmem:[%s3 + $0x18] sm:$0xf]
      %v331 = vld [vmem:[%s3 + $0x1c] sm:$0xf]
      %v332 = vld [vmem:[%s3 + $0x20] sm:$0xf]
      %v333 = vld [vmem:[%s3 + $0x24] sm:$0xf]
      %v334 = vld [vmem:[%s3 + $0x28] sm:$0xf]
      %v335 = vld [vmem:[%s3 + $0x2c] sm:$0xf]
      %v336 = vld [vmem:[%s3 + $0x30] sm:$0xf]
      %v337 = vld [vmem:[%s3 + $0x34] sm:$0xf]
      %v338 = vld [vmem:[%s3 + $0x38] sm:$0xf]
      %v339 = vld [vmem:[%s3 + $0x3c] sm:$0xf]
      %v344 = vunpack.c.l.b16 %v320
      %v345 = vunpack.c.l.b16 %v321
      %v346 = vunpack.c.l.b16 %v322
      %v347 = vunpack.c.l.b16 %v323
      %v348 = vpack.c.b16 %v345, %v344
      %v349 = vpack.c.b16 %v347, %v346
      %v368 = vunpack.c.l.b16 %v324
      %v369 = vunpack.c.l.b16 %v325
      %v370 = vunpack.c.l.b16 %v326
      %v371 = vunpack.c.l.b16 %v327
      %v372 = vunpack.c.l.b16 %v328
      %v373 = vunpack.c.l.b16 %v329
      %v374 = vunpack.c.l.b16 %v330
      %v375 = vunpack.c.l.b16 %v331
      %v376 = vunpack.c.l.b16 %v332
      %v377 = vunpack.c.l.b16 %v333
      %v378 = vunpack.c.l.b16 %v334
      %v379 = vunpack.c.l.b16 %v335
      %v380 = vunpack.c.l.b16 %v336
      %v381 = vunpack.c.l.b16 %v337
      %v382 = vunpack.c.l.b16 %v338
      %v383 = vunpack.c.l.b16 %v339
      %v384 = vpack.c.b16 %v369, %v368
      %v385 = vpack.c.b16 %v371, %v370
      %v386 = vpack.c.b16 %v373, %v372
      %v387 = vpack.c.b16 %v375, %v374
      %v388 = vpack.c.b16 %v377, %v376
      %v389 = vpack.c.b16 %v379, %v378
      %v390 = vpack.c.b16 %v381, %v380
      %v391 = vpack.c.b16 %v383, %v382
      %400 = vmatprep.subr.bf16.mxu0 0
      %401 = vmatpush1.bf16.msra.mxu0 %v391
      %402 = vmatprep.subr.bf16.mxu0 0
      %403 = vmatpush1.bf16.msra.mxu0 %v390
      %404 = vmatprep.subr.bf16.mxu0 0
      %405 = vmatpush1.bf16.msra.mxu0 %v389
      %406 = vmatprep.subr.bf16.mxu0 0
      %407 = vmatpush1.bf16.msra.mxu0 %v388
      %408 = vmatprep.subr.bf16.mxu0 0
      %409 = vmatpush1.bf16.msra.mxu0 %v387
      %410 = vmatprep.subr.bf16.mxu0 0
      %411 = vmatpush1.bf16.msra.mxu0 %v386
      %412 = vmatprep.subr.bf16.mxu0 0
      %413 = vmatpush1.bf16.msra.mxu0 %v385
      %414 = vmatprep.subr.bf16.mxu0 0
      %415 = vmatpush1.bf16.msra.mxu0 %v384
      %416 = vmatprep.subr.bf16.mxu0 0
      %417 = vmatpush2.bf16.msra.mxu0 0
      %418 = vmatprep.subr.bf16.mxu0 0
      %419 = vmatpush2.bf16.msra.mxu0 0
      %420 = vmatprep.subr.bf16.mxu0 0
      %421 = vmatpush2.bf16.msra.mxu0 0
      %422 = vmatprep.subr.bf16.mxu0 0
      %423 = vmatpush2.bf16.msra.mxu0 0
      %424 = vmatprep.subr.bf16.mxu0 0
      %425 = vmatpush2.bf16.msra.mxu0 0
      %426 = vmatprep.subr.bf16.mxu0 0
      %427 = vmatpush2.bf16.msra.mxu0 0
      %428 = vmatprep.subr.bf16.mxu0 0
      %429 = vmatpush2.bf16.msra.mxu0 0
      %430 = vmatprep.subr.bf16.mxu0 0
      %431 = vmatpush2.bf16.msra.mxu0 0
      %432 = vmatprep.mubr.bf16.mxu0 0
      %433 = vmatmul.mubr.bf16.gmra.mxu0 %v348
      %v434 = vpop.f32.mrf.mxu0
      %v435 = vadd.f32 0.0, %v434
      %v436 = vpop.f32.mrf.mxu0
      %v437 = vpop.f32.mrf.mxu0
      %v438 = vadd.f32 0.0, %v437
      %v439 = vpop.f32.mrf.mxu0
      %440 = vmatprep.mubr.bf16.mxu0 0
      %441 = vmatmul.mubr.bf16.gmra.mxu0 %v349
      %v442 = vpop.f32.mrf.mxu0
      %v443 = vadd.f32 0.0, %v442
      %v444 = vpop.f32.mrf.mxu0
      %v445 = vpop.f32.mrf.mxu0
      %v446 = vadd.f32 0.0, %v445
      %v447 = vpop.f32.mrf.mxu0
      %448 = vdwg.mxu0
      %v449 = vpack.c.bf16 %v438, %v435
      %v450 = vpack.c.bf16 %v446, %v443
      %v453 = vunpack.c.l.b16 %v449
      %v454 = vunpack.c.h.b16 %v449
      %v455 = vunpack.c.l.b16 %v450
      %v456 = vunpack.c.h.b16 %v450
      %v457 = vpack.c.b16 %v453, %v453
      %v458 = vpack.c.b16 %v454, %v454
      %v459 = vpack.c.b16 %v455, %v455
      %v460 = vpack.c.b16 %v456, %v456
      %465 = vst [vmem:[%s275] sm:$0xf] %v457
      %466 = vst [vmem:[%s275 + $0x4] sm:$0xf] %v458
      %467 = vst [vmem:[%s275 + $0x8] sm:$0xf] %v459
      %468 = vst [vmem:[%s275 + $0xc] sm:$0xf] %v460
      %v469 = vadd.f32 %v435, %v438
      %v470 = vadd.f32 %v469, %v443
      %v471 = vadd.f32 %v470, %v446
      %v472 = vrot.slane %v471, 4
      %v473 = vadd.f32 %v471, %v472
      %v474 = vrot.slane %v473, 2
      %v475 = vadd.f32 %v473, %v474
      %v476 = vrot.slane %v475, 1
      %v477 = vadd.f32 %v475, %v476
      %v478 = vmul.f32 %v435, %v435
      %v479 = vmul.f32 %v438, %v438
      %v480 = vmul.f32 %v443, %v443
      %v481 = vmul.f32 %v446, %v446
      %v482 = vadd.f32 %v478, %v479
      %v483 = vadd.f32 %v482, %v480
      %v484 = vadd.f32 %v483, %v481
      %v485 = vrot.slane %v484, 4
      %v486 = vadd.f32 %v484, %v485
      %v487 = vrot.slane %v486, 2
      %v488 = vadd.f32 %v486, %v487
      %v489 = vrot.slane %v488, 1
      %v490 = vadd.f32 %v488, %v489
      %vm491 = vcmask 1040384
      %v492 = vsel %vm491, %v477, %v490
      %493 = vst [vmem:[%s282] sm:$0x3] %v492
      %s494 = smul.u32 4, %s22
      %p495 = scmp.lt.s32.totalorder %s21, 1
      %s496 = scalar_select %p495, %s21, 1
      %p497 = scmp.lt.s32.totalorder %s494, 7
      %s498 = scalar_select %p497, %s494, 7
      %s499 = smul.addr %s496, 8
      %s500 = sadd.s32 %s498, %s499
      %s501 = smul.addr %s500, 4
      %s502 = scalar_lea.vmem %s4, %s501
      %s503 = smul.u32 %s21, 2
      %s504 = sadd.s32 %s503, %s22
      %p505 = scmp.lt.s32.totalorder %s504, 3
      %s506 = scalar_select %p505, %s504, 3
      %s507 = smul.addr %s506, 2
      %s508 = scalar_lea.vmem %s5, %s507
      // Predicated region
      $region37: #{res_bottleneck_forward.6} parent=35 // pred_check
        %p509 = pneg %p140
      $region38: #{res_bottleneck_forward.6} parent=35 // pred_check_branch
        %511 = sbr.rel (%p509) target = $region40
      $region39: #{res_bottleneck_forward.6} parent=35 // pred_region
        %s512 = smul.u32 4, %s22
      $region40: #{res_bottleneck_forward.6} parent=35 // pred_fallthru
        _
      // Predicated region
      $region41: #{res_bottleneck_forward.6} parent=35 // pred_check
        %p513 = pneg %p170
      $region42: #{res_bottleneck_forward.6} parent=35 // pred_check_branch
        %515 = sbr.rel (%p513) target = $region44
      $region43: #{res_bottleneck_forward.6} parent=35 // pred_region
        %s516 = smul.u32 %s21, 2
        %s517 = sadd.s32 %s516, %s22
      $region44: #{res_bottleneck_forward.6} parent=35 // pred_fallthru
        _
    $region36: #{res_bottleneck_forward.6} parent=5 // pred_fallthru
      _
    %p518 = scmp.le.s32.totalorder 2, %s12
    // Predicated region
    $region45: #{res_bottleneck_forward.6} parent=5 // pred_check
      %p519 = pneg %p518
    $region46: #{res_bottleneck_forward.6} parent=5 // pred_check_branch
      %521 = sbr.rel (%p519) target = $region48
    $region47: #{res_bottleneck_forward.6} parent=5 // pred_region
      %s522 = ssub.s32 %s12, 2
      // Predicated region
      $region49: #{res_bottleneck_forward.6} parent=47 // pred_check
        %p523 = pneg %p146
      $region50: #{res_bottleneck_forward.6} parent=47 // pred_check_branch
        %525 = sbr.rel (%p523) target = $region52
      $region51: #{res_bottleneck_forward.6} parent=47 // pred_region
        %s526 = smul.u32 4, %s24
        %p527 = scmp.lt.s32.totalorder %s23, 1
        %s528 = scalar_select %p527, %s23, 1
        %p529 = scmp.lt.s32.totalorder %s526, 7
        %s530 = scalar_select %p529, %s526, 7
        %s531 = smul.addr %s528, 8
        %s532 = sadd.s32 %s530, %s531
        %s533 = smul.addr %s532, 4
        %s534 = scalar_lea.vmem %s4, %s533
      $region52: #{res_bottleneck_forward.6} parent=47 // pred_fallthru
        _
      // Predicated region
      $region53: #{res_bottleneck_forward.6} parent=47 // pred_check
        %p535 = pneg %p176
      $region54: #{res_bottleneck_forward.6} parent=47 // pred_check_branch
        %537 = sbr.rel (%p535) target = $region56
      $region55: #{res_bottleneck_forward.6} parent=47 // pred_region
        %s538 = smul.u32 %s23, 2
        %s539 = sadd.s32 %s538, %s24
        %p540 = scmp.lt.s32.totalorder %s539, 3
        %s541 = scalar_select %p540, %s539, 3
        %s542 = smul.addr %s541, 2
        %s543 = scalar_lea.vmem %s5, %s542
      $region56: #{res_bottleneck_forward.6} parent=47 // pred_fallthru
        _
    $region48: #{res_bottleneck_forward.6} parent=5 // pred_fallthru
      _
  $region6: #{res_bottleneck_forward.6} parent=0 // loop_footer
    %s16 = sadd.s32 1, %s12
  $region7: #{res_bottleneck_forward.6} parent=0 // loop_footer_branch
    %11 = sbr.rel target = $region3
  $region8: #{res_bottleneck_forward.6} parent=0 // loop_exit
    _

// kernel: res_bottleneck_forward.7
$region0: #{res_bottleneck_forward.7}
  #allocation0 [shape = 'u32[]', space=smem, size = 0x4, offset = 0x4, fixed_abs, tag = 'smem constant byte address 0x4 - core index']
  #allocation1 [shape = 'u32[144,128]{1,0:T(1,128)}', space=vmem, size = 0x12000, scoped, tag = 'internal scratch']
  %s0 = inlined_call_operand.vmem [shape: bf16[2,8,8,128], index: 0, kind: input, shape index: {}]
  %s1 = inlined_call_operand.vmem [shape: f32[1,128], index: 1, kind: input, shape index: {}]
  %s2 = inlined_call_operand.vmem [shape: f32[1,128], index: 2, kind: input, shape index: {}]
  %s3 = inlined_call_operand.vmem [shape: bf16[2,8,8,128], index: 3, kind: input, shape index: {}]
  %s4 = inlined_call_operand.vmem [shape: f32[1,128], index: 4, kind: input, shape index: {}]
  %s5 = inlined_call_operand.vmem [shape: f32[1,128], index: 5, kind: input, shape index: {}]
  %s6 = inlined_call_operand.vmem [shape: f32[2,8,8,128], index: 6, kind: output, shape index: {}]
  %s7 = sld [smem:[#allocation0]]
  $region57: #{res_bottleneck_forward.7} parent=0
    _
  %s9 = ssub.s32 1, %s7
  %s10 = scalar_select 0, %s9, %s7
  loop: start=0, step=1, limit=6
  $region2: #{res_bottleneck_forward.7} parent=0 // loop_pre_header
    _
  $region3: #{res_bottleneck_forward.7} parent=0 // loop_header
    %s12 = sphi 0, %s16
    %p13 = scmp.ge.s32.totalorder %s12, 6
    %s19 = sphi 0, %s31
    %s20 = sphi 0, %s27
    %s21 = sphi 0, %s19
    %s22 = sphi 0, %s20
    %s23 = sphi 0, %s21
    %s24 = sphi 0, %s22
    %s36 = sphi 0, %s38
    %s39 = sphi 0, %s36
    %s40 = sphi 0, %s39
    %s56 = sphi 0, %s40
    %s60 = sphi 0, %s60
    %s62 = sphi 0, %s60
    %s63 = sphi 0, %s62
    %s77 = sphi 0, %s63
    %s81 = sphi 0, %s81
    %s83 = sphi 0, %s81
    %s84 = sphi 0, %s83
    %s98 = sphi 0, %s84
    %s106 = sphi 0, %s108
    %s109 = sphi 0, %s106
    %s110 = sphi 0, %s109
    %s126 = sphi 0, %s110
    %s130 = sphi 0, %s130
    %s132 = sphi 0, %s130
    %s133 = sphi 0, %s132
    %s147 = sphi 0, %s133
    %s151 = sphi 0, %s151
    %s153 = sphi 0, %s151
    %s154 = sphi 0, %s153
    %s168 = sphi 0, %s154
    %s176 = sphi 0, %s178
    %s179 = sphi 0, %s176
    %s180 = sphi 0, %s179
    %s196 = sphi 0, %s180
  $region4: #{res_bottleneck_forward.7} parent=0 // loop_header_branch
    %15 = sbr.rel (%p13) target = $region8
  $region5: #{res_bottleneck_forward.7} parent=0 // loop_body
    %s17 = ssub.s32 %s12, 1
    %s18 = ssub.s32 %s12, 2
    %s25 = sadd.s32 1, %s20
    %p26 = scmp.ge.s32.totalorder %s25, 2
    %s27 = scalar_select %p26, 0, %s25
    %s28 = sadd.s32 1, %s19
    %s29 = scalar_select %p26, %s28, %s19
    %p30 = scmp.ge.s32.totalorder %s29, 2
    %s31 = scalar_select %p30, 0, %s29
    %s32 = ssub.s32 %s19, %s31
    %s33 = ssub.s32 %s20, %s27
    %s34 = sor.u32 %s32, %s33
    %p35 = scmp.eq.s32.totalorder %s34, 0
    %s37 = sadd.s32 %s36, 1
    %s38 = scalar_select %p35, %s36, %s37
    %p41 = pneg %p35
    %p42 = scmp.eq.s32.totalorder %s12, 3
    %p43 = por %p41, %p42
    %p44 = scmp.ne.s32.totalorder %s36, %s39
    %p45 = scmp.eq.s32.totalorder %s12, 0
    %p46 = por %p44, %p45
    %p47 = scmp.ne.s32.totalorder %s36, %s39
    %p48 = scmp.eq.s32.totalorder %s17, 3
    %p49 = por %p47, %p48
    %p50 = scmp.ne.s32.totalorder %s39, %s40
    %p51 = scmp.eq.s32.totalorder %s17, 0
    %p52 = por %p50, %p51
    %p53 = scmp.ne.s32.totalorder %s39, %s40
    %p54 = scmp.eq.s32.totalorder %s18, 3
    %p55 = por %p53, %p54
    %p57 = scmp.ne.s32.totalorder %s40, %s56
    %p58 = scmp.eq.s32.totalorder %s18, 0
    %p59 = por %p57, %p58
    %s61 = sadd.s32 %s60, 1
    %p64 = scmp.eq.s32.totalorder %s12, 3
    %p65 = scmp.ne.s32.totalorder %s60, %s62
    %p66 = scmp.eq.s32.totalorder %s12, 0
    %p67 = por %p65, %p66
    %p68 = scmp.ne.s32.totalorder %s60, %s62
    %p69 = scmp.eq.s32.totalorder %s17, 3
    %p70 = por %p68, %p69
    %p71 = scmp.ne.s32.totalorder %s62, %s63
    %p72 = scmp.eq.s32.totalorder %s17, 0
    %p73 = por %p71, %p72
    %p74 = scmp.ne.s32.totalorder %s62, %s63
    %p75 = scmp.eq.s32.totalorder %s18, 3
    %p76 = por %p74, %p75
    %p78 = scmp.ne.s32.totalorder %s63, %s77
    %p79 = scmp.eq.s32.totalorder %s18, 0
    %p80 = por %p78, %p79
    %s82 = sadd.s32 %s81, 1
    %p85 = scmp.eq.s32.totalorder %s12, 3
    %p86 = scmp.ne.s32.totalorder %s81, %s83
    %p87 = scmp.eq.s32.totalorder %s12, 0
    %p88 = por %p86, %p87
    %p89 = scmp.ne.s32.totalorder %s81, %s83
    %p90 = scmp.eq.s32.totalorder %s17, 3
    %p91 = por %p89, %p90
    %p92 = scmp.ne.s32.totalorder %s83, %s84
    %p93 = scmp.eq.s32.totalorder %s17, 0
    %p94 = por %p92, %p93
    %p95 = scmp.ne.s32.totalorder %s83, %s84
    %p96 = scmp.eq.s32.totalorder %s18, 3
    %p97 = por %p95, %p96
    %p99 = scmp.ne.s32.totalorder %s84, %s98
    %p100 = scmp.eq.s32.totalorder %s18, 0
    %p101 = por %p99, %p100
    %s102 = ssub.s32 %s19, %s31
    %s103 = ssub.s32 %s20, %s27
    %s104 = sor.u32 %s102, %s103
    %p105 = scmp.eq.s32.totalorder %s104, 0
    %s107 = sadd.s32 %s106, 1
    %s108 = scalar_select %p105, %s106, %s107
    %p111 = pneg %p105
    %p112 = scmp.eq.s32.totalorder %s12, 3
    %p113 = por %p111, %p112
    %p114 = scmp.ne.s32.totalorder %s106, %s109
    %p115 = scmp.eq.s32.totalorder %s12, 0
    %p116 = por %p114, %p115
    %p117 = scmp.ne.s32.totalorder %s106, %s109
    %p118 = scmp.eq.s32.totalorder %s17, 3
    %p119 = por %p117, %p118
    %p120 = scmp.ne.s32.totalorder %s109, %s110
    %p121 = scmp.eq.s32.totalorder %s17, 0
    %p122 = por %p120, %p121
    %p123 = scmp.ne.s32.totalorder %s109, %s110
    %p124 = scmp.eq.s32.totalorder %s18, 3
    %p125 = por %p123, %p124
    %p127 = scmp.ne.s32.totalorder %s110, %s126
    %p128 = scmp.eq.s32.totalorder %s18, 0
    %p129 = por %p127, %p128
    %s131 = sadd.s32 %s130, 1
    %p134 = scmp.eq.s32.totalorder %s12, 3
    %p135 = scmp.ne.s32.totalorder %s130, %s132
    %p136 = scmp.eq.s32.totalorder %s12, 0
    %p137 = por %p135, %p136
    %p138 = scmp.ne.s32.totalorder %s130, %s132
    %p139 = scmp.eq.s32.totalorder %s17, 3
    %p140 = por %p138, %p139
    %p141 = scmp.ne.s32.totalorder %s132, %s133
    %p142 = scmp.eq.s32.totalorder %s17, 0
    %p143 = por %p141, %p142
    %p144 = scmp.ne.s32.totalorder %s132, %s133
    %p145 = scmp.eq.s32.totalorder %s18, 3
    %p146 = por %p144, %p145
    %p148 = scmp.ne.s32.totalorder %s133, %s147
    %p149 = scmp.eq.s32.totalorder %s18, 0
    %p150 = por %p148, %p149
    %s152 = sadd.s32 %s151, 1
    %p155 = scmp.eq.s32.totalorder %s12, 3
    %p156 = scmp.ne.s32.totalorder %s151, %s153
    %p157 = scmp.eq.s32.totalorder %s12, 0
    %p158 = por %p156, %p157
    %p159 = scmp.ne.s32.totalorder %s151, %s153
    %p160 = scmp.eq.s32.totalorder %s17, 3
    %p161 = por %p159, %p160
    %p162 = scmp.ne.s32.totalorder %s153, %s154
    %p163 = scmp.eq.s32.totalorder %s17, 0
    %p164 = por %p162, %p163
    %p165 = scmp.ne.s32.totalorder %s153, %s154
    %p166 = scmp.eq.s32.totalorder %s18, 3
    %p167 = por %p165, %p166
    %p169 = scmp.ne.s32.totalorder %s154, %s168
    %p170 = scmp.eq.s32.totalorder %s18, 0
    %p171 = por %p169, %p170
    %s172 = ssub.s32 %s19, %s31
    %s173 = ssub.s32 %s20, %s27
    %s174 = sor.u32 %s172, %s173
    %p175 = scmp.eq.s32.totalorder %s174, 0
    %s177 = sadd.s32 %s176, 1
    %s178 = scalar_select %p175, %s176, %s177
    %p181 = pneg %p175
    %p182 = scmp.eq.s32.totalorder %s12, 3
    %p183 = por %p181, %p182
    %p184 = scmp.ne.s32.totalorder %s176, %s179
    %p185 = scmp.eq.s32.totalorder %s12, 0
    %p186 = por %p184, %p185
    %p187 = scmp.ne.s32.totalorder %s176, %s179
    %p188 = scmp.eq.s32.totalorder %s17, 3
    %p189 = por %p187, %p188
    %p190 = scmp.ne.s32.totalorder %s179, %s180
    %p191 = scmp.eq.s32.totalorder %s17, 0
    %p192 = por %p190, %p191
    %p193 = scmp.ne.s32.totalorder %s179, %s180
    %p194 = scmp.eq.s32.totalorder %s18, 3
    %p195 = por %p193, %p194
    %p197 = scmp.ne.s32.totalorder %s180, %s196
    %p198 = scmp.eq.s32.totalorder %s18, 0
    %p199 = por %p197, %p198
    %p200 = scmp.le.s32.totalorder 1, %s12
    %p201 = scmp.lt.s32.totalorder %s12, 5
    %p202 = pnand %p200, %p201
    %p203 = pneg %p202
    // Predicated region
    $region9: #{res_bottleneck_forward.7} parent=5 // pred_check
      _
    $region10: #{res_bottleneck_forward.7} parent=5 // pred_check_branch
      %205 = sbr.rel (%p202) target = $region12
    $region11: #{res_bottleneck_forward.7} parent=5 // pred_region
      %s206 = ssub.s32 %s12, 1
      // Predicated region
      $region13: #{res_bottleneck_forward.7} parent=11 // pred_check
        %p207 = pneg %p73
      $region14: #{res_bottleneck_forward.7} parent=11 // pred_check_branch
        %209 = sbr.rel (%p207) target = $region16
      $region15: #{res_bottleneck_forward.7} parent=11 // pred_region
        _
      $region16: #{res_bottleneck_forward.7} parent=11 // pred_fallthru
        _
      // Predicated region
      $region17: #{res_bottleneck_forward.7} parent=11 // pred_check
        %p210 = pneg %p94
      $region18: #{res_bottleneck_forward.7} parent=11 // pred_check_branch
        %212 = sbr.rel (%p210) target = $region20
      $region19: #{res_bottleneck_forward.7} parent=11 // pred_region
        _
      $region20: #{res_bottleneck_forward.7} parent=11 // pred_fallthru
        _
      // Predicated region
      $region21: #{res_bottleneck_forward.7} parent=11 // pred_check
        %p213 = pneg %p143
      $region22: #{res_bottleneck_forward.7} parent=11 // pred_check_branch
        %215 = sbr.rel (%p213) target = $region24
      $region23: #{res_bottleneck_forward.7} parent=11 // pred_region
        _
      $region24: #{res_bottleneck_forward.7} parent=11 // pred_fallthru
        _
      // Predicated region
      $region25: #{res_bottleneck_forward.7} parent=11 // pred_check
        %p216 = pneg %p164
      $region26: #{res_bottleneck_forward.7} parent=11 // pred_check_branch
        %218 = sbr.rel (%p216) target = $region28
      $region27: #{res_bottleneck_forward.7} parent=11 // pred_region
        _
      $region28: #{res_bottleneck_forward.7} parent=11 // pred_fallthru
        _
    $region12: #{res_bottleneck_forward.7} parent=5 // pred_fallthru
      _
    %p219 = scmp.lt.s32.totalorder %s12, 4
    // Predicated region
    $region29: #{res_bottleneck_forward.7} parent=5 // pred_check
      %p220 = pneg %p219
    $region30: #{res_bottleneck_forward.7} parent=5 // pred_check_branch
      %222 = sbr.rel (%p220) target = $region32
    $region31: #{res_bottleneck_forward.7} parent=5 // pred_region
      // Predicated region
      $region33: #{res_bottleneck_forward.7} parent=31 // pred_check
        %p223 = pneg %p46
      $region34: #{res_bottleneck_forward.7} parent=31 // pred_check_branch
        %225 = sbr.rel (%p223) target = $region36
      $region35: #{res_bottleneck_forward.7} parent=31 // pred_region
        %s226 = smul.u32 4, %s20
        %p227 = scmp.lt.s32.totalorder %s19, 1
        %s228 = scalar_select %p227, %s19, 1
        %p229 = scmp.lt.s32.totalorder %s226, 7
        %s230 = scalar_select %p229, %s226, 7
        %s231 = smul.addr %s228, 8
        %s232 = sadd.s32 %s230, %s231
        %s233 = smul.addr %s232, 4
        %s234 = scalar_lea.vmem %s0, %s233
        %s235 = smul.u32 4, %s20
      $region36: #{res_bottleneck_forward.7} parent=31 // pred_fallthru
        _
      // Predicated region
      $region37: #{res_bottleneck_forward.7} parent=31 // pred_check
        %p236 = pneg %p116
      $region38: #{res_bottleneck_forward.7} parent=31 // pred_check_branch
        %238 = sbr.rel (%p236) target = $region40
      $region39: #{res_bottleneck_forward.7} parent=31 // pred_region
        %s239 = smul.u32 4, %s20
        %p240 = scmp.lt.s32.totalorder %s19, 1
        %s241 = scalar_select %p240, %s19, 1
        %p242 = scmp.lt.s32.totalorder %s239, 7
        %s243 = scalar_select %p242, %s239, 7
        %s244 = smul.addr %s241, 8
        %s245 = sadd.s32 %s243, %s244
        %s246 = smul.addr %s245, 4
        %s247 = scalar_lea.vmem %s3, %s246
        %s248 = smul.u32 4, %s20
      $region40: #{res_bottleneck_forward.7} parent=31 // pred_fallthru
        _
    $region32: #{res_bottleneck_forward.7} parent=5 // pred_fallthru
      _
    %p249 = scmp.le.s32.totalorder 1, %s12
    %p250 = scmp.lt.s32.totalorder %s12, 5
    %p251 = pnand %p249, %p250
    %p252 = pneg %p251
    // Predicated region
    $region41: #{res_bottleneck_forward.7} parent=5 // pred_check
      _
    $region42: #{res_bottleneck_forward.7} parent=5 // pred_check_branch
      %254 = sbr.rel (%p251) target = $region44
    $region43: #{res_bottleneck_forward.7} parent=5 // pred_region
      %s255 = ssub.s32 %s12, 1
      %s256 = smul.u32 4, %s22
      %p257 = scmp.lt.s32.totalorder %s21, 1
      %s258 = scalar_select %p257, %s21, 1
      %p259 = scmp.lt.s32.totalorder %s256, 7
      %s260 = scalar_select %p259, %s256, 7
      %s261 = smul.addr %s258, 8
      %s262 = sadd.s32 %s260, %s261
      %s263 = smul.addr %s262, 4
      %s264 = scalar_lea.vmem %s0, %s263
      %p265 = pneg %p52
      %p266 = pneg %p49
      %p267 = pneg %p73
      %p268 = pneg %p70
      %p269 = pneg %p94
      %p270 = pneg %p91
      %s271 = smul.u32 4, %s22
      %p272 = scmp.lt.s32.totalorder %s21, 1
      %s273 = scalar_select %p272, %s21, 1
      %p274 = scmp.lt.s32.totalorder %s271, 7
      %s275 = scalar_select %p274, %s271, 7
      %s276 = smul.addr %s273, 8
      %s277 = sadd.s32 %s275, %s276
      %s278 = smul.addr %s277, 4
      %s279 = scalar_lea.vmem %s3, %s278
      %p280 = pneg %p122
      %p281 = pneg %p119
      %p282 = pneg %p143
      %p283 = pneg %p140
      %p284 = pneg %p164
      %p285 = pneg %p161
      %p286 = pneg %p192
      %p287 = pneg %p189
      %s288 = smul.u32 4, %s22
      %p289 = scmp.lt.s32.totalorder %s21, 1
      %s290 = scalar_select %p289, %s21, 1
      %p291 = scmp.lt.s32.totalorder %s288, 7
      %s292 = scalar_select %p291, %s288, 7
      %s293 = smul.addr %s290, 8
      %s294 = sadd.s32 %s292, %s293
      %s295 = smul.addr %s294, 8
      %s296 = scalar_lea.vmem %s6, %s295
      %s297 = smul.u32 4, %s22
      %p298 = scmp.lt.s32.totalorder %s21, 1
      %s299 = scalar_select %p298, %s21, 1
      %p300 = scmp.lt.s32.totalorder %s297, 7
      %s301 = scalar_select %p300, %s297, 7
      %s302 = smul.addr %s299, 8
      %s303 = sadd.s32 %s301, %s302
      %s304 = smul.addr %s303, 4
      %s305 = scalar_lea.vmem %s0, %s304
      %s306 = smul.u32 4, %s22
      %s307 = smul.u32 4, %s22
      %p308 = scmp.lt.s32.totalorder %s21, 1
      %s309 = scalar_select %p308, %s21, 1
      %p310 = scmp.lt.s32.totalorder %s307, 7
      %s311 = scalar_select %p310, %s307, 7
      %s312 = smul.addr %s309, 8
      %s313 = sadd.s32 %s311, %s312
      %s314 = smul.addr %s313, 4
      %s315 = scalar_lea.vmem %s3, %s314
      %s316 = smul.u32 4, %s22
      %s317 = smul.u32 4, %s22
      %p318 = scmp.lt.s32.totalorder %s21, 1
      %s319 = scalar_select %p318, %s21, 1
      %p320 = scmp.lt.s32.totalorder %s317, 7
      %s321 = scalar_select %p320, %s317, 7
      %s322 = smul.addr %s319, 8
      %s323 = sadd.s32 %s321, %s322
      %s324 = smul.addr %s323, 8
      %s325 = scalar_lea.vmem %s6, %s324
      %s326 = smul.u32 4, %s22
      %v327 = vld [vmem:[%s305] sm:$0xf]
      %v328 = vld [vmem:[%s305 + $0x4] sm:$0xf]
      %v329 = vld [vmem:[%s305 + $0x8] sm:$0xf]
      %v330 = vld [vmem:[%s305 + $0xc] sm:$0xf]
      %v331 = vunpack.c.l.bf16 %v327
      %v332 = vunpack.c.l.bf16 %v328
      %v333 = vunpack.c.l.bf16 %v329
      %v334 = vunpack.c.l.bf16 %v330
      %v335 = vld [vmem:[%s1] sm:$0x1]
      %v337 = vlaneseq
      %v338 = vshrl.u32 %v337, 7
      %v339 = vsub.s32 0, %v338
      %v340 = vrot.slane %v335, %v339
      %v342 = vmul.f32 %v331, %v340
      %v343 = vmul.f32 %v332, %v340
      %v344 = vmul.f32 %v333, %v340
      %v345 = vmul.f32 %v334, %v340
      %v346 = vld [vmem:[%s2] sm:$0x1]
      %v348 = vlaneseq
      %v349 = vshrl.u32 %v348, 7
      %v350 = vsub.s32 0, %v349
      %v351 = vrot.slane %v346, %v350
      %v353 = vadd.f32 %v342, %v351
      %v354 = vadd.f32 %v343, %v351
      %v355 = vadd.f32 %v344, %v351
      %v356 = vadd.f32 %v345, %v351
      %v357 = vld [vmem:[%s315] sm:$0xf]
      %v358 = vld [vmem:[%s315 + $0x4] sm:$0xf]
      %v359 = vld [vmem:[%s315 + $0x8] sm:$0xf]
      %v360 = vld [vmem:[%s315 + $0xc] sm:$0xf]
      %v361 = vunpack.c.l.bf16 %v357
      %v362 = vunpack.c.l.bf16 %v358
      %v363 = vunpack.c.l.bf16 %v359
      %v364 = vunpack.c.l.bf16 %v360
      %v365 = vld [vmem:[%s4] sm:$0x1]
      %v367 = vlaneseq
      %v368 = vshrl.u32 %v367, 7
      %v369 = vsub.s32 0, %v368
      %v370 = vrot.slane %v365, %v369
      %v372 = vmul.f32 %v361, %v370
      %v373 = vmul.f32 %v362, %v370
      %v374 = vmul.f32 %v363, %v370
      %v375 = vmul.f32 %v364, %v370
      %v376 = vld [vmem:[%s5] sm:$0x1]
      %v378 = vlaneseq
      %v379 = vshrl.u32 %v378, 7
      %v380 = vsub.s32 0, %v379
      %v381 = vrot.slane %v376, %v380
      %v383 = vadd.f32 %v372, %v381
      %v384 = vadd.f32 %v373, %v381
      %v385 = vadd.f32 %v374, %v381
      %v386 = vadd.f32 %v375, %v381
      %v387 = vadd.f32 %v353, %v383
      %v388 = vadd.f32 %v354, %v384
      %v389 = vadd.f32 %v355, %v385
      %v390 = vadd.f32 %v356, %v386
      %v391 = vmax.f32 %v387, 0.0
      %v392 = vmax.f32 %v388, 0.0
      %v393 = vmax.f32 %v389, 0.0
      %v394 = vmax.f32 %v390, 0.0
      %395 = vst [vmem:[%s325] sm:$0xff] %v391
      %396 = vst [vmem:[%s325 + $0x8] sm:$0xff] %v392
      %397 = vst [vmem:[%s325 + $0x10] sm:$0xff] %v393
      %398 = vst [vmem:[%s325 + $0x18] sm:$0xff] %v394
      %s399 = smul.u32 4, %s22
      %p400 = scmp.lt.s32.totalorder %s21, 1
      %s401 = scalar_select %p400, %s21, 1
      %p402 = scmp.lt.s32.totalorder %s399, 7
      %s403 = scalar_select %p402, %s399, 7
      %s404 = smul.addr %s401, 8
      %s405 = sadd.s32 %s403, %s404
      %s406 = smul.addr %s405, 8
      %s407 = scalar_lea.vmem %s6, %s406
      // Predicated region
      $region45: #{res_bottleneck_forward.7} parent=43 // pred_check
        %p408 = pneg %p189
      $region46: #{res_bottleneck_forward.7} parent=43 // pred_check_branch
        %410 = sbr.rel (%p408) target = $region48
      $region47: #{res_bottleneck_forward.7} parent=43 // pred_region
        %s411 = smul.u32 4, %s22
      $region48: #{res_bottleneck_forward.7} parent=43 // pred_fallthru
        _
    $region44: #{res_bottleneck_forward.7} parent=5 // pred_fallthru
      _
    %p412 = scmp.le.s32.totalorder 2, %s12
    // Predicated region
    $region49: #{res_bottleneck_forward.7} parent=5 // pred_check
      %p413 = pneg %p412
    $region50: #{res_bottleneck_forward.7} parent=5 // pred_check_branch
      %415 = sbr.rel (%p413) target = $region52
    $region51: #{res_bottleneck_forward.7} parent=5 // pred_region
      %s416 = ssub.s32 %s12, 2
      // Predicated region
      $region53: #{res_bottleneck_forward.7} parent=51 // pred_check
        %p417 = pneg %p195
      $region54: #{res_bottleneck_forward.7} parent=51 // pred_check_branch
        %419 = sbr.rel (%p417) target = $region56
      $region55: #{res_bottleneck_forward.7} parent=51 // pred_region
        %s420 = smul.u32 4, %s24
        %p421 = scmp.lt.s32.totalorder %s23, 1
        %s422 = scalar_select %p421, %s23, 1
        %p423 = scmp.lt.s32.totalorder %s420, 7
        %s424 = scalar_select %p423, %s420, 7
        %s425 = smul.addr %s422, 8
        %s426 = sadd.s32 %s424, %s425
        %s427 = smul.addr %s426, 8
        %s428 = scalar_lea.vmem %s6, %s427
      $region56: #{res_bottleneck_forward.7} parent=51 // pred_fallthru
        _
    $region52: #{res_bottleneck_forward.7} parent=5 // pred_fallthru
      _
  $region6: #{res_bottleneck_forward.7} parent=0 // loop_footer
    %s16 = sadd.s32 1, %s12
  $region7: #{res_bottleneck_forward.7} parent=0 // loop_footer_branch
    %11 = sbr.rel target = $region3
  $region8: #{res_bottleneck_forward.7} parent=0 // loop_exit
    _

// kernel: res_bottleneck_forward.5
$region0: #{res_bottleneck_forward.5}
  #allocation0 [shape = 'u32[]', space=smem, size = 0x4, offset = 0x4, fixed_abs, tag = 'smem constant byte address 0x4 - core index']
  #allocation1 [shape = 'u32[144,128]{1,0:T(1,128)}', space=vmem, size = 0x12000, scoped, tag = 'internal scratch']
  %s0 = inlined_call_operand.vmem [shape: bf16[2,8,8,128], index: 0, kind: input, shape index: {}]
  %s1 = inlined_call_operand.vmem [shape: f32[1,128], index: 1, kind: input, shape index: {}]
  %s2 = inlined_call_operand.vmem [shape: f32[1,128], index: 2, kind: input, shape index: {}]
  %s3 = inlined_call_operand.vmem [shape: bf16[1152,128], index: 3, kind: input, shape index: {}]
  %s4 = inlined_call_operand.vmem [shape: bf16[2,8,8,128], index: 4, kind: output, shape index: {0}]
  %s5 = inlined_call_operand.vmem [shape: f32[4,2,128], index: 5, kind: output, shape index: {1}]
  %6 = xla_tuple %s4, %s5
  %s7 = sld [smem:[#allocation0]]
  $region57: #{res_bottleneck_forward.5} parent=0
    _
  %s9 = ssub.s32 1, %s7
  %s10 = scalar_select 0, %s9, %s7
  loop: start=0, step=1, limit=6
  $region2: #{res_bottleneck_forward.5} parent=0 // loop_pre_header
    _
  $region3: #{res_bottleneck_forward.5} parent=0 // loop_header
    %s12 = sphi 0, %s16
    %p13 = scmp.ge.s32.totalorder %s12, 6
    %s19 = sphi 0, %s31
    %s20 = sphi 0, %s27
    %s21 = sphi 0, %s19
    %s22 = sphi 0, %s20
    %s23 = sphi 0, %s21
    %s24 = sphi 0, %s22
    %s34 = sphi 0, %s36
    %s37 = sphi 0, %s34
    %s38 = sphi 0, %s37
    %s54 = sphi 0, %s38
    %s58 = sphi 0, %s58
    %s60 = sphi 0, %s58
    %s61 = sphi 0, %s60
    %s75 = sphi 0, %s61
    %s79 = sphi 0, %s79
    %s81 = sphi 0, %s79
    %s82 = sphi 0, %s81
    %s96 = sphi 0, %s82
    %s100 = sphi 0, %s100
    %s102 = sphi 0, %s100
    %s103 = sphi 0, %s102
    %s117 = sphi 0, %s103
    %s125 = sphi 0, %s127
    %s128 = sphi 0, %s125
    %s129 = sphi 0, %s128
    %s145 = sphi 0, %s129
    %s155 = sphi 0, %s157
    %s158 = sphi 0, %s155
    %s159 = sphi 0, %s158
    %s175 = sphi 0, %s159
  $region4: #{res_bottleneck_forward.5} parent=0 // loop_header_branch
    %15 = sbr.rel (%p13) target = $region8
  $region5: #{res_bottleneck_forward.5} parent=0 // loop_body
    %s17 = ssub.s32 %s12, 1
    %s18 = ssub.s32 %s12, 2
    %s25 = sadd.s32 1, %s20
    %p26 = scmp.ge.s32.totalorder %s25, 2
    %s27 = scalar_select %p26, 0, %s25
    %s28 = sadd.s32 1, %s19
    %s29 = scalar_select %p26, %s28, %s19
    %p30 = scmp.ge.s32.totalorder %s29, 2
    %s31 = scalar_select %p30, 0, %s29
    %s32 = ssub.s32 %s19, %s31
    %p33 = scmp.eq.s32.totalorder %s32, 0
    %s35 = sadd.s32 %s34, 1
    %s36 = scalar_select %p33, %s34, %s35
    %p39 = pneg %p33
    %p40 = scmp.eq.s32.totalorder %s12, 3
    %p41 = por %p39, %p40
    %p42 = scmp.ne.s32.totalorder %s34, %s37
    %p43 = scmp.eq.s32.totalorder %s12, 0
    %p44 = por %p42, %p43
    %p45 = scmp.ne.s32.totalorder %s34, %s37
    %p46 = scmp.eq.s32.totalorder %s17, 3
    %p47 = por %p45, %p46
    %p48 = scmp.ne.s32.totalorder %s37, %s38
    %p49 = scmp.eq.s32.totalorder %s17, 0
    %p50 = por %p48, %p49
    %p51 = scmp.ne.s32.totalorder %s37, %s38
    %p52 = scmp.eq.s32.totalorder %s18, 3
    %p53 = por %p51, %p52
    %p55 = scmp.ne.s32.totalorder %s38, %s54
    %p56 = scmp.eq.s32.totalorder %s18, 0
    %p57 = por %p55, %p56
    %s59 = sadd.s32 %s58, 1
    %p62 = scmp.eq.s32.totalorder %s12, 3
    %p63 = scmp.ne.s32.totalorder %s58, %s60
    %p64 = scmp.eq.s32.totalorder %s12, 0
    %p65 = por %p63, %p64
    %p66 = scmp.ne.s32.totalorder %s58, %s60
    %p67 = scmp.eq.s32.totalorder %s17, 3
    %p68 = por %p66, %p67
    %p69 = scmp.ne.s32.totalorder %s60, %s61
    %p70 = scmp.eq.s32.totalorder %s17, 0
    %p71 = por %p69, %p70
    %p72 = scmp.ne.s32.totalorder %s60, %s61
    %p73 = scmp.eq.s32.totalorder %s18, 3
    %p74 = por %p72, %p73
    %p76 = scmp.ne.s32.totalorder %s61, %s75
    %p77 = scmp.eq.s32.totalorder %s18, 0
    %p78 = por %p76, %p77
    %s80 = sadd.s32 %s79, 1
    %p83 = scmp.eq.s32.totalorder %s12, 3
    %p84 = scmp.ne.s32.totalorder %s79, %s81
    %p85 = scmp.eq.s32.totalorder %s12, 0
    %p86 = por %p84, %p85
    %p87 = scmp.ne.s32.totalorder %s79, %s81
    %p88 = scmp.eq.s32.totalorder %s17, 3
    %p89 = por %p87, %p88
    %p90 = scmp.ne.s32.totalorder %s81, %s82
    %p91 = scmp.eq.s32.totalorder %s17, 0
    %p92 = por %p90, %p91
    %p93 = scmp.ne.s32.totalorder %s81, %s82
    %p94 = scmp.eq.s32.totalorder %s18, 3
    %p95 = por %p93, %p94
    %p97 = scmp.ne.s32.totalorder %s82, %s96
    %p98 = scmp.eq.s32.totalorder %s18, 0
    %p99 = por %p97, %p98
    %s101 = sadd.s32 %s100, 1
    %p104 = scmp.eq.s32.totalorder %s12, 3
    %p105 = scmp.ne.s32.totalorder %s100, %s102
    %p106 = scmp.eq.s32.totalorder %s12, 0
    %p107 = por %p105, %p106
    %p108 = scmp.ne.s32.totalorder %s100, %s102
    %p109 = scmp.eq.s32.totalorder %s17, 3
    %p110 = por %p108, %p109
    %p111 = scmp.ne.s32.totalorder %s102, %s103
    %p112 = scmp.eq.s32.totalorder %s17, 0
    %p113 = por %p111, %p112
    %p114 = scmp.ne.s32.totalorder %s102, %s103
    %p115 = scmp.eq.s32.totalorder %s18, 3
    %p116 = por %p114, %p115
    %p118 = scmp.ne.s32.totalorder %s103, %s117
    %p119 = scmp.eq.s32.totalorder %s18, 0
    %p120 = por %p118, %p119
    %s121 = ssub.s32 %s19, %s31
    %s122 = ssub.s32 %s20, %s27
    %s123 = sor.u32 %s121, %s122
    %p124 = scmp.eq.s32.totalorder %s123, 0
    %s126 = sadd.s32 %s125, 1
    %s127 = scalar_select %p124, %s125, %s126
    %p130 = pneg %p124
    %p131 = scmp.eq.s32.totalorder %s12, 3
    %p132 = por %p130, %p131
    %p133 = scmp.ne.s32.totalorder %s125, %s128
    %p134 = scmp.eq.s32.totalorder %s12, 0
    %p135 = por %p133, %p134
    %p136 = scmp.ne.s32.totalorder %s125, %s128
    %p137 = scmp.eq.s32.totalorder %s17, 3
    %p138 = por %p136, %p137
    %p139 = scmp.ne.s32.totalorder %s128, %s129
    %p140 = scmp.eq.s32.totalorder %s17, 0
    %p141 = por %p139, %p140
    %p142 = scmp.ne.s32.totalorder %s128, %s129
    %p143 = scmp.eq.s32.totalorder %s18, 3
    %p144 = por %p142, %p143
    %p146 = scmp.ne.s32.totalorder %s129, %s145
    %p147 = scmp.eq.s32.totalorder %s18, 0
    %p148 = por %p146, %p147
    %s149 = smul.u32 %s19, 2
    %s150 = sadd.s32 %s149, %s20
    %s151 = smul.u32 %s31, 2
    %s152 = sadd.s32 %s151, %s27
    %s153 = ssub.s32 %s150, %s152
    %p154 = scmp.eq.s32.totalorder %s153, 0
    %s156 = sadd.s32 %s155, 1
    %s157 = scalar_select %p154, %s155, %s156
    %p160 = pneg %p154
    %p161 = scmp.eq.s32.totalorder %s12, 3
    %p162 = por %p160, %p161
    %p163 = scmp.ne.s32.totalorder %s155, %s158
    %p164 = scmp.eq.s32.totalorder %s12, 0
    %p165 = por %p163, %p164
    %p166 = scmp.ne.s32.totalorder %s155, %s158
    %p167 = scmp.eq.s32.totalorder %s17, 3
    %p168 = por %p166, %p167
    %p169 = scmp.ne.s32.totalorder %s158, %s159
    %p170 = scmp.eq.s32.totalorder %s17, 0
    %p171 = por %p169, %p170
    %p172 = scmp.ne.s32.totalorder %s158, %s159
    %p173 = scmp.eq.s32.totalorder %s18, 3
    %p174 = por %p172, %p173
    %p176 = scmp.ne.s32.totalorder %s159, %s175
    %p177 = scmp.eq.s32.totalorder %s18, 0
    %p178 = por %p176, %p177
    %p179 = scmp.le.s32.totalorder 1, %s12
    %p180 = scmp.lt.s32.totalorder %s12, 5
    %p181 = pnand %p179, %p180
    %p182 = pneg %p181
    // Predicated region
    $region9: #{res_bottleneck_forward.5} parent=5 // pred_check
      _
    $region10: #{res_bottleneck_forward.5} parent=5 // pred_check_branch
      %184 = sbr.rel (%p181) target = $region12
    $region11: #{res_bottleneck_forward.5} parent=5 // pred_region
      %s185 = ssub.s32 %s12, 1
      // Predicated region
      $region13: #{res_bottleneck_forward.5} parent=11 // pred_check
        %p186 = pneg %p71
      $region14: #{res_bottleneck_forward.5} parent=11 // pred_check_branch
        %188 = sbr.rel (%p186) target = $region16
      $region15: #{res_bottleneck_forward.5} parent=11 // pred_region
        _
      $region16: #{res_bottleneck_forward.5} parent=11 // pred_fallthru
        _
      // Predicated region
      $region17: #{res_bottleneck_forward.5} parent=11 // pred_check
        %p189 = pneg %p92
      $region18: #{res_bottleneck_forward.5} parent=11 // pred_check_branch
        %191 = sbr.rel (%p189) target = $region20
      $region19: #{res_bottleneck_forward.5} parent=11 // pred_region
        _
      $region20: #{res_bottleneck_forward.5} parent=11 // pred_fallthru
        _
      // Predicated region
      $region21: #{res_bottleneck_forward.5} parent=11 // pred_check
        %p192 = pneg %p113
      $region22: #{res_bottleneck_forward.5} parent=11 // pred_check_branch
        %194 = sbr.rel (%p192) target = $region24
      $region23: #{res_bottleneck_forward.5} parent=11 // pred_region
        _
      $region24: #{res_bottleneck_forward.5} parent=11 // pred_fallthru
        _
    $region12: #{res_bottleneck_forward.5} parent=5 // pred_fallthru
      _
    %p195 = scmp.lt.s32.totalorder %s12, 4
    // Predicated region
    $region25: #{res_bottleneck_forward.5} parent=5 // pred_check
      %p196 = pneg %p195
    $region26: #{res_bottleneck_forward.5} parent=5 // pred_check_branch
      %198 = sbr.rel (%p196) target = $region28
    $region27: #{res_bottleneck_forward.5} parent=5 // pred_region
      // Predicated region
      $region29: #{res_bottleneck_forward.5} parent=27 // pred_check
        %p199 = pneg %p44
      $region30: #{res_bottleneck_forward.5} parent=27 // pred_check_branch
        %201 = sbr.rel (%p199) target = $region32
      $region31: #{res_bottleneck_forward.5} parent=27 // pred_region
        %p202 = scmp.lt.s32.totalorder %s19, 1
        %s203 = scalar_select %p202, %s19, 1
        %s204 = smul.addr %s203, 8
        %s205 = smul.addr %s204, 4
        %s206 = scalar_lea.vmem %s0, %s205
      $region32: #{res_bottleneck_forward.5} parent=27 // pred_fallthru
        _
    $region28: #{res_bottleneck_forward.5} parent=5 // pred_fallthru
      _
    %p207 = scmp.le.s32.totalorder 1, %s12
    %p208 = scmp.lt.s32.totalorder %s12, 5
    %p209 = pnand %p207, %p208
    %p210 = pneg %p209
    // Predicated region
    $region33: #{res_bottleneck_forward.5} parent=5 // pred_check
      _
    $region34: #{res_bottleneck_forward.5} parent=5 // pred_check_branch
      %212 = sbr.rel (%p209) target = $region36
    $region35: #{res_bottleneck_forward.5} parent=5 // pred_region
      %s213 = ssub.s32 %s12, 1
      %p214 = scmp.lt.s32.totalorder %s21, 1
      %s215 = scalar_select %p214, %s21, 1
      %s216 = smul.addr %s215, 8
      %s217 = smul.addr %s216, 4
      %s218 = scalar_lea.vmem %s0, %s217
      %p219 = pneg %p50
      %p220 = pneg %p47
      %p221 = pneg %p71
      %p222 = pneg %p68
      %p223 = pneg %p92
      %p224 = pneg %p89
      %p225 = pneg %p113
      %p226 = pneg %p110
      %p227 = pneg %p141
      %p228 = pneg %p138
      %s229 = smul.u32 4, %s22
      %p230 = scmp.lt.s32.totalorder %s21, 1
      %s231 = scalar_select %p230, %s21, 1
      %p232 = scmp.lt.s32.totalorder %s229, 7
      %s233 = scalar_select %p232, %s229, 7
      %s234 = smul.addr %s231, 8
      %s235 = sadd.s32 %s233, %s234
      %s236 = smul.addr %s235, 4
      %s237 = scalar_lea.vmem %s4, %s236
      %p238 = pneg %p171
      %p239 = pneg %p168
      %s240 = smul.u32 %s21, 2
      %s241 = sadd.s32 %s240, %s22
      %p242 = scmp.lt.s32.totalorder %s241, 3
      %s243 = scalar_select %p242, %s241, 3
      %s244 = smul.addr %s243, 2
      %s245 = scalar_lea.vmem %s5, %s244
      %p246 = scmp.lt.s32.totalorder %s21, 1
      %s247 = scalar_select %p246, %s21, 1
      %s248 = smul.addr %s247, 8
      %s249 = smul.addr %s248, 4
      %s250 = scalar_lea.vmem %s0, %s249
      %s251 = smul.u32 4, %s22
      %p252 = scmp.lt.s32.totalorder %s21, 1
      %s253 = scalar_select %p252, %s21, 1
      %p254 = scmp.lt.s32.totalorder %s251, 7
      %s255 = scalar_select %p254, %s251, 7
      %s256 = smul.addr %s253, 8
      %s257 = sadd.s32 %s255, %s256
      %s258 = smul.addr %s257, 4
      %s259 = scalar_lea.vmem %s4, %s258
      %s260 = smul.u32 4, %s22
      %s261 = smul.u32 %s21, 2
      %s262 = sadd.s32 %s261, %s22
      %p263 = scmp.lt.s32.totalorder %s262, 3
      %s264 = scalar_select %p263, %s262, 3
      %s265 = smul.addr %s264, 2
      %s266 = scalar_lea.vmem %s5, %s265
      %s267 = smul.u32 %s21, 2
      %s268 = sadd.s32 %s267, %s22
      %s270 = smul.u32 %s22, 4
      %v271 = vld [vmem:[%s1] sm:$0x1]
      %v272 = vld [vmem:[%s2] sm:$0x1]
      %s273 = smul.addr %s270, 4
      %s274 = scalar_lea.vmem %s250, %s273
      %v275 = vld [vmem:[%s274] sm:$0xf]
      %v276 = vld [vmem:[%s274 + $0x4] sm:$0xf]
      %v277 = vld [vmem:[%s274 + $0x8] sm:$0xf]
      %v278 = vld [vmem:[%s274 + $0xc] sm:$0xf]
      %v279 = vunpack.c.l.bf16 %v275
      %v280 = vunpack.c.l.bf16 %v276
      %v281 = vunpack.c.l.bf16 %v277
      %v282 = vunpack.c.l.bf16 %v278
      %v284 = vlaneseq
      %v285 = vshrl.u32 %v284, 7
      %v286 = vsub.s32 0, %v285
      %v287 = vrot.slane %v271, %v286
      %v289 = vmul.f32 %v279, %v287
      %v290 = vmul.f32 %v280, %v287
      %v291 = vmul.f32 %v281, %v287
      %v292 = vmul.f32 %v282, %v287
      %v294 = vlaneseq
      %v295 = vshrl.u32 %v294, 7
      %v296 = vsub.s32 0, %v295
      %v297 = vrot.slane %v272, %v296
      %v299 = vadd.f32 %v289, %v297
      %v300 = vadd.f32 %v290, %v297
      %v301 = vadd.f32 %v291, %v297
      %v302 = vadd.f32 %v292, %v297
      %v303 = vmax.f32 %v299, 0.0
      %v304 = vmax.f32 %v300, 0.0
      %v305 = vmax.f32 %v301, 0.0
      %v306 = vmax.f32 %v302, 0.0
      %v307 = vpack.c.bf16 %v303, %v303
      %v308 = vpack.c.bf16 %v304, %v304
      %v309 = vpack.c.bf16 %v305, %v305
      %v310 = vpack.c.bf16 %v306, %v306
      %s311 = ssub.s32 %s270, 1
      %p312 = scmp.gt.s32.totalorder %s311, 0
      %s313 = scalar_select %p312, %s311, 0
      %s314 = smul.addr %s313, 4
      %s315 = scalar_lea.vmem %s250, %s314
      %v316 = vld [vmem:[%s315] sm:$0xf]
      %v317 = vunpack.c.l.bf16 %v316
      %v318 = vmul.f32 %v317, %v287
      %v319 = vadd.f32 %v318, %v297
      %v320 = vmax.f32 %v319, 0.0
      %v321 = vpack.c.bf16 %v320, %v320
      %s322 = sadd.s32 %s270, 4
      %p323 = scmp.lt.s32.totalorder %s322, 7
      %s324 = scalar_select %p323, %s322, 7
      %s325 = smul.addr %s324, 4
      %s326 = scalar_lea.vmem %s250, %s325
      %v327 = vld [vmem:[%s326] sm:$0xf]
      %v328 = vunpack.c.l.bf16 %v327
      %v329 = vmul.f32 %v328, %v287
      %v330 = vadd.f32 %v329, %v297
      %v331 = vmax.f32 %v330, 0.0
      %v332 = vpack.c.bf16 %v331, %v331
      %p333 = scmp.gt.s32.totalorder %s22, 0
      %s334 = scalar_select %p333, 1, 0
      %s335 = scvt.s32.f32 %s334
      %p337 = scmp.ne.f32.partialorder %s335, %s335
      %s338 = sshrl.u32 %s335, 16
      %s339 = sand.u32 %s338, 1
      %s340 = sadd.s32 32767, %s339
      %s341 = sadd.s32 %s335, %s340
      %s342 = sand.u32 %s341, 4294901760
      %s343 = scalar_select %p337, 2143289344, %s342
      %s345 = sshrl.u32 %s343, 16
      %s346 = sshll.u32 %s345, 16
      %s347 = sor.u32 %s345, %s346
      %v348 = vstv %s347
      %v350 = vmul.bf16 %v321, %v348
      %p351 = scmp.lt.s32.totalorder %s22, 1
      %s352 = scalar_select %p351, 1, 0
      %s353 = scvt.s32.f32 %s352
      %p355 = scmp.ne.f32.partialorder %s353, %s353
      %s356 = sshrl.u32 %s353, 16
      %s357 = sand.u32 %s356, 1
      %s358 = sadd.s32 32767, %s357
      %s359 = sadd.s32 %s353, %s358
      %s360 = sand.u32 %s359, 4294901760
      %s361 = scalar_select %p355, 2143289344, %s360
      %s363 = sshrl.u32 %s361, 16
      %s364 = sshll.u32 %s363, 16
      %s365 = sor.u32 %s363, %s364
      %v366 = vstv %s365
      %v368 = vmul.bf16 %v332, %v366
      %v370 = vshrl.u32 %v350, 16
      %v372 = vrot.slane %v370, 7
      %v373 = vshll.u32 %v350, 16
      %v375 = vor.u32 %v372, %v373
      %v377 = vshrl.u32 %v307, 16
      %v379 = vrot.slane %v377, 7
      %v380 = vshll.u32 %v307, 16
      %v382 = vor.u32 %v379, %v380
      %v384 = vshrl.u32 %v308, 16
      %v386 = vrot.slane %v384, 7
      %v387 = vshll.u32 %v308, 16
      %v389 = vor.u32 %v386, %v387
      %v391 = vshrl.u32 %v309, 16
      %v393 = vrot.slane %v391, 7
      %v394 = vshll.u32 %v309, 16
      %v396 = vor.u32 %v393, %v394
      %v398 = vshrl.u32 %v310, 16
      %v400 = vrot.slane %v398, 7
      %v401 = vshll.u32 %v310, 16
      %v403 = vor.u32 %v400, %v401
      %v405 = vshrl.u32 %v368, 16
      %v407 = vrot.slane %v405, 7
      %v408 = vshll.u32 %v368, 16
      %v410 = vor.u32 %v407, %v408
      %vm417 = vcmask 1040384
      %vm418 = vsmask.f32 256
      %vm419 = vmand %vm417, %vm418
      %v420 = vsel %vm419, 0, %v375
      %v421 = vsel %vm419, 0, %v382
      %v422 = vsel %vm419, 0, %v389
      %v423 = vsel %vm419, 0, %v396
      %v424 = vsel %vm419, 0, %v403
      %v425 = vsel %vm419, 0, %v410
      %vm426 = vcmask 1044480
      %vm427 = vsmask.f32 4352
      %vm428 = vmand %vm426, %vm427
      %v429 = vsel %vm428, %v420, 0
      %v430 = vsel %vm428, %v421, 0
      %v431 = vsel %vm428, %v422, 0
      %v432 = vsel %vm428, %v423, 0
      %v433 = vsel %vm428, %v424, 0
      %v434 = vsel %vm428, %v425, 0
      %v439 = vunpack.c.l.b16 %v429
      %v440 = vunpack.c.h.b16 %v429
      %v441 = vunpack.c.l.b16 %v430
      %v442 = vunpack.c.h.b16 %v430
      %v443 = vunpack.c.l.b16 %v431
      %v444 = vunpack.c.h.b16 %v431
      %v445 = vunpack.c.l.b16 %v432
      %v446 = vunpack.c.h.b16 %v432
      %v447 = vpack.c.b16 %v439, %v439
      %v448 = vpack.c.b16 %v440, %v440
      %v449 = vpack.c.b16 %v441, %v441
      %v450 = vpack.c.b16 %v442, %v442
      %v451 = vpack.c.b16 %v443, %v443
      %v452 = vpack.c.b16 %v444, %v444
      %v453 = vpack.c.b16 %v445, %v445
      %v454 = vpack.c.b16 %v446, %v446
      %vm455 = vsmask.f32 3328
      %vm456 = vsmask.f32 7440
      %vm457 = vmor %vm455, %vm456
      %v459 = vshrl.u32 %v447, 16
      %v461 = vrot.slane %v459, 4
      %v462 = vshll.u32 %v447, 16
      %v464 = vrot.slane %v462, 5
      %v465 = vor.u32 %v461, %v464
      %v466 = vrot.slane %v465, 4
      %v468 = vshll.u32 %v448, 16
      %v470 = vrot.slane %v468, 5
      %v471 = vsel %vm457, %v466, %v470
      %v473 = vshrl.u32 %v449, 16
      %v475 = vrot.slane %v473, 4
      %v476 = vshll.u32 %v449, 16
      %v478 = vrot.slane %v476, 5
      %v479 = vor.u32 %v475, %v478
      %v480 = vrot.slane %v479, 4
      %v482 = vshll.u32 %v450, 16
      %v484 = vrot.slane %v482, 5
      %v485 = vsel %vm457, %v480, %v484
      %v487 = vshrl.u32 %v451, 16
      %v489 = vrot.slane %v487, 4
      %v490 = vshll.u32 %v451, 16
      %v492 = vrot.slane %v490, 5
      %v493 = vor.u32 %v489, %v492
      %v494 = vrot.slane %v493, 4
      %v496 = vshll.u32 %v452, 16
      %v498 = vrot.slane %v496, 5
      %v499 = vsel %vm457, %v494, %v498
      %v501 = vshrl.u32 %v453, 16
      %v503 = vrot.slane %v501, 4
      %v504 = vshll.u32 %v453, 16
      %v506 = vrot.slane %v504, 5
      %v507 = vor.u32 %v503, %v506
      %v508 = vrot.slane %v507, 4
      %v510 = vshll.u32 %v454, 16
      %v512 = vrot.slane %v510, 5
      %v513 = vsel %vm457, %v508, %v512
      %vm514 = vcmask 1042432
      %vm515 = vcmask 1046532
      %vm516 = vmor %vm514, %vm515
      %v517 = vrot.slane %v447, 5
      %v518 = vrot.slane %v517, 4
      %v519 = vrot.slane %v448, 5
      %v520 = vsel %vm516, %v518, %v519
      %v521 = vrot.slane %v449, 5
      %v522 = vrot.slane %v521, 4
      %v523 = vrot.slane %v450, 5
      %v524 = vsel %vm516, %v522, %v523
      %v525 = vrot.slane %v451, 5
      %v526 = vrot.slane %v525, 4
      %v527 = vrot.slane %v452, 5
      %v528 = vsel %vm516, %v526, %v527
      %v529 = vrot.slane %v453, 5
      %v530 = vrot.slane %v529, 4
      %v531 = vrot.slane %v454, 5
      %v532 = vsel %vm516, %v530, %v531
      %v534 = vunpack.c.l.b16 %v433
      %v535 = vunpack.c.h.b16 %v433
      %v536 = vpack.c.b16 %v534, %v534
      %v537 = vpack.c.b16 %v535, %v535
      %v539 = vshrl.u32 %v536, 16
      %v541 = vrot.slane %v539, 4
      %v542 = vshll.u32 %v536, 16
      %v544 = vrot.slane %v542, 5
      %v545 = vor.u32 %v541, %v544
      %v546 = vrot.slane %v545, 4
      %v548 = vshll.u32 %v537, 16
      %v550 = vrot.slane %v548, 5
      %v551 = vsel %vm457, %v546, %v550
      %v552 = vrot.slane %v536, 5
      %v553 = vrot.slane %v552, 4
      %v554 = vrot.slane %v537, 5
      %v555 = vsel %vm516, %v553, %v554
      %v557 = vunpack.c.l.b16 %v434
      %v558 = vunpack.c.h.b16 %v434
      %v559 = vpack.c.b16 %v557, %v557
      %v560 = vpack.c.b16 %v558, %v558
      %v562 = vshrl.u32 %v559, 16
      %v564 = vrot.slane %v562, 4
      %v565 = vshll.u32 %v559, 16
      %v567 = vrot.slane %v565, 5
      %v568 = vor.u32 %v564, %v567
      %v569 = vrot.slane %v568, 4
      %v571 = vshll.u32 %v560, 16
      %v573 = vrot.slane %v571, 5
      %v574 = vsel %vm457, %v569, %v573
      %v575 = vrot.slane %v559, 5
      %v576 = vrot.slane %v575, 4
      %v577 = vrot.slane %v560, 5
      %v578 = vsel %vm516, %v576, %v577
      %v579 = vpack.c.b16 %v441, %v439
      %v580 = vpack.c.b16 %v445, %v443
      %v583 = vunpack.c.l.b16 %v471
      %v584 = vunpack.c.l.b16 %v485
      %v585 = vunpack.c.l.b16 %v499
      %v586 = vunpack.c.l.b16 %v513
      %v587 = vpack.c.b16 %v584, %v583
      %v588 = vpack.c.b16 %v586, %v585
      %v591 = vunpack.c.l.b16 %v520
      %v592 = vunpack.c.l.b16 %v524
      %v593 = vunpack.c.l.b16 %v528
      %v594 = vunpack.c.l.b16 %v532
      %v595 = vpack.c.b16 %v592, %v591
      %v596 = vpack.c.b16 %v594, %v593
      %v599 = vpack.c.b16 %v443, %v441
      %v600 = vpack.c.b16 %v534, %v445
      %v603 = vunpack.c.l.b16 %v551
      %v604 = vpack.c.b16 %v585, %v584
      %v605 = vpack.c.b16 %v603, %v586
      %v608 = vunpack.c.l.b16 %v555
      %v609 = vpack.c.b16 %v593, %v592
      %v610 = vpack.c.b16 %v608, %v594
      %v613 = vpack.c.b16 %v557, %v534
      %v615 = vunpack.c.l.b16 %v574
      %v616 = vpack.c.b16 %v615, %v603
      %v618 = vunpack.c.l.b16 %v578
      %v619 = vpack.c.b16 %v618, %v608
      %v621 = vld [vmem:[%s3] sm:$0xf]
      %v622 = vld [vmem:[%s3 + $0x4] sm:$0xf]
      %v623 = vld [vmem:[%s3 + $0x8] sm:$0xf]
      %v624 = vld [vmem:[%s3 + $0xc] sm:$0xf]
      %v625 = vld [vmem:[%s3 + $0x10] sm:$0xf]
      %v626 = vld [vmem:[%s3 + $0x14] sm:$0xf]
      %v627 = vld [vmem:[%s3 + $0x18] sm:$0xf]
      %v628 = vld [vmem:[%s3 + $0x1c] sm:$0xf]
      %v629 = vld [vmem:[%s3 + $0x20] sm:$0xf]
      %v630 = vld [vmem:[%s3 + $0x24] sm:$0xf]
      %v631 = vld [vmem:[%s3 + $0x28] sm:$0xf]
      %v632 = vld [vmem:[%s3 + $0x2c] sm:$0xf]
      %v633 = vld [vmem:[%s3 + $0x30] sm:$0xf]
      %v634 = vld [vmem:[%s3 + $0x34] sm:$0xf]
      %v635 = vld [vmem:[%s3 + $0x38] sm:$0xf]
      %v636 = vld [vmem:[%s3 + $0x3c] sm:$0xf]
      %v637 = vld [vmem:[%s3 + $0x40] sm:$0xf]
      %v638 = vld [vmem:[%s3 + $0x44] sm:$0xf]
      %v639 = vld [vmem:[%s3 + $0x48] sm:$0xf]
      %v640 = vld [vmem:[%s3 + $0x4c] sm:$0xf]
      %v641 = vld [vmem:[%s3 + $0x50] sm:$0xf]
      %v642 = vld [vmem:[%s3 + $0x54] sm:$0xf]
      %v643 = vld [vmem:[%s3 + $0x58] sm:$0xf]
      %v644 = vld [vmem:[%s3 + $0x5c] sm:$0xf]
      %v645 = vld [vmem:[%s3 + $0x60] sm:$0xf]
      %v646 = vld [vmem:[%s3 + $0x64] sm:$0xf]
      %v647 = vld [vmem:[%s3 + $0x68] sm:$0xf]
      %v648 = vld [vmem:[%s3 + $0x6c] sm:$0xf]
      %v649 = vld [vmem:[%s3 + $0x70] sm:$0xf]
      %v650 = vld [vmem:[%s3 + $0x74] sm:$0xf]
      %v651 = vld [vmem:[%s3 + $0x78] sm:$0xf]
      %v652 = vld [vmem:[%s3 + $0x7c] sm:$0xf]
      %v653 = vld [vmem:[%s3 + $0x80] sm:$0xf]
      %v654 = vld [vmem:[%s3 + $0x84] sm:$0xf]
      %v655 = vld [vmem:[%s3 + $0x88] sm:$0xf]
      %v656 = vld [vmem:[%s3 + $0x8c] sm:$0xf]
      %v657 = vld [vmem:[%s3 + $0x90] sm:$0xf]
      %v658 = vld [vmem:[%s3 + $0x94] sm:$0xf]
      %v659 = vld [vmem:[%s3 + $0x98] sm:$0xf]
      %v660 = vld [vmem:[%s3 + $0x9c] sm:$0xf]
      %v661 = vld [vmem:[%s3 + $0xa0] sm:$0xf]
      %v662 = vld [vmem:[%s3 + $0xa4] sm:$0xf]
      %v663 = vld [vmem:[%s3 + $0xa8] sm:$0xf]
      %v664 = vld [vmem:[%s3 + $0xac] sm:$0xf]
      %v665 = vld [vmem:[%s3 + $0xb0] sm:$0xf]
      %v666 = vld [vmem:[%s3 + $0xb4] sm:$0xf]
      %v667 = vld [vmem:[%s3 + $0xb8] sm:$0xf]
      %v668 = vld [vmem:[%s3 + $0xbc] sm:$0xf]
      %v669 = vld [vmem:[%s3 + $0xc0] sm:$0xf]
      %v670 = vld [vmem:[%s3 + $0xc4] sm:$0xf]
      %v671 = vld [vmem:[%s3 + $0xc8] sm:$0xf]
      %v672 = vld [vmem:[%s3 + $0xcc] sm:$0xf]
      %v673 = vld [vmem:[%s3 + $0xd0] sm:$0xf]
      %v674 = vld [vmem:[%s3 + $0xd4] sm:$0xf]
      %v675 = vld [vmem:[%s3 + $0xd8] sm:$0xf]
      %v676 = vld [vmem:[%s3 + $0xdc] sm:$0xf]
      %v677 = vld [vmem:[%s3 + $0xe0] sm:$0xf]
      %v678 = vld [vmem:[%s3 + $0xe4] sm:$0xf]
      %v679 = vld [vmem:[%s3 + $0xe8] sm:$0xf]
      %v680 = vld [vmem:[%s3 + $0xec] sm:$0xf]
      %v681 = vld [vmem:[%s3 + $0xf0] sm:$0xf]
      %v682 = vld [vmem:[%s3 + $0xf4] sm:$0xf]
      %v683 = vld [vmem:[%s3 + $0xf8] sm:$0xf]
      %v684 = vld [vmem:[%s3 + $0xfc] sm:$0xf]
      %v685 = vld [vmem:[%s3 + $0x100] sm:$0xf]
      %v686 = vld [vmem:[%s3 + $0x104] sm:$0xf]
      %v687 = vld [vmem:[%s3 + $0x108] sm:$0xf]
      %v688 = vld [vmem:[%s3 + $0x10c] sm:$0xf]
      %v689 = vld [vmem:[%s3 + $0x110] sm:$0xf]
      %v690 = vld [vmem:[%s3 + $0x114] sm:$0xf]
      %v691 = vld [vmem:[%s3 + $0x118] sm:$0xf]
      %v692 = vld [vmem:[%s3 + $0x11c] sm:$0xf]
      %v693 = vld [vmem:[%s3 + $0x120] sm:$0xf]
      %v694 = vld [vmem:[%s3 + $0x124] sm:$0xf]
      %v695 = vld [vmem:[%s3 + $0x128] sm:$0xf]
      %v696 = vld [vmem:[%s3 + $0x12c] sm:$0xf]
      %v697 = vld [vmem:[%s3 + $0x130] sm:$0xf]
      %v698 = vld [vmem:[%s3 + $0x134] sm:$0xf]
      %v699 = vld [vmem:[%s3 + $0x138] sm:$0xf]
      %v700 = vld [vmem:[%s3 + $0x13c] sm:$0xf]
      %v701 = vld [vmem:[%s3 + $0x140] sm:$0xf]
      %v702 = vld [vmem:[%s3 + $0x144] sm:$0xf]
      %v703 = vld [vmem:[%s3 + $0x148] sm:$0xf]
      %v704 = vld [vmem:[%s3 + $0x14c] sm:$0xf]
      %v705 = vld [vmem:[%s3 + $0x150] sm:$0xf]
      %v706 = vld [vmem:[%s3 + $0x154] sm:$0xf]
      %v707 = vld [vmem:[%s3 + $0x158] sm:$0xf]
      %v708 = vld [vmem:[%s3 + $0x15c] sm:$0xf]
      %v709 = vld [vmem:[%s3 + $0x160] sm:$0xf]
      %v710 = vld [vmem:[%s3 + $0x164] sm:$0xf]
      %v711 = vld [vmem:[%s3 + $0x168] sm:$0xf]
      %v712 = vld [vmem:[%s3 + $0x16c] sm:$0xf]
      %v713 = vld [vmem:[%s3 + $0x170] sm:$0xf]
      %v714 = vld [vmem:[%s3 + $0x174] sm:$0xf]
      %v715 = vld [vmem:[%s3 + $0x178] sm:$0xf]
      %v716 = vld [vmem:[%s3 + $0x17c] sm:$0xf]
      %v717 = vld [vmem:[%s3 + $0x180] sm:$0xf]
      %v718 = vld [vmem:[%s3 + $0x184] sm:$0xf]
      %v719 = vld [vmem:[%s3 + $0x188] sm:$0xf]
      %v720 = vld [vmem:[%s3 + $0x18c] sm:$0xf]
      %v721 = vld [vmem:[%s3 + $0x190] sm:$0xf]
      %v722 = vld [vmem:[%s3 + $0x194] sm:$0xf]
      %v723 = vld [vmem:[%s3 + $0x198] sm:$0xf]
      %v724 = vld [vmem:[%s3 + $0x19c] sm:$0xf]
      %v725 = vld [vmem:[%s3 + $0x1a0] sm:$0xf]
      %v726 = vld [vmem:[%s3 + $0x1a4] sm:$0xf]
      %v727 = vld [vmem:[%s3 + $0x1a8] sm:$0xf]
      %v728 = vld [vmem:[%s3 + $0x1ac] sm:$0xf]
      %v729 = vld [vmem:[%s3 + $0x1b0] sm:$0xf]
      %v730 = vld [vmem:[%s3 + $0x1b4] sm:$0xf]
      %v731 = vld [vmem:[%s3 + $0x1b8] sm:$0xf]
      %v732 = vld [vmem:[%s3 + $0x1bc] sm:$0xf]
      %v733 = vld [vmem:[%s3 + $0x1c0] sm:$0xf]
      %v734 = vld [vmem:[%s3 + $0x1c4] sm:$0xf]
      %v735 = vld [vmem:[%s3 + $0x1c8] sm:$0xf]
      %v736 = vld [vmem:[%s3 + $0x1cc] sm:$0xf]
      %v737 = vld [vmem:[%s3 + $0x1d0] sm:$0xf]
      %v738 = vld [vmem:[%s3 + $0x1d4] sm:$0xf]
      %v739 = vld [vmem:[%s3 + $0x1d8] sm:$0xf]
      %v740 = vld [vmem:[%s3 + $0x1dc] sm:$0xf]
      %v741 = vld [vmem:[%s3 + $0x1e0] sm:$0xf]
      %v742 = vld [vmem:[%s3 + $0x1e4] sm:$0xf]
      %v743 = vld [vmem:[%s3 + $0x1e8] sm:$0xf]
      %v744 = vld [vmem:[%s3 + $0x1ec] sm:$0xf]
      %v745 = vld [vmem:[%s3 + $0x1f0] sm:$0xf]
      %v746 = vld [vmem:[%s3 + $0x1f4] sm:$0xf]
      %v747 = vld [vmem:[%s3 + $0x1f8] sm:$0xf]
      %v748 = vld [vmem:[%s3 + $0x1fc] sm:$0xf]
      %v749 = vld [vmem:[%s3 + $0x200] sm:$0xf]
      %v750 = vld [vmem:[%s3 + $0x204] sm:$0xf]
      %v751 = vld [vmem:[%s3 + $0x208] sm:$0xf]
      %v752 = vld [vmem:[%s3 + $0x20c] sm:$0xf]
      %v753 = vld [vmem:[%s3 + $0x210] sm:$0xf]
      %v754 = vld [vmem:[%s3 + $0x214] sm:$0xf]
      %v755 = vld [vmem:[%s3 + $0x218] sm:$0xf]
      %v756 = vld [vmem:[%s3 + $0x21c] sm:$0xf]
      %v757 = vld [vmem:[%s3 + $0x220] sm:$0xf]
      %v758 = vld [vmem:[%s3 + $0x224] sm:$0xf]
      %v759 = vld [vmem:[%s3 + $0x228] sm:$0xf]
      %v760 = vld [vmem:[%s3 + $0x22c] sm:$0xf]
      %v761 = vld [vmem:[%s3 + $0x230] sm:$0xf]
      %v762 = vld [vmem:[%s3 + $0x234] sm:$0xf]
      %v763 = vld [vmem:[%s3 + $0x238] sm:$0xf]
      %v764 = vld [vmem:[%s3 + $0x23c] sm:$0xf]
      %v909 = vunpack.c.l.b16 %v621
      %v910 = vunpack.c.l.b16 %v622
      %v911 = vunpack.c.l.b16 %v623
      %v912 = vunpack.c.l.b16 %v624
      %v913 = vunpack.c.l.b16 %v625
      %v914 = vunpack.c.l.b16 %v626
      %v915 = vunpack.c.l.b16 %v627
      %v916 = vunpack.c.l.b16 %v628
      %v917 = vunpack.c.l.b16 %v629
      %v918 = vunpack.c.l.b16 %v630
      %v919 = vunpack.c.l.b16 %v631
      %v920 = vunpack.c.l.b16 %v632
      %v921 = vunpack.c.l.b16 %v633
      %v922 = vunpack.c.l.b16 %v634
      %v923 = vunpack.c.l.b16 %v635
      %v924 = vunpack.c.l.b16 %v636
      %v925 = vunpack.c.l.b16 %v637
      %v926 = vunpack.c.l.b16 %v638
      %v927 = vunpack.c.l.b16 %v639
      %v928 = vunpack.c.l.b16 %v640
      %v929 = vunpack.c.l.b16 %v641
      %v930 = vunpack.c.l.b16 %v642
      %v931 = vunpack.c.l.b16 %v643
      %v932 = vunpack.c.l.b16 %v644
      %v933 = vunpack.c.l.b16 %v645
      %v934 = vunpack.c.l.b16 %v646
      %v935 = vunpack.c.l.b16 %v647
      %v936 = vunpack.c.l.b16 %v648
      %v937 = vunpack.c.l.b16 %v649
      %v938 = vunpack.c.l.b16 %v650
      %v939 = vunpack.c.l.b16 %v651
      %v940 = vunpack.c.l.b16 %v652
      %v941 = vunpack.c.l.b16 %v653
      %v942 = vunpack.c.l.b16 %v654
      %v943 = vunpack.c.l.b16 %v655
      %v944 = vunpack.c.l.b16 %v656
      %v945 = vunpack.c.l.b16 %v657
      %v946 = vunpack.c.l.b16 %v658
      %v947 = vunpack.c.l.b16 %v659
      %v948 = vunpack.c.l.b16 %v660
      %v949 = vunpack.c.l.b16 %v661
      %v950 = vunpack.c.l.b16 %v662
      %v951 = vunpack.c.l.b16 %v663
      %v952 = vunpack.c.l.b16 %v664
      %v953 = vunpack.c.l.b16 %v665
      %v954 = vunpack.c.l.b16 %v666
      %v955 = vunpack.c.l.b16 %v667
      %v956 = vunpack.c.l.b16 %v668
      %v957 = vunpack.c.l.b16 %v669
      %v958 = vunpack.c.l.b16 %v670
      %v959 = vunpack.c.l.b16 %v671
      %v960 = vunpack.c.l.b16 %v672
      %v961 = vunpack.c.l.b16 %v673
      %v962 = vunpack.c.l.b16 %v674
      %v963 = vunpack.c.l.b16 %v675
      %v964 = vunpack.c.l.b16 %v676
      %v965 = vunpack.c.l.b16 %v677
      %v966 = vunpack.c.l.b16 %v678
      %v967 = vunpack.c.l.b16 %v679
      %v968 = vunpack.c.l.b16 %v680
      %v969 = vunpack.c.l.b16 %v681
      %v970 = vunpack.c.l.b16 %v682
      %v971 = vunpack.c.l.b16 %v683
      %v972 = vunpack.c.l.b16 %v684
      %v973 = vunpack.c.l.b16 %v685
      %v974 = vunpack.c.l.b16 %v686
      %v975 = vunpack.c.l.b16 %v687
      %v976 = vunpack.c.l.b16 %v688
      %v977 = vunpack.c.l.b16 %v689
      %v978 = vunpack.c.l.b16 %v690
      %v979 = vunpack.c.l.b16 %v691
      %v980 = vunpack.c.l.b16 %v692
      %v981 = vunpack.c.l.b16 %v693
      %v982 = vunpack.c.l.b16 %v694
      %v983 = vunpack.c.l.b16 %v695
      %v984 = vunpack.c.l.b16 %v696
      %v985 = vunpack.c.l.b16 %v697
      %v986 = vunpack.c.l.b16 %v698
      %v987 = vunpack.c.l.b16 %v699
      %v988 = vunpack.c.l.b16 %v700
      %v989 = vunpack.c.l.b16 %v701
      %v990 = vunpack.c.l.b16 %v702
      %v991 = vunpack.c.l.b16 %v703
      %v992 = vunpack.c.l.b16 %v704
      %v993 = vunpack.c.l.b16 %v705
      %v994 = vunpack.c.l.b16 %v706
      %v995 = vunpack.c.l.b16 %v707
      %v996 = vunpack.c.l.b16 %v708
      %v997 = vunpack.c.l.b16 %v709
      %v998 = vunpack.c.l.b16 %v710
      %v999 = vunpack.c.l.b16 %v711
      %v1000 = vunpack.c.l.b16 %v712
      %v1001 = vunpack.c.l.b16 %v713
      %v1002 = vunpack.c.l.b16 %v714
      %v1003 = vunpack.c.l.b16 %v715
      %v1004 = vunpack.c.l.b16 %v716
      %v1005 = vunpack.c.l.b16 %v717
      %v1006 = vunpack.c.l.b16 %v718
      %v1007 = vunpack.c.l.b16 %v719
      %v1008 = vunpack.c.l.b16 %v720
      %v1009 = vunpack.c.l.b16 %v721
      %v1010 = vunpack.c.l.b16 %v722
      %v1011 = vunpack.c.l.b16 %v723
      %v1012 = vunpack.c.l.b16 %v724
      %v1013 = vunpack.c.l.b16 %v725
      %v1014 = vunpack.c.l.b16 %v726
      %v1015 = vunpack.c.l.b16 %v727
      %v1016 = vunpack.c.l.b16 %v728
      %v1017 = vunpack.c.l.b16 %v729
      %v1018 = vunpack.c.l.b16 %v730
      %v1019 = vunpack.c.l.b16 %v731
      %v1020 = vunpack.c.l.b16 %v732
      %v1021 = vunpack.c.l.b16 %v733
      %v1022 = vunpack.c.l.b16 %v734
      %v1023 = vunpack.c.l.b16 %v735
      %v1024 = vunpack.c.l.b16 %v736
      %v1025 = vunpack.c.l.b16 %v737
      %v1026 = vunpack.c.l.b16 %v738
      %v1027 = vunpack.c.l.b16 %v739
      %v1028 = vunpack.c.l.b16 %v740
      %v1029 = vunpack.c.l.b16 %v741
      %v1030 = vunpack.c.l.b16 %v742
      %v1031 = vunpack.c.l.b16 %v743
      %v1032 = vunpack.c.l.b16 %v744
      %v1033 = vunpack.c.l.b16 %v745
      %v1034 = vunpack.c.l.b16 %v746
      %v1035 = vunpack.c.l.b16 %v747
      %v1036 = vunpack.c.l.b16 %v748
      %v1037 = vunpack.c.l.b16 %v749
      %v1038 = vunpack.c.l.b16 %v750
      %v1039 = vunpack.c.l.b16 %v751
      %v1040 = vunpack.c.l.b16 %v752
      %v1041 = vunpack.c.l.b16 %v753
      %v1042 = vunpack.c.l.b16 %v754
      %v1043 = vunpack.c.l.b16 %v755
      %v1044 = vunpack.c.l.b16 %v756
      %v1045 = vunpack.c.l.b16 %v757
      %v1046 = vunpack.c.l.b16 %v758
      %v1047 = vunpack.c.l.b16 %v759
      %v1048 = vunpack.c.l.b16 %v760
      %v1049 = vunpack.c.l.b16 %v761
      %v1050 = vunpack.c.l.b16 %v762
      %v1051 = vunpack.c.l.b16 %v763
      %v1052 = vunpack.c.l.b16 %v764
      %v1053 = vpack.c.b16 %v910, %v909
      %v1054 = vpack.c.b16 %v912, %v911
      %v1055 = vpack.c.b16 %v914, %v913
      %v1056 = vpack.c.b16 %v916, %v915
      %v1057 = vpack.c.b16 %v918, %v917
      %v1058 = vpack.c.b16 %v920, %v919
      %v1059 = vpack.c.b16 %v922, %v921
      %v1060 = vpack.c.b16 %v924, %v923
      %v1061 = vpack.c.b16 %v926, %v925
      %v1062 = vpack.c.b16 %v928, %v927
      %v1063 = vpack.c.b16 %v930, %v929
      %v1064 = vpack.c.b16 %v932, %v931
      %v1065 = vpack.c.b16 %v934, %v933
      %v1066 = vpack.c.b16 %v936, %v935
      %v1067 = vpack.c.b16 %v938, %v937
      %v1068 = vpack.c.b16 %v940, %v939
      %v1069 = vpack.c.b16 %v942, %v941
      %v1070 = vpack.c.b16 %v944, %v943
      %v1071 = vpack.c.b16 %v946, %v945
      %v1072 = vpack.c.b16 %v948, %v947
      %v1073 = vpack.c.b16 %v950, %v949
      %v1074 = vpack.c.b16 %v952, %v951
      %v1075 = vpack.c.b16 %v954, %v953
      %v1076 = vpack.c.b16 %v956, %v955
      %v1077 = vpack.c.b16 %v958, %v957
      %v1078 = vpack.c.b16 %v960, %v959
      %v1079 = vpack.c.b16 %v962, %v961
      %v1080 = vpack.c.b16 %v964, %v963
      %v1081 = vpack.c.b16 %v966, %v965
      %v1082 = vpack.c.b16 %v968, %v967
      %v1083 = vpack.c.b16 %v970, %v969
      %v1084 = vpack.c.b16 %v972, %v971
      %v1085 = vpack.c.b16 %v974, %v973
      %v1086 = vpack.c.b16 %v976, %v975
      %v1087 = vpack.c.b16 %v978, %v977
      %v1088 = vpack.c.b16 %v980, %v979
      %v1089 = vpack.c.b16 %v982, %v981
      %v1090 = vpack.c.b16 %v984, %v983
      %v1091 = vpack.c.b16 %v986, %v985
      %v1092 = vpack.c.b16 %v988, %v987
      %v1093 = vpack.c.b16 %v990, %v989
      %v1094 = vpack.c.b16 %v992, %v991
      %v1095 = vpack.c.b16 %v994, %v993
      %v1096 = vpack.c.b16 %v996, %v995
      %v1097 = vpack.c.b16 %v998, %v997
      %v1098 = vpack.c.b16 %v1000, %v999
      %v1099 = vpack.c.b16 %v1002, %v1001
      %v1100 = vpack.c.b16 %v1004, %v1003
      %v1101 = vpack.c.b16 %v1006, %v1005
      %v1102 = vpack.c.b16 %v1008, %v1007
      %v1103 = vpack.c.b16 %v1010, %v1009
      %v1104 = vpack.c.b16 %v1012, %v1011
      %v1105 = vpack.c.b16 %v1014, %v1013
      %v1106 = vpack.c.b16 %v1016, %v1015
      %v1107 = vpack.c.b16 %v1018, %v1017
      %v1108 = vpack.c.b16 %v1020, %v1019
      %v1109 = vpack.c.b16 %v1022, %v1021
      %v1110 = vpack.c.b16 %v1024, %v1023
      %v1111 = vpack.c.b16 %v1026, %v1025
      %v1112 = vpack.c.b16 %v1028, %v1027
      %v1113 = vpack.c.b16 %v1030, %v1029
      %v1114 = vpack.c.b16 %v1032, %v1031
      %v1115 = vpack.c.b16 %v1034, %v1033
      %v1116 = vpack.c.b16 %v1036, %v1035
      %v1117 = vpack.c.b16 %v1038, %v1037
      %v1118 = vpack.c.b16 %v1040, %v1039
      %v1119 = vpack.c.b16 %v1042, %v1041
      %v1120 = vpack.c.b16 %v1044, %v1043
      %v1121 = vpack.c.b16 %v1046, %v1045
      %v1122 = vpack.c.b16 %v1048, %v1047
      %v1123 = vpack.c.b16 %v1050, %v1049
      %v1124 = vpack.c.b16 %v1052, %v1051
      %1197 = vmatprep.subr.bf16.mxu0 0
      %1198 = vmatpush1.bf16.msra.mxu0 %v1060
      %1199 = vmatprep.subr.bf16.mxu0 0
      %1200 = vmatpush1.bf16.msra.mxu0 %v1059
      %1201 = vmatprep.subr.bf16.mxu0 0
      %1202 = vmatpush1.bf16.msra.mxu0 %v1058
      %1203 = vmatprep.subr.bf16.mxu0 0
      %1204 = vmatpush1.bf16.msra.mxu0 %v1057
      %1205 = vmatprep.subr.bf16.mxu0 0
      %1206 = vmatpush1.bf16.msra.mxu0 %v1056
      %1207 = vmatprep.subr.bf16.mxu0 0
      %1208 = vmatpush1.bf16.msra.mxu0 %v1055
      %1209 = vmatprep.subr.bf16.mxu0 0
      %1210 = vmatpush1.bf16.msra.mxu0 %v1054
      %1211 = vmatprep.subr.bf16.mxu0 0
      %1212 = vmatpush1.bf16.msra.mxu0 %v1053
      %1213 = vmatprep.subr.bf16.mxu0 0
      %1214 = vmatpush2.bf16.msra.mxu0 %v1068
      %1215 = vmatprep.subr.bf16.mxu0 0
      %1216 = vmatpush2.bf16.msra.mxu0 %v1067
      %1217 = vmatprep.subr.bf16.mxu0 0
      %1218 = vmatpush2.bf16.msra.mxu0 %v1066
      %1219 = vmatprep.subr.bf16.mxu0 0
      %1220 = vmatpush2.bf16.msra.mxu0 %v1065
      %1221 = vmatprep.subr.bf16.mxu0 0
      %1222 = vmatpush2.bf16.msra.mxu0 %v1064
      %1223 = vmatprep.subr.bf16.mxu0 0
      %1224 = vmatpush2.bf16.msra.mxu0 %v1063
      %1225 = vmatprep.subr.bf16.mxu0 0
      %1226 = vmatpush2.bf16.msra.mxu0 %v1062
      %1227 = vmatprep.subr.bf16.mxu0 0
      %1228 = vmatpush2.bf16.msra.mxu0 %v1061
      %1229 = vmatprep.mubr.bf16.mxu0 %v587
      %1230 = vmatmul.mubr.bf16.gmra.mxu0 %v579
      %v1231 = vpop.f32.mrf.mxu0
      %v1232 = vadd.f32 0.0, %v1231
      %v1233 = vpop.f32.mrf.mxu0
      %v1234 = vpop.f32.mrf.mxu0
      %v1235 = vadd.f32 0.0, %v1234
      %v1236 = vpop.f32.mrf.mxu0
      %1237 = vmatprep.mubr.bf16.mxu0 %v588
      %1238 = vmatmul.mubr.bf16.gmra.mxu0 %v580
      %v1239 = vpop.f32.mrf.mxu0
      %v1240 = vadd.f32 0.0, %v1239
      %v1241 = vpop.f32.mrf.mxu0
      %v1242 = vpop.f32.mrf.mxu0
      %v1243 = vadd.f32 0.0, %v1242
      %v1244 = vpop.f32.mrf.mxu0
      %1245 = vdwg.mxu0
      %1246 = vmatprep.subr.bf16.mxu0 0
      %1247 = vmatpush1.bf16.msra.mxu0 %v1076
      %1248 = vmatprep.subr.bf16.mxu0 0
      %1249 = vmatpush1.bf16.msra.mxu0 %v1075
      %1250 = vmatprep.subr.bf16.mxu0 0
      %1251 = vmatpush1.bf16.msra.mxu0 %v1074
      %1252 = vmatprep.subr.bf16.mxu0 0
      %1253 = vmatpush1.bf16.msra.mxu0 %v1073
      %1254 = vmatprep.subr.bf16.mxu0 0
      %1255 = vmatpush1.bf16.msra.mxu0 %v1072
      %1256 = vmatprep.subr.bf16.mxu0 0
      %1257 = vmatpush1.bf16.msra.mxu0 %v1071
      %1258 = vmatprep.subr.bf16.mxu0 0
      %1259 = vmatpush1.bf16.msra.mxu0 %v1070
      %1260 = vmatprep.subr.bf16.mxu0 0
      %1261 = vmatpush1.bf16.msra.mxu0 %v1069
      %1262 = vmatprep.subr.bf16.mxu0 0
      %1263 = vmatpush2.bf16.msra.mxu0 %v1084
      %1264 = vmatprep.subr.bf16.mxu0 0
      %1265 = vmatpush2.bf16.msra.mxu0 %v1083
      %1266 = vmatprep.subr.bf16.mxu0 0
      %1267 = vmatpush2.bf16.msra.mxu0 %v1082
      %1268 = vmatprep.subr.bf16.mxu0 0
      %1269 = vmatpush2.bf16.msra.mxu0 %v1081
      %1270 = vmatprep.subr.bf16.mxu0 0
      %1271 = vmatpush2.bf16.msra.mxu0 %v1080
      %1272 = vmatprep.subr.bf16.mxu0 0
      %1273 = vmatpush2.bf16.msra.mxu0 %v1079
      %1274 = vmatprep.subr.bf16.mxu0 0
      %1275 = vmatpush2.bf16.msra.mxu0 %v1078
      %1276 = vmatprep.subr.bf16.mxu0 0
      %1277 = vmatpush2.bf16.msra.mxu0 %v1077
      %1278 = vmatprep.mubr.bf16.mxu0 %v599
      %1279 = vmatmul.mubr.bf16.gmra.mxu0 %v595
      %v1280 = vpop.f32.mrf.mxu0
      %v1281 = vadd.f32 %v1232, %v1280
      %v1282 = vpop.f32.mrf.mxu0
      %v1283 = vpop.f32.mrf.mxu0
      %v1284 = vadd.f32 %v1235, %v1283
      %v1285 = vpop.f32.mrf.mxu0
      %1286 = vmatprep.mubr.bf16.mxu0 %v600
      %1287 = vmatmul.mubr.bf16.gmra.mxu0 %v596
      %v1288 = vpop.f32.mrf.mxu0
      %v1289 = vadd.f32 %v1240, %v1288
      %v1290 = vpop.f32.mrf.mxu0
      %v1291 = vpop.f32.mrf.mxu0
      %v1292 = vadd.f32 %v1243, %v1291
      %v1293 = vpop.f32.mrf.mxu0
      %1294 = vdwg.mxu0
      %1295 = vmatprep.subr.bf16.mxu0 0
      %1296 = vmatpush1.bf16.msra.mxu0 %v1092
      %1297 = vmatprep.subr.bf16.mxu0 0
      %1298 = vmatpush1.bf16.msra.mxu0 %v1091
      %1299 = vmatprep.subr.bf16.mxu0 0
      %1300 = vmatpush1.bf16.msra.mxu0 %v1090
      %1301 = vmatprep.subr.bf16.mxu0 0
      %1302 = vmatpush1.bf16.msra.mxu0 %v1089
      %1303 = vmatprep.subr.bf16.mxu0 0
      %1304 = vmatpush1.bf16.msra.mxu0 %v1088
      %1305 = vmatprep.subr.bf16.mxu0 0
      %1306 = vmatpush1.bf16.msra.mxu0 %v1087
      %1307 = vmatprep.subr.bf16.mxu0 0
      %1308 = vmatpush1.bf16.msra.mxu0 %v1086
      %1309 = vmatprep.subr.bf16.mxu0 0
      %1310 = vmatpush1.bf16.msra.mxu0 %v1085
      %1311 = vmatprep.subr.bf16.mxu0 0
      %1312 = vmatpush2.bf16.msra.mxu0 %v1100
      %1313 = vmatprep.subr.bf16.mxu0 0
      %1314 = vmatpush2.bf16.msra.mxu0 %v1099
      %1315 = vmatprep.subr.bf16.mxu0 0
      %1316 = vmatpush2.bf16.msra.mxu0 %v1098
      %1317 = vmatprep.subr.bf16.mxu0 0
      %1318 = vmatpush2.bf16.msra.mxu0 %v1097
      %1319 = vmatprep.subr.bf16.mxu0 0
      %1320 = vmatpush2.bf16.msra.mxu0 %v1096
      %1321 = vmatprep.subr.bf16.mxu0 0
      %1322 = vmatpush2.bf16.msra.mxu0 %v1095
      %1323 = vmatprep.subr.bf16.mxu0 0
      %1324 = vmatpush2.bf16.msra.mxu0 %v1094
      %1325 = vmatprep.subr.bf16.mxu0 0
      %1326 = vmatpush2.bf16.msra.mxu0 %v1093
      %1327 = vmatprep.mubr.bf16.mxu0 %v609
      %1328 = vmatmul.mubr.bf16.gmra.mxu0 %v604
      %v1329 = vpop.f32.mrf.mxu0
      %v1330 = vadd.f32 %v1281, %v1329
      %v1331 = vpop.f32.mrf.mxu0
      %v1332 = vpop.f32.mrf.mxu0
      %v1333 = vadd.f32 %v1284, %v1332
      %v1334 = vpop.f32.mrf.mxu0
      %1335 = vmatprep.mubr.bf16.mxu0 %v610
      %1336 = vmatmul.mubr.bf16.gmra.mxu0 %v605
      %v1337 = vpop.f32.mrf.mxu0
      %v1338 = vadd.f32 %v1289, %v1337
      %v1339 = vpop.f32.mrf.mxu0
      %v1340 = vpop.f32.mrf.mxu0
      %v1341 = vadd.f32 %v1292, %v1340
      %v1342 = vpop.f32.mrf.mxu0
      %1343 = vdwg.mxu0
      %1344 = vmatprep.subr.bf16.mxu0 0
      %1345 = vmatpush1.bf16.msra.mxu0 %v1108
      %1346 = vmatprep.subr.bf16.mxu0 0
      %1347 = vmatpush1.bf16.msra.mxu0 %v1107
      %1348 = vmatprep.subr.bf16.mxu0 0
      %1349 = vmatpush1.bf16.msra.mxu0 %v1106
      %1350 = vmatprep.subr.bf16.mxu0 0
      %1351 = vmatpush1.bf16.msra.mxu0 %v1105
      %1352 = vmatprep.subr.bf16.mxu0 0
      %1353 = vmatpush1.bf16.msra.mxu0 %v1104
      %1354 = vmatprep.subr.bf16.mxu0 0
      %1355 = vmatpush1.bf16.msra.mxu0 %v1103
      %1356 = vmatprep.subr.bf16.mxu0 0
      %1357 = vmatpush1.bf16.msra.mxu0 %v1102
      %1358 = vmatprep.subr.bf16.mxu0 0
      %1359 = vmatpush1.bf16.msra.mxu0 %v1101
      %1360 = vmatprep.subr.bf16.mxu0 0
      %1361 = vmatpush2.bf16.msra.mxu0 %v1116
      %1362 = vmatprep.subr.bf16.mxu0 0
      %1363 = vmatpush2.bf16.msra.mxu0 %v1115
      %1364 = vmatprep.subr.bf16.mxu0 0
      %1365 = vmatpush2.bf16.msra.mxu0 %v1114
      %1366 = vmatprep.subr.bf16.mxu0 0
      %1367 = vmatpush2.bf16.msra.mxu0 %v1113
      %1368 = vmatprep.subr.bf16.mxu0 0
      %1369 = vmatpush2.bf16.msra.mxu0 %v1112
      %1370 = vmatprep.subr.bf16.mxu0 0
      %1371 = vmatpush2.bf16.msra.mxu0 %v1111
      %1372 = vmatprep.subr.bf16.mxu0 0
      %1373 = vmatpush2.bf16.msra.mxu0 %v1110
      %1374 = vmatprep.subr.bf16.mxu0 0
      %1375 = vmatpush2.bf16.msra.mxu0 %v1109
      %1376 = vmatprep.mubr.bf16.mxu0 %v588
      %1377 = vmatmul.mubr.bf16.gmra.mxu0 %v580
      %v1378 = vpop.f32.mrf.mxu0
      %v1379 = vadd.f32 %v1330, %v1378
      %v1380 = vpop.f32.mrf.mxu0
      %v1381 = vpop.f32.mrf.mxu0
      %v1382 = vadd.f32 %v1333, %v1381
      %v1383 = vpop.f32.mrf.mxu0
      %1384 = vmatprep.mubr.bf16.mxu0 %v616
      %1385 = vmatmul.mubr.bf16.gmra.mxu0 %v613
      %v1386 = vpop.f32.mrf.mxu0
      %v1387 = vadd.f32 %v1338, %v1386
      %v1388 = vpop.f32.mrf.mxu0
      %v1389 = vpop.f32.mrf.mxu0
      %v1390 = vadd.f32 %v1341, %v1389
      %v1391 = vpop.f32.mrf.mxu0
      %1392 = vdwg.mxu0
      %1393 = vmatprep.subr.bf16.mxu0 0
      %1394 = vmatpush1.bf16.msra.mxu0 %v1124
      %1395 = vmatprep.subr.bf16.mxu0 0
      %1396 = vmatpush1.bf16.msra.mxu0 %v1123
      %1397 = vmatprep.subr.bf16.mxu0 0
      %1398 = vmatpush1.bf16.msra.mxu0 %v1122
      %1399 = vmatprep.subr.bf16.mxu0 0
      %1400 = vmatpush1.bf16.msra.mxu0 %v1121
      %1401 = vmatprep.subr.bf16.mxu0 0
      %1402 = vmatpush1.bf16.msra.mxu0 %v1120
      %1403 = vmatprep.subr.bf16.mxu0 0
      %1404 = vmatpush1.bf16.msra.mxu0 %v1119
      %1405 = vmatprep.subr.bf16.mxu0 0
      %1406 = vmatpush1.bf16.msra.mxu0 %v1118
      %1407 = vmatprep.subr.bf16.mxu0 0
      %1408 = vmatpush1.bf16.msra.mxu0 %v1117
      %1409 = vmatprep.subr.bf16.mxu0 0
      %1410 = vmatpush2.bf16.msra.mxu0 0
      %1411 = vmatprep.subr.bf16.mxu0 0
      %1412 = vmatpush2.bf16.msra.mxu0 0
      %1413 = vmatprep.subr.bf16.mxu0 0
      %1414 = vmatpush2.bf16.msra.mxu0 0
      %1415 = vmatprep.subr.bf16.mxu0 0
      %1416 = vmatpush2.bf16.msra.mxu0 0
      %1417 = vmatprep.subr.bf16.mxu0 0
      %1418 = vmatpush2.bf16.msra.mxu0 0
      %1419 = vmatprep.subr.bf16.mxu0 0
      %1420 = vmatpush2.bf16.msra.mxu0 0
      %1421 = vmatprep.subr.bf16.mxu0 0
      %1422 = vmatpush2.bf16.msra.mxu0 0
      %1423 = vmatprep.subr.bf16.mxu0 0
      %1424 = vmatpush2.bf16.msra.mxu0 0
      %1425 = vmatprep.mubr.bf16.mxu0 0
      %1426 = vmatmul.mubr.bf16.gmra.mxu0 %v596
      %v1427 = vpop.f32.mrf.mxu0
      %v1428 = vadd.f32 %v1379, %v1427
      %v1429 = vpop.f32.mrf.mxu0
      %v1430 = vpop.f32.mrf.mxu0
      %v1431 = vadd.f32 %v1382, %v1430
      %v1432 = vpop.f32.mrf.mxu0
      %1433 = vmatprep.mubr.bf16.mxu0 0
      %1434 = vmatmul.mubr.bf16.gmra.mxu0 %v619
      %v1435 = vpop.f32.mrf.mxu0
      %v1436 = vadd.f32 %v1387, %v1435
      %v1437 = vpop.f32.mrf.mxu0
      %v1438 = vpop.f32.mrf.mxu0
      %v1439 = vadd.f32 %v1390, %v1438
      %v1440 = vpop.f32.mrf.mxu0
      %1441 = vdwg.mxu0
      %v1442 = vpack.c.bf16 %v1431, %v1428
      %v1443 = vpack.c.bf16 %v1439, %v1436
      %v1446 = vunpack.c.l.b16 %v1442
      %v1447 = vunpack.c.h.b16 %v1442
      %v1448 = vunpack.c.l.b16 %v1443
      %v1449 = vunpack.c.h.b16 %v1443
      %v1450 = vpack.c.b16 %v1446, %v1446
      %v1451 = vpack.c.b16 %v1447, %v1447
      %v1452 = vpack.c.b16 %v1448, %v1448
      %v1453 = vpack.c.b16 %v1449, %v1449
      %1458 = vst [vmem:[%s259] sm:$0xf] %v1450
      %1459 = vst [vmem:[%s259 + $0x4] sm:$0xf] %v1451
      %1460 = vst [vmem:[%s259 + $0x8] sm:$0xf] %v1452
      %1461 = vst [vmem:[%s259 + $0xc] sm:$0xf] %v1453
      %v1462 = vadd.f32 %v1428, %v1431
      %v1463 = vadd.f32 %v1462, %v1436
      %v1464 = vadd.f32 %v1463, %v1439
      %v1465 = vrot.slane %v1464, 4
      %v1466 = vadd.f32 %v1464, %v1465
      %v1467 = vrot.slane %v1466, 2
      %v1468 = vadd.f32 %v1466, %v1467
      %v1469 = vrot.slane %v1468, 1
      %v1470 = vadd.f32 %v1468, %v1469
      %v1471 = vmul.f32 %v1428, %v1428
      %v1472 = vmul.f32 %v1431, %v1431
      %v1473 = vmul.f32 %v1436, %v1436
      %v1474 = vmul.f32 %v1439, %v1439
      %v1475 = vadd.f32 %v1471, %v1472
      %v1476 = vadd.f32 %v1475, %v1473
      %v1477 = vadd.f32 %v1476, %v1474
      %v1478 = vrot.slane %v1477, 4
      %v1479 = vadd.f32 %v1477, %v1478
      %v1480 = vrot.slane %v1479, 2
      %v1481 = vadd.f32 %v1479, %v1480
      %v1482 = vrot.slane %v1481, 1
      %v1483 = vadd.f32 %v1481, %v1482
      %vm1484 = vcmask 1040384
      %v1485 = vsel %vm1484, %v1470, %v1483
      %1486 = vst [vmem:[%s266] sm:$0x3] %v1485
      %s1487 = smul.u32 4, %s22
      %p1488 = scmp.lt.s32.totalorder %s21, 1
      %s1489 = scalar_select %p1488, %s21, 1
      %p1490 = scmp.lt.s32.totalorder %s1487, 7
      %s1491 = scalar_select %p1490, %s1487, 7
      %s1492 = smul.addr %s1489, 8
      %s1493 = sadd.s32 %s1491, %s1492
      %s1494 = smul.addr %s1493, 4
      %s1495 = scalar_lea.vmem %s4, %s1494
      %s1496 = smul.u32 %s21, 2
      %s1497 = sadd.s32 %s1496, %s22
      %p1498 = scmp.lt.s32.totalorder %s1497, 3
      %s1499 = scalar_select %p1498, %s1497, 3
      %s1500 = smul.addr %s1499, 2
      %s1501 = scalar_lea.vmem %s5, %s1500
      // Predicated region
      $region37: #{res_bottleneck_forward.5} parent=35 // pred_check
        %p1502 = pneg %p138
      $region38: #{res_bottleneck_forward.5} parent=35 // pred_check_branch
        %1504 = sbr.rel (%p1502) target = $region40
      $region39: #{res_bottleneck_forward.5} parent=35 // pred_region
        %s1505 = smul.u32 4, %s22
      $region40: #{res_bottleneck_forward.5} parent=35 // pred_fallthru
        _
      // Predicated region
      $region41: #{res_bottleneck_forward.5} parent=35 // pred_check
        %p1506 = pneg %p168
      $region42: #{res_bottleneck_forward.5} parent=35 // pred_check_branch
        %1508 = sbr.rel (%p1506) target = $region44
      $region43: #{res_bottleneck_forward.5} parent=35 // pred_region
        %s1509 = smul.u32 %s21, 2
        %s1510 = sadd.s32 %s1509, %s22
      $region44: #{res_bottleneck_forward.5} parent=35 // pred_fallthru
        _
    $region36: #{res_bottleneck_forward.5} parent=5 // pred_fallthru
      _
    %p1511 = scmp.le.s32.totalorder 2, %s12
    // Predicated region
    $region45: #{res_bottleneck_forward.5} parent=5 // pred_check
      %p1512 = pneg %p1511
    $region46: #{res_bottleneck_forward.5} parent=5 // pred_check_branch
      %1514 = sbr.rel (%p1512) target = $region48
    $region47: #{res_bottleneck_forward.5} parent=5 // pred_region
      %s1515 = ssub.s32 %s12, 2
      // Predicated region
      $region49: #{res_bottleneck_forward.5} parent=47 // pred_check
        %p1516 = pneg %p144
      $region50: #{res_bottleneck_forward.5} parent=47 // pred_check_branch
        %1518 = sbr.rel (%p1516) target = $region52
      $region51: #{res_bottleneck_forward.5} parent=47 // pred_region
        %s1519 = smul.u32 4, %s24
        %p1520 = scmp.lt.s32.totalorder %s23, 1
        %s1521 = scalar_select %p1520, %s23, 1
        %p1522 = scmp.lt.s32.totalorder %s1519, 7
        %s1523 = scalar_select %p1522, %s1519, 7
        %s1524 = smul.addr %s1521, 8
        %s1525 = sadd.s32 %s1523, %s1524
        %s1526 = smul.addr %s1525, 4
        %s1527 = scalar_lea.vmem %s4, %s1526
      $region52: #{res_bottleneck_forward.5} parent=47 // pred_fallthru
        _
      // Predicated region
      $region53: #{res_bottleneck_forward.5} parent=47 // pred_check
        %p1528 = pneg %p174
      $region54: #{res_bottleneck_forward.5} parent=47 // pred_check_branch
        %1530 = sbr.rel (%p1528) target = $region56
      $region55: #{res_bottleneck_forward.5} parent=47 // pred_region
        %s1531 = smul.u32 %s23, 2
        %s1532 = sadd.s32 %s1531, %s24
        %p1533 = scmp.lt.s32.totalorder %s1532, 3
        %s1534 = scalar_select %p1533, %s1532, 3
        %s1535 = smul.addr %s1534, 2
        %s1536 = scalar_lea.vmem %s5, %s1535
      $region56: #{res_bottleneck_forward.5} parent=47 // pred_fallthru
        _
    $region48: #{res_bottleneck_forward.5} parent=5 // pred_fallthru
      _
  $region6: #{res_bottleneck_forward.5} parent=0 // loop_footer
    %s16 = sadd.s32 1, %s12
  $region7: #{res_bottleneck_forward.5} parent=0 // loop_footer_branch
    %11 = sbr.rel target = $region3
  $region8: #{res_bottleneck_forward.5} parent=0 // loop_exit
    _

// kernel: res_bottleneck_forward.4
$region0: #{res_bottleneck_forward.4}
  #allocation0 [shape = 'u32[]', space=smem, size = 0x4, offset = 0x4, fixed_abs, tag = 'smem constant byte address 0x4 - core index']
  #allocation1 [shape = 'u32[144,128]{1,0:T(1,128)}', space=vmem, size = 0x12000, scoped, tag = 'internal scratch']
  %s0 = inlined_call_operand.vmem [shape: bf16[2,8,8,128], index: 0, kind: input, shape index: {}]
  %s1 = inlined_call_operand.vmem [shape: bf16[128,128], index: 1, kind: input, shape index: {}]
  %s2 = inlined_call_operand.vmem [shape: bf16[128,128], index: 2, kind: input, shape index: {}]
  %s3 = inlined_call_operand.vmem [shape: bf16[2,8,8,128], index: 3, kind: output, shape index: {0}]
  %s4 = inlined_call_operand.vmem [shape: bf16[2,8,8,128], index: 4, kind: output, shape index: {1}]
  %s5 = inlined_call_operand.vmem [shape: f32[4,2,128], index: 5, kind: output, shape index: {2}]
  %s6 = inlined_call_operand.vmem [shape: f32[4,2,128], index: 6, kind: output, shape index: {3}]
  %7 = xla_tuple %s3, %s4, %s5, %s6
  %s8 = sld [smem:[#allocation0]]
  $region69: #{res_bottleneck_forward.4} parent=0
    _
  %s10 = ssub.s32 1, %s8
  %s11 = scalar_select 0, %s10, %s8
  loop: start=0, step=1, limit=6
  $region2: #{res_bottleneck_forward.4} parent=0 // loop_pre_header
    _
  $region3: #{res_bottleneck_forward.4} parent=0 // loop_header
    %s13 = sphi 0, %s17
    %p14 = scmp.ge.s32.totalorder %s13, 6
    %s20 = sphi 0, %s32
    %s21 = sphi 0, %s28
    %s22 = sphi 0, %s20
    %s23 = sphi 0, %s21
    %s24 = sphi 0, %s22
    %s25 = sphi 0, %s23
    %s37 = sphi 0, %s39
    %s40 = sphi 0, %s37
    %s41 = sphi 0, %s40
    %s57 = sphi 0, %s41
    %s61 = sphi 0, %s61
    %s63 = sphi 0, %s61
    %s64 = sphi 0, %s63
    %s78 = sphi 0, %s64
    %s82 = sphi 0, %s82
    %s84 = sphi 0, %s82
    %s85 = sphi 0, %s84
    %s99 = sphi 0, %s85
    %s107 = sphi 0, %s109
    %s110 = sphi 0, %s107
    %s111 = sphi 0, %s110
    %s127 = sphi 0, %s111
    %s135 = sphi 0, %s137
    %s138 = sphi 0, %s135
    %s139 = sphi 0, %s138
    %s155 = sphi 0, %s139
    %s165 = sphi 0, %s167
    %s168 = sphi 0, %s165
    %s169 = sphi 0, %s168
    %s185 = sphi 0, %s169
    %s195 = sphi 0, %s197
    %s198 = sphi 0, %s195
    %s199 = sphi 0, %s198
    %s215 = sphi 0, %s199
  $region4: #{res_bottleneck_forward.4} parent=0 // loop_header_branch
    %16 = sbr.rel (%p14) target = $region8
  $region5: #{res_bottleneck_forward.4} parent=0 // loop_body
    %s18 = ssub.s32 %s13, 1
    %s19 = ssub.s32 %s13, 2
    %s26 = sadd.s32 1, %s21
    %p27 = scmp.ge.s32.totalorder %s26, 2
    %s28 = scalar_select %p27, 0, %s26
    %s29 = sadd.s32 1, %s20
    %s30 = scalar_select %p27, %s29, %s20
    %p31 = scmp.ge.s32.totalorder %s30, 2
    %s32 = scalar_select %p31, 0, %s30
    %s33 = ssub.s32 %s20, %s32
    %s34 = ssub.s32 %s21, %s28
    %s35 = sor.u32 %s33, %s34
    %p36 = scmp.eq.s32.totalorder %s35, 0
    %s38 = sadd.s32 %s37, 1
    %s39 = scalar_select %p36, %s37, %s38
    %p42 = pneg %p36
    %p43 = scmp.eq.s32.totalorder %s13, 3
    %p44 = por %p42, %p43
    %p45 = scmp.ne.s32.totalorder %s37, %s40
    %p46 = scmp.eq.s32.totalorder %s13, 0
    %p47 = por %p45, %p46
    %p48 = scmp.ne.s32.totalorder %s37, %s40
    %p49 = scmp.eq.s32.totalorder %s18, 3
    %p50 = por %p48, %p49
    %p51 = scmp.ne.s32.totalorder %s40, %s41
    %p52 = scmp.eq.s32.totalorder %s18, 0
    %p53 = por %p51, %p52
    %p54 = scmp.ne.s32.totalorder %s40, %s41
    %p55 = scmp.eq.s32.totalorder %s19, 3
    %p56 = por %p54, %p55
    %p58 = scmp.ne.s32.totalorder %s41, %s57
    %p59 = scmp.eq.s32.totalorder %s19, 0
    %p60 = por %p58, %p59
    %s62 = sadd.s32 %s61, 1
    %p65 = scmp.eq.s32.totalorder %s13, 3
    %p66 = scmp.ne.s32.totalorder %s61, %s63
    %p67 = scmp.eq.s32.totalorder %s13, 0
    %p68 = por %p66, %p67
    %p69 = scmp.ne.s32.totalorder %s61, %s63
    %p70 = scmp.eq.s32.totalorder %s18, 3
    %p71 = por %p69, %p70
    %p72 = scmp.ne.s32.totalorder %s63, %s64
    %p73 = scmp.eq.s32.totalorder %s18, 0
    %p74 = por %p72, %p73
    %p75 = scmp.ne.s32.totalorder %s63, %s64
    %p76 = scmp.eq.s32.totalorder %s19, 3
    %p77 = por %p75, %p76
    %p79 = scmp.ne.s32.totalorder %s64, %s78
    %p80 = scmp.eq.s32.totalorder %s19, 0
    %p81 = por %p79, %p80
    %s83 = sadd.s32 %s82, 1
    %p86 = scmp.eq.s32.totalorder %s13, 3
    %p87 = scmp.ne.s32.totalorder %s82, %s84
    %p88 = scmp.eq.s32.totalorder %s13, 0
    %p89 = por %p87, %p88
    %p90 = scmp.ne.s32.totalorder %s82, %s84
    %p91 = scmp.eq.s32.totalorder %s18, 3
    %p92 = por %p90, %p91
    %p93 = scmp.ne.s32.totalorder %s84, %s85
    %p94 = scmp.eq.s32.totalorder %s18, 0
    %p95 = por %p93, %p94
    %p96 = scmp.ne.s32.totalorder %s84, %s85
    %p97 = scmp.eq.s32.totalorder %s19, 3
    %p98 = por %p96, %p97
    %p100 = scmp.ne.s32.totalorder %s85, %s99
    %p101 = scmp.eq.s32.totalorder %s19, 0
    %p102 = por %p100, %p101
    %s103 = ssub.s32 %s20, %s32
    %s104 = ssub.s32 %s21, %s28
    %s105 = sor.u32 %s103, %s104
    %p106 = scmp.eq.s32.totalorder %s105, 0
    %s108 = sadd.s32 %s107, 1
    %s109 = scalar_select %p106, %s107, %s108
    %p112 = pneg %p106
    %p113 = scmp.eq.s32.totalorder %s13, 3
    %p114 = por %p112, %p113
    %p115 = scmp.ne.s32.totalorder %s107, %s110
    %p116 = scmp.eq.s32.totalorder %s13, 0
    %p117 = por %p115, %p116
    %p118 = scmp.ne.s32.totalorder %s107, %s110
    %p119 = scmp.eq.s32.totalorder %s18, 3
    %p120 = por %p118, %p119
    %p121 = scmp.ne.s32.totalorder %s110, %s111
    %p122 = scmp.eq.s32.totalorder %s18, 0
    %p123 = por %p121, %p122
    %p124 = scmp.ne.s32.totalorder %s110, %s111
    %p125 = scmp.eq.s32.totalorder %s19, 3
    %p126 = por %p124, %p125
    %p128 = scmp.ne.s32.totalorder %s111, %s127
    %p129 = scmp.eq.s32.totalorder %s19, 0
    %p130 = por %p128, %p129
    %s131 = ssub.s32 %s20, %s32
    %s132 = ssub.s32 %s21, %s28
    %s133 = sor.u32 %s131, %s132
    %p134 = scmp.eq.s32.totalorder %s133, 0
    %s136 = sadd.s32 %s135, 1
    %s137 = scalar_select %p134, %s135, %s136
    %p140 = pneg %p134
    %p141 = scmp.eq.s32.totalorder %s13, 3
    %p142 = por %p140, %p141
    %p143 = scmp.ne.s32.totalorder %s135, %s138
    %p144 = scmp.eq.s32.totalorder %s13, 0
    %p145 = por %p143, %p144
    %p146 = scmp.ne.s32.totalorder %s135, %s138
    %p147 = scmp.eq.s32.totalorder %s18, 3
    %p148 = por %p146, %p147
    %p149 = scmp.ne.s32.totalorder %s138, %s139
    %p150 = scmp.eq.s32.totalorder %s18, 0
    %p151 = por %p149, %p150
    %p152 = scmp.ne.s32.totalorder %s138, %s139
    %p153 = scmp.eq.s32.totalorder %s19, 3
    %p154 = por %p152, %p153
    %p156 = scmp.ne.s32.totalorder %s139, %s155
    %p157 = scmp.eq.s32.totalorder %s19, 0
    %p158 = por %p156, %p157
    %s159 = smul.u32 %s20, 2
    %s160 = sadd.s32 %s159, %s21
    %s161 = smul.u32 %s32, 2
    %s162 = sadd.s32 %s161, %s28
    %s163 = ssub.s32 %s160, %s162
    %p164 = scmp.eq.s32.totalorder %s163, 0
    %s166 = sadd.s32 %s165, 1
    %s167 = scalar_select %p164, %s165, %s166
    %p170 = pneg %p164
    %p171 = scmp.eq.s32.totalorder %s13, 3
    %p172 = por %p170, %p171
    %p173 = scmp.ne.s32.totalorder %s165, %s168
    %p174 = scmp.eq.s32.totalorder %s13, 0
    %p175 = por %p173, %p174
    %p176 = scmp.ne.s32.totalorder %s165, %s168
    %p177 = scmp.eq.s32.totalorder %s18, 3
    %p178 = por %p176, %p177
    %p179 = scmp.ne.s32.totalorder %s168, %s169
    %p180 = scmp.eq.s32.totalorder %s18, 0
    %p181 = por %p179, %p180
    %p182 = scmp.ne.s32.totalorder %s168, %s169
    %p183 = scmp.eq.s32.totalorder %s19, 3
    %p184 = por %p182, %p183
    %p186 = scmp.ne.s32.totalorder %s169, %s185
    %p187 = scmp.eq.s32.totalorder %s19, 0
    %p188 = por %p186, %p187
    %s189 = smul.u32 %s20, 2
    %s190 = sadd.s32 %s189, %s21
    %s191 = smul.u32 %s32, 2
    %s192 = sadd.s32 %s191, %s28
    %s193 = ssub.s32 %s190, %s192
    %p194 = scmp.eq.s32.totalorder %s193, 0
    %s196 = sadd.s32 %s195, 1
    %s197 = scalar_select %p194, %s195, %s196
    %p200 = pneg %p194
    %p201 = scmp.eq.s32.totalorder %s13, 3
    %p202 = por %p200, %p201
    %p203 = scmp.ne.s32.totalorder %s195, %s198
    %p204 = scmp.eq.s32.totalorder %s13, 0
    %p205 = por %p203, %p204
    %p206 = scmp.ne.s32.totalorder %s195, %s198
    %p207 = scmp.eq.s32.totalorder %s18, 3
    %p208 = por %p206, %p207
    %p209 = scmp.ne.s32.totalorder %s198, %s199
    %p210 = scmp.eq.s32.totalorder %s18, 0
    %p211 = por %p209, %p210
    %p212 = scmp.ne.s32.totalorder %s198, %s199
    %p213 = scmp.eq.s32.totalorder %s19, 3
    %p214 = por %p212, %p213
    %p216 = scmp.ne.s32.totalorder %s199, %s215
    %p217 = scmp.eq.s32.totalorder %s19, 0
    %p218 = por %p216, %p217
    %p219 = scmp.le.s32.totalorder 1, %s13
    %p220 = scmp.lt.s32.totalorder %s13, 5
    %p221 = pnand %p219, %p220
    %p222 = pneg %p221
    // Predicated region
    $region9: #{res_bottleneck_forward.4} parent=5 // pred_check
      _
    $region10: #{res_bottleneck_forward.4} parent=5 // pred_check_branch
      %224 = sbr.rel (%p221) target = $region12
    $region11: #{res_bottleneck_forward.4} parent=5 // pred_region
      %s225 = ssub.s32 %s13, 1
      // Predicated region
      $region13: #{res_bottleneck_forward.4} parent=11 // pred_check
        %p226 = pneg %p74
      $region14: #{res_bottleneck_forward.4} parent=11 // pred_check_branch
        %228 = sbr.rel (%p226) target = $region16
      $region15: #{res_bottleneck_forward.4} parent=11 // pred_region
        _
      $region16: #{res_bottleneck_forward.4} parent=11 // pred_fallthru
        _
      // Predicated region
      $region17: #{res_bottleneck_forward.4} parent=11 // pred_check
        %p229 = pneg %p95
      $region18: #{res_bottleneck_forward.4} parent=11 // pred_check_branch
        %231 = sbr.rel (%p229) target = $region20
      $region19: #{res_bottleneck_forward.4} parent=11 // pred_region
        _
      $region20: #{res_bottleneck_forward.4} parent=11 // pred_fallthru
        _
    $region12: #{res_bottleneck_forward.4} parent=5 // pred_fallthru
      _
    %p232 = scmp.lt.s32.totalorder %s13, 4
    // Predicated region
    $region21: #{res_bottleneck_forward.4} parent=5 // pred_check
      %p233 = pneg %p232
    $region22: #{res_bottleneck_forward.4} parent=5 // pred_check_branch
      %235 = sbr.rel (%p233) target = $region24
    $region23: #{res_bottleneck_forward.4} parent=5 // pred_region
      // Predicated region
      $region25: #{res_bottleneck_forward.4} parent=23 // pred_check
        %p236 = pneg %p47
      $region26: #{res_bottleneck_forward.4} parent=23 // pred_check_branch
        %238 = sbr.rel (%p236) target = $region28
      $region27: #{res_bottleneck_forward.4} parent=23 // pred_region
        %s239 = smul.u32 4, %s21
        %p240 = scmp.lt.s32.totalorder %s20, 1
        %s241 = scalar_select %p240, %s20, 1
        %p242 = scmp.lt.s32.totalorder %s239, 7
        %s243 = scalar_select %p242, %s239, 7
        %s244 = smul.addr %s241, 8
        %s245 = sadd.s32 %s243, %s244
        %s246 = smul.addr %s245, 4
        %s247 = scalar_lea.vmem %s0, %s246
        %s248 = smul.u32 4, %s21
      $region28: #{res_bottleneck_forward.4} parent=23 // pred_fallthru
        _
    $region24: #{res_bottleneck_forward.4} parent=5 // pred_fallthru
      _
    %p249 = scmp.le.s32.totalorder 1, %s13
    %p250 = scmp.lt.s32.totalorder %s13, 5
    %p251 = pnand %p249, %p250
    %p252 = pneg %p251
    // Predicated region
    $region29: #{res_bottleneck_forward.4} parent=5 // pred_check
      _
    $region30: #{res_bottleneck_forward.4} parent=5 // pred_check_branch
      %254 = sbr.rel (%p251) target = $region32
    $region31: #{res_bottleneck_forward.4} parent=5 // pred_region
      %s255 = ssub.s32 %s13, 1
      %s256 = smul.u32 4, %s23
      %p257 = scmp.lt.s32.totalorder %s22, 1
      %s258 = scalar_select %p257, %s22, 1
      %p259 = scmp.lt.s32.totalorder %s256, 7
      %s260 = scalar_select %p259, %s256, 7
      %s261 = smul.addr %s258, 8
      %s262 = sadd.s32 %s260, %s261
      %s263 = smul.addr %s262, 4
      %s264 = scalar_lea.vmem %s0, %s263
      %p265 = pneg %p53
      %p266 = pneg %p50
      %p267 = pneg %p74
      %p268 = pneg %p71
      %p269 = pneg %p95
      %p270 = pneg %p92
      %p271 = pneg %p123
      %p272 = pneg %p120
      %s273 = smul.u32 4, %s23
      %p274 = scmp.lt.s32.totalorder %s22, 1
      %s275 = scalar_select %p274, %s22, 1
      %p276 = scmp.lt.s32.totalorder %s273, 7
      %s277 = scalar_select %p276, %s273, 7
      %s278 = smul.addr %s275, 8
      %s279 = sadd.s32 %s277, %s278
      %s280 = smul.addr %s279, 4
      %s281 = scalar_lea.vmem %s3, %s280
      %p282 = pneg %p151
      %p283 = pneg %p148
      %s284 = smul.u32 4, %s23
      %p285 = scmp.lt.s32.totalorder %s22, 1
      %s286 = scalar_select %p285, %s22, 1
      %p287 = scmp.lt.s32.totalorder %s284, 7
      %s288 = scalar_select %p287, %s284, 7
      %s289 = smul.addr %s286, 8
      %s290 = sadd.s32 %s288, %s289
      %s291 = smul.addr %s290, 4
      %s292 = scalar_lea.vmem %s4, %s291
      %p293 = pneg %p181
      %p294 = pneg %p178
      %s295 = smul.u32 %s22, 2
      %s296 = sadd.s32 %s295, %s23
      %p297 = scmp.lt.s32.totalorder %s296, 3
      %s298 = scalar_select %p297, %s296, 3
      %s299 = smul.addr %s298, 2
      %s300 = scalar_lea.vmem %s5, %s299
      %p301 = pneg %p211
      %p302 = pneg %p208
      %s303 = smul.u32 %s22, 2
      %s304 = sadd.s32 %s303, %s23
      %p305 = scmp.lt.s32.totalorder %s304, 3
      %s306 = scalar_select %p305, %s304, 3
      %s307 = smul.addr %s306, 2
      %s308 = scalar_lea.vmem %s6, %s307
      %s309 = smul.u32 4, %s23
      %p310 = scmp.lt.s32.totalorder %s22, 1
      %s311 = scalar_select %p310, %s22, 1
      %p312 = scmp.lt.s32.totalorder %s309, 7
      %s313 = scalar_select %p312, %s309, 7
      %s314 = smul.addr %s311, 8
      %s315 = sadd.s32 %s313, %s314
      %s316 = smul.addr %s315, 4
      %s317 = scalar_lea.vmem %s0, %s316
      %s318 = smul.u32 4, %s23
      %s319 = smul.u32 4, %s23
      %p320 = scmp.lt.s32.totalorder %s22, 1
      %s321 = scalar_select %p320, %s22, 1
      %p322 = scmp.lt.s32.totalorder %s319, 7
      %s323 = scalar_select %p322, %s319, 7
      %s324 = smul.addr %s321, 8
      %s325 = sadd.s32 %s323, %s324
      %s326 = smul.addr %s325, 4
      %s327 = scalar_lea.vmem %s3, %s326
      %s328 = smul.u32 4, %s23
      %s329 = smul.u32 4, %s23
      %p330 = scmp.lt.s32.totalorder %s22, 1
      %s331 = scalar_select %p330, %s22, 1
      %p332 = scmp.lt.s32.totalorder %s329, 7
      %s333 = scalar_select %p332, %s329, 7
      %s334 = smul.addr %s331, 8
      %s335 = sadd.s32 %s333, %s334
      %s336 = smul.addr %s335, 4
      %s337 = scalar_lea.vmem %s4, %s336
      %s338 = smul.u32 4, %s23
      %s339 = smul.u32 %s22, 2
      %s340 = sadd.s32 %s339, %s23
      %p341 = scmp.lt.s32.totalorder %s340, 3
      %s342 = scalar_select %p341, %s340, 3
      %s343 = smul.addr %s342, 2
      %s344 = scalar_lea.vmem %s5, %s343
      %s345 = smul.u32 %s22, 2
      %s346 = sadd.s32 %s345, %s23
      %s347 = smul.u32 %s22, 2
      %s348 = sadd.s32 %s347, %s23
      %p349 = scmp.lt.s32.totalorder %s348, 3
      %s350 = scalar_select %p349, %s348, 3
      %s351 = smul.addr %s350, 2
      %s352 = scalar_lea.vmem %s6, %s351
      %s353 = smul.u32 %s22, 2
      %s354 = sadd.s32 %s353, %s23
      %v356 = vld [vmem:[%s317] sm:$0xf]
      %v357 = vld [vmem:[%s317 + $0x4] sm:$0xf]
      %v358 = vld [vmem:[%s317 + $0x8] sm:$0xf]
      %v359 = vld [vmem:[%s317 + $0xc] sm:$0xf]
      %v360 = vld [vmem:[%s1] sm:$0xf]
      %v361 = vld [vmem:[%s1 + $0x4] sm:$0xf]
      %v362 = vld [vmem:[%s1 + $0x8] sm:$0xf]
      %v363 = vld [vmem:[%s1 + $0xc] sm:$0xf]
      %v364 = vld [vmem:[%s1 + $0x10] sm:$0xf]
      %v365 = vld [vmem:[%s1 + $0x14] sm:$0xf]
      %v366 = vld [vmem:[%s1 + $0x18] sm:$0xf]
      %v367 = vld [vmem:[%s1 + $0x1c] sm:$0xf]
      %v368 = vld [vmem:[%s1 + $0x20] sm:$0xf]
      %v369 = vld [vmem:[%s1 + $0x24] sm:$0xf]
      %v370 = vld [vmem:[%s1 + $0x28] sm:$0xf]
      %v371 = vld [vmem:[%s1 + $0x2c] sm:$0xf]
      %v372 = vld [vmem:[%s1 + $0x30] sm:$0xf]
      %v373 = vld [vmem:[%s1 + $0x34] sm:$0xf]
      %v374 = vld [vmem:[%s1 + $0x38] sm:$0xf]
      %v375 = vld [vmem:[%s1 + $0x3c] sm:$0xf]
      %v380 = vunpack.c.l.b16 %v356
      %v381 = vunpack.c.l.b16 %v357
      %v382 = vunpack.c.l.b16 %v358
      %v383 = vunpack.c.l.b16 %v359
      %v384 = vpack.c.b16 %v381, %v380
      %v385 = vpack.c.b16 %v383, %v382
      %v404 = vunpack.c.l.b16 %v360
      %v405 = vunpack.c.l.b16 %v361
      %v406 = vunpack.c.l.b16 %v362
      %v407 = vunpack.c.l.b16 %v363
      %v408 = vunpack.c.l.b16 %v364
      %v409 = vunpack.c.l.b16 %v365
      %v410 = vunpack.c.l.b16 %v366
      %v411 = vunpack.c.l.b16 %v367
      %v412 = vunpack.c.l.b16 %v368
      %v413 = vunpack.c.l.b16 %v369
      %v414 = vunpack.c.l.b16 %v370
      %v415 = vunpack.c.l.b16 %v371
      %v416 = vunpack.c.l.b16 %v372
      %v417 = vunpack.c.l.b16 %v373
      %v418 = vunpack.c.l.b16 %v374
      %v419 = vunpack.c.l.b16 %v375
      %v420 = vpack.c.b16 %v405, %v404
      %v421 = vpack.c.b16 %v407, %v406
      %v422 = vpack.c.b16 %v409, %v408
      %v423 = vpack.c.b16 %v411, %v410
      %v424 = vpack.c.b16 %v413, %v412
      %v425 = vpack.c.b16 %v415, %v414
      %v426 = vpack.c.b16 %v417, %v416
      %v427 = vpack.c.b16 %v419, %v418
      %436 = vmatprep.subr.bf16.mxu0 0
      %437 = vmatpush1.bf16.msra.mxu0 %v427
      %438 = vmatprep.subr.bf16.mxu0 0
      %439 = vmatpush1.bf16.msra.mxu0 %v426
      %440 = vmatprep.subr.bf16.mxu0 0
      %441 = vmatpush1.bf16.msra.mxu0 %v425
      %442 = vmatprep.subr.bf16.mxu0 0
      %443 = vmatpush1.bf16.msra.mxu0 %v424
      %444 = vmatprep.subr.bf16.mxu0 0
      %445 = vmatpush1.bf16.msra.mxu0 %v423
      %446 = vmatprep.subr.bf16.mxu0 0
      %447 = vmatpush1.bf16.msra.mxu0 %v422
      %448 = vmatprep.subr.bf16.mxu0 0
      %449 = vmatpush1.bf16.msra.mxu0 %v421
      %450 = vmatprep.subr.bf16.mxu0 0
      %451 = vmatpush1.bf16.msra.mxu0 %v420
      %452 = vmatprep.subr.bf16.mxu0 0
      %453 = vmatpush2.bf16.msra.mxu0 0
      %454 = vmatprep.subr.bf16.mxu0 0
      %455 = vmatpush2.bf16.msra.mxu0 0
      %456 = vmatprep.subr.bf16.mxu0 0
      %457 = vmatpush2.bf16.msra.mxu0 0
      %458 = vmatprep.subr.bf16.mxu0 0
      %459 = vmatpush2.bf16.msra.mxu0 0
      %460 = vmatprep.subr.bf16.mxu0 0
      %461 = vmatpush2.bf16.msra.mxu0 0
      %462 = vmatprep.subr.bf16.mxu0 0
      %463 = vmatpush2.bf16.msra.mxu0 0
      %464 = vmatprep.subr.bf16.mxu0 0
      %465 = vmatpush2.bf16.msra.mxu0 0
      %466 = vmatprep.subr.bf16.mxu0 0
      %467 = vmatpush2.bf16.msra.mxu0 0
      %468 = vmatprep.mubr.bf16.mxu0 0
      %469 = vmatmul.mubr.bf16.gmra.mxu0 %v384
      %v470 = vpop.f32.mrf.mxu0
      %v471 = vadd.f32 0.0, %v470
      %v472 = vpop.f32.mrf.mxu0
      %v473 = vpop.f32.mrf.mxu0
      %v474 = vadd.f32 0.0, %v473
      %v475 = vpop.f32.mrf.mxu0
      %476 = vmatprep.mubr.bf16.mxu0 0
      %477 = vmatmul.mubr.bf16.gmra.mxu0 %v385
      %v478 = vpop.f32.mrf.mxu0
      %v479 = vadd.f32 0.0, %v478
      %v480 = vpop.f32.mrf.mxu0
      %v481 = vpop.f32.mrf.mxu0
      %v482 = vadd.f32 0.0, %v481
      %v483 = vpop.f32.mrf.mxu0
      %484 = vdwg.mxu0
      %v485 = vld [vmem:[%s2] sm:$0xf]
      %v486 = vld [vmem:[%s2 + $0x4] sm:$0xf]
      %v487 = vld [vmem:[%s2 + $0x8] sm:$0xf]
      %v488 = vld [vmem:[%s2 + $0xc] sm:$0xf]
      %v489 = vld [vmem:[%s2 + $0x10] sm:$0xf]
      %v490 = vld [vmem:[%s2 + $0x14] sm:$0xf]
      %v491 = vld [vmem:[%s2 + $0x18] sm:$0xf]
      %v492 = vld [vmem:[%s2 + $0x1c] sm:$0xf]
      %v493 = vld [vmem:[%s2 + $0x20] sm:$0xf]
      %v494 = vld [vmem:[%s2 + $0x24] sm:$0xf]
      %v495 = vld [vmem:[%s2 + $0x28] sm:$0xf]
      %v496 = vld [vmem:[%s2 + $0x2c] sm:$0xf]
      %v497 = vld [vmem:[%s2 + $0x30] sm:$0xf]
      %v498 = vld [vmem:[%s2 + $0x34] sm:$0xf]
      %v499 = vld [vmem:[%s2 + $0x38] sm:$0xf]
      %v500 = vld [vmem:[%s2 + $0x3c] sm:$0xf]
      %v517 = vunpack.c.l.b16 %v485
      %v518 = vunpack.c.l.b16 %v486
      %v519 = vunpack.c.l.b16 %v487
      %v520 = vunpack.c.l.b16 %v488
      %v521 = vunpack.c.l.b16 %v489
      %v522 = vunpack.c.l.b16 %v490
      %v523 = vunpack.c.l.b16 %v491
      %v524 = vunpack.c.l.b16 %v492
      %v525 = vunpack.c.l.b16 %v493
      %v526 = vunpack.c.l.b16 %v494
      %v527 = vunpack.c.l.b16 %v495
      %v528 = vunpack.c.l.b16 %v496
      %v529 = vunpack.c.l.b16 %v497
      %v530 = vunpack.c.l.b16 %v498
      %v531 = vunpack.c.l.b16 %v499
      %v532 = vunpack.c.l.b16 %v500
      %v533 = vpack.c.b16 %v518, %v517
      %v534 = vpack.c.b16 %v520, %v519
      %v535 = vpack.c.b16 %v522, %v521
      %v536 = vpack.c.b16 %v524, %v523
      %v537 = vpack.c.b16 %v526, %v525
      %v538 = vpack.c.b16 %v528, %v527
      %v539 = vpack.c.b16 %v530, %v529
      %v540 = vpack.c.b16 %v532, %v531
      %549 = vmatprep.subr.bf16.mxu0 0
      %550 = vmatpush1.bf16.msra.mxu0 %v540
      %551 = vmatprep.subr.bf16.mxu0 0
      %552 = vmatpush1.bf16.msra.mxu0 %v539
      %553 = vmatprep.subr.bf16.mxu0 0
      %554 = vmatpush1.bf16.msra.mxu0 %v538
      %555 = vmatprep.subr.bf16.mxu0 0
      %556 = vmatpush1.bf16.msra.mxu0 %v537
      %557 = vmatprep.subr.bf16.mxu0 0
      %558 = vmatpush1.bf16.msra.mxu0 %v536
      %559 = vmatprep.subr.bf16.mxu0 0
      %560 = vmatpush1.bf16.msra.mxu0 %v535
      %561 = vmatprep.subr.bf16.mxu0 0
      %562 = vmatpush1.bf16.msra.mxu0 %v534
      %563 = vmatprep.subr.bf16.mxu0 0
      %564 = vmatpush1.bf16.msra.mxu0 %v533
      %565 = vmatprep.subr.bf16.mxu0 0
      %566 = vmatpush2.bf16.msra.mxu0 0
      %567 = vmatprep.subr.bf16.mxu0 0
      %568 = vmatpush2.bf16.msra.mxu0 0
      %569 = vmatprep.subr.bf16.mxu0 0
      %570 = vmatpush2.bf16.msra.mxu0 0
      %571 = vmatprep.subr.bf16.mxu0 0
      %572 = vmatpush2.bf16.msra.mxu0 0
      %573 = vmatprep.subr.bf16.mxu0 0
      %574 = vmatpush2.bf16.msra.mxu0 0
      %575 = vmatprep.subr.bf16.mxu0 0
      %576 = vmatpush2.bf16.msra.mxu0 0
      %577 = vmatprep.subr.bf16.mxu0 0
      %578 = vmatpush2.bf16.msra.mxu0 0
      %579 = vmatprep.subr.bf16.mxu0 0
      %580 = vmatpush2.bf16.msra.mxu0 0
      %581 = vmatprep.mubr.bf16.mxu0 0
      %582 = vmatmul.mubr.bf16.gmra.mxu0 %v384
      %v583 = vpop.f32.mrf.mxu0
      %v584 = vadd.f32 0.0, %v583
      %v585 = vpop.f32.mrf.mxu0
      %v586 = vpop.f32.mrf.mxu0
      %v587 = vadd.f32 0.0, %v586
      %v588 = vpop.f32.mrf.mxu0
      %589 = vmatprep.mubr.bf16.mxu0 0
      %590 = vmatmul.mubr.bf16.gmra.mxu0 %v385
      %v591 = vpop.f32.mrf.mxu0
      %v592 = vadd.f32 0.0, %v591
      %v593 = vpop.f32.mrf.mxu0
      %v594 = vpop.f32.mrf.mxu0
      %v595 = vadd.f32 0.0, %v594
      %v596 = vpop.f32.mrf.mxu0
      %597 = vdwg.mxu0
      %v598 = vpack.c.bf16 %v474, %v471
      %v599 = vpack.c.bf16 %v482, %v479
      %v602 = vunpack.c.l.b16 %v598
      %v603 = vunpack.c.h.b16 %v598
      %v604 = vunpack.c.l.b16 %v599
      %v605 = vunpack.c.h.b16 %v599
      %v606 = vpack.c.b16 %v602, %v602
      %v607 = vpack.c.b16 %v603, %v603
      %v608 = vpack.c.b16 %v604, %v604
      %v609 = vpack.c.b16 %v605, %v605
      %614 = vst [vmem:[%s327] sm:$0xf] %v606
      %615 = vst [vmem:[%s327 + $0x4] sm:$0xf] %v607
      %616 = vst [vmem:[%s327 + $0x8] sm:$0xf] %v608
      %617 = vst [vmem:[%s327 + $0xc] sm:$0xf] %v609
      %v618 = vpack.c.bf16 %v587, %v584
      %v619 = vpack.c.bf16 %v595, %v592
      %v622 = vunpack.c.l.b16 %v618
      %v623 = vunpack.c.h.b16 %v618
      %v624 = vunpack.c.l.b16 %v619
      %v625 = vunpack.c.h.b16 %v619
      %v626 = vpack.c.b16 %v622, %v622
      %v627 = vpack.c.b16 %v623, %v623
      %v628 = vpack.c.b16 %v624, %v624
      %v629 = vpack.c.b16 %v625, %v625
      %634 = vst [vmem:[%s337] sm:$0xf] %v626
      %635 = vst [vmem:[%s337 + $0x4] sm:$0xf] %v627
      %636 = vst [vmem:[%s337 + $0x8] sm:$0xf] %v628
      %637 = vst [vmem:[%s337 + $0xc] sm:$0xf] %v629
      %v638 = vadd.f32 %v471, %v474
      %v639 = vadd.f32 %v638, %v479
      %v640 = vadd.f32 %v639, %v482
      %v641 = vrot.slane %v640, 4
      %v642 = vadd.f32 %v640, %v641
      %v643 = vrot.slane %v642, 2
      %v644 = vadd.f32 %v642, %v643
      %v645 = vrot.slane %v644, 1
      %v646 = vadd.f32 %v644, %v645
      %v647 = vmul.f32 %v471, %v471
      %v648 = vmul.f32 %v474, %v474
      %v649 = vmul.f32 %v479, %v479
      %v650 = vmul.f32 %v482, %v482
      %v651 = vadd.f32 %v647, %v648
      %v652 = vadd.f32 %v651, %v649
      %v653 = vadd.f32 %v652, %v650
      %v654 = vrot.slane %v653, 4
      %v655 = vadd.f32 %v653, %v654
      %v656 = vrot.slane %v655, 2
      %v657 = vadd.f32 %v655, %v656
      %v658 = vrot.slane %v657, 1
      %v659 = vadd.f32 %v657, %v658
      %vm660 = vcmask 1040384
      %v661 = vsel %vm660, %v646, %v659
      %662 = vst [vmem:[%s344] sm:$0x3] %v661
      %v663 = vadd.f32 %v584, %v587
      %v664 = vadd.f32 %v663, %v592
      %v665 = vadd.f32 %v664, %v595
      %v666 = vrot.slane %v665, 4
      %v667 = vadd.f32 %v665, %v666
      %v668 = vrot.slane %v667, 2
      %v669 = vadd.f32 %v667, %v668
      %v670 = vrot.slane %v669, 1
      %v671 = vadd.f32 %v669, %v670
      %v672 = vmul.f32 %v584, %v584
      %v673 = vmul.f32 %v587, %v587
      %v674 = vmul.f32 %v592, %v592
      %v675 = vmul.f32 %v595, %v595
      %v676 = vadd.f32 %v672, %v673
      %v677 = vadd.f32 %v676, %v674
      %v678 = vadd.f32 %v677, %v675
      %v679 = vrot.slane %v678, 4
      %v680 = vadd.f32 %v678, %v679
      %v681 = vrot.slane %v680, 2
      %v682 = vadd.f32 %v680, %v681
      %v683 = vrot.slane %v682, 1
      %v684 = vadd.f32 %v682, %v683
      %v685 = vsel %vm660, %v671, %v684
      %686 = vst [vmem:[%s352] sm:$0x3] %v685
      %s687 = smul.u32 4, %s23
      %p688 = scmp.lt.s32.totalorder %s22, 1
      %s689 = scalar_select %p688, %s22, 1
      %p690 = scmp.lt.s32.totalorder %s687, 7
      %s691 = scalar_select %p690, %s687, 7
      %s692 = smul.addr %s689, 8
      %s693 = sadd.s32 %s691, %s692
      %s694 = smul.addr %s693, 4
      %s695 = scalar_lea.vmem %s3, %s694
      %s696 = smul.u32 4, %s23
      %p697 = scmp.lt.s32.totalorder %s22, 1
      %s698 = scalar_select %p697, %s22, 1
      %p699 = scmp.lt.s32.totalorder %s696, 7
      %s700 = scalar_select %p699, %s696, 7
      %s701 = smul.addr %s698, 8
      %s702 = sadd.s32 %s700, %s701
      %s703 = smul.addr %s702, 4
      %s704 = scalar_lea.vmem %s4, %s703
      %s705 = smul.u32 %s22, 2
      %s706 = sadd.s32 %s705, %s23
      %p707 = scmp.lt.s32.totalorder %s706, 3
      %s708 = scalar_select %p707, %s706, 3
      %s709 = smul.addr %s708, 2
      %s710 = scalar_lea.vmem %s5, %s709
      %s711 = smul.u32 %s22, 2
      %s712 = sadd.s32 %s711, %s23
      %p713 = scmp.lt.s32.totalorder %s712, 3
      %s714 = scalar_select %p713, %s712, 3
      %s715 = smul.addr %s714, 2
      %s716 = scalar_lea.vmem %s6, %s715
      // Predicated region
      $region33: #{res_bottleneck_forward.4} parent=31 // pred_check
        %p717 = pneg %p120
      $region34: #{res_bottleneck_forward.4} parent=31 // pred_check_branch
        %719 = sbr.rel (%p717) target = $region36
      $region35: #{res_bottleneck_forward.4} parent=31 // pred_region
        %s720 = smul.u32 4, %s23
      $region36: #{res_bottleneck_forward.4} parent=31 // pred_fallthru
        _
      // Predicated region
      $region37: #{res_bottleneck_forward.4} parent=31 // pred_check
        %p721 = pneg %p148
      $region38: #{res_bottleneck_forward.4} parent=31 // pred_check_branch
        %723 = sbr.rel (%p721) target = $region40
      $region39: #{res_bottleneck_forward.4} parent=31 // pred_region
        %s724 = smul.u32 4, %s23
      $region40: #{res_bottleneck_forward.4} parent=31 // pred_fallthru
        _
      // Predicated region
      $region41: #{res_bottleneck_forward.4} parent=31 // pred_check
        %p725 = pneg %p178
      $region42: #{res_bottleneck_forward.4} parent=31 // pred_check_branch
        %727 = sbr.rel (%p725) target = $region44
      $region43: #{res_bottleneck_forward.4} parent=31 // pred_region
        %s728 = smul.u32 %s22, 2
        %s729 = sadd.s32 %s728, %s23
      $region44: #{res_bottleneck_forward.4} parent=31 // pred_fallthru
        _
      // Predicated region
      $region45: #{res_bottleneck_forward.4} parent=31 // pred_check
        %p730 = pneg %p208
      $region46: #{res_bottleneck_forward.4} parent=31 // pred_check_branch
        %732 = sbr.rel (%p730) target = $region48
      $region47: #{res_bottleneck_forward.4} parent=31 // pred_region
        %s733 = smul.u32 %s22, 2
        %s734 = sadd.s32 %s733, %s23
      $region48: #{res_bottleneck_forward.4} parent=31 // pred_fallthru
        _
    $region32: #{res_bottleneck_forward.4} parent=5 // pred_fallthru
      _
    %p735 = scmp.le.s32.totalorder 2, %s13
    // Predicated region
    $region49: #{res_bottleneck_forward.4} parent=5 // pred_check
      %p736 = pneg %p735
    $region50: #{res_bottleneck_forward.4} parent=5 // pred_check_branch
      %738 = sbr.rel (%p736) target = $region52
    $region51: #{res_bottleneck_forward.4} parent=5 // pred_region
      %s739 = ssub.s32 %s13, 2
      // Predicated region
      $region53: #{res_bottleneck_forward.4} parent=51 // pred_check
        %p740 = pneg %p126
      $region54: #{res_bottleneck_forward.4} parent=51 // pred_check_branch
        %742 = sbr.rel (%p740) target = $region56
      $region55: #{res_bottleneck_forward.4} parent=51 // pred_region
        %s743 = smul.u32 4, %s25
        %p744 = scmp.lt.s32.totalorder %s24, 1
        %s745 = scalar_select %p744, %s24, 1
        %p746 = scmp.lt.s32.totalorder %s743, 7
        %s747 = scalar_select %p746, %s743, 7
        %s748 = smul.addr %s745, 8
        %s749 = sadd.s32 %s747, %s748
        %s750 = smul.addr %s749, 4
        %s751 = scalar_lea.vmem %s3, %s750
      $region56: #{res_bottleneck_forward.4} parent=51 // pred_fallthru
        _
      // Predicated region
      $region57: #{res_bottleneck_forward.4} parent=51 // pred_check
        %p752 = pneg %p154
      $region58: #{res_bottleneck_forward.4} parent=51 // pred_check_branch
        %754 = sbr.rel (%p752) target = $region60
      $region59: #{res_bottleneck_forward.4} parent=51 // pred_region
        %s755 = smul.u32 4, %s25
        %p756 = scmp.lt.s32.totalorder %s24, 1
        %s757 = scalar_select %p756, %s24, 1
        %p758 = scmp.lt.s32.totalorder %s755, 7
        %s759 = scalar_select %p758, %s755, 7
        %s760 = smul.addr %s757, 8
        %s761 = sadd.s32 %s759, %s760
        %s762 = smul.addr %s761, 4
        %s763 = scalar_lea.vmem %s4, %s762
      $region60: #{res_bottleneck_forward.4} parent=51 // pred_fallthru
        _
      // Predicated region
      $region61: #{res_bottleneck_forward.4} parent=51 // pred_check
        %p764 = pneg %p184
      $region62: #{res_bottleneck_forward.4} parent=51 // pred_check_branch
        %766 = sbr.rel (%p764) target = $region64
      $region63: #{res_bottleneck_forward.4} parent=51 // pred_region
        %s767 = smul.u32 %s24, 2
        %s768 = sadd.s32 %s767, %s25
        %p769 = scmp.lt.s32.totalorder %s768, 3
        %s770 = scalar_select %p769, %s768, 3
        %s771 = smul.addr %s770, 2
        %s772 = scalar_lea.vmem %s5, %s771
      $region64: #{res_bottleneck_forward.4} parent=51 // pred_fallthru
        _
      // Predicated region
      $region65: #{res_bottleneck_forward.4} parent=51 // pred_check
        %p773 = pneg %p214
      $region66: #{res_bottleneck_forward.4} parent=51 // pred_check_branch
        %775 = sbr.rel (%p773) target = $region68
      $region67: #{res_bottleneck_forward.4} parent=51 // pred_region
        %s776 = smul.u32 %s24, 2
        %s777 = sadd.s32 %s776, %s25
        %p778 = scmp.lt.s32.totalorder %s777, 3
        %s779 = scalar_select %p778, %s777, 3
        %s780 = smul.addr %s779, 2
        %s781 = scalar_lea.vmem %s6, %s780
      $region68: #{res_bottleneck_forward.4} parent=51 // pred_fallthru
        _
    $region52: #{res_bottleneck_forward.4} parent=5 // pred_fallthru
      _
  $region6: #{res_bottleneck_forward.4} parent=0 // loop_footer
    %s17 = sadd.s32 1, %s13
  $region7: #{res_bottleneck_forward.4} parent=0 // loop_footer_branch
    %12 = sbr.rel target = $region3
  $region8: #{res_bottleneck_forward.4} parent=0 // loop_exit
    _

// kernel: res_bottleneck_forward.7
$region0: #{res_bottleneck_forward.7}
  #allocation0 [shape = 'u32[]', space=smem, size = 0x4, offset = 0x4, fixed_abs, tag = 'smem constant byte address 0x4 - core index']
  #allocation1 [shape = 'u32[144,128]{1,0:T(1,128)}', space=vmem, size = 0x12000, scoped, tag = 'internal scratch']
  %s0 = inlined_call_operand.vmem [shape: bf16[2,8,8,128], index: 0, kind: input, shape index: {}]
  %s1 = inlined_call_operand.vmem [shape: f32[1,128], index: 1, kind: input, shape index: {}]
  %s2 = inlined_call_operand.vmem [shape: f32[1,128], index: 2, kind: input, shape index: {}]
  %s3 = inlined_call_operand.vmem [shape: bf16[2,8,8,128], index: 3, kind: input, shape index: {}]
  %s4 = inlined_call_operand.vmem [shape: f32[1,128], index: 4, kind: input, shape index: {}]
  %s5 = inlined_call_operand.vmem [shape: f32[1,128], index: 5, kind: input, shape index: {}]
  %s6 = inlined_call_operand.vmem [shape: f32[2,8,8,128], index: 6, kind: output, shape index: {}]
  %s7 = sld [smem:[#allocation0]]
  $region57: #{res_bottleneck_forward.7} parent=0
    _
  %s9 = ssub.s32 1, %s7
  %s10 = scalar_select 0, %s9, %s7
  loop: start=0, step=1, limit=6
  $region2: #{res_bottleneck_forward.7} parent=0 // loop_pre_header
    _
  $region3: #{res_bottleneck_forward.7} parent=0 // loop_header
    %s12 = sphi 0, %s16
    %p13 = scmp.ge.s32.totalorder %s12, 6
    %s19 = sphi 0, %s31
    %s20 = sphi 0, %s27
    %s21 = sphi 0, %s19
    %s22 = sphi 0, %s20
    %s23 = sphi 0, %s21
    %s24 = sphi 0, %s22
    %s36 = sphi 0, %s38
    %s39 = sphi 0, %s36
    %s40 = sphi 0, %s39
    %s56 = sphi 0, %s40
    %s60 = sphi 0, %s60
    %s62 = sphi 0, %s60
    %s63 = sphi 0, %s62
    %s77 = sphi 0, %s63
    %s81 = sphi 0, %s81
    %s83 = sphi 0, %s81
    %s84 = sphi 0, %s83
    %s98 = sphi 0, %s84
    %s106 = sphi 0, %s108
    %s109 = sphi 0, %s106
    %s110 = sphi 0, %s109
    %s126 = sphi 0, %s110
    %s130 = sphi 0, %s130
    %s132 = sphi 0, %s130
    %s133 = sphi 0, %s132
    %s147 = sphi 0, %s133
    %s151 = sphi 0, %s151
    %s153 = sphi 0, %s151
    %s154 = sphi 0, %s153
    %s168 = sphi 0, %s154
    %s176 = sphi 0, %s178
    %s179 = sphi 0, %s176
    %s180 = sphi 0, %s179
    %s196 = sphi 0, %s180
  $region4: #{res_bottleneck_forward.7} parent=0 // loop_header_branch
    %15 = sbr.rel (%p13) target = $region8
  $region5: #{res_bottleneck_forward.7} parent=0 // loop_body
    %s17 = ssub.s32 %s12, 1
    %s18 = ssub.s32 %s12, 2
    %s25 = sadd.s32 1, %s20
    %p26 = scmp.ge.s32.totalorder %s25, 2
    %s27 = scalar_select %p26, 0, %s25
    %s28 = sadd.s32 1, %s19
    %s29 = scalar_select %p26, %s28, %s19
    %p30 = scmp.ge.s32.totalorder %s29, 2
    %s31 = scalar_select %p30, 0, %s29
    %s32 = ssub.s32 %s19, %s31
    %s33 = ssub.s32 %s20, %s27
    %s34 = sor.u32 %s32, %s33
    %p35 = scmp.eq.s32.totalorder %s34, 0
    %s37 = sadd.s32 %s36, 1
    %s38 = scalar_select %p35, %s36, %s37
    %p41 = pneg %p35
    %p42 = scmp.eq.s32.totalorder %s12, 3
    %p43 = por %p41, %p42
    %p44 = scmp.ne.s32.totalorder %s36, %s39
    %p45 = scmp.eq.s32.totalorder %s12, 0
    %p46 = por %p44, %p45
    %p47 = scmp.ne.s32.totalorder %s36, %s39
    %p48 = scmp.eq.s32.totalorder %s17, 3
    %p49 = por %p47, %p48
    %p50 = scmp.ne.s32.totalorder %s39, %s40
    %p51 = scmp.eq.s32.totalorder %s17, 0
    %p52 = por %p50, %p51
    %p53 = scmp.ne.s32.totalorder %s39, %s40
    %p54 = scmp.eq.s32.totalorder %s18, 3
    %p55 = por %p53, %p54
    %p57 = scmp.ne.s32.totalorder %s40, %s56
    %p58 = scmp.eq.s32.totalorder %s18, 0
    %p59 = por %p57, %p58
    %s61 = sadd.s32 %s60, 1
    %p64 = scmp.eq.s32.totalorder %s12, 3
    %p65 = scmp.ne.s32.totalorder %s60, %s62
    %p66 = scmp.eq.s32.totalorder %s12, 0
    %p67 = por %p65, %p66
    %p68 = scmp.ne.s32.totalorder %s60, %s62
    %p69 = scmp.eq.s32.totalorder %s17, 3
    %p70 = por %p68, %p69
    %p71 = scmp.ne.s32.totalorder %s62, %s63
    %p72 = scmp.eq.s32.totalorder %s17, 0
    %p73 = por %p71, %p72
    %p74 = scmp.ne.s32.totalorder %s62, %s63
    %p75 = scmp.eq.s32.totalorder %s18, 3
    %p76 = por %p74, %p75
    %p78 = scmp.ne.s32.totalorder %s63, %s77
    %p79 = scmp.eq.s32.totalorder %s18, 0
    %p80 = por %p78, %p79
    %s82 = sadd.s32 %s81, 1
    %p85 = scmp.eq.s32.totalorder %s12, 3
    %p86 = scmp.ne.s32.totalorder %s81, %s83
    %p87 = scmp.eq.s32.totalorder %s12, 0
    %p88 = por %p86, %p87
    %p89 = scmp.ne.s32.totalorder %s81, %s83
    %p90 = scmp.eq.s32.totalorder %s17, 3
    %p91 = por %p89, %p90
    %p92 = scmp.ne.s32.totalorder %s83, %s84
    %p93 = scmp.eq.s32.totalorder %s17, 0
    %p94 = por %p92, %p93
    %p95 = scmp.ne.s32.totalorder %s83, %s84
    %p96 = scmp.eq.s32.totalorder %s18, 3
    %p97 = por %p95, %p96
    %p99 = scmp.ne.s32.totalorder %s84, %s98
    %p100 = scmp.eq.s32.totalorder %s18, 0
    %p101 = por %p99, %p100
    %s102 = ssub.s32 %s19, %s31
    %s103 = ssub.s32 %s20, %s27
    %s104 = sor.u32 %s102, %s103
    %p105 = scmp.eq.s32.totalorder %s104, 0
    %s107 = sadd.s32 %s106, 1
    %s108 = scalar_select %p105, %s106, %s107
    %p111 = pneg %p105
    %p112 = scmp.eq.s32.totalorder %s12, 3
    %p113 = por %p111, %p112
    %p114 = scmp.ne.s32.totalorder %s106, %s109
    %p115 = scmp.eq.s32.totalorder %s12, 0
    %p116 = por %p114, %p115
    %p117 = scmp.ne.s32.totalorder %s106, %s109
    %p118 = scmp.eq.s32.totalorder %s17, 3
    %p119 = por %p117, %p118
    %p120 = scmp.ne.s32.totalorder %s109, %s110
    %p121 = scmp.eq.s32.totalorder %s17, 0
    %p122 = por %p120, %p121
    %p123 = scmp.ne.s32.totalorder %s109, %s110
    %p124 = scmp.eq.s32.totalorder %s18, 3
    %p125 = por %p123, %p124
    %p127 = scmp.ne.s32.totalorder %s110, %s126
    %p128 = scmp.eq.s32.totalorder %s18, 0
    %p129 = por %p127, %p128
    %s131 = sadd.s32 %s130, 1
    %p134 = scmp.eq.s32.totalorder %s12, 3
    %p135 = scmp.ne.s32.totalorder %s130, %s132
    %p136 = scmp.eq.s32.totalorder %s12, 0
    %p137 = por %p135, %p136
    %p138 = scmp.ne.s32.totalorder %s130, %s132
    %p139 = scmp.eq.s32.totalorder %s17, 3
    %p140 = por %p138, %p139
    %p141 = scmp.ne.s32.totalorder %s132, %s133
    %p142 = scmp.eq.s32.totalorder %s17, 0
    %p143 = por %p141, %p142
    %p144 = scmp.ne.s32.totalorder %s132, %s133
    %p145 = scmp.eq.s32.totalorder %s18, 3
    %p146 = por %p144, %p145
    %p148 = scmp.ne.s32.totalorder %s133, %s147
    %p149 = scmp.eq.s32.totalorder %s18, 0
    %p150 = por %p148, %p149
    %s152 = sadd.s32 %s151, 1
    %p155 = scmp.eq.s32.totalorder %s12, 3
    %p156 = scmp.ne.s32.totalorder %s151, %s153
    %p157 = scmp.eq.s32.totalorder %s12, 0
    %p158 = por %p156, %p157
    %p159 = scmp.ne.s32.totalorder %s151, %s153
    %p160 = scmp.eq.s32.totalorder %s17, 3
    %p161 = por %p159, %p160
    %p162 = scmp.ne.s32.totalorder %s153, %s154
    %p163 = scmp.eq.s32.totalorder %s17, 0
    %p164 = por %p162, %p163
    %p165 = scmp.ne.s32.totalorder %s153, %s154
    %p166 = scmp.eq.s32.totalorder %s18, 3
    %p167 = por %p165, %p166
    %p169 = scmp.ne.s32.totalorder %s154, %s168
    %p170 = scmp.eq.s32.totalorder %s18, 0
    %p171 = por %p169, %p170
    %s172 = ssub.s32 %s19, %s31
    %s173 = ssub.s32 %s20, %s27
    %s174 = sor.u32 %s172, %s173
    %p175 = scmp.eq.s32.totalorder %s174, 0
    %s177 = sadd.s32 %s176, 1
    %s178 = scalar_select %p175, %s176, %s177
    %p181 = pneg %p175
    %p182 = scmp.eq.s32.totalorder %s12, 3
    %p183 = por %p181, %p182
    %p184 = scmp.ne.s32.totalorder %s176, %s179
    %p185 = scmp.eq.s32.totalorder %s12, 0
    %p186 = por %p184, %p185
    %p187 = scmp.ne.s32.totalorder %s176, %s179
    %p188 = scmp.eq.s32.totalorder %s17, 3
    %p189 = por %p187, %p188
    %p190 = scmp.ne.s32.totalorder %s179, %s180
    %p191 = scmp.eq.s32.totalorder %s17, 0
    %p192 = por %p190, %p191
    %p193 = scmp.ne.s32.totalorder %s179, %s180
    %p194 = scmp.eq.s32.totalorder %s18, 3
    %p195 = por %p193, %p194
    %p197 = scmp.ne.s32.totalorder %s180, %s196
    %p198 = scmp.eq.s32.totalorder %s18, 0
    %p199 = por %p197, %p198
    %p200 = scmp.le.s32.totalorder 1, %s12
    %p201 = scmp.lt.s32.totalorder %s12, 5
    %p202 = pnand %p200, %p201
    %p203 = pneg %p202
    // Predicated region
    $region9: #{res_bottleneck_forward.7} parent=5 // pred_check
      _
    $region10: #{res_bottleneck_forward.7} parent=5 // pred_check_branch
      %205 = sbr.rel (%p202) target = $region12
    $region11: #{res_bottleneck_forward.7} parent=5 // pred_region
      %s206 = ssub.s32 %s12, 1
      // Predicated region
      $region13: #{res_bottleneck_forward.7} parent=11 // pred_check
        %p207 = pneg %p73
      $region14: #{res_bottleneck_forward.7} parent=11 // pred_check_branch
        %209 = sbr.rel (%p207) target = $region16
      $region15: #{res_bottleneck_forward.7} parent=11 // pred_region
        _
      $region16: #{res_bottleneck_forward.7} parent=11 // pred_fallthru
        _
      // Predicated region
      $region17: #{res_bottleneck_forward.7} parent=11 // pred_check
        %p210 = pneg %p94
      $region18: #{res_bottleneck_forward.7} parent=11 // pred_check_branch
        %212 = sbr.rel (%p210) target = $region20
      $region19: #{res_bottleneck_forward.7} parent=11 // pred_region
        _
      $region20: #{res_bottleneck_forward.7} parent=11 // pred_fallthru
        _
      // Predicated region
      $region21: #{res_bottleneck_forward.7} parent=11 // pred_check
        %p213 = pneg %p143
      $region22: #{res_bottleneck_forward.7} parent=11 // pred_check_branch
        %215 = sbr.rel (%p213) target = $region24
      $region23: #{res_bottleneck_forward.7} parent=11 // pred_region
        _
      $region24: #{res_bottleneck_forward.7} parent=11 // pred_fallthru
        _
      // Predicated region
      $region25: #{res_bottleneck_forward.7} parent=11 // pred_check
        %p216 = pneg %p164
      $region26: #{res_bottleneck_forward.7} parent=11 // pred_check_branch
        %218 = sbr.rel (%p216) target = $region28
      $region27: #{res_bottleneck_forward.7} parent=11 // pred_region
        _
      $region28: #{res_bottleneck_forward.7} parent=11 // pred_fallthru
        _
    $region12: #{res_bottleneck_forward.7} parent=5 // pred_fallthru
      _
    %p219 = scmp.lt.s32.totalorder %s12, 4
    // Predicated region
    $region29: #{res_bottleneck_forward.7} parent=5 // pred_check
      %p220 = pneg %p219
    $region30: #{res_bottleneck_forward.7} parent=5 // pred_check_branch
      %222 = sbr.rel (%p220) target = $region32
    $region31: #{res_bottleneck_forward.7} parent=5 // pred_region
      // Predicated region
      $region33: #{res_bottleneck_forward.7} parent=31 // pred_check
        %p223 = pneg %p46
      $region34: #{res_bottleneck_forward.7} parent=31 // pred_check_branch
        %225 = sbr.rel (%p223) target = $region36
      $region35: #{res_bottleneck_forward.7} parent=31 // pred_region
        %s226 = smul.u32 4, %s20
        %p227 = scmp.lt.s32.totalorder %s19, 1
        %s228 = scalar_select %p227, %s19, 1
        %p229 = scmp.lt.s32.totalorder %s226, 7
        %s230 = scalar_select %p229, %s226, 7
        %s231 = smul.addr %s228, 8
        %s232 = sadd.s32 %s230, %s231
        %s233 = smul.addr %s232, 4
        %s234 = scalar_lea.vmem %s0, %s233
        %s235 = smul.u32 4, %s20
      $region36: #{res_bottleneck_forward.7} parent=31 // pred_fallthru
        _
      // Predicated region
      $region37: #{res_bottleneck_forward.7} parent=31 // pred_check
        %p236 = pneg %p116
      $region38: #{res_bottleneck_forward.7} parent=31 // pred_check_branch
        %238 = sbr.rel (%p236) target = $region40
      $region39: #{res_bottleneck_forward.7} parent=31 // pred_region
        %s239 = smul.u32 4, %s20
        %p240 = scmp.lt.s32.totalorder %s19, 1
        %s241 = scalar_select %p240, %s19, 1
        %p242 = scmp.lt.s32.totalorder %s239, 7
        %s243 = scalar_select %p242, %s239, 7
        %s244 = smul.addr %s241, 8
        %s245 = sadd.s32 %s243, %s244
        %s246 = smul.addr %s245, 4
        %s247 = scalar_lea.vmem %s3, %s246
        %s248 = smul.u32 4, %s20
      $region40: #{res_bottleneck_forward.7} parent=31 // pred_fallthru
        _
    $region32: #{res_bottleneck_forward.7} parent=5 // pred_fallthru
      _
    %p249 = scmp.le.s32.totalorder 1, %s12
    %p250 = scmp.lt.s32.totalorder %s12, 5
    %p251 = pnand %p249, %p250
    %p252 = pneg %p251
    // Predicated region
    $region41: #{res_bottleneck_forward.7} parent=5 // pred_check
      _
    $region42: #{res_bottleneck_forward.7} parent=5 // pred_check_branch
      %254 = sbr.rel (%p251) target = $region44
    $region43: #{res_bottleneck_forward.7} parent=5 // pred_region
      %s255 = ssub.s32 %s12, 1
      %s256 = smul.u32 4, %s22
      %p257 = scmp.lt.s32.totalorder %s21, 1
      %s258 = scalar_select %p257, %s21, 1
      %p259 = scmp.lt.s32.totalorder %s256, 7
      %s260 = scalar_select %p259, %s256, 7
      %s261 = smul.addr %s258, 8
      %s262 = sadd.s32 %s260, %s261
      %s263 = smul.addr %s262, 4
      %s264 = scalar_lea.vmem %s0, %s263
      %p265 = pneg %p52
      %p266 = pneg %p49
      %p267 = pneg %p73
      %p268 = pneg %p70
      %p269 = pneg %p94
      %p270 = pneg %p91
      %s271 = smul.u32 4, %s22
      %p272 = scmp.lt.s32.totalorder %s21, 1
      %s273 = scalar_select %p272, %s21, 1
      %p274 = scmp.lt.s32.totalorder %s271, 7
      %s275 = scalar_select %p274, %s271, 7
      %s276 = smul.addr %s273, 8
      %s277 = sadd.s32 %s275, %s276
      %s278 = smul.addr %s277, 4
      %s279 = scalar_lea.vmem %s3, %s278
      %p280 = pneg %p122
      %p281 = pneg %p119
      %p282 = pneg %p143
      %p283 = pneg %p140
      %p284 = pneg %p164
      %p285 = pneg %p161
      %p286 = pneg %p192
      %p287 = pneg %p189
      %s288 = smul.u32 4, %s22
      %p289 = scmp.lt.s32.totalorder %s21, 1
      %s290 = scalar_select %p289, %s21, 1
      %p291 = scmp.lt.s32.totalorder %s288, 7
      %s292 = scalar_select %p291, %s288, 7
      %s293 = smul.addr %s290, 8
      %s294 = sadd.s32 %s292, %s293
      %s295 = smul.addr %s294, 8
      %s296 = scalar_lea.vmem %s6, %s295
      %s297 = smul.u32 4, %s22
      %p298 = scmp.lt.s32.totalorder %s21, 1
      %s299 = scalar_select %p298, %s21, 1
      %p300 = scmp.lt.s32.totalorder %s297, 7
      %s301 = scalar_select %p300, %s297, 7
      %s302 = smul.addr %s299, 8
      %s303 = sadd.s32 %s301, %s302
      %s304 = smul.addr %s303, 4
      %s305 = scalar_lea.vmem %s0, %s304
      %s306 = smul.u32 4, %s22
      %s307 = smul.u32 4, %s22
      %p308 = scmp.lt.s32.totalorder %s21, 1
      %s309 = scalar_select %p308, %s21, 1
      %p310 = scmp.lt.s32.totalorder %s307, 7
      %s311 = scalar_select %p310, %s307, 7
      %s312 = smul.addr %s309, 8
      %s313 = sadd.s32 %s311, %s312
      %s314 = smul.addr %s313, 4
      %s315 = scalar_lea.vmem %s3, %s314
      %s316 = smul.u32 4, %s22
      %s317 = smul.u32 4, %s22
      %p318 = scmp.lt.s32.totalorder %s21, 1
      %s319 = scalar_select %p318, %s21, 1
      %p320 = scmp.lt.s32.totalorder %s317, 7
      %s321 = scalar_select %p320, %s317, 7
      %s322 = smul.addr %s319, 8
      %s323 = sadd.s32 %s321, %s322
      %s324 = smul.addr %s323, 8
      %s325 = scalar_lea.vmem %s6, %s324
      %s326 = smul.u32 4, %s22
      %v327 = vld [vmem:[%s305] sm:$0xf]
      %v328 = vld [vmem:[%s305 + $0x4] sm:$0xf]
      %v329 = vld [vmem:[%s305 + $0x8] sm:$0xf]
      %v330 = vld [vmem:[%s305 + $0xc] sm:$0xf]
      %v331 = vunpack.c.l.bf16 %v327
      %v332 = vunpack.c.l.bf16 %v328
      %v333 = vunpack.c.l.bf16 %v329
      %v334 = vunpack.c.l.bf16 %v330
      %v335 = vld [vmem:[%s1] sm:$0x1]
      %v337 = vlaneseq
      %v338 = vshrl.u32 %v337, 7
      %v339 = vsub.s32 0, %v338
      %v340 = vrot.slane %v335, %v339
      %v342 = vmul.f32 %v331, %v340
      %v343 = vmul.f32 %v332, %v340
      %v344 = vmul.f32 %v333, %v340
      %v345 = vmul.f32 %v334, %v340
      %v346 = vld [vmem:[%s2] sm:$0x1]
      %v348 = vlaneseq
      %v349 = vshrl.u32 %v348, 7
      %v350 = vsub.s32 0, %v349
      %v351 = vrot.slane %v346, %v350
      %v353 = vadd.f32 %v342, %v351
      %v354 = vadd.f32 %v343, %v351
      %v355 = vadd.f32 %v344, %v351
      %v356 = vadd.f32 %v345, %v351
      %v357 = vld [vmem:[%s315] sm:$0xf]
      %v358 = vld [vmem:[%s315 + $0x4] sm:$0xf]
      %v359 = vld [vmem:[%s315 + $0x8] sm:$0xf]
      %v360 = vld [vmem:[%s315 + $0xc] sm:$0xf]
      %v361 = vunpack.c.l.bf16 %v357
      %v362 = vunpack.c.l.bf16 %v358
      %v363 = vunpack.c.l.bf16 %v359
      %v364 = vunpack.c.l.bf16 %v360
      %v365 = vld [vmem:[%s4] sm:$0x1]
      %v367 = vlaneseq
      %v368 = vshrl.u32 %v367, 7
      %v369 = vsub.s32 0, %v368
      %v370 = vrot.slane %v365, %v369
      %v372 = vmul.f32 %v361, %v370
      %v373 = vmul.f32 %v362, %v370
      %v374 = vmul.f32 %v363, %v370
      %v375 = vmul.f32 %v364, %v370
      %v376 = vld [vmem:[%s5] sm:$0x1]
      %v378 = vlaneseq
      %v379 = vshrl.u32 %v378, 7
      %v380 = vsub.s32 0, %v379
      %v381 = vrot.slane %v376, %v380
      %v383 = vadd.f32 %v372, %v381
      %v384 = vadd.f32 %v373, %v381
      %v385 = vadd.f32 %v374, %v381
      %v386 = vadd.f32 %v375, %v381
      %v387 = vadd.f32 %v353, %v383
      %v388 = vadd.f32 %v354, %v384
      %v389 = vadd.f32 %v355, %v385
      %v390 = vadd.f32 %v356, %v386
      %v391 = vmax.f32 %v387, 0.0
      %v392 = vmax.f32 %v388, 0.0
      %v393 = vmax.f32 %v389, 0.0
      %v394 = vmax.f32 %v390, 0.0
      %395 = vst [vmem:[%s325] sm:$0xff] %v391
      %396 = vst [vmem:[%s325 + $0x8] sm:$0xff] %v392
      %397 = vst [vmem:[%s325 + $0x10] sm:$0xff] %v393
      %398 = vst [vmem:[%s325 + $0x18] sm:$0xff] %v394
      %s399 = smul.u32 4, %s22
      %p400 = scmp.lt.s32.totalorder %s21, 1
      %s401 = scalar_select %p400, %s21, 1
      %p402 = scmp.lt.s32.totalorder %s399, 7
      %s403 = scalar_select %p402, %s399, 7
      %s404 = smul.addr %s401, 8
      %s405 = sadd.s32 %s403, %s404
      %s406 = smul.addr %s405, 8
      %s407 = scalar_lea.vmem %s6, %s406
      // Predicated region
      $region45: #{res_bottleneck_forward.7} parent=43 // pred_check
        %p408 = pneg %p189
      $region46: #{res_bottleneck_forward.7} parent=43 // pred_check_branch
        %410 = sbr.rel (%p408) target = $region48
      $region47: #{res_bottleneck_forward.7} parent=43 // pred_region
        %s411 = smul.u32 4, %s22
      $region48: #{res_bottleneck_forward.7} parent=43 // pred_fallthru
        _
    $region44: #{res_bottleneck_forward.7} parent=5 // pred_fallthru
      _
    %p412 = scmp.le.s32.totalorder 2, %s12
    // Predicated region
    $region49: #{res_bottleneck_forward.7} parent=5 // pred_check
      %p413 = pneg %p412
    $region50: #{res_bottleneck_forward.7} parent=5 // pred_check_branch
      %415 = sbr.rel (%p413) target = $region52
    $region51: #{res_bottleneck_forward.7} parent=5 // pred_region
      %s416 = ssub.s32 %s12, 2
      // Predicated region
      $region53: #{res_bottleneck_forward.7} parent=51 // pred_check
        %p417 = pneg %p195
      $region54: #{res_bottleneck_forward.7} parent=51 // pred_check_branch
        %419 = sbr.rel (%p417) target = $region56
      $region55: #{res_bottleneck_forward.7} parent=51 // pred_region
        %s420 = smul.u32 4, %s24
        %p421 = scmp.lt.s32.totalorder %s23, 1
        %s422 = scalar_select %p421, %s23, 1
        %p423 = scmp.lt.s32.totalorder %s420, 7
        %s424 = scalar_select %p423, %s420, 7
        %s425 = smul.addr %s422, 8
        %s426 = sadd.s32 %s424, %s425
        %s427 = smul.addr %s426, 8
        %s428 = scalar_lea.vmem %s6, %s427
      $region56: #{res_bottleneck_forward.7} parent=51 // pred_fallthru
        _
    $region52: #{res_bottleneck_forward.7} parent=5 // pred_fallthru
      _
  $region6: #{res_bottleneck_forward.7} parent=0 // loop_footer
    %s16 = sadd.s32 1, %s12
  $region7: #{res_bottleneck_forward.7} parent=0 // loop_footer_branch
    %11 = sbr.rel target = $region3
  $region8: #{res_bottleneck_forward.7} parent=0 // loop_exit
    _

// kernel: res_bottleneck_forward.6
$region0: #{res_bottleneck_forward.6}
  #allocation0 [shape = 'u32[]', space=smem, size = 0x4, offset = 0x4, fixed_abs, tag = 'smem constant byte address 0x4 - core index']
  #allocation1 [shape = 'u32[144,128]{1,0:T(1,128)}', space=vmem, size = 0x12000, scoped, tag = 'internal scratch']
  %s0 = inlined_call_operand.vmem [shape: bf16[2,8,8,128], index: 0, kind: input, shape index: {}]
  %s1 = inlined_call_operand.vmem [shape: f32[1,128], index: 1, kind: input, shape index: {}]
  %s2 = inlined_call_operand.vmem [shape: f32[1,128], index: 2, kind: input, shape index: {}]
  %s3 = inlined_call_operand.vmem [shape: bf16[128,128], index: 3, kind: input, shape index: {}]
  %s4 = inlined_call_operand.vmem [shape: bf16[2,8,8,128], index: 4, kind: output, shape index: {0}]
  %s5 = inlined_call_operand.vmem [shape: f32[4,2,128], index: 5, kind: output, shape index: {1}]
  %6 = xla_tuple %s4, %s5
  %s7 = sld [smem:[#allocation0]]
  $region57: #{res_bottleneck_forward.6} parent=0
    _
  %s9 = ssub.s32 1, %s7
  %s10 = scalar_select 0, %s9, %s7
  loop: start=0, step=1, limit=6
  $region2: #{res_bottleneck_forward.6} parent=0 // loop_pre_header
    _
  $region3: #{res_bottleneck_forward.6} parent=0 // loop_header
    %s12 = sphi 0, %s16
    %p13 = scmp.ge.s32.totalorder %s12, 6
    %s19 = sphi 0, %s31
    %s20 = sphi 0, %s27
    %s21 = sphi 0, %s19
    %s22 = sphi 0, %s20
    %s23 = sphi 0, %s21
    %s24 = sphi 0, %s22
    %s36 = sphi 0, %s38
    %s39 = sphi 0, %s36
    %s40 = sphi 0, %s39
    %s56 = sphi 0, %s40
    %s60 = sphi 0, %s60
    %s62 = sphi 0, %s60
    %s63 = sphi 0, %s62
    %s77 = sphi 0, %s63
    %s81 = sphi 0, %s81
    %s83 = sphi 0, %s81
    %s84 = sphi 0, %s83
    %s98 = sphi 0, %s84
    %s102 = sphi 0, %s102
    %s104 = sphi 0, %s102
    %s105 = sphi 0, %s104
    %s119 = sphi 0, %s105
    %s127 = sphi 0, %s129
    %s130 = sphi 0, %s127
    %s131 = sphi 0, %s130
    %s147 = sphi 0, %s131
    %s157 = sphi 0, %s159
    %s160 = sphi 0, %s157
    %s161 = sphi 0, %s160
    %s177 = sphi 0, %s161
  $region4: #{res_bottleneck_forward.6} parent=0 // loop_header_branch
    %15 = sbr.rel (%p13) target = $region8
  $region5: #{res_bottleneck_forward.6} parent=0 // loop_body
    %s17 = ssub.s32 %s12, 1
    %s18 = ssub.s32 %s12, 2
    %s25 = sadd.s32 1, %s20
    %p26 = scmp.ge.s32.totalorder %s25, 2
    %s27 = scalar_select %p26, 0, %s25
    %s28 = sadd.s32 1, %s19
    %s29 = scalar_select %p26, %s28, %s19
    %p30 = scmp.ge.s32.totalorder %s29, 2
    %s31 = scalar_select %p30, 0, %s29
    %s32 = ssub.s32 %s19, %s31
    %s33 = ssub.s32 %s20, %s27
    %s34 = sor.u32 %s32, %s33
    %p35 = scmp.eq.s32.totalorder %s34, 0
    %s37 = sadd.s32 %s36, 1
    %s38 = scalar_select %p35, %s36, %s37
    %p41 = pneg %p35
    %p42 = scmp.eq.s32.totalorder %s12, 3
    %p43 = por %p41, %p42
    %p44 = scmp.ne.s32.totalorder %s36, %s39
    %p45 = scmp.eq.s32.totalorder %s12, 0
    %p46 = por %p44, %p45
    %p47 = scmp.ne.s32.totalorder %s36, %s39
    %p48 = scmp.eq.s32.totalorder %s17, 3
    %p49 = por %p47, %p48
    %p50 = scmp.ne.s32.totalorder %s39, %s40
    %p51 = scmp.eq.s32.totalorder %s17, 0
    %p52 = por %p50, %p51
    %p53 = scmp.ne.s32.totalorder %s39, %s40
    %p54 = scmp.eq.s32.totalorder %s18, 3
    %p55 = por %p53, %p54
    %p57 = scmp.ne.s32.totalorder %s40, %s56
    %p58 = scmp.eq.s32.totalorder %s18, 0
    %p59 = por %p57, %p58
    %s61 = sadd.s32 %s60, 1
    %p64 = scmp.eq.s32.totalorder %s12, 3
    %p65 = scmp.ne.s32.totalorder %s60, %s62
    %p66 = scmp.eq.s32.totalorder %s12, 0
    %p67 = por %p65, %p66
    %p68 = scmp.ne.s32.totalorder %s60, %s62
    %p69 = scmp.eq.s32.totalorder %s17, 3
    %p70 = por %p68, %p69
    %p71 = scmp.ne.s32.totalorder %s62, %s63
    %p72 = scmp.eq.s32.totalorder %s17, 0
    %p73 = por %p71, %p72
    %p74 = scmp.ne.s32.totalorder %s62, %s63
    %p75 = scmp.eq.s32.totalorder %s18, 3
    %p76 = por %p74, %p75
    %p78 = scmp.ne.s32.totalorder %s63, %s77
    %p79 = scmp.eq.s32.totalorder %s18, 0
    %p80 = por %p78, %p79
    %s82 = sadd.s32 %s81, 1
    %p85 = scmp.eq.s32.totalorder %s12, 3
    %p86 = scmp.ne.s32.totalorder %s81, %s83
    %p87 = scmp.eq.s32.totalorder %s12, 0
    %p88 = por %p86, %p87
    %p89 = scmp.ne.s32.totalorder %s81, %s83
    %p90 = scmp.eq.s32.totalorder %s17, 3
    %p91 = por %p89, %p90
    %p92 = scmp.ne.s32.totalorder %s83, %s84
    %p93 = scmp.eq.s32.totalorder %s17, 0
    %p94 = por %p92, %p93
    %p95 = scmp.ne.s32.totalorder %s83, %s84
    %p96 = scmp.eq.s32.totalorder %s18, 3
    %p97 = por %p95, %p96
    %p99 = scmp.ne.s32.totalorder %s84, %s98
    %p100 = scmp.eq.s32.totalorder %s18, 0
    %p101 = por %p99, %p100
    %s103 = sadd.s32 %s102, 1
    %p106 = scmp.eq.s32.totalorder %s12, 3
    %p107 = scmp.ne.s32.totalorder %s102, %s104
    %p108 = scmp.eq.s32.totalorder %s12, 0
    %p109 = por %p107, %p108
    %p110 = scmp.ne.s32.totalorder %s102, %s104
    %p111 = scmp.eq.s32.totalorder %s17, 3
    %p112 = por %p110, %p111
    %p113 = scmp.ne.s32.totalorder %s104, %s105
    %p114 = scmp.eq.s32.totalorder %s17, 0
    %p115 = por %p113, %p114
    %p116 = scmp.ne.s32.totalorder %s104, %s105
    %p117 = scmp.eq.s32.totalorder %s18, 3
    %p118 = por %p116, %p117
    %p120 = scmp.ne.s32.totalorder %s105, %s119
    %p121 = scmp.eq.s32.totalorder %s18, 0
    %p122 = por %p120, %p121
    %s123 = ssub.s32 %s19, %s31
    %s124 = ssub.s32 %s20, %s27
    %s125 = sor.u32 %s123, %s124
    %p126 = scmp.eq.s32.totalorder %s125, 0
    %s128 = sadd.s32 %s127, 1
    %s129 = scalar_select %p126, %s127, %s128
    %p132 = pneg %p126
    %p133 = scmp.eq.s32.totalorder %s12, 3
    %p134 = por %p132, %p133
    %p135 = scmp.ne.s32.totalorder %s127, %s130
    %p136 = scmp.eq.s32.totalorder %s12, 0
    %p137 = por %p135, %p136
    %p138 = scmp.ne.s32.totalorder %s127, %s130
    %p139 = scmp.eq.s32.totalorder %s17, 3
    %p140 = por %p138, %p139
    %p141 = scmp.ne.s32.totalorder %s130, %s131
    %p142 = scmp.eq.s32.totalorder %s17, 0
    %p143 = por %p141, %p142
    %p144 = scmp.ne.s32.totalorder %s130, %s131
    %p145 = scmp.eq.s32.totalorder %s18, 3
    %p146 = por %p144, %p145
    %p148 = scmp.ne.s32.totalorder %s131, %s147
    %p149 = scmp.eq.s32.totalorder %s18, 0
    %p150 = por %p148, %p149
    %s151 = smul.u32 %s19, 2
    %s152 = sadd.s32 %s151, %s20
    %s153 = smul.u32 %s31, 2
    %s154 = sadd.s32 %s153, %s27
    %s155 = ssub.s32 %s152, %s154
    %p156 = scmp.eq.s32.totalorder %s155, 0
    %s158 = sadd.s32 %s157, 1
    %s159 = scalar_select %p156, %s157, %s158
    %p162 = pneg %p156
    %p163 = scmp.eq.s32.totalorder %s12, 3
    %p164 = por %p162, %p163
    %p165 = scmp.ne.s32.totalorder %s157, %s160
    %p166 = scmp.eq.s32.totalorder %s12, 0
    %p167 = por %p165, %p166
    %p168 = scmp.ne.s32.totalorder %s157, %s160
    %p169 = scmp.eq.s32.totalorder %s17, 3
    %p170 = por %p168, %p169
    %p171 = scmp.ne.s32.totalorder %s160, %s161
    %p172 = scmp.eq.s32.totalorder %s17, 0
    %p173 = por %p171, %p172
    %p174 = scmp.ne.s32.totalorder %s160, %s161
    %p175 = scmp.eq.s32.totalorder %s18, 3
    %p176 = por %p174, %p175
    %p178 = scmp.ne.s32.totalorder %s161, %s177
    %p179 = scmp.eq.s32.totalorder %s18, 0
    %p180 = por %p178, %p179
    %p181 = scmp.le.s32.totalorder 1, %s12
    %p182 = scmp.lt.s32.totalorder %s12, 5
    %p183 = pnand %p181, %p182
    %p184 = pneg %p183
    // Predicated region
    $region9: #{res_bottleneck_forward.6} parent=5 // pred_check
      _
    $region10: #{res_bottleneck_forward.6} parent=5 // pred_check_branch
      %186 = sbr.rel (%p183) target = $region12
    $region11: #{res_bottleneck_forward.6} parent=5 // pred_region
      %s187 = ssub.s32 %s12, 1
      // Predicated region
      $region13: #{res_bottleneck_forward.6} parent=11 // pred_check
        %p188 = pneg %p73
      $region14: #{res_bottleneck_forward.6} parent=11 // pred_check_branch
        %190 = sbr.rel (%p188) target = $region16
      $region15: #{res_bottleneck_forward.6} parent=11 // pred_region
        _
      $region16: #{res_bottleneck_forward.6} parent=11 // pred_fallthru
        _
      // Predicated region
      $region17: #{res_bottleneck_forward.6} parent=11 // pred_check
        %p191 = pneg %p94
      $region18: #{res_bottleneck_forward.6} parent=11 // pred_check_branch
        %193 = sbr.rel (%p191) target = $region20
      $region19: #{res_bottleneck_forward.6} parent=11 // pred_region
        _
      $region20: #{res_bottleneck_forward.6} parent=11 // pred_fallthru
        _
      // Predicated region
      $region21: #{res_bottleneck_forward.6} parent=11 // pred_check
        %p194 = pneg %p115
      $region22: #{res_bottleneck_forward.6} parent=11 // pred_check_branch
        %196 = sbr.rel (%p194) target = $region24
      $region23: #{res_bottleneck_forward.6} parent=11 // pred_region
        _
      $region24: #{res_bottleneck_forward.6} parent=11 // pred_fallthru
        _
    $region12: #{res_bottleneck_forward.6} parent=5 // pred_fallthru
      _
    %p197 = scmp.lt.s32.totalorder %s12, 4
    // Predicated region
    $region25: #{res_bottleneck_forward.6} parent=5 // pred_check
      %p198 = pneg %p197
    $region26: #{res_bottleneck_forward.6} parent=5 // pred_check_branch
      %200 = sbr.rel (%p198) target = $region28
    $region27: #{res_bottleneck_forward.6} parent=5 // pred_region
      // Predicated region
      $region29: #{res_bottleneck_forward.6} parent=27 // pred_check
        %p201 = pneg %p46
      $region30: #{res_bottleneck_forward.6} parent=27 // pred_check_branch
        %203 = sbr.rel (%p201) target = $region32
      $region31: #{res_bottleneck_forward.6} parent=27 // pred_region
        %s204 = smul.u32 4, %s20
        %p205 = scmp.lt.s32.totalorder %s19, 1
        %s206 = scalar_select %p205, %s19, 1
        %p207 = scmp.lt.s32.totalorder %s204, 7
        %s208 = scalar_select %p207, %s204, 7
        %s209 = smul.addr %s206, 8
        %s210 = sadd.s32 %s208, %s209
        %s211 = smul.addr %s210, 4
        %s212 = scalar_lea.vmem %s0, %s211
        %s213 = smul.u32 4, %s20
      $region32: #{res_bottleneck_forward.6} parent=27 // pred_fallthru
        _
    $region28: #{res_bottleneck_forward.6} parent=5 // pred_fallthru
      _
    %p214 = scmp.le.s32.totalorder 1, %s12
    %p215 = scmp.lt.s32.totalorder %s12, 5
    %p216 = pnand %p214, %p215
    %p217 = pneg %p216
    // Predicated region
    $region33: #{res_bottleneck_forward.6} parent=5 // pred_check
      _
    $region34: #{res_bottleneck_forward.6} parent=5 // pred_check_branch
      %219 = sbr.rel (%p216) target = $region36
    $region35: #{res_bottleneck_forward.6} parent=5 // pred_region
      %s220 = ssub.s32 %s12, 1
      %s221 = smul.u32 4, %s22
      %p222 = scmp.lt.s32.totalorder %s21, 1
      %s223 = scalar_select %p222, %s21, 1
      %p224 = scmp.lt.s32.totalorder %s221, 7
      %s225 = scalar_select %p224, %s221, 7
      %s226 = smul.addr %s223, 8
      %s227 = sadd.s32 %s225, %s226
      %s228 = smul.addr %s227, 4
      %s229 = scalar_lea.vmem %s0, %s228
      %p230 = pneg %p52
      %p231 = pneg %p49
      %p232 = pneg %p73
      %p233 = pneg %p70
      %p234 = pneg %p94
      %p235 = pneg %p91
      %p236 = pneg %p115
      %p237 = pneg %p112
      %p238 = pneg %p143
      %p239 = pneg %p140
      %s240 = smul.u32 4, %s22
      %p241 = scmp.lt.s32.totalorder %s21, 1
      %s242 = scalar_select %p241, %s21, 1
      %p243 = scmp.lt.s32.totalorder %s240, 7
      %s244 = scalar_select %p243, %s240, 7
      %s245 = smul.addr %s242, 8
      %s246 = sadd.s32 %s244, %s245
      %s247 = smul.addr %s246, 4
      %s248 = scalar_lea.vmem %s4, %s247
      %p249 = pneg %p173
      %p250 = pneg %p170
      %s251 = smul.u32 %s21, 2
      %s252 = sadd.s32 %s251, %s22
      %p253 = scmp.lt.s32.totalorder %s252, 3
      %s254 = scalar_select %p253, %s252, 3
      %s255 = smul.addr %s254, 2
      %s256 = scalar_lea.vmem %s5, %s255
      %s257 = smul.u32 4, %s22
      %p258 = scmp.lt.s32.totalorder %s21, 1
      %s259 = scalar_select %p258, %s21, 1
      %p260 = scmp.lt.s32.totalorder %s257, 7
      %s261 = scalar_select %p260, %s257, 7
      %s262 = smul.addr %s259, 8
      %s263 = sadd.s32 %s261, %s262
      %s264 = smul.addr %s263, 4
      %s265 = scalar_lea.vmem %s0, %s264
      %s266 = smul.u32 4, %s22
      %s267 = smul.u32 4, %s22
      %p268 = scmp.lt.s32.totalorder %s21, 1
      %s269 = scalar_select %p268, %s21, 1
      %p270 = scmp.lt.s32.totalorder %s267, 7
      %s271 = scalar_select %p270, %s267, 7
      %s272 = smul.addr %s269, 8
      %s273 = sadd.s32 %s271, %s272
      %s274 = smul.addr %s273, 4
      %s275 = scalar_lea.vmem %s4, %s274
      %s276 = smul.u32 4, %s22
      %s277 = smul.u32 %s21, 2
      %s278 = sadd.s32 %s277, %s22
      %p279 = scmp.lt.s32.totalorder %s278, 3
      %s280 = scalar_select %p279, %s278, 3
      %s281 = smul.addr %s280, 2
      %s282 = scalar_lea.vmem %s5, %s281
      %s283 = smul.u32 %s21, 2
      %s284 = sadd.s32 %s283, %s22
      %v286 = vld [vmem:[%s1] sm:$0x1]
      %v287 = vld [vmem:[%s2] sm:$0x1]
      %v288 = vld [vmem:[%s265] sm:$0xf]
      %v289 = vld [vmem:[%s265 + $0x4] sm:$0xf]
      %v290 = vld [vmem:[%s265 + $0x8] sm:$0xf]
      %v291 = vld [vmem:[%s265 + $0xc] sm:$0xf]
      %v292 = vunpack.c.l.bf16 %v288
      %v293 = vunpack.c.l.bf16 %v289
      %v294 = vunpack.c.l.bf16 %v290
      %v295 = vunpack.c.l.bf16 %v291
      %v297 = vlaneseq
      %v298 = vshrl.u32 %v297, 7
      %v299 = vsub.s32 0, %v298
      %v300 = vrot.slane %v286, %v299
      %v302 = vmul.f32 %v292, %v300
      %v303 = vmul.f32 %v293, %v300
      %v304 = vmul.f32 %v294, %v300
      %v305 = vmul.f32 %v295, %v300
      %v307 = vlaneseq
      %v308 = vshrl.u32 %v307, 7
      %v309 = vsub.s32 0, %v308
      %v310 = vrot.slane %v287, %v309
      %v312 = vadd.f32 %v302, %v310
      %v313 = vadd.f32 %v303, %v310
      %v314 = vadd.f32 %v304, %v310
      %v315 = vadd.f32 %v305, %v310
      %v316 = vmax.f32 %v312, 0.0
      %v317 = vmax.f32 %v313, 0.0
      %v318 = vmax.f32 %v314, 0.0
      %v319 = vmax.f32 %v315, 0.0
      %v320 = vpack.c.bf16 %v316, %v316
      %v321 = vpack.c.bf16 %v317, %v317
      %v322 = vpack.c.bf16 %v318, %v318
      %v323 = vpack.c.bf16 %v319, %v319
      %v324 = vld [vmem:[%s3] sm:$0xf]
      %v325 = vld [vmem:[%s3 + $0x4] sm:$0xf]
      %v326 = vld [vmem:[%s3 + $0x8] sm:$0xf]
      %v327 = vld [vmem:[%s3 + $0xc] sm:$0xf]
      %v328 = vld [vmem:[%s3 + $0x10] sm:$0xf]
      %v329 = vld [vmem:[%s3 + $0x14] sm:$0xf]
      %v330 = vld [vmem:[%s3 + $0x18] sm:$0xf]
      %v331 = vld [vmem:[%s3 + $0x1c] sm:$0xf]
      %v332 = vld [vmem:[%s3 + $0x20] sm:$0xf]
      %v333 = vld [vmem:[%s3 + $0x24] sm:$0xf]
      %v334 = vld [vmem:[%s3 + $0x28] sm:$0xf]
      %v335 = vld [vmem:[%s3 + $0x2c] sm:$0xf]
      %v336 = vld [vmem:[%s3 + $0x30] sm:$0xf]
      %v337 = vld [vmem:[%s3 + $0x34] sm:$0xf]
      %v338 = vld [vmem:[%s3 + $0x38] sm:$0xf]
      %v339 = vld [vmem:[%s3 + $0x3c] sm:$0xf]
      %v344 = vunpack.c.l.b16 %v320
      %v345 = vunpack.c.l.b16 %v321
      %v346 = vunpack.c.l.b16 %v322
      %v347 = vunpack.c.l.b16 %v323
      %v348 = vpack.c.b16 %v345, %v344
      %v349 = vpack.c.b16 %v347, %v346
      %v368 = vunpack.c.l.b16 %v324
      %v369 = vunpack.c.l.b16 %v325
      %v370 = vunpack.c.l.b16 %v326
      %v371 = vunpack.c.l.b16 %v327
      %v372 = vunpack.c.l.b16 %v328
      %v373 = vunpack.c.l.b16 %v329
      %v374 = vunpack.c.l.b16 %v330
      %v375 = vunpack.c.l.b16 %v331
      %v376 = vunpack.c.l.b16 %v332
      %v377 = vunpack.c.l.b16 %v333
      %v378 = vunpack.c.l.b16 %v334
      %v379 = vunpack.c.l.b16 %v335
      %v380 = vunpack.c.l.b16 %v336
      %v381 = vunpack.c.l.b16 %v337
      %v382 = vunpack.c.l.b16 %v338
      %v383 = vunpack.c.l.b16 %v339
      %v384 = vpack.c.b16 %v369, %v368
      %v385 = vpack.c.b16 %v371, %v370
      %v386 = vpack.c.b16 %v373, %v372
      %v387 = vpack.c.b16 %v375, %v374
      %v388 = vpack.c.b16 %v377, %v376
      %v389 = vpack.c.b16 %v379, %v378
      %v390 = vpack.c.b16 %v381, %v380
      %v391 = vpack.c.b16 %v383, %v382
      %400 = vmatprep.subr.bf16.mxu0 0
      %401 = vmatpush1.bf16.msra.mxu0 %v391
      %402 = vmatprep.subr.bf16.mxu0 0
      %403 = vmatpush1.bf16.msra.mxu0 %v390
      %404 = vmatprep.subr.bf16.mxu0 0
      %405 = vmatpush1.bf16.msra.mxu0 %v389
      %406 = vmatprep.subr.bf16.mxu0 0
      %407 = vmatpush1.bf16.msra.mxu0 %v388
      %408 = vmatprep.subr.bf16.mxu0 0
      %409 = vmatpush1.bf16.msra.mxu0 %v387
      %410 = vmatprep.subr.bf16.mxu0 0
      %411 = vmatpush1.bf16.msra.mxu0 %v386
      %412 = vmatprep.subr.bf16.mxu0 0
      %413 = vmatpush1.bf16.msra.mxu0 %v385
      %414 = vmatprep.subr.bf16.mxu0 0
      %415 = vmatpush1.bf16.msra.mxu0 %v384
      %416 = vmatprep.subr.bf16.mxu0 0
      %417 = vmatpush2.bf16.msra.mxu0 0
      %418 = vmatprep.subr.bf16.mxu0 0
      %419 = vmatpush2.bf16.msra.mxu0 0
      %420 = vmatprep.subr.bf16.mxu0 0
      %421 = vmatpush2.bf16.msra.mxu0 0
      %422 = vmatprep.subr.bf16.mxu0 0
      %423 = vmatpush2.bf16.msra.mxu0 0
      %424 = vmatprep.subr.bf16.mxu0 0
      %425 = vmatpush2.bf16.msra.mxu0 0
      %426 = vmatprep.subr.bf16.mxu0 0
      %427 = vmatpush2.bf16.msra.mxu0 0
      %428 = vmatprep.subr.bf16.mxu0 0
      %429 = vmatpush2.bf16.msra.mxu0 0
      %430 = vmatprep.subr.bf16.mxu0 0
      %431 = vmatpush2.bf16.msra.mxu0 0
      %432 = vmatprep.mubr.bf16.mxu0 0
      %433 = vmatmul.mubr.bf16.gmra.mxu0 %v348
      %v434 = vpop.f32.mrf.mxu0
      %v435 = vadd.f32 0.0, %v434
      %v436 = vpop.f32.mrf.mxu0
      %v437 = vpop.f32.mrf.mxu0
      %v438 = vadd.f32 0.0, %v437
      %v439 = vpop.f32.mrf.mxu0
      %440 = vmatprep.mubr.bf16.mxu0 0
      %441 = vmatmul.mubr.bf16.gmra.mxu0 %v349
      %v442 = vpop.f32.mrf.mxu0
      %v443 = vadd.f32 0.0, %v442
      %v444 = vpop.f32.mrf.mxu0
      %v445 = vpop.f32.mrf.mxu0
      %v446 = vadd.f32 0.0, %v445
      %v447 = vpop.f32.mrf.mxu0
      %448 = vdwg.mxu0
      %v449 = vpack.c.bf16 %v438, %v435
      %v450 = vpack.c.bf16 %v446, %v443
      %v453 = vunpack.c.l.b16 %v449
      %v454 = vunpack.c.h.b16 %v449
      %v455 = vunpack.c.l.b16 %v450
      %v456 = vunpack.c.h.b16 %v450
      %v457 = vpack.c.b16 %v453, %v453
      %v458 = vpack.c.b16 %v454, %v454
      %v459 = vpack.c.b16 %v455, %v455
      %v460 = vpack.c.b16 %v456, %v456
      %465 = vst [vmem:[%s275] sm:$0xf] %v457
      %466 = vst [vmem:[%s275 + $0x4] sm:$0xf] %v458
      %467 = vst [vmem:[%s275 + $0x8] sm:$0xf] %v459
      %468 = vst [vmem:[%s275 + $0xc] sm:$0xf] %v460
      %v469 = vadd.f32 %v435, %v438
      %v470 = vadd.f32 %v469, %v443
      %v471 = vadd.f32 %v470, %v446
      %v472 = vrot.slane %v471, 4
      %v473 = vadd.f32 %v471, %v472
      %v474 = vrot.slane %v473, 2
      %v475 = vadd.f32 %v473, %v474
      %v476 = vrot.slane %v475, 1
      %v477 = vadd.f32 %v475, %v476
      %v478 = vmul.f32 %v435, %v435
      %v479 = vmul.f32 %v438, %v438
      %v480 = vmul.f32 %v443, %v443
      %v481 = vmul.f32 %v446, %v446
      %v482 = vadd.f32 %v478, %v479
      %v483 = vadd.f32 %v482, %v480
      %v484 = vadd.f32 %v483, %v481
      %v485 = vrot.slane %v484, 4
      %v486 = vadd.f32 %v484, %v485
      %v487 = vrot.slane %v486, 2
      %v488 = vadd.f32 %v486, %v487
      %v489 = vrot.slane %v488, 1
      %v490 = vadd.f32 %v488, %v489
      %vm491 = vcmask 1040384
      %v492 = vsel %vm491, %v477, %v490
      %493 = vst [vmem:[%s282] sm:$0x3] %v492
      %s494 = smul.u32 4, %s22
      %p495 = scmp.lt.s32.totalorder %s21, 1
      %s496 = scalar_select %p495, %s21, 1
      %p497 = scmp.lt.s32.totalorder %s494, 7
      %s498 = scalar_select %p497, %s494, 7
      %s499 = smul.addr %s496, 8
      %s500 = sadd.s32 %s498, %s499
      %s501 = smul.addr %s500, 4
      %s502 = scalar_lea.vmem %s4, %s501
      %s503 = smul.u32 %s21, 2
      %s504 = sadd.s32 %s503, %s22
      %p505 = scmp.lt.s32.totalorder %s504, 3
      %s506 = scalar_select %p505, %s504, 3
      %s507 = smul.addr %s506, 2
      %s508 = scalar_lea.vmem %s5, %s507
      // Predicated region
      $region37: #{res_bottleneck_forward.6} parent=35 // pred_check
        %p509 = pneg %p140
      $region38: #{res_bottleneck_forward.6} parent=35 // pred_check_branch
        %511 = sbr.rel (%p509) target = $region40
      $region39: #{res_bottleneck_forward.6} parent=35 // pred_region
        %s512 = smul.u32 4, %s22
      $region40: #{res_bottleneck_forward.6} parent=35 // pred_fallthru
        _
      // Predicated region
      $region41: #{res_bottleneck_forward.6} parent=35 // pred_check
        %p513 = pneg %p170
      $region42: #{res_bottleneck_forward.6} parent=35 // pred_check_branch
        %515 = sbr.rel (%p513) target = $region44
      $region43: #{res_bottleneck_forward.6} parent=35 // pred_region
        %s516 = smul.u32 %s21, 2
        %s517 = sadd.s32 %s516, %s22
      $region44: #{res_bottleneck_forward.6} parent=35 // pred_fallthru
        _
    $region36: #{res_bottleneck_forward.6} parent=5 // pred_fallthru
      _
    %p518 = scmp.le.s32.totalorder 2, %s12
    // Predicated region
    $region45: #{res_bottleneck_forward.6} parent=5 // pred_check
      %p519 = pneg %p518
    $region46: #{res_bottleneck_forward.6} parent=5 // pred_check_branch
      %521 = sbr.rel (%p519) target = $region48
    $region47: #{res_bottleneck_forward.6} parent=5 // pred_region
      %s522 = ssub.s32 %s12, 2
      // Predicated region
      $region49: #{res_bottleneck_forward.6} parent=47 // pred_check
        %p523 = pneg %p146
      $region50: #{res_bottleneck_forward.6} parent=47 // pred_check_branch
        %525 = sbr.rel (%p523) target = $region52
      $region51: #{res_bottleneck_forward.6} parent=47 // pred_region
        %s526 = smul.u32 4, %s24
        %p527 = scmp.lt.s32.totalorder %s23, 1
        %s528 = scalar_select %p527, %s23, 1
        %p529 = scmp.lt.s32.totalorder %s526, 7
        %s530 = scalar_select %p529, %s526, 7
        %s531 = smul.addr %s528, 8
        %s532 = sadd.s32 %s530, %s531
        %s533 = smul.addr %s532, 4
        %s534 = scalar_lea.vmem %s4, %s533
      $region52: #{res_bottleneck_forward.6} parent=47 // pred_fallthru
        _
      // Predicated region
      $region53: #{res_bottleneck_forward.6} parent=47 // pred_check
        %p535 = pneg %p176
      $region54: #{res_bottleneck_forward.6} parent=47 // pred_check_branch
        %537 = sbr.rel (%p535) target = $region56
      $region55: #{res_bottleneck_forward.6} parent=47 // pred_region
        %s538 = smul.u32 %s23, 2
        %s539 = sadd.s32 %s538, %s24
        %p540 = scmp.lt.s32.totalorder %s539, 3
        %s541 = scalar_select %p540, %s539, 3
        %s542 = smul.addr %s541, 2
        %s543 = scalar_lea.vmem %s5, %s542
      $region56: #{res_bottleneck_forward.6} parent=47 // pred_fallthru
        _
    $region48: #{res_bottleneck_forward.6} parent=5 // pred_fallthru
      _
  $region6: #{res_bottleneck_forward.6} parent=0 // loop_footer
    %s16 = sadd.s32 1, %s12
  $region7: #{res_bottleneck_forward.6} parent=0 // loop_footer_branch
    %11 = sbr.rel target = $region3
  $region8: #{res_bottleneck_forward.6} parent=0 // loop_exit
    _

// kernel: res_bottleneck_forward.5
$region0: #{res_bottleneck_forward.5}
  #allocation0 [shape = 'u32[]', space=smem, size = 0x4, offset = 0x4, fixed_abs, tag = 'smem constant byte address 0x4 - core index']
  #allocation1 [shape = 'u32[144,128]{1,0:T(1,128)}', space=vmem, size = 0x12000, scoped, tag = 'internal scratch']
  %s0 = inlined_call_operand.vmem [shape: bf16[2,8,8,128], index: 0, kind: input, shape index: {}]
  %s1 = inlined_call_operand.vmem [shape: f32[1,128], index: 1, kind: input, shape index: {}]
  %s2 = inlined_call_operand.vmem [shape: f32[1,128], index: 2, kind: input, shape index: {}]
  %s3 = inlined_call_operand.vmem [shape: bf16[1152,128], index: 3, kind: input, shape index: {}]
  %s4 = inlined_call_operand.vmem [shape: bf16[2,8,8,128], index: 4, kind: output, shape index: {0}]
  %s5 = inlined_call_operand.vmem [shape: f32[4,2,128], index: 5, kind: output, shape index: {1}]
  %6 = xla_tuple %s4, %s5
  %s7 = sld [smem:[#allocation0]]
  $region57: #{res_bottleneck_forward.5} parent=0
    _
  %s9 = ssub.s32 1, %s7
  %s10 = scalar_select 0, %s9, %s7
  loop: start=0, step=1, limit=6
  $region2: #{res_bottleneck_forward.5} parent=0 // loop_pre_header
    _
  $region3: #{res_bottleneck_forward.5} parent=0 // loop_header
    %s12 = sphi 0, %s16
    %p13 = scmp.ge.s32.totalorder %s12, 6
    %s19 = sphi 0, %s31
    %s20 = sphi 0, %s27
    %s21 = sphi 0, %s19
    %s22 = sphi 0, %s20
    %s23 = sphi 0, %s21
    %s24 = sphi 0, %s22
    %s34 = sphi 0, %s36
    %s37 = sphi 0, %s34
    %s38 = sphi 0, %s37
    %s54 = sphi 0, %s38
    %s58 = sphi 0, %s58
    %s60 = sphi 0, %s58
    %s61 = sphi 0, %s60
    %s75 = sphi 0, %s61
    %s79 = sphi 0, %s79
    %s81 = sphi 0, %s79
    %s82 = sphi 0, %s81
    %s96 = sphi 0, %s82
    %s100 = sphi 0, %s100
    %s102 = sphi 0, %s100
    %s103 = sphi 0, %s102
    %s117 = sphi 0, %s103
    %s125 = sphi 0, %s127
    %s128 = sphi 0, %s125
    %s129 = sphi 0, %s128
    %s145 = sphi 0, %s129
    %s155 = sphi 0, %s157
    %s158 = sphi 0, %s155
    %s159 = sphi 0, %s158
    %s175 = sphi 0, %s159
  $region4: #{res_bottleneck_forward.5} parent=0 // loop_header_branch
    %15 = sbr.rel (%p13) target = $region8
  $region5: #{res_bottleneck_forward.5} parent=0 // loop_body
    %s17 = ssub.s32 %s12, 1
    %s18 = ssub.s32 %s12, 2
    %s25 = sadd.s32 1, %s20
    %p26 = scmp.ge.s32.totalorder %s25, 2
    %s27 = scalar_select %p26, 0, %s25
    %s28 = sadd.s32 1, %s19
    %s29 = scalar_select %p26, %s28, %s19
    %p30 = scmp.ge.s32.totalorder %s29, 2
    %s31 = scalar_select %p30, 0, %s29
    %s32 = ssub.s32 %s19, %s31
    %p33 = scmp.eq.s32.totalorder %s32, 0
    %s35 = sadd.s32 %s34, 1
    %s36 = scalar_select %p33, %s34, %s35
    %p39 = pneg %p33
    %p40 = scmp.eq.s32.totalorder %s12, 3
    %p41 = por %p39, %p40
    %p42 = scmp.ne.s32.totalorder %s34, %s37
    %p43 = scmp.eq.s32.totalorder %s12, 0
    %p44 = por %p42, %p43
    %p45 = scmp.ne.s32.totalorder %s34, %s37
    %p46 = scmp.eq.s32.totalorder %s17, 3
    %p47 = por %p45, %p46
    %p48 = scmp.ne.s32.totalorder %s37, %s38
    %p49 = scmp.eq.s32.totalorder %s17, 0
    %p50 = por %p48, %p49
    %p51 = scmp.ne.s32.totalorder %s37, %s38
    %p52 = scmp.eq.s32.totalorder %s18, 3
    %p53 = por %p51, %p52
    %p55 = scmp.ne.s32.totalorder %s38, %s54
    %p56 = scmp.eq.s32.totalorder %s18, 0
    %p57 = por %p55, %p56
    %s59 = sadd.s32 %s58, 1
    %p62 = scmp.eq.s32.totalorder %s12, 3
    %p63 = scmp.ne.s32.totalorder %s58, %s60
    %p64 = scmp.eq.s32.totalorder %s12, 0
    %p65 = por %p63, %p64
    %p66 = scmp.ne.s32.totalorder %s58, %s60
    %p67 = scmp.eq.s32.totalorder %s17, 3
    %p68 = por %p66, %p67
    %p69 = scmp.ne.s32.totalorder %s60, %s61
    %p70 = scmp.eq.s32.totalorder %s17, 0
    %p71 = por %p69, %p70
    %p72 = scmp.ne.s32.totalorder %s60, %s61
    %p73 = scmp.eq.s32.totalorder %s18, 3
    %p74 = por %p72, %p73
    %p76 = scmp.ne.s32.totalorder %s61, %s75
    %p77 = scmp.eq.s32.totalorder %s18, 0
    %p78 = por %p76, %p77
    %s80 = sadd.s32 %s79, 1
    %p83 = scmp.eq.s32.totalorder %s12, 3
    %p84 = scmp.ne.s32.totalorder %s79, %s81
    %p85 = scmp.eq.s32.totalorder %s12, 0
    %p86 = por %p84, %p85
    %p87 = scmp.ne.s32.totalorder %s79, %s81
    %p88 = scmp.eq.s32.totalorder %s17, 3
    %p89 = por %p87, %p88
    %p90 = scmp.ne.s32.totalorder %s81, %s82
    %p91 = scmp.eq.s32.totalorder %s17, 0
    %p92 = por %p90, %p91
    %p93 = scmp.ne.s32.totalorder %s81, %s82
    %p94 = scmp.eq.s32.totalorder %s18, 3
    %p95 = por %p93, %p94
    %p97 = scmp.ne.s32.totalorder %s82, %s96
    %p98 = scmp.eq.s32.totalorder %s18, 0
    %p99 = por %p97, %p98
    %s101 = sadd.s32 %s100, 1
    %p104 = scmp.eq.s32.totalorder %s12, 3
    %p105 = scmp.ne.s32.totalorder %s100, %s102
    %p106 = scmp.eq.s32.totalorder %s12, 0
    %p107 = por %p105, %p106
    %p108 = scmp.ne.s32.totalorder %s100, %s102
    %p109 = scmp.eq.s32.totalorder %s17, 3
    %p110 = por %p108, %p109
    %p111 = scmp.ne.s32.totalorder %s102, %s103
    %p112 = scmp.eq.s32.totalorder %s17, 0
    %p113 = por %p111, %p112
    %p114 = scmp.ne.s32.totalorder %s102, %s103
    %p115 = scmp.eq.s32.totalorder %s18, 3
    %p116 = por %p114, %p115
    %p118 = scmp.ne.s32.totalorder %s103, %s117
    %p119 = scmp.eq.s32.totalorder %s18, 0
    %p120 = por %p118, %p119
    %s121 = ssub.s32 %s19, %s31
    %s122 = ssub.s32 %s20, %s27
    %s123 = sor.u32 %s121, %s122
    %p124 = scmp.eq.s32.totalorder %s123, 0
    %s126 = sadd.s32 %s125, 1
    %s127 = scalar_select %p124, %s125, %s126
    %p130 = pneg %p124
    %p131 = scmp.eq.s32.totalorder %s12, 3
    %p132 = por %p130, %p131
    %p133 = scmp.ne.s32.totalorder %s125, %s128
    %p134 = scmp.eq.s32.totalorder %s12, 0
    %p135 = por %p133, %p134
    %p136 = scmp.ne.s32.totalorder %s125, %s128
    %p137 = scmp.eq.s32.totalorder %s17, 3
    %p138 = por %p136, %p137
    %p139 = scmp.ne.s32.totalorder %s128, %s129
    %p140 = scmp.eq.s32.totalorder %s17, 0
    %p141 = por %p139, %p140
    %p142 = scmp.ne.s32.totalorder %s128, %s129
    %p143 = scmp.eq.s32.totalorder %s18, 3
    %p144 = por %p142, %p143
    %p146 = scmp.ne.s32.totalorder %s129, %s145
    %p147 = scmp.eq.s32.totalorder %s18, 0
    %p148 = por %p146, %p147
    %s149 = smul.u32 %s19, 2
    %s150 = sadd.s32 %s149, %s20
    %s151 = smul.u32 %s31, 2
    %s152 = sadd.s32 %s151, %s27
    %s153 = ssub.s32 %s150, %s152
    %p154 = scmp.eq.s32.totalorder %s153, 0
    %s156 = sadd.s32 %s155, 1
    %s157 = scalar_select %p154, %s155, %s156
    %p160 = pneg %p154
    %p161 = scmp.eq.s32.totalorder %s12, 3
    %p162 = por %p160, %p161
    %p163 = scmp.ne.s32.totalorder %s155, %s158
    %p164 = scmp.eq.s32.totalorder %s12, 0
    %p165 = por %p163, %p164
    %p166 = scmp.ne.s32.totalorder %s155, %s158
    %p167 = scmp.eq.s32.totalorder %s17, 3
    %p168 = por %p166, %p167
    %p169 = scmp.ne.s32.totalorder %s158, %s159
    %p170 = scmp.eq.s32.totalorder %s17, 0
    %p171 = por %p169, %p170
    %p172 = scmp.ne.s32.totalorder %s158, %s159
    %p173 = scmp.eq.s32.totalorder %s18, 3
    %p174 = por %p172, %p173
    %p176 = scmp.ne.s32.totalorder %s159, %s175
    %p177 = scmp.eq.s32.totalorder %s18, 0
    %p178 = por %p176, %p177
    %p179 = scmp.le.s32.totalorder 1, %s12
    %p180 = scmp.lt.s32.totalorder %s12, 5
    %p181 = pnand %p179, %p180
    %p182 = pneg %p181
    // Predicated region
    $region9: #{res_bottleneck_forward.5} parent=5 // pred_check
      _
    $region10: #{res_bottleneck_forward.5} parent=5 // pred_check_branch
      %184 = sbr.rel (%p181) target = $region12
    $region11: #{res_bottleneck_forward.5} parent=5 // pred_region
      %s185 = ssub.s32 %s12, 1
      // Predicated region
      $region13: #{res_bottleneck_forward.5} parent=11 // pred_check
        %p186 = pneg %p71
      $region14: #{res_bottleneck_forward.5} parent=11 // pred_check_branch
        %188 = sbr.rel (%p186) target = $region16
      $region15: #{res_bottleneck_forward.5} parent=11 // pred_region
        _
      $region16: #{res_bottleneck_forward.5} parent=11 // pred_fallthru
        _
      // Predicated region
      $region17: #{res_bottleneck_forward.5} parent=11 // pred_check
        %p189 = pneg %p92
      $region18: #{res_bottleneck_forward.5} parent=11 // pred_check_branch
        %191 = sbr.rel (%p189) target = $region20
      $region19: #{res_bottleneck_forward.5} parent=11 // pred_region
        _
      $region20: #{res_bottleneck_forward.5} parent=11 // pred_fallthru
        _
      // Predicated region
      $region21: #{res_bottleneck_forward.5} parent=11 // pred_check
        %p192 = pneg %p113
      $region22: #{res_bottleneck_forward.5} parent=11 // pred_check_branch
        %194 = sbr.rel (%p192) target = $region24
      $region23: #{res_bottleneck_forward.5} parent=11 // pred_region
        _
      $region24: #{res_bottleneck_forward.5} parent=11 // pred_fallthru
        _
    $region12: #{res_bottleneck_forward.5} parent=5 // pred_fallthru
      _
    %p195 = scmp.lt.s32.totalorder %s12, 4
    // Predicated region
    $region25: #{res_bottleneck_forward.5} parent=5 // pred_check
      %p196 = pneg %p195
    $region26: #{res_bottleneck_forward.5} parent=5 // pred_check_branch
      %198 = sbr.rel (%p196) target = $region28
    $region27: #{res_bottleneck_forward.5} parent=5 // pred_region
      // Predicated region
      $region29: #{res_bottleneck_forward.5} parent=27 // pred_check
        %p199 = pneg %p44
      $region30: #{res_bottleneck_forward.5} parent=27 // pred_check_branch
        %201 = sbr.rel (%p199) target = $region32
      $region31: #{res_bottleneck_forward.5} parent=27 // pred_region
        %p202 = scmp.lt.s32.totalorder %s19, 1
        %s203 = scalar_select %p202, %s19, 1
        %s204 = smul.addr %s203, 8
        %s205 = smul.addr %s204, 4
        %s206 = scalar_lea.vmem %s0, %s205
      $region32: #{res_bottleneck_forward.5} parent=27 // pred_fallthru
        _
    $region28: #{res_bottleneck_forward.5} parent=5 // pred_fallthru
      _
    %p207 = scmp.le.s32.totalorder 1, %s12
    %p208 = scmp.lt.s32.totalorder %s12, 5
    %p209 = pnand %p207, %p208
    %p210 = pneg %p209
    // Predicated region
    $region33: #{res_bottleneck_forward.5} parent=5 // pred_check
      _
    $region34: #{res_bottleneck_forward.5} parent=5 // pred_check_branch
      %212 = sbr.rel (%p209) target = $region36
    $region35: #{res_bottleneck_forward.5} parent=5 // pred_region
      %s213 = ssub.s32 %s12, 1
      %p214 = scmp.lt.s32.totalorder %s21, 1
      %s215 = scalar_select %p214, %s21, 1
      %s216 = smul.addr %s215, 8
      %s217 = smul.addr %s216, 4
      %s218 = scalar_lea.vmem %s0, %s217
      %p219 = pneg %p50
      %p220 = pneg %p47
      %p221 = pneg %p71
      %p222 = pneg %p68
      %p223 = pneg %p92
      %p224 = pneg %p89
      %p225 = pneg %p113
      %p226 = pneg %p110
      %p227 = pneg %p141
      %p228 = pneg %p138
      %s229 = smul.u32 4, %s22
      %p230 = scmp.lt.s32.totalorder %s21, 1
      %s231 = scalar_select %p230, %s21, 1
      %p232 = scmp.lt.s32.totalorder %s229, 7
      %s233 = scalar_select %p232, %s229, 7
      %s234 = smul.addr %s231, 8
      %s235 = sadd.s32 %s233, %s234
      %s236 = smul.addr %s235, 4
      %s237 = scalar_lea.vmem %s4, %s236
      %p238 = pneg %p171
      %p239 = pneg %p168
      %s240 = smul.u32 %s21, 2
      %s241 = sadd.s32 %s240, %s22
      %p242 = scmp.lt.s32.totalorder %s241, 3
      %s243 = scalar_select %p242, %s241, 3
      %s244 = smul.addr %s243, 2
      %s245 = scalar_lea.vmem %s5, %s244
      %p246 = scmp.lt.s32.totalorder %s21, 1
      %s247 = scalar_select %p246, %s21, 1
      %s248 = smul.addr %s247, 8
      %s249 = smul.addr %s248, 4
      %s250 = scalar_lea.vmem %s0, %s249
      %s251 = smul.u32 4, %s22
      %p252 = scmp.lt.s32.totalorder %s21, 1
      %s253 = scalar_select %p252, %s21, 1
      %p254 = scmp.lt.s32.totalorder %s251, 7
      %s255 = scalar_select %p254, %s251, 7
      %s256 = smul.addr %s253, 8
      %s257 = sadd.s32 %s255, %s256
      %s258 = smul.addr %s257, 4
      %s259 = scalar_lea.vmem %s4, %s258
      %s260 = smul.u32 4, %s22
      %s261 = smul.u32 %s21, 2
      %s262 = sadd.s32 %s261, %s22
      %p263 = scmp.lt.s32.totalorder %s262, 3
      %s264 = scalar_select %p263, %s262, 3
      %s265 = smul.addr %s264, 2
      %s266 = scalar_lea.vmem %s5, %s265
      %s267 = smul.u32 %s21, 2
      %s268 = sadd.s32 %s267, %s22
      %s270 = smul.u32 %s22, 4
      %v271 = vld [vmem:[%s1] sm:$0x1]
      %v272 = vld [vmem:[%s2] sm:$0x1]
      %s273 = smul.addr %s270, 4
      %s274 = scalar_lea.vmem %s250, %s273
      %v275 = vld [vmem:[%s274] sm:$0xf]
      %v276 = vld [vmem:[%s274 + $0x4] sm:$0xf]
      %v277 = vld [vmem:[%s274 + $0x8] sm:$0xf]
      %v278 = vld [vmem:[%s274 + $0xc] sm:$0xf]
      %v279 = vunpack.c.l.bf16 %v275
      %v280 = vunpack.c.l.bf16 %v276
      %v281 = vunpack.c.l.bf16 %v277
      %v282 = vunpack.c.l.bf16 %v278
      %v284 = vlaneseq
      %v285 = vshrl.u32 %v284, 7
      %v286 = vsub.s32 0, %v285
      %v287 = vrot.slane %v271, %v286
      %v289 = vmul.f32 %v279, %v287
      %v290 = vmul.f32 %v280, %v287
      %v291 = vmul.f32 %v281, %v287
      %v292 = vmul.f32 %v282, %v287
      %v294 = vlaneseq
      %v295 = vshrl.u32 %v294, 7
      %v296 = vsub.s32 0, %v295
      %v297 = vrot.slane %v272, %v296
      %v299 = vadd.f32 %v289, %v297
      %v300 = vadd.f32 %v290, %v297
      %v301 = vadd.f32 %v291, %v297
      %v302 = vadd.f32 %v292, %v297
      %v303 = vmax.f32 %v299, 0.0
      %v304 = vmax.f32 %v300, 0.0
      %v305 = vmax.f32 %v301, 0.0
      %v306 = vmax.f32 %v302, 0.0
      %v307 = vpack.c.bf16 %v303, %v303
      %v308 = vpack.c.bf16 %v304, %v304
      %v309 = vpack.c.bf16 %v305, %v305
      %v310 = vpack.c.bf16 %v306, %v306
      %s311 = ssub.s32 %s270, 1
      %p312 = scmp.gt.s32.totalorder %s311, 0
      %s313 = scalar_select %p312, %s311, 0
      %s314 = smul.addr %s313, 4
      %s315 = scalar_lea.vmem %s250, %s314
      %v316 = vld [vmem:[%s315] sm:$0xf]
      %v317 = vunpack.c.l.bf16 %v316
      %v318 = vmul.f32 %v317, %v287
      %v319 = vadd.f32 %v318, %v297
      %v320 = vmax.f32 %v319, 0.0
      %v321 = vpack.c.bf16 %v320, %v320
      %s322 = sadd.s32 %s270, 4
      %p323 = scmp.lt.s32.totalorder %s322, 7
      %s324 = scalar_select %p323, %s322, 7
      %s325 = smul.addr %s324, 4
      %s326 = scalar_lea.vmem %s250, %s325
      %v327 = vld [vmem:[%s326] sm:$0xf]
      %v328 = vunpack.c.l.bf16 %v327
      %v329 = vmul.f32 %v328, %v287
      %v330 = vadd.f32 %v329, %v297
      %v331 = vmax.f32 %v330, 0.0
      %v332 = vpack.c.bf16 %v331, %v331
      %p333 = scmp.gt.s32.totalorder %s22, 0
      %s334 = scalar_select %p333, 1, 0
      %s335 = scvt.s32.f32 %s334
      %p337 = scmp.ne.f32.partialorder %s335, %s335
      %s338 = sshrl.u32 %s335, 16
      %s339 = sand.u32 %s338, 1
      %s340 = sadd.s32 32767, %s339
      %s341 = sadd.s32 %s335, %s340
      %s342 = sand.u32 %s341, 4294901760
      %s343 = scalar_select %p337, 2143289344, %s342
      %s345 = sshrl.u32 %s343, 16
      %s346 = sshll.u32 %s345, 16
      %s347 = sor.u32 %s345, %s346
      %v348 = vstv %s347
      %v350 = vmul.bf16 %v321, %v348
      %p351 = scmp.lt.s32.totalorder %s22, 1
      %s352 = scalar_select %p351, 1, 0
      %s353 = scvt.s32.f32 %s352
      %p355 = scmp.ne.f32.partialorder %s353, %s353
      %s356 = sshrl.u32 %s353, 16
      %s357 = sand.u32 %s356, 1
      %s358 = sadd.s32 32767, %s357
      %s359 = sadd.s32 %s353, %s358
      %s360 = sand.u32 %s359, 4294901760
      %s361 = scalar_select %p355, 2143289344, %s360
      %s363 = sshrl.u32 %s361, 16
      %s364 = sshll.u32 %s363, 16
      %s365 = sor.u32 %s363, %s364
      %v366 = vstv %s365
      %v368 = vmul.bf16 %v332, %v366
      %v370 = vshrl.u32 %v350, 16
      %v372 = vrot.slane %v370, 7
      %v373 = vshll.u32 %v350, 16
      %v375 = vor.u32 %v372, %v373
      %v377 = vshrl.u32 %v307, 16
      %v379 = vrot.slane %v377, 7
      %v380 = vshll.u32 %v307, 16
      %v382 = vor.u32 %v379, %v380
      %v384 = vshrl.u32 %v308, 16
      %v386 = vrot.slane %v384, 7
      %v387 = vshll.u32 %v308, 16
      %v389 = vor.u32 %v386, %v387
      %v391 = vshrl.u32 %v309, 16
      %v393 = vrot.slane %v391, 7
      %v394 = vshll.u32 %v309, 16
      %v396 = vor.u32 %v393, %v394
      %v398 = vshrl.u32 %v310, 16
      %v400 = vrot.slane %v398, 7
      %v401 = vshll.u32 %v310, 16
      %v403 = vor.u32 %v400, %v401
      %v405 = vshrl.u32 %v368, 16
      %v407 = vrot.slane %v405, 7
      %v408 = vshll.u32 %v368, 16
      %v410 = vor.u32 %v407, %v408
      %vm417 = vcmask 1040384
      %vm418 = vsmask.f32 256
      %vm419 = vmand %vm417, %vm418
      %v420 = vsel %vm419, 0, %v375
      %v421 = vsel %vm419, 0, %v382
      %v422 = vsel %vm419, 0, %v389
      %v423 = vsel %vm419, 0, %v396
      %v424 = vsel %vm419, 0, %v403
      %v425 = vsel %vm419, 0, %v410
      %vm426 = vcmask 1044480
      %vm427 = vsmask.f32 4352
      %vm428 = vmand %vm426, %vm427
      %v429 = vsel %vm428, %v420, 0
      %v430 = vsel %vm428, %v421, 0
      %v431 = vsel %vm428, %v422, 0
      %v432 = vsel %vm428, %v423, 0
      %v433 = vsel %vm428, %v424, 0
      %v434 = vsel %vm428, %v425, 0
      %v439 = vunpack.c.l.b16 %v429
      %v440 = vunpack.c.h.b16 %v429
      %v441 = vunpack.c.l.b16 %v430
      %v442 = vunpack.c.h.b16 %v430
      %v443 = vunpack.c.l.b16 %v431
      %v444 = vunpack.c.h.b16 %v431
      %v445 = vunpack.c.l.b16 %v432
      %v446 = vunpack.c.h.b16 %v432
      %v447 = vpack.c.b16 %v439, %v439
      %v448 = vpack.c.b16 %v440, %v440
      %v449 = vpack.c.b16 %v441, %v441
      %v450 = vpack.c.b16 %v442, %v442
      %v451 = vpack.c.b16 %v443, %v443
      %v452 = vpack.c.b16 %v444, %v444
      %v453 = vpack.c.b16 %v445, %v445
      %v454 = vpack.c.b16 %v446, %v446
      %vm455 = vsmask.f32 3328
      %vm456 = vsmask.f32 7440
      %vm457 = vmor %vm455, %vm456
      %v459 = vshrl.u32 %v447, 16
      %v461 = vrot.slane %v459, 4
      %v462 = vshll.u32 %v447, 16
      %v464 = vrot.slane %v462, 5
      %v465 = vor.u32 %v461, %v464
      %v466 = vrot.slane %v465, 4
      %v468 = vshll.u32 %v448, 16
      %v470 = vrot.slane %v468, 5
      %v471 = vsel %vm457, %v466, %v470
      %v473 = vshrl.u32 %v449, 16
      %v475 = vrot.slane %v473, 4
      %v476 = vshll.u32 %v449, 16
      %v478 = vrot.slane %v476, 5
      %v479 = vor.u32 %v475, %v478
      %v480 = vrot.slane %v479, 4
      %v482 = vshll.u32 %v450, 16
      %v484 = vrot.slane %v482, 5
      %v485 = vsel %vm457, %v480, %v484
      %v487 = vshrl.u32 %v451, 16
      %v489 = vrot.slane %v487, 4
      %v490 = vshll.u32 %v451, 16
      %v492 = vrot.slane %v490, 5
      %v493 = vor.u32 %v489, %v492
      %v494 = vrot.slane %v493, 4
      %v496 = vshll.u32 %v452, 16
      %v498 = vrot.slane %v496, 5
      %v499 = vsel %vm457, %v494, %v498
      %v501 = vshrl.u32 %v453, 16
      %v503 = vrot.slane %v501, 4
      %v504 = vshll.u32 %v453, 16
      %v506 = vrot.slane %v504, 5
      %v507 = vor.u32 %v503, %v506
      %v508 = vrot.slane %v507, 4
      %v510 = vshll.u32 %v454, 16
      %v512 = vrot.slane %v510, 5
      %v513 = vsel %vm457, %v508, %v512
      %vm514 = vcmask 1042432
      %vm515 = vcmask 1046532
      %vm516 = vmor %vm514, %vm515
      %v517 = vrot.slane %v447, 5
      %v518 = vrot.slane %v517, 4
      %v519 = vrot.slane %v448, 5
      %v520 = vsel %vm516, %v518, %v519
      %v521 = vrot.slane %v449, 5
      %v522 = vrot.slane %v521, 4
      %v523 = vrot.slane %v450, 5
      %v524 = vsel %vm516, %v522, %v523
      %v525 = vrot.slane %v451, 5
      %v526 = vrot.slane %v525, 4
      %v527 = vrot.slane %v452, 5
      %v528 = vsel %vm516, %v526, %v527
      %v529 = vrot.slane %v453, 5
      %v530 = vrot.slane %v529, 4
      %v531 = vrot.slane %v454, 5
      %v532 = vsel %vm516, %v530, %v531
      %v534 = vunpack.c.l.b16 %v433
      %v535 = vunpack.c.h.b16 %v433
      %v536 = vpack.c.b16 %v534, %v534
      %v537 = vpack.c.b16 %v535, %v535
      %v539 = vshrl.u32 %v536, 16
      %v541 = vrot.slane %v539, 4
      %v542 = vshll.u32 %v536, 16
      %v544 = vrot.slane %v542, 5
      %v545 = vor.u32 %v541, %v544
      %v546 = vrot.slane %v545, 4
      %v548 = vshll.u32 %v537, 16
      %v550 = vrot.slane %v548, 5
      %v551 = vsel %vm457, %v546, %v550
      %v552 = vrot.slane %v536, 5
      %v553 = vrot.slane %v552, 4
      %v554 = vrot.slane %v537, 5
      %v555 = vsel %vm516, %v553, %v554
      %v557 = vunpack.c.l.b16 %v434
      %v558 = vunpack.c.h.b16 %v434
      %v559 = vpack.c.b16 %v557, %v557
      %v560 = vpack.c.b16 %v558, %v558
      %v562 = vshrl.u32 %v559, 16
      %v564 = vrot.slane %v562, 4
      %v565 = vshll.u32 %v559, 16
      %v567 = vrot.slane %v565, 5
      %v568 = vor.u32 %v564, %v567
      %v569 = vrot.slane %v568, 4
      %v571 = vshll.u32 %v560, 16
      %v573 = vrot.slane %v571, 5
      %v574 = vsel %vm457, %v569, %v573
      %v575 = vrot.slane %v559, 5
      %v576 = vrot.slane %v575, 4
      %v577 = vrot.slane %v560, 5
      %v578 = vsel %vm516, %v576, %v577
      %v579 = vpack.c.b16 %v441, %v439
      %v580 = vpack.c.b16 %v445, %v443
      %v583 = vunpack.c.l.b16 %v471
      %v584 = vunpack.c.l.b16 %v485
      %v585 = vunpack.c.l.b16 %v499
      %v586 = vunpack.c.l.b16 %v513
      %v587 = vpack.c.b16 %v584, %v583
      %v588 = vpack.c.b16 %v586, %v585
      %v591 = vunpack.c.l.b16 %v520
      %v592 = vunpack.c.l.b16 %v524
      %v593 = vunpack.c.l.b16 %v528
      %v594 = vunpack.c.l.b16 %v532
      %v595 = vpack.c.b16 %v592, %v591
      %v596 = vpack.c.b16 %v594, %v593
      %v599 = vpack.c.b16 %v443, %v441
      %v600 = vpack.c.b16 %v534, %v445
      %v603 = vunpack.c.l.b16 %v551
      %v604 = vpack.c.b16 %v585, %v584
      %v605 = vpack.c.b16 %v603, %v586
      %v608 = vunpack.c.l.b16 %v555
      %v609 = vpack.c.b16 %v593, %v592
      %v610 = vpack.c.b16 %v608, %v594
      %v613 = vpack.c.b16 %v557, %v534
      %v615 = vunpack.c.l.b16 %v574
      %v616 = vpack.c.b16 %v615, %v603
      %v618 = vunpack.c.l.b16 %v578
      %v619 = vpack.c.b16 %v618, %v608
      %v621 = vld [vmem:[%s3] sm:$0xf]
      %v622 = vld [vmem:[%s3 + $0x4] sm:$0xf]
      %v623 = vld [vmem:[%s3 + $0x8] sm:$0xf]
      %v624 = vld [vmem:[%s3 + $0xc] sm:$0xf]
      %v625 = vld [vmem:[%s3 + $0x10] sm:$0xf]
      %v626 = vld [vmem:[%s3 + $0x14] sm:$0xf]
      %v627 = vld [vmem:[%s3 + $0x18] sm:$0xf]
      %v628 = vld [vmem:[%s3 + $0x1c] sm:$0xf]
      %v629 = vld [vmem:[%s3 + $0x20] sm:$0xf]
      %v630 = vld [vmem:[%s3 + $0x24] sm:$0xf]
      %v631 = vld [vmem:[%s3 + $0x28] sm:$0xf]
      %v632 = vld [vmem:[%s3 + $0x2c] sm:$0xf]
      %v633 = vld [vmem:[%s3 + $0x30] sm:$0xf]
      %v634 = vld [vmem:[%s3 + $0x34] sm:$0xf]
      %v635 = vld [vmem:[%s3 + $0x38] sm:$0xf]
      %v636 = vld [vmem:[%s3 + $0x3c] sm:$0xf]
      %v637 = vld [vmem:[%s3 + $0x40] sm:$0xf]
      %v638 = vld [vmem:[%s3 + $0x44] sm:$0xf]
      %v639 = vld [vmem:[%s3 + $0x48] sm:$0xf]
      %v640 = vld [vmem:[%s3 + $0x4c] sm:$0xf]
      %v641 = vld [vmem:[%s3 + $0x50] sm:$0xf]
      %v642 = vld [vmem:[%s3 + $0x54] sm:$0xf]
      %v643 = vld [vmem:[%s3 + $0x58] sm:$0xf]
      %v644 = vld [vmem:[%s3 + $0x5c] sm:$0xf]
      %v645 = vld [vmem:[%s3 + $0x60] sm:$0xf]
      %v646 = vld [vmem:[%s3 + $0x64] sm:$0xf]
      %v647 = vld [vmem:[%s3 + $0x68] sm:$0xf]
      %v648 = vld [vmem:[%s3 + $0x6c] sm:$0xf]
      %v649 = vld [vmem:[%s3 + $0x70] sm:$0xf]
      %v650 = vld [vmem:[%s3 + $0x74] sm:$0xf]
      %v651 = vld [vmem:[%s3 + $0x78] sm:$0xf]
      %v652 = vld [vmem:[%s3 + $0x7c] sm:$0xf]
      %v653 = vld [vmem:[%s3 + $0x80] sm:$0xf]
      %v654 = vld [vmem:[%s3 + $0x84] sm:$0xf]
      %v655 = vld [vmem:[%s3 + $0x88] sm:$0xf]
      %v656 = vld [vmem:[%s3 + $0x8c] sm:$0xf]
      %v657 = vld [vmem:[%s3 + $0x90] sm:$0xf]
      %v658 = vld [vmem:[%s3 + $0x94] sm:$0xf]
      %v659 = vld [vmem:[%s3 + $0x98] sm:$0xf]
      %v660 = vld [vmem:[%s3 + $0x9c] sm:$0xf]
      %v661 = vld [vmem:[%s3 + $0xa0] sm:$0xf]
      %v662 = vld [vmem:[%s3 + $0xa4] sm:$0xf]
      %v663 = vld [vmem:[%s3 + $0xa8] sm:$0xf]
      %v664 = vld [vmem:[%s3 + $0xac] sm:$0xf]
      %v665 = vld [vmem:[%s3 + $0xb0] sm:$0xf]
      %v666 = vld [vmem:[%s3 + $0xb4] sm:$0xf]
      %v667 = vld [vmem:[%s3 + $0xb8] sm:$0xf]
      %v668 = vld [vmem:[%s3 + $0xbc] sm:$0xf]
      %v669 = vld [vmem:[%s3 + $0xc0] sm:$0xf]
      %v670 = vld [vmem:[%s3 + $0xc4] sm:$0xf]
      %v671 = vld [vmem:[%s3 + $0xc8] sm:$0xf]
      %v672 = vld [vmem:[%s3 + $0xcc] sm:$0xf]
      %v673 = vld [vmem:[%s3 + $0xd0] sm:$0xf]
      %v674 = vld [vmem:[%s3 + $0xd4] sm:$0xf]
      %v675 = vld [vmem:[%s3 + $0xd8] sm:$0xf]
      %v676 = vld [vmem:[%s3 + $0xdc] sm:$0xf]
      %v677 = vld [vmem:[%s3 + $0xe0] sm:$0xf]
      %v678 = vld [vmem:[%s3 + $0xe4] sm:$0xf]
      %v679 = vld [vmem:[%s3 + $0xe8] sm:$0xf]
      %v680 = vld [vmem:[%s3 + $0xec] sm:$0xf]
      %v681 = vld [vmem:[%s3 + $0xf0] sm:$0xf]
      %v682 = vld [vmem:[%s3 + $0xf4] sm:$0xf]
      %v683 = vld [vmem:[%s3 + $0xf8] sm:$0xf]
      %v684 = vld [vmem:[%s3 + $0xfc] sm:$0xf]
      %v685 = vld [vmem:[%s3 + $0x100] sm:$0xf]
      %v686 = vld [vmem:[%s3 + $0x104] sm:$0xf]
      %v687 = vld [vmem:[%s3 + $0x108] sm:$0xf]
      %v688 = vld [vmem:[%s3 + $0x10c] sm:$0xf]
      %v689 = vld [vmem:[%s3 + $0x110] sm:$0xf]
      %v690 = vld [vmem:[%s3 + $0x114] sm:$0xf]
      %v691 = vld [vmem:[%s3 + $0x118] sm:$0xf]
      %v692 = vld [vmem:[%s3 + $0x11c] sm:$0xf]
      %v693 = vld [vmem:[%s3 + $0x120] sm:$0xf]
      %v694 = vld [vmem:[%s3 + $0x124] sm:$0xf]
      %v695 = vld [vmem:[%s3 + $0x128] sm:$0xf]
      %v696 = vld [vmem:[%s3 + $0x12c] sm:$0xf]
      %v697 = vld [vmem:[%s3 + $0x130] sm:$0xf]
      %v698 = vld [vmem:[%s3 + $0x134] sm:$0xf]
      %v699 = vld [vmem:[%s3 + $0x138] sm:$0xf]
      %v700 = vld [vmem:[%s3 + $0x13c] sm:$0xf]
      %v701 = vld [vmem:[%s3 + $0x140] sm:$0xf]
      %v702 = vld [vmem:[%s3 + $0x144] sm:$0xf]
      %v703 = vld [vmem:[%s3 + $0x148] sm:$0xf]
      %v704 = vld [vmem:[%s3 + $0x14c] sm:$0xf]
      %v705 = vld [vmem:[%s3 + $0x150] sm:$0xf]
      %v706 = vld [vmem:[%s3 + $0x154] sm:$0xf]
      %v707 = vld [vmem:[%s3 + $0x158] sm:$0xf]
      %v708 = vld [vmem:[%s3 + $0x15c] sm:$0xf]
      %v709 = vld [vmem:[%s3 + $0x160] sm:$0xf]
      %v710 = vld [vmem:[%s3 + $0x164] sm:$0xf]
      %v711 = vld [vmem:[%s3 + $0x168] sm:$0xf]
      %v712 = vld [vmem:[%s3 + $0x16c] sm:$0xf]
      %v713 = vld [vmem:[%s3 + $0x170] sm:$0xf]
      %v714 = vld [vmem:[%s3 + $0x174] sm:$0xf]
      %v715 = vld [vmem:[%s3 + $0x178] sm:$0xf]
      %v716 = vld [vmem:[%s3 + $0x17c] sm:$0xf]
      %v717 = vld [vmem:[%s3 + $0x180] sm:$0xf]
      %v718 = vld [vmem:[%s3 + $0x184] sm:$0xf]
      %v719 = vld [vmem:[%s3 + $0x188] sm:$0xf]
      %v720 = vld [vmem:[%s3 + $0x18c] sm:$0xf]
      %v721 = vld [vmem:[%s3 + $0x190] sm:$0xf]
      %v722 = vld [vmem:[%s3 + $0x194] sm:$0xf]
      %v723 = vld [vmem:[%s3 + $0x198] sm:$0xf]
      %v724 = vld [vmem:[%s3 + $0x19c] sm:$0xf]
      %v725 = vld [vmem:[%s3 + $0x1a0] sm:$0xf]
      %v726 = vld [vmem:[%s3 + $0x1a4] sm:$0xf]
      %v727 = vld [vmem:[%s3 + $0x1a8] sm:$0xf]
      %v728 = vld [vmem:[%s3 + $0x1ac] sm:$0xf]
      %v729 = vld [vmem:[%s3 + $0x1b0] sm:$0xf]
      %v730 = vld [vmem:[%s3 + $0x1b4] sm:$0xf]
      %v731 = vld [vmem:[%s3 + $0x1b8] sm:$0xf]
      %v732 = vld [vmem:[%s3 + $0x1bc] sm:$0xf]
      %v733 = vld [vmem:[%s3 + $0x1c0] sm:$0xf]
      %v734 = vld [vmem:[%s3 + $0x1c4] sm:$0xf]
      %v735 = vld [vmem:[%s3 + $0x1c8] sm:$0xf]
      %v736 = vld [vmem:[%s3 + $0x1cc] sm:$0xf]
      %v737 = vld [vmem:[%s3 + $0x1d0] sm:$0xf]
      %v738 = vld [vmem:[%s3 + $0x1d4] sm:$0xf]
      %v739 = vld [vmem:[%s3 + $0x1d8] sm:$0xf]
      %v740 = vld [vmem:[%s3 + $0x1dc] sm:$0xf]
      %v741 = vld [vmem:[%s3 + $0x1e0] sm:$0xf]
      %v742 = vld [vmem:[%s3 + $0x1e4] sm:$0xf]
      %v743 = vld [vmem:[%s3 + $0x1e8] sm:$0xf]
      %v744 = vld [vmem:[%s3 + $0x1ec] sm:$0xf]
      %v745 = vld [vmem:[%s3 + $0x1f0] sm:$0xf]
      %v746 = vld [vmem:[%s3 + $0x1f4] sm:$0xf]
      %v747 = vld [vmem:[%s3 + $0x1f8] sm:$0xf]
      %v748 = vld [vmem:[%s3 + $0x1fc] sm:$0xf]
      %v749 = vld [vmem:[%s3 + $0x200] sm:$0xf]
      %v750 = vld [vmem:[%s3 + $0x204] sm:$0xf]
      %v751 = vld [vmem:[%s3 + $0x208] sm:$0xf]
      %v752 = vld [vmem:[%s3 + $0x20c] sm:$0xf]
      %v753 = vld [vmem:[%s3 + $0x210] sm:$0xf]
      %v754 = vld [vmem:[%s3 + $0x214] sm:$0xf]
      %v755 = vld [vmem:[%s3 + $0x218] sm:$0xf]
      %v756 = vld [vmem:[%s3 + $0x21c] sm:$0xf]
      %v757 = vld [vmem:[%s3 + $0x220] sm:$0xf]
      %v758 = vld [vmem:[%s3 + $0x224] sm:$0xf]
      %v759 = vld [vmem:[%s3 + $0x228] sm:$0xf]
      %v760 = vld [vmem:[%s3 + $0x22c] sm:$0xf]
      %v761 = vld [vmem:[%s3 + $0x230] sm:$0xf]
      %v762 = vld [vmem:[%s3 + $0x234] sm:$0xf]
      %v763 = vld [vmem:[%s3 + $0x238] sm:$0xf]
      %v764 = vld [vmem:[%s3 + $0x23c] sm:$0xf]
      %v909 = vunpack.c.l.b16 %v621
      %v910 = vunpack.c.l.b16 %v622
      %v911 = vunpack.c.l.b16 %v623
      %v912 = vunpack.c.l.b16 %v624
      %v913 = vunpack.c.l.b16 %v625
      %v914 = vunpack.c.l.b16 %v626
      %v915 = vunpack.c.l.b16 %v627
      %v916 = vunpack.c.l.b16 %v628
      %v917 = vunpack.c.l.b16 %v629
      %v918 = vunpack.c.l.b16 %v630
      %v919 = vunpack.c.l.b16 %v631
      %v920 = vunpack.c.l.b16 %v632
      %v921 = vunpack.c.l.b16 %v633
      %v922 = vunpack.c.l.b16 %v634
      %v923 = vunpack.c.l.b16 %v635
      %v924 = vunpack.c.l.b16 %v636
      %v925 = vunpack.c.l.b16 %v637
      %v926 = vunpack.c.l.b16 %v638
      %v927 = vunpack.c.l.b16 %v639
      %v928 = vunpack.c.l.b16 %v640
      %v929 = vunpack.c.l.b16 %v641
      %v930 = vunpack.c.l.b16 %v642
      %v931 = vunpack.c.l.b16 %v643
      %v932 = vunpack.c.l.b16 %v644
      %v933 = vunpack.c.l.b16 %v645
      %v934 = vunpack.c.l.b16 %v646
      %v935 = vunpack.c.l.b16 %v647
      %v936 = vunpack.c.l.b16 %v648
      %v937 = vunpack.c.l.b16 %v649
      %v938 = vunpack.c.l.b16 %v650
      %v939 = vunpack.c.l.b16 %v651
      %v940 = vunpack.c.l.b16 %v652
      %v941 = vunpack.c.l.b16 %v653
      %v942 = vunpack.c.l.b16 %v654
      %v943 = vunpack.c.l.b16 %v655
      %v944 = vunpack.c.l.b16 %v656
      %v945 = vunpack.c.l.b16 %v657
      %v946 = vunpack.c.l.b16 %v658
      %v947 = vunpack.c.l.b16 %v659
      %v948 = vunpack.c.l.b16 %v660
      %v949 = vunpack.c.l.b16 %v661
      %v950 = vunpack.c.l.b16 %v662
      %v951 = vunpack.c.l.b16 %v663
      %v952 = vunpack.c.l.b16 %v664
      %v953 = vunpack.c.l.b16 %v665
      %v954 = vunpack.c.l.b16 %v666
      %v955 = vunpack.c.l.b16 %v667
      %v956 = vunpack.c.l.b16 %v668
      %v957 = vunpack.c.l.b16 %v669
      %v958 = vunpack.c.l.b16 %v670
      %v959 = vunpack.c.l.b16 %v671
      %v960 = vunpack.c.l.b16 %v672
      %v961 = vunpack.c.l.b16 %v673
      %v962 = vunpack.c.l.b16 %v674
      %v963 = vunpack.c.l.b16 %v675
      %v964 = vunpack.c.l.b16 %v676
      %v965 = vunpack.c.l.b16 %v677
      %v966 = vunpack.c.l.b16 %v678
      %v967 = vunpack.c.l.b16 %v679
      %v968 = vunpack.c.l.b16 %v680
      %v969 = vunpack.c.l.b16 %v681
      %v970 = vunpack.c.l.b16 %v682
      %v971 = vunpack.c.l.b16 %v683
      %v972 = vunpack.c.l.b16 %v684
      %v973 = vunpack.c.l.b16 %v685
      %v974 = vunpack.c.l.b16 %v686
      %v975 = vunpack.c.l.b16 %v687
      %v976 = vunpack.c.l.b16 %v688
      %v977 = vunpack.c.l.b16 %v689
      %v978 = vunpack.c.l.b16 %v690
      %v979 = vunpack.c.l.b16 %v691
      %v980 = vunpack.c.l.b16 %v692
      %v981 = vunpack.c.l.b16 %v693
      %v982 = vunpack.c.l.b16 %v694
      %v983 = vunpack.c.l.b16 %v695
      %v984 = vunpack.c.l.b16 %v696
      %v985 = vunpack.c.l.b16 %v697
      %v986 = vunpack.c.l.b16 %v698
      %v987 = vunpack.c.l.b16 %v699
      %v988 = vunpack.c.l.b16 %v700
      %v989 = vunpack.c.l.b16 %v701
      %v990 = vunpack.c.l.b16 %v702
      %v991 = vunpack.c.l.b16 %v703
      %v992 = vunpack.c.l.b16 %v704
      %v993 = vunpack.c.l.b16 %v705
      %v994 = vunpack.c.l.b16 %v706
      %v995 = vunpack.c.l.b16 %v707
      %v996 = vunpack.c.l.b16 %v708
      %v997 = vunpack.c.l.b16 %v709
      %v998 = vunpack.c.l.b16 %v710
      %v999 = vunpack.c.l.b16 %v711
      %v1000 = vunpack.c.l.b16 %v712
      %v1001 = vunpack.c.l.b16 %v713
      %v1002 = vunpack.c.l.b16 %v714
      %v1003 = vunpack.c.l.b16 %v715
      %v1004 = vunpack.c.l.b16 %v716
      %v1005 = vunpack.c.l.b16 %v717
      %v1006 = vunpack.c.l.b16 %v718
      %v1007 = vunpack.c.l.b16 %v719
      %v1008 = vunpack.c.l.b16 %v720
      %v1009 = vunpack.c.l.b16 %v721
      %v1010 = vunpack.c.l.b16 %v722
      %v1011 = vunpack.c.l.b16 %v723
      %v1012 = vunpack.c.l.b16 %v724
      %v1013 = vunpack.c.l.b16 %v725
      %v1014 = vunpack.c.l.b16 %v726
      %v1015 = vunpack.c.l.b16 %v727
      %v1016 = vunpack.c.l.b16 %v728
      %v1017 = vunpack.c.l.b16 %v729
      %v1018 = vunpack.c.l.b16 %v730
      %v1019 = vunpack.c.l.b16 %v731
      %v1020 = vunpack.c.l.b16 %v732
      %v1021 = vunpack.c.l.b16 %v733
      %v1022 = vunpack.c.l.b16 %v734
      %v1023 = vunpack.c.l.b16 %v735
      %v1024 = vunpack.c.l.b16 %v736
      %v1025 = vunpack.c.l.b16 %v737
      %v1026 = vunpack.c.l.b16 %v738
      %v1027 = vunpack.c.l.b16 %v739
      %v1028 = vunpack.c.l.b16 %v740
      %v1029 = vunpack.c.l.b16 %v741
      %v1030 = vunpack.c.l.b16 %v742
      %v1031 = vunpack.c.l.b16 %v743
      %v1032 = vunpack.c.l.b16 %v744
      %v1033 = vunpack.c.l.b16 %v745
      %v1034 = vunpack.c.l.b16 %v746
      %v1035 = vunpack.c.l.b16 %v747
      %v1036 = vunpack.c.l.b16 %v748
      %v1037 = vunpack.c.l.b16 %v749
      %v1038 = vunpack.c.l.b16 %v750
      %v1039 = vunpack.c.l.b16 %v751
      %v1040 = vunpack.c.l.b16 %v752
      %v1041 = vunpack.c.l.b16 %v753
      %v1042 = vunpack.c.l.b16 %v754
      %v1043 = vunpack.c.l.b16 %v755
      %v1044 = vunpack.c.l.b16 %v756
      %v1045 = vunpack.c.l.b16 %v757
      %v1046 = vunpack.c.l.b16 %v758
      %v1047 = vunpack.c.l.b16 %v759
      %v1048 = vunpack.c.l.b16 %v760
      %v1049 = vunpack.c.l.b16 %v761
      %v1050 = vunpack.c.l.b16 %v762
      %v1051 = vunpack.c.l.b16 %v763
      %v1052 = vunpack.c.l.b16 %v764
      %v1053 = vpack.c.b16 %v910, %v909
      %v1054 = vpack.c.b16 %v912, %v911
      %v1055 = vpack.c.b16 %v914, %v913
      %v1056 = vpack.c.b16 %v916, %v915
      %v1057 = vpack.c.b16 %v918, %v917
      %v1058 = vpack.c.b16 %v920, %v919
      %v1059 = vpack.c.b16 %v922, %v921
      %v1060 = vpack.c.b16 %v924, %v923
      %v1061 = vpack.c.b16 %v926, %v925
      %v1062 = vpack.c.b16 %v928, %v927
      %v1063 = vpack.c.b16 %v930, %v929
      %v1064 = vpack.c.b16 %v932, %v931
      %v1065 = vpack.c.b16 %v934, %v933
      %v1066 = vpack.c.b16 %v936, %v935
      %v1067 = vpack.c.b16 %v938, %v937
      %v1068 = vpack.c.b16 %v940, %v939
      %v1069 = vpack.c.b16 %v942, %v941
      %v1070 = vpack.c.b16 %v944, %v943
      %v1071 = vpack.c.b16 %v946, %v945
      %v1072 = vpack.c.b16 %v948, %v947
      %v1073 = vpack.c.b16 %v950, %v949
      %v1074 = vpack.c.b16 %v952, %v951
      %v1075 = vpack.c.b16 %v954, %v953
      %v1076 = vpack.c.b16 %v956, %v955
      %v1077 = vpack.c.b16 %v958, %v957
      %v1078 = vpack.c.b16 %v960, %v959
      %v1079 = vpack.c.b16 %v962, %v961
      %v1080 = vpack.c.b16 %v964, %v963
      %v1081 = vpack.c.b16 %v966, %v965
      %v1082 = vpack.c.b16 %v968, %v967
      %v1083 = vpack.c.b16 %v970, %v969
      %v1084 = vpack.c.b16 %v972, %v971
      %v1085 = vpack.c.b16 %v974, %v973
      %v1086 = vpack.c.b16 %v976, %v975
      %v1087 = vpack.c.b16 %v978, %v977
      %v1088 = vpack.c.b16 %v980, %v979
      %v1089 = vpack.c.b16 %v982, %v981
      %v1090 = vpack.c.b16 %v984, %v983
      %v1091 = vpack.c.b16 %v986, %v985
      %v1092 = vpack.c.b16 %v988, %v987
      %v1093 = vpack.c.b16 %v990, %v989
      %v1094 = vpack.c.b16 %v992, %v991
      %v1095 = vpack.c.b16 %v994, %v993
      %v1096 = vpack.c.b16 %v996, %v995
      %v1097 = vpack.c.b16 %v998, %v997
      %v1098 = vpack.c.b16 %v1000, %v999
      %v1099 = vpack.c.b16 %v1002, %v1001
      %v1100 = vpack.c.b16 %v1004, %v1003
      %v1101 = vpack.c.b16 %v1006, %v1005
      %v1102 = vpack.c.b16 %v1008, %v1007
      %v1103 = vpack.c.b16 %v1010, %v1009
      %v1104 = vpack.c.b16 %v1012, %v1011
      %v1105 = vpack.c.b16 %v1014, %v1013
      %v1106 = vpack.c.b16 %v1016, %v1015
      %v1107 = vpack.c.b16 %v1018, %v1017
      %v1108 = vpack.c.b16 %v1020, %v1019
      %v1109 = vpack.c.b16 %v1022, %v1021
      %v1110 = vpack.c.b16 %v1024, %v1023
      %v1111 = vpack.c.b16 %v1026, %v1025
      %v1112 = vpack.c.b16 %v1028, %v1027
      %v1113 = vpack.c.b16 %v1030, %v1029
      %v1114 = vpack.c.b16 %v1032, %v1031
      %v1115 = vpack.c.b16 %v1034, %v1033
      %v1116 = vpack.c.b16 %v1036, %v1035
      %v1117 = vpack.c.b16 %v1038, %v1037
      %v1118 = vpack.c.b16 %v1040, %v1039
      %v1119 = vpack.c.b16 %v1042, %v1041
      %v1120 = vpack.c.b16 %v1044, %v1043
      %v1121 = vpack.c.b16 %v1046, %v1045
      %v1122 = vpack.c.b16 %v1048, %v1047
      %v1123 = vpack.c.b16 %v1050, %v1049
      %v1124 = vpack.c.b16 %v1052, %v1051
      %1197 = vmatprep.subr.bf16.mxu0 0
      %1198 = vmatpush1.bf16.msra.mxu0 %v1060
      %1199 = vmatprep.subr.bf16.mxu0 0
      %1200 = vmatpush1.bf16.msra.mxu0 %v1059
      %1201 = vmatprep.subr.bf16.mxu0 0
      %1202 = vmatpush1.bf16.msra.mxu0 %v1058
      %1203 = vmatprep.subr.bf16.mxu0 0
      %1204 = vmatpush1.bf16.msra.mxu0 %v1057
      %1205 = vmatprep.subr.bf16.mxu0 0
      %1206 = vmatpush1.bf16.msra.mxu0 %v1056
      %1207 = vmatprep.subr.bf16.mxu0 0
      %1208 = vmatpush1.bf16.msra.mxu0 %v1055
      %1209 = vmatprep.subr.bf16.mxu0 0
      %1210 = vmatpush1.bf16.msra.mxu0 %v1054
      %1211 = vmatprep.subr.bf16.mxu0 0
      %1212 = vmatpush1.bf16.msra.mxu0 %v1053
      %1213 = vmatprep.subr.bf16.mxu0 0
      %1214 = vmatpush2.bf16.msra.mxu0 %v1068
      %1215 = vmatprep.subr.bf16.mxu0 0
      %1216 = vmatpush2.bf16.msra.mxu0 %v1067
      %1217 = vmatprep.subr.bf16.mxu0 0
      %1218 = vmatpush2.bf16.msra.mxu0 %v1066
      %1219 = vmatprep.subr.bf16.mxu0 0
      %1220 = vmatpush2.bf16.msra.mxu0 %v1065
      %1221 = vmatprep.subr.bf16.mxu0 0
      %1222 = vmatpush2.bf16.msra.mxu0 %v1064
      %1223 = vmatprep.subr.bf16.mxu0 0
      %1224 = vmatpush2.bf16.msra.mxu0 %v1063
      %1225 = vmatprep.subr.bf16.mxu0 0
      %1226 = vmatpush2.bf16.msra.mxu0 %v1062
      %1227 = vmatprep.subr.bf16.mxu0 0
      %1228 = vmatpush2.bf16.msra.mxu0 %v1061
      %1229 = vmatprep.mubr.bf16.mxu0 %v587
      %1230 = vmatmul.mubr.bf16.gmra.mxu0 %v579
      %v1231 = vpop.f32.mrf.mxu0
      %v1232 = vadd.f32 0.0, %v1231
      %v1233 = vpop.f32.mrf.mxu0
      %v1234 = vpop.f32.mrf.mxu0
      %v1235 = vadd.f32 0.0, %v1234
      %v1236 = vpop.f32.mrf.mxu0
      %1237 = vmatprep.mubr.bf16.mxu0 %v588
      %1238 = vmatmul.mubr.bf16.gmra.mxu0 %v580
      %v1239 = vpop.f32.mrf.mxu0
      %v1240 = vadd.f32 0.0, %v1239
      %v1241 = vpop.f32.mrf.mxu0
      %v1242 = vpop.f32.mrf.mxu0
      %v1243 = vadd.f32 0.0, %v1242
      %v1244 = vpop.f32.mrf.mxu0
      %1245 = vdwg.mxu0
      %1246 = vmatprep.subr.bf16.mxu0 0
      %1247 = vmatpush1.bf16.msra.mxu0 %v1076
      %1248 = vmatprep.subr.bf16.mxu0 0
      %1249 = vmatpush1.bf16.msra.mxu0 %v1075
      %1250 = vmatprep.subr.bf16.mxu0 0
      %1251 = vmatpush1.bf16.msra.mxu0 %v1074
      %1252 = vmatprep.subr.bf16.mxu0 0
      %1253 = vmatpush1.bf16.msra.mxu0 %v1073
      %1254 = vmatprep.subr.bf16.mxu0 0
      %1255 = vmatpush1.bf16.msra.mxu0 %v1072
      %1256 = vmatprep.subr.bf16.mxu0 0
      %1257 = vmatpush1.bf16.msra.mxu0 %v1071
      %1258 = vmatprep.subr.bf16.mxu0 0
      %1259 = vmatpush1.bf16.msra.mxu0 %v1070
      %1260 = vmatprep.subr.bf16.mxu0 0
      %1261 = vmatpush1.bf16.msra.mxu0 %v1069
      %1262 = vmatprep.subr.bf16.mxu0 0
      %1263 = vmatpush2.bf16.msra.mxu0 %v1084
      %1264 = vmatprep.subr.bf16.mxu0 0
      %1265 = vmatpush2.bf16.msra.mxu0 %v1083
      %1266 = vmatprep.subr.bf16.mxu0 0
      %1267 = vmatpush2.bf16.msra.mxu0 %v1082
      %1268 = vmatprep.subr.bf16.mxu0 0
      %1269 = vmatpush2.bf16.msra.mxu0 %v1081
      %1270 = vmatprep.subr.bf16.mxu0 0
      %1271 = vmatpush2.bf16.msra.mxu0 %v1080
      %1272 = vmatprep.subr.bf16.mxu0 0
      %1273 = vmatpush2.bf16.msra.mxu0 %v1079
      %1274 = vmatprep.subr.bf16.mxu0 0
      %1275 = vmatpush2.bf16.msra.mxu0 %v1078
      %1276 = vmatprep.subr.bf16.mxu0 0
      %1277 = vmatpush2.bf16.msra.mxu0 %v1077
      %1278 = vmatprep.mubr.bf16.mxu0 %v599
      %1279 = vmatmul.mubr.bf16.gmra.mxu0 %v595
      %v1280 = vpop.f32.mrf.mxu0
      %v1281 = vadd.f32 %v1232, %v1280
      %v1282 = vpop.f32.mrf.mxu0
      %v1283 = vpop.f32.mrf.mxu0
      %v1284 = vadd.f32 %v1235, %v1283
      %v1285 = vpop.f32.mrf.mxu0
      %1286 = vmatprep.mubr.bf16.mxu0 %v600
      %1287 = vmatmul.mubr.bf16.gmra.mxu0 %v596
      %v1288 = vpop.f32.mrf.mxu0
      %v1289 = vadd.f32 %v1240, %v1288
      %v1290 = vpop.f32.mrf.mxu0
      %v1291 = vpop.f32.mrf.mxu0
      %v1292 = vadd.f32 %v1243, %v1291
      %v1293 = vpop.f32.mrf.mxu0
      %1294 = vdwg.mxu0
      %1295 = vmatprep.subr.bf16.mxu0 0
      %1296 = vmatpush1.bf16.msra.mxu0 %v1092
      %1297 = vmatprep.subr.bf16.mxu0 0
      %1298 = vmatpush1.bf16.msra.mxu0 %v1091
      %1299 = vmatprep.subr.bf16.mxu0 0
      %1300 = vmatpush1.bf16.msra.mxu0 %v1090
      %1301 = vmatprep.subr.bf16.mxu0 0
      %1302 = vmatpush1.bf16.msra.mxu0 %v1089
      %1303 = vmatprep.subr.bf16.mxu0 0
      %1304 = vmatpush1.bf16.msra.mxu0 %v1088
      %1305 = vmatprep.subr.bf16.mxu0 0
      %1306 = vmatpush1.bf16.msra.mxu0 %v1087
      %1307 = vmatprep.subr.bf16.mxu0 0
      %1308 = vmatpush1.bf16.msra.mxu0 %v1086
      %1309 = vmatprep.subr.bf16.mxu0 0
      %1310 = vmatpush1.bf16.msra.mxu0 %v1085
      %1311 = vmatprep.subr.bf16.mxu0 0
      %1312 = vmatpush2.bf16.msra.mxu0 %v1100
      %1313 = vmatprep.subr.bf16.mxu0 0
      %1314 = vmatpush2.bf16.msra.mxu0 %v1099
      %1315 = vmatprep.subr.bf16.mxu0 0
      %1316 = vmatpush2.bf16.msra.mxu0 %v1098
      %1317 = vmatprep.subr.bf16.mxu0 0
      %1318 = vmatpush2.bf16.msra.mxu0 %v1097
      %1319 = vmatprep.subr.bf16.mxu0 0
      %1320 = vmatpush2.bf16.msra.mxu0 %v1096
      %1321 = vmatprep.subr.bf16.mxu0 0
      %1322 = vmatpush2.bf16.msra.mxu0 %v1095
      %1323 = vmatprep.subr.bf16.mxu0 0
      %1324 = vmatpush2.bf16.msra.mxu0 %v1094
      %1325 = vmatprep.subr.bf16.mxu0 0
      %1326 = vmatpush2.bf16.msra.mxu0 %v1093
      %1327 = vmatprep.mubr.bf16.mxu0 %v609
      %1328 = vmatmul.mubr.bf16.gmra.mxu0 %v604
      %v1329 = vpop.f32.mrf.mxu0
      %v1330 = vadd.f32 %v1281, %v1329
      %v1331 = vpop.f32.mrf.mxu0
      %v1332 = vpop.f32.mrf.mxu0
      %v1333 = vadd.f32 %v1284, %v1332
      %v1334 = vpop.f32.mrf.mxu0
      %1335 = vmatprep.mubr.bf16.mxu0 %v610
      %1336 = vmatmul.mubr.bf16.gmra.mxu0 %v605
      %v1337 = vpop.f32.mrf.mxu0
      %v1338 = vadd.f32 %v1289, %v1337
      %v1339 = vpop.f32.mrf.mxu0
      %v1340 = vpop.f32.mrf.mxu0
      %v1341 = vadd.f32 %v1292, %v1340
      %v1342 = vpop.f32.mrf.mxu0
      %1343 = vdwg.mxu0
      %1344 = vmatprep.subr.bf16.mxu0 0
      %1345 = vmatpush1.bf16.msra.mxu0 %v1108
      %1346 = vmatprep.subr.bf16.mxu0 0
      %1347 = vmatpush1.bf16.msra.mxu0 %v1107
      %1348 = vmatprep.subr.bf16.mxu0 0
      %1349 = vmatpush1.bf16.msra.mxu0 %v1106
      %1350 = vmatprep.subr.bf16.mxu0 0
      %1351 = vmatpush1.bf16.msra.mxu0 %v1105
      %1352 = vmatprep.subr.bf16.mxu0 0
      %1353 = vmatpush1.bf16.msra.mxu0 %v1104
      %1354 = vmatprep.subr.bf16.mxu0 0
      %1355 = vmatpush1.bf16.msra.mxu0 %v1103
      %1356 = vmatprep.subr.bf16.mxu0 0
      %1357 = vmatpush1.bf16.msra.mxu0 %v1102
      %1358 = vmatprep.subr.bf16.mxu0 0
      %1359 = vmatpush1.bf16.msra.mxu0 %v1101
      %1360 = vmatprep.subr.bf16.mxu0 0
      %1361 = vmatpush2.bf16.msra.mxu0 %v1116
      %1362 = vmatprep.subr.bf16.mxu0 0
      %1363 = vmatpush2.bf16.msra.mxu0 %v1115
      %1364 = vmatprep.subr.bf16.mxu0 0
      %1365 = vmatpush2.bf16.msra.mxu0 %v1114
      %1366 = vmatprep.subr.bf16.mxu0 0
      %1367 = vmatpush2.bf16.msra.mxu0 %v1113
      %1368 = vmatprep.subr.bf16.mxu0 0
      %1369 = vmatpush2.bf16.msra.mxu0 %v1112
      %1370 = vmatprep.subr.bf16.mxu0 0
      %1371 = vmatpush2.bf16.msra.mxu0 %v1111
      %1372 = vmatprep.subr.bf16.mxu0 0
      %1373 = vmatpush2.bf16.msra.mxu0 %v1110
      %1374 = vmatprep.subr.bf16.mxu0 0
      %1375 = vmatpush2.bf16.msra.mxu0 %v1109
      %1376 = vmatprep.mubr.bf16.mxu0 %v588
      %1377 = vmatmul.mubr.bf16.gmra.mxu0 %v580
      %v1378 = vpop.f32.mrf.mxu0
      %v1379 = vadd.f32 %v1330, %v1378
      %v1380 = vpop.f32.mrf.mxu0
      %v1381 = vpop.f32.mrf.mxu0
      %v1382 = vadd.f32 %v1333, %v1381
      %v1383 = vpop.f32.mrf.mxu0
      %1384 = vmatprep.mubr.bf16.mxu0 %v616
      %1385 = vmatmul.mubr.bf16.gmra.mxu0 %v613
      %v1386 = vpop.f32.mrf.mxu0
      %v1387 = vadd.f32 %v1338, %v1386
      %v1388 = vpop.f32.mrf.mxu0
      %v1389 = vpop.f32.mrf.mxu0
      %v1390 = vadd.f32 %v1341, %v1389
      %v1391 = vpop.f32.mrf.mxu0
      %1392 = vdwg.mxu0
      %1393 = vmatprep.subr.bf16.mxu0 0
      %1394 = vmatpush1.bf16.msra.mxu0 %v1124
      %1395 = vmatprep.subr.bf16.mxu0 0
      %1396 = vmatpush1.bf16.msra.mxu0 %v1123
      %1397 = vmatprep.subr.bf16.mxu0 0
      %1398 = vmatpush1.bf16.msra.mxu0 %v1122
      %1399 = vmatprep.subr.bf16.mxu0 0
      %1400 = vmatpush1.bf16.msra.mxu0 %v1121
      %1401 = vmatprep.subr.bf16.mxu0 0
      %1402 = vmatpush1.bf16.msra.mxu0 %v1120
      %1403 = vmatprep.subr.bf16.mxu0 0
      %1404 = vmatpush1.bf16.msra.mxu0 %v1119
      %1405 = vmatprep.subr.bf16.mxu0 0
      %1406 = vmatpush1.bf16.msra.mxu0 %v1118
      %1407 = vmatprep.subr.bf16.mxu0 0
      %1408 = vmatpush1.bf16.msra.mxu0 %v1117
      %1409 = vmatprep.subr.bf16.mxu0 0
      %1410 = vmatpush2.bf16.msra.mxu0 0
      %1411 = vmatprep.subr.bf16.mxu0 0
      %1412 = vmatpush2.bf16.msra.mxu0 0
      %1413 = vmatprep.subr.bf16.mxu0 0
      %1414 = vmatpush2.bf16.msra.mxu0 0
      %1415 = vmatprep.subr.bf16.mxu0 0
      %1416 = vmatpush2.bf16.msra.mxu0 0
      %1417 = vmatprep.subr.bf16.mxu0 0
      %1418 = vmatpush2.bf16.msra.mxu0 0
      %1419 = vmatprep.subr.bf16.mxu0 0
      %1420 = vmatpush2.bf16.msra.mxu0 0
      %1421 = vmatprep.subr.bf16.mxu0 0
      %1422 = vmatpush2.bf16.msra.mxu0 0
      %1423 = vmatprep.subr.bf16.mxu0 0
      %1424 = vmatpush2.bf16.msra.mxu0 0
      %1425 = vmatprep.mubr.bf16.mxu0 0
      %1426 = vmatmul.mubr.bf16.gmra.mxu0 %v596
      %v1427 = vpop.f32.mrf.mxu0
      %v1428 = vadd.f32 %v1379, %v1427
      %v1429 = vpop.f32.mrf.mxu0
      %v1430 = vpop.f32.mrf.mxu0
      %v1431 = vadd.f32 %v1382, %v1430
      %v1432 = vpop.f32.mrf.mxu0
      %1433 = vmatprep.mubr.bf16.mxu0 0
      %1434 = vmatmul.mubr.bf16.gmra.mxu0 %v619
      %v1435 = vpop.f32.mrf.mxu0
      %v1436 = vadd.f32 %v1387, %v1435
      %v1437 = vpop.f32.mrf.mxu0
      %v1438 = vpop.f32.mrf.mxu0
      %v1439 = vadd.f32 %v1390, %v1438
      %v1440 = vpop.f32.mrf.mxu0
      %1441 = vdwg.mxu0
      %v1442 = vpack.c.bf16 %v1431, %v1428
      %v1443 = vpack.c.bf16 %v1439, %v1436
      %v1446 = vunpack.c.l.b16 %v1442
      %v1447 = vunpack.c.h.b16 %v1442
      %v1448 = vunpack.c.l.b16 %v1443
      %v1449 = vunpack.c.h.b16 %v1443
      %v1450 = vpack.c.b16 %v1446, %v1446
      %v1451 = vpack.c.b16 %v1447, %v1447
      %v1452 = vpack.c.b16 %v1448, %v1448
      %v1453 = vpack.c.b16 %v1449, %v1449
      %1458 = vst [vmem:[%s259] sm:$0xf] %v1450
      %1459 = vst [vmem:[%s259 + $0x4] sm:$0xf] %v1451
      %1460 = vst [vmem:[%s259 + $0x8] sm:$0xf] %v1452
      %1461 = vst [vmem:[%s259 + $0xc] sm:$0xf] %v1453
      %v1462 = vadd.f32 %v1428, %v1431
      %v1463 = vadd.f32 %v1462, %v1436
      %v1464 = vadd.f32 %v1463, %v1439
      %v1465 = vrot.slane %v1464, 4
      %v1466 = vadd.f32 %v1464, %v1465
      %v1467 = vrot.slane %v1466, 2
      %v1468 = vadd.f32 %v1466, %v1467
      %v1469 = vrot.slane %v1468, 1
      %v1470 = vadd.f32 %v1468, %v1469
      %v1471 = vmul.f32 %v1428, %v1428
      %v1472 = vmul.f32 %v1431, %v1431
      %v1473 = vmul.f32 %v1436, %v1436
      %v1474 = vmul.f32 %v1439, %v1439
      %v1475 = vadd.f32 %v1471, %v1472
      %v1476 = vadd.f32 %v1475, %v1473
      %v1477 = vadd.f32 %v1476, %v1474
      %v1478 = vrot.slane %v1477, 4
      %v1479 = vadd.f32 %v1477, %v1478
      %v1480 = vrot.slane %v1479, 2
      %v1481 = vadd.f32 %v1479, %v1480
      %v1482 = vrot.slane %v1481, 1
      %v1483 = vadd.f32 %v1481, %v1482
      %vm1484 = vcmask 1040384
      %v1485 = vsel %vm1484, %v1470, %v1483
      %1486 = vst [vmem:[%s266] sm:$0x3] %v1485
      %s1487 = smul.u32 4, %s22
      %p1488 = scmp.lt.s32.totalorder %s21, 1
      %s1489 = scalar_select %p1488, %s21, 1
      %p1490 = scmp.lt.s32.totalorder %s1487, 7
      %s1491 = scalar_select %p1490, %s1487, 7
      %s1492 = smul.addr %s1489, 8
      %s1493 = sadd.s32 %s1491, %s1492
      %s1494 = smul.addr %s1493, 4
      %s1495 = scalar_lea.vmem %s4, %s1494
      %s1496 = smul.u32 %s21, 2
      %s1497 = sadd.s32 %s1496, %s22
      %p1498 = scmp.lt.s32.totalorder %s1497, 3
      %s1499 = scalar_select %p1498, %s1497, 3
      %s1500 = smul.addr %s1499, 2
      %s1501 = scalar_lea.vmem %s5, %s1500
      // Predicated region
      $region37: #{res_bottleneck_forward.5} parent=35 // pred_check
        %p1502 = pneg %p138
      $region38: #{res_bottleneck_forward.5} parent=35 // pred_check_branch
        %1504 = sbr.rel (%p1502) target = $region40
      $region39: #{res_bottleneck_forward.5} parent=35 // pred_region
        %s1505 = smul.u32 4, %s22
      $region40: #{res_bottleneck_forward.5} parent=35 // pred_fallthru
        _
      // Predicated region
      $region41: #{res_bottleneck_forward.5} parent=35 // pred_check
        %p1506 = pneg %p168
      $region42: #{res_bottleneck_forward.5} parent=35 // pred_check_branch
        %1508 = sbr.rel (%p1506) target = $region44
      $region43: #{res_bottleneck_forward.5} parent=35 // pred_region
        %s1509 = smul.u32 %s21, 2
        %s1510 = sadd.s32 %s1509, %s22
      $region44: #{res_bottleneck_forward.5} parent=35 // pred_fallthru
        _
    $region36: #{res_bottleneck_forward.5} parent=5 // pred_fallthru
      _
    %p1511 = scmp.le.s32.totalorder 2, %s12
    // Predicated region
    $region45: #{res_bottleneck_forward.5} parent=5 // pred_check
      %p1512 = pneg %p1511
    $region46: #{res_bottleneck_forward.5} parent=5 // pred_check_branch
      %1514 = sbr.rel (%p1512) target = $region48
    $region47: #{res_bottleneck_forward.5} parent=5 // pred_region
      %s1515 = ssub.s32 %s12, 2
      // Predicated region
      $region49: #{res_bottleneck_forward.5} parent=47 // pred_check
        %p1516 = pneg %p144
      $region50: #{res_bottleneck_forward.5} parent=47 // pred_check_branch
        %1518 = sbr.rel (%p1516) target = $region52
      $region51: #{res_bottleneck_forward.5} parent=47 // pred_region
        %s1519 = smul.u32 4, %s24
        %p1520 = scmp.lt.s32.totalorder %s23, 1
        %s1521 = scalar_select %p1520, %s23, 1
        %p1522 = scmp.lt.s32.totalorder %s1519, 7
        %s1523 = scalar_select %p1522, %s1519, 7
        %s1524 = smul.addr %s1521, 8
        %s1525 = sadd.s32 %s1523, %s1524
        %s1526 = smul.addr %s1525, 4
        %s1527 = scalar_lea.vmem %s4, %s1526
      $region52: #{res_bottleneck_forward.5} parent=47 // pred_fallthru
        _
      // Predicated region
      $region53: #{res_bottleneck_forward.5} parent=47 // pred_check
        %p1528 = pneg %p174
      $region54: #{res_bottleneck_forward.5} parent=47 // pred_check_branch
        %1530 = sbr.rel (%p1528) target = $region56
      $region55: #{res_bottleneck_forward.5} parent=47 // pred_region
        %s1531 = smul.u32 %s23, 2
        %s1532 = sadd.s32 %s1531, %s24
        %p1533 = scmp.lt.s32.totalorder %s1532, 3
        %s1534 = scalar_select %p1533, %s1532, 3
        %s1535 = smul.addr %s1534, 2
        %s1536 = scalar_lea.vmem %s5, %s1535
      $region56: #{res_bottleneck_forward.5} parent=47 // pred_fallthru
        _
    $region48: #{res_bottleneck_forward.5} parent=5 // pred_fallthru
      _
  $region6: #{res_bottleneck_forward.5} parent=0 // loop_footer
    %s16 = sadd.s32 1, %s12
  $region7: #{res_bottleneck_forward.5} parent=0 // loop_footer_branch
    %11 = sbr.rel target = $region3
  $region8: #{res_bottleneck_forward.5} parent=0 // loop_exit
    _

</llo_original>
